<compile_context>
chip_gen: v7x
topology: tpu7x:2x2x1
jax: 0.10.0
libtpu: 0.0.40
codegen_flags: <defaults>
</compile_context>

<pallas_src>
import functools

import numpy as np
import jax
import jax.numpy as jnp
from jax.experimental import pallas as pl
from jax.experimental.pallas import tpu as pltpu


# ----------------------------- fused Pallas kernel ------------------------- #
def _rir_kernel(x_ref, w_ref, b_ref, o_ref, lhs_ref, *, G, H, WC, n_res):
    """One image group: 5x(conv-relu-conv+res) + final conv + outer residual.

    x_ref   : (G*H, WC)           activation slab (lane dim = W*C), f32
    w_ref   : (n_conv, 3*WC, WC)  bf16 K-stacked banded conv weights (VMEM-resident)
    b_ref   : (n_conv, 1, WC)     f32 bias, tiled along W
    o_ref   : (G*H, WC)
    lhs_ref : (G*H, 3*WC) f32     matmul LHS scratch: three dy-shifted copies of
                                  the current activation at lane offsets
                                  0 / WC / 2*WC, with per-image zero halo rows.
    """
    M = G * H

    # Zero only the per-image halo cells: row 0 of the dy=0 column block and
    # row H-1 of the dy=2 column block.  _store_shifted never touches them, so
    # they stay zero for every conv in the chain ('same' zero padding along H).
    zrow = jnp.zeros((1, WC), jnp.float32)
    for g in range(G):
        r = g * H
        lhs_ref[r:r + 1, 0:WC] = zrow
        lhs_ref[r + H - 1:r + H, 2 * WC:3 * WC] = zrow

    def store_shifted(a):                    # a: (M, WC) f32 activation
        lhs_ref[:, WC:2 * WC] = a                                       # dy = 1
        for g in range(G):                   # per-image one-row shifts (own halo)
            r = g * H
            lhs_ref[r + 1:r + H, 0:WC] = a[r:r + H - 1, :]              # dy = 0
            lhs_ref[r:r + H - 1, 2 * WC:3 * WC] = a[r + 1:r + H, :]     # dy = 2

    def conv(k):
        # 3x3 'same' conv == one fat bf16 MXU matmul with f32 accumulation.
        y = jnp.dot(lhs_ref[...].astype(jnp.bfloat16), w_ref[k],
                    preferred_element_type=jnp.float32)
        return y + b_ref[k]                  # (1, WC) bias broadcasts over rows

    x = x_ref[...].astype(jnp.float32)       # (M, WC)
    store_shifted(x)
    h = x                                    # residual stream kept in f32 values
    for rb in range(n_res):                  # 5 ResBlocks, fully unrolled
        t = jnp.maximum(conv(2 * rb), 0.0)   # conv1 + ReLU
        store_shifted(t)
        h = conv(2 * rb + 1) + h             # conv2 + residual (f32)
        store_shifted(h)
    out = conv(2 * n_res) + x                # outer conv + input residual
    o_ref[...] = out.astype(o_ref.dtype)


# ------------------------------ JAX wrapper -------------------------------- #
def _images_per_step(n_batch):
    """v7x has 2 TensorCores/chip: keep 2 'parallel' grid steps (one image group
    per core).  Single-TC chips (v5e/v6e): fold the whole batch into M."""
    try:
        kind = jax.devices()[0].device_kind.lower()
    except Exception:
        kind = ""
    if ("v7" in kind or "7x" in kind) and n_batch % 2 == 0:
        return max(n_batch // 2, 1)
    return n_batch


def rir_block(x_nhwc, wstk, bslab, *, single_buffer_weights=True):
    """x_nhwc: (N,H,W,C); wstk: (n_conv, 3*W*C, W*C) bf16; bslab: (n_conv,1,W*C) f32."""
    N, H, W, C = x_nhwc.shape
    WC = W * C
    n_conv = wstk.shape[0]
    n_res = (n_conv - 1) // 2
    G = _images_per_step(N)                  # images folded into M per grid step
    steps = N // G
    M = G * H

    x_slab = x_nhwc.reshape(N * H, WC)       # contiguous, lane-dense (last dim 128)
    kernel = functools.partial(_rir_kernel, G=G, H=H, WC=WC, n_res=n_res)

    const_kw = {}
    if single_buffer_weights:
        # Constant index_map -> double buffering only duplicates VMEM.
        const_kw = dict(pipeline_mode=pl.Buffered(1))
    w_spec = pl.BlockSpec((n_conv, 3 * WC, WC), lambda n: (0, 0, 0), **const_kw)
    b_spec = pl.BlockSpec((n_conv, 1, WC), lambda n: (0, 0, 0), **const_kw)

    out_slab = pl.pallas_call(
        kernel,
        out_shape=jax.ShapeDtypeStruct((N * H, WC), x_nhwc.dtype),
        grid_spec=pltpu.PrefetchScalarGridSpec(
            num_scalar_prefetch=0,
            grid=(steps,),
            in_specs=[
                pl.BlockSpec((M, WC), lambda n: (n, 0)),
                w_spec,
                b_spec,
            ],
            out_specs=pl.BlockSpec((M, WC), lambda n: (n, 0)),
            scratch_shapes=[pltpu.VMEM((M, 3 * WC), jnp.float32)],  # LHS staging
        ),
        compiler_params=pltpu.CompilerParams(dimension_semantics=("parallel",)),
    )(x_slab, wstk, bslab)
    return out_slab.reshape(N, H, W, C)


# --------------------------- parameter creation ----------------------------- #
def make_params(key, channels):
    std = (2.0 / (9 * channels)) ** 0.5

    def one_conv(k):
        kw_, kb = jax.random.split(k)
        w = std * jax.random.normal(kw_, (3, 3, channels, channels), jnp.float32)
        # The kernel stores weights in bf16: keep the module weights
        # bf16-representable so reference and kernel use identical values.
        w = w.astype(jnp.bfloat16).astype(jnp.float32)
        b = 0.01 * jax.random.normal(kb, (1, channels), jnp.float32)
        return w, b

    keys = jax.random.split(key, 11)
    resblocks = [(one_conv(keys[2 * i]), one_conv(keys[2 * i + 1])) for i in range(5)]
    w1, b1 = one_conv(keys[10])
    return {"resblocks": resblocks, "w1": w1, "b1": b1}


def _band_from_hwio(w_hwio, W):
    """(3,3,Cin,Cout) HWIO conv weight -> (3, W*Cin, W*Cout) banded matrices.

    band[dy, wi*Cin+ci, wo*Cout+co] = w[dy, wi-wo+1, ci, co] for |wi-wo| <= 1,
    folding the dx taps and the 'same' zero padding along W into a lane-space
    matmul per kernel row.  Built once on the host (fixed module weights).
    """
    kh, kw, Cin, Cout = w_hwio.shape
    w_np = np.asarray(w_hwio)
    band = np.zeros((kh, W * Cin, W * Cout), np.float32)
    for dy in range(kh):
        for dx in range(kw):
            for wo in range(W):
                wi = wo + dx - 1
                if 0 <= wi < W:
                    band[dy, wi * Cin:(wi + 1) * Cin,
                         wo * Cout:(wo + 1) * Cout] = w_np[dy, dx]
    return band


def prepare_pallas_params(params, W):
    """Stack the 11 convs (rb1.c1, rb1.c2, ..., rb5.c2, outer conv1)."""
    ws, bs = [], []
    for (w1, b1), (w2, b2) in params["resblocks"]:
        ws += [w1, w2]
        bs += [b1, b2]
    ws.append(params["w1"])
    bs.append(params["b1"])
    bands = np.stack([_band_from_hwio(w, W) for w in ws])          # (11, 3, WC, WC)
    n_conv, kh, WC, _ = bands.shape
    # K-stack the dy axis: (11, 3, WC, WC) -> (11, 3*WC, WC); store in bf16.
    wstk = jnp.asarray(bands.reshape(n_conv, kh * WC, WC), dtype=jnp.bfloat16)
    bslab = jnp.stack([jnp.tile(jnp.asarray(b, jnp.float32).reshape(1, -1), (1, W))
                       for b in bs])                                # (11, 1, WC) f32
    return wstk, bslab


# --------------------------- pure-JAX reference ----------------------------- #
def _ref_conv(x, w, b, *, round_input):
    if round_input:       # match the kernel's bf16 matmul-LHS rounding exactly
        x = x.astype(jnp.bfloat16).astype(jnp.float32)
    y = jax.lax.conv_general_dilated(
        x, w, window_strides=(1, 1), padding="SAME",
        dimension_numbers=("NHWC", "HWIO", "NHWC"),
        precision=jax.lax.Precision.HIGHEST)
    return y + b.reshape(1, 1, 1, -1)


def rir_block_ref(x, params, *, round_inputs=False):
    h = x
    for (w1, b1), (w2, b2) in params["resblocks"]:
        t = jnp.maximum(_ref_conv(h, w1, b1, round_input=round_inputs), 0.0)
        h = _ref_conv(t, w2, b2, round_input=round_inputs) + h
    return _ref_conv(h, params["w1"], params["b1"], round_input=round_inputs) + x


# --------------------------------- main ------------------------------------ #
if __name__ == "__main__":
    N, C, H, W = 2, 8, 16, 16            # W * C = 128 -> lane-dense slabs
    key = jax.random.PRNGKey(0)
    kx, kp = jax.random.split(key)

    # PyTorch-style NCHW input, transposed to NHWC for the kernel.
    x_nchw = jax.random.normal(kx, (N, C, H, W), jnp.float32)
    x_nhwc = jnp.transpose(x_nchw, (0, 2, 3, 1))

    params = make_params(kp, C)
    wstk, bslab = prepare_pallas_params(params, W)

    try:
        fn = jax.jit(functools.partial(rir_block, single_buffer_weights=True))
        out_nhwc = fn(x_nhwc, wstk, bslab)
        jax.block_until_ready(out_nhwc)
    except Exception:
        # Fallback if this build rejects pipeline_mode=pl.Buffered(1) on the
        # constant weight/bias specs (only costs ~1 MiB of duplicated VMEM).
        fn = jax.jit(functools.partial(rir_block, single_buffer_weights=False))
        out_nhwc = fn(x_nhwc, wstk, bslab)
        jax.block_until_ready(out_nhwc)

    # Structural check: reference with the same bf16 matmul-input rounding the
    # kernel applies (band construction / halo / shifts / residual chain).
    ref_matched = rir_block_ref(x_nhwc, params, round_inputs=True)
    scale_m = float(jnp.max(jnp.abs(ref_matched))) + 1e-6
    err_m = float(jnp.max(jnp.abs(out_nhwc - ref_matched))) / scale_m
    assert err_m < 2e-2, f"mismatch vs precision-matched reference: {err_m}"

    # Accuracy sanity check vs the full-f32 reference (bf16 activation drift).
    ref_f32 = rir_block_ref(x_nhwc, params, round_inputs=False)
    scale_f = float(jnp.max(jnp.abs(ref_f32))) + 1e-6
    err_f = float(jnp.max(jnp.abs(out_nhwc - ref_f32))) / scale_f
    assert err_f < 8e-2, f"bf16 drift vs f32 reference too large: {err_f}"

    out_nchw = jnp.transpose(out_nhwc, (0, 3, 1, 2))   # back to PyTorch layout
    jax.block_until_ready(out_nchw)

    print("KERNEL_OK")
</pallas_src>

<mosaic_0001>
module attributes {stable_mosaic.version = 11 : i64} {
  func.func @_rir_kernel(%arg0: i32, %arg1: memref<32x128xf32, #tpu.memory_space<vmem>>, %arg2: memref<11x384x128xbf16, #tpu.memory_space<vmem>>, %arg3: memref<11x1x128xf32, #tpu.memory_space<vmem>>, %arg4: memref<32x128xf32, #tpu.memory_space<vmem>>, %arg5: memref<32x384xf32, #tpu.memory_space<vmem>>) attributes {dimension_semantics = [#tpu.dimension_semantics<parallel>], iteration_bounds = array<i64: 1>, scalar_prefetch = 0 : i64, scratch_operands = 1 : i64, tpu.core_type = #tpu.core_type<tc>, window_params = [{transform_indices = @transform_0, window_bounds = array<i64: 32, 128>}, {pipeline_mode = #tpu.pipeline_mode<synchronous>, transform_indices = @transform_1, window_bounds = array<i64: 11, 384, 128>}, {pipeline_mode = #tpu.pipeline_mode<synchronous>, transform_indices = @transform_2, window_bounds = array<i64: 11, 1, 128>}, {transform_indices = @transform_3, window_bounds = array<i64: 32, 128>}]} {
    %cst = arith.constant 0.000000e+00 : f32
    %0 = vector.broadcast %cst : f32 to vector<1x128xf32>
    %c0 = arith.constant 0 : index
    %c0_0 = arith.constant 0 : index
    %1 = vector.load %arg5[%c0, %c0_0] : memref<32x384xf32, #tpu.memory_space<vmem>>, vector<1x128xf32>
    tpu.vector_store %arg5[%c0, %c0_0], %0 {strides = array<i32>} : memref<32x384xf32, #tpu.memory_space<vmem>>, vector<1x128xf32>,
    %c15 = arith.constant 15 : index
    %c256 = arith.constant 256 : index
    %2 = vector.load %arg5[%c15, %c256] : memref<32x384xf32, #tpu.memory_space<vmem>>, vector<1x128xf32>
    tpu.vector_store %arg5[%c15, %c256], %0 {strides = array<i32>} : memref<32x384xf32, #tpu.memory_space<vmem>>, vector<1x128xf32>,
    %c16 = arith.constant 16 : index
    %c0_1 = arith.constant 0 : index
    %3 = vector.load %arg5[%c16, %c0_1] : memref<32x384xf32, #tpu.memory_space<vmem>>, vector<1x128xf32>
    tpu.vector_store %arg5[%c16, %c0_1], %0 {strides = array<i32>} : memref<32x384xf32, #tpu.memory_space<vmem>>, vector<1x128xf32>,
    %c31 = arith.constant 31 : index
    %c256_2 = arith.constant 256 : index
    %4 = vector.load %arg5[%c31, %c256_2] : memref<32x384xf32, #tpu.memory_space<vmem>>, vector<1x128xf32>
    tpu.vector_store %arg5[%c31, %c256_2], %0 {strides = array<i32>} : memref<32x384xf32, #tpu.memory_space<vmem>>, vector<1x128xf32>,
    %c0_3 = arith.constant 0 : index
    %c0_4 = arith.constant 0 : index
    %5 = vector.load %arg1[%c0_3, %c0_4] : memref<32x128xf32, #tpu.memory_space<vmem>>, vector<32x128xf32>
    %c0_5 = arith.constant 0 : index
    %c128 = arith.constant 128 : index
    %6 = vector.load %arg5[%c0_5, %c128] : memref<32x384xf32, #tpu.memory_space<vmem>>, vector<32x128xf32>
    tpu.vector_store %arg5[%c0_5, %c128], %5 {strides = array<i32>} : memref<32x384xf32, #tpu.memory_space<vmem>>, vector<32x128xf32>,
    %7 = vector.extract_strided_slice %5 {offsets = [0, 0], sizes = [15, 128], strides = [1, 1]} : vector<32x128xf32> to vector<15x128xf32>
    %c1 = arith.constant 1 : index
    %c0_6 = arith.constant 0 : index
    %8 = vector.load %arg5[%c1, %c0_6] : memref<32x384xf32, #tpu.memory_space<vmem>>, vector<15x128xf32>
    tpu.vector_store %arg5[%c1, %c0_6], %7 {strides = array<i32>} : memref<32x384xf32, #tpu.memory_space<vmem>>, vector<15x128xf32>,
    %9 = vector.extract_strided_slice %5 {offsets = [1, 0], sizes = [15, 128], strides = [1, 1]} : vector<32x128xf32> to vector<15x128xf32>
    %c0_7 = arith.constant 0 : index
    %c256_8 = arith.constant 256 : index
    %10 = vector.load %arg5[%c0_7, %c256_8] : memref<32x384xf32, #tpu.memory_space<vmem>>, vector<15x128xf32>
    tpu.vector_store %arg5[%c0_7, %c256_8], %9 {strides = array<i32>} : memref<32x384xf32, #tpu.memory_space<vmem>>, vector<15x128xf32>,
    %11 = vector.extract_strided_slice %5 {offsets = [16, 0], sizes = [15, 128], strides = [1, 1]} : vector<32x128xf32> to vector<15x128xf32>
    %c17 = arith.constant 17 : index
    %c0_9 = arith.constant 0 : index
    %12 = vector.load %arg5[%c17, %c0_9] : memref<32x384xf32, #tpu.memory_space<vmem>>, vector<15x128xf32>
    tpu.vector_store %arg5[%c17, %c0_9], %11 {strides = array<i32>} : memref<32x384xf32, #tpu.memory_space<vmem>>, vector<15x128xf32>,
    %13 = vector.extract_strided_slice %5 {offsets = [17, 0], sizes = [15, 128], strides = [1, 1]} : vector<32x128xf32> to vector<15x128xf32>
    %c16_10 = arith.constant 16 : index
    %c256_11 = arith.constant 256 : index
    %14 = vector.load %arg5[%c16_10, %c256_11] : memref<32x384xf32, #tpu.memory_space<vmem>>, vector<15x128xf32>
    tpu.vector_store %arg5[%c16_10, %c256_11], %13 {strides = array<i32>} : memref<32x384xf32, #tpu.memory_space<vmem>>, vector<15x128xf32>,
    %c0_12 = arith.constant 0 : index
    %c0_13 = arith.constant 0 : index
    %15 = vector.load %arg5[%c0_12, %c0_13] : memref<32x384xf32, #tpu.memory_space<vmem>>, vector<32x384xf32>
    %16 = arith.truncf %15 : vector<32x384xf32> to vector<32x384xbf16>
    %c0_14 = arith.constant 0 : index
    %c0_15 = arith.constant 0 : index
    %c0_16 = arith.constant 0 : index
    %17 = vector.load %arg2[%c0_14, %c0_15, %c0_16] : memref<11x384x128xbf16, #tpu.memory_space<vmem>>, vector<1x384x128xbf16>
    %18 = vector.shape_cast %17 : vector<1x384x128xbf16> to vector<384x128xbf16>
    %cst_17 = arith.constant dense<0.000000e+00> : vector<32x128xf32>
    %19 = tpu.matmul %16, %18, %cst_17 {dimension_numbers = #tpu.dot_dimension_numbers<[1], [0], [0], [1], [0, 0, 1, 1], [], []>} : vector<32x384xbf16>, vector<384x128xbf16>, vector<32x128xf32> -> vector<32x128xf32>
    %c0_18 = arith.constant 0 : index
    %c0_19 = arith.constant 0 : index
    %c0_20 = arith.constant 0 : index
    %20 = vector.load %arg3[%c0_18, %c0_19, %c0_20] : memref<11x1x128xf32, #tpu.memory_space<vmem>>, vector<1x1x128xf32>
    %21 = vector.shape_cast %20 : vector<1x1x128xf32> to vector<1x128xf32>
    %22 = vector.broadcast %21 : vector<1x128xf32> to vector<32x128xf32>
    %23 = arith.addf %19, %22 : vector<32x128xf32>
    %cst_21 = arith.constant 0.000000e+00 : f32
    %24 = vector.broadcast %cst_21 : f32 to vector<32x128xf32>
    %25 = arith.maximumf %23, %24 : vector<32x128xf32>
    %c0_22 = arith.constant 0 : index
    %c128_23 = arith.constant 128 : index
    %26 = vector.load %arg5[%c0_22, %c128_23] : memref<32x384xf32, #tpu.memory_space<vmem>>, vector<32x128xf32>
    tpu.vector_store %arg5[%c0_22, %c128_23], %25 {strides = array<i32>} : memref<32x384xf32, #tpu.memory_space<vmem>>, vector<32x128xf32>,
    %27 = vector.extract_strided_slice %25 {offsets = [0, 0], sizes = [15, 128], strides = [1, 1]} : vector<32x128xf32> to vector<15x128xf32>
    %c1_24 = arith.constant 1 : index
    %c0_25 = arith.constant 0 : index
    %28 = vector.load %arg5[%c1_24, %c0_25] : memref<32x384xf32, #tpu.memory_space<vmem>>, vector<15x128xf32>
    tpu.vector_store %arg5[%c1_24, %c0_25], %27 {strides = array<i32>} : memref<32x384xf32, #tpu.memory_space<vmem>>, vector<15x128xf32>,
    %29 = vector.extract_strided_slice %25 {offsets = [1, 0], sizes = [15, 128], strides = [1, 1]} : vector<32x128xf32> to vector<15x128xf32>
    %c0_26 = arith.constant 0 : index
    %c256_27 = arith.constant 256 : index
    %30 = vector.load %arg5[%c0_26, %c256_27] : memref<32x384xf32, #tpu.memory_space<vmem>>, vector<15x128xf32>
    tpu.vector_store %arg5[%c0_26, %c256_27], %29 {strides = array<i32>} : memref<32x384xf32, #tpu.memory_space<vmem>>, vector<15x128xf32>,
    %31 = vector.extract_strided_slice %25 {offsets = [16, 0], sizes = [15, 128], strides = [1, 1]} : vector<32x128xf32> to vector<15x128xf32>
    %c17_28 = arith.constant 17 : index
    %c0_29 = arith.constant 0 : index
    %32 = vector.load %arg5[%c17_28, %c0_29] : memref<32x384xf32, #tpu.memory_space<vmem>>, vector<15x128xf32>
    tpu.vector_store %arg5[%c17_28, %c0_29], %31 {strides = array<i32>} : memref<32x384xf32, #tpu.memory_space<vmem>>, vector<15x128xf32>,
    %33 = vector.extract_strided_slice %25 {offsets = [17, 0], sizes = [15, 128], strides = [1, 1]} : vector<32x128xf32> to vector<15x128xf32>
    %c16_30 = arith.constant 16 : index
    %c256_31 = arith.constant 256 : index
    %34 = vector.load %arg5[%c16_30, %c256_31] : memref<32x384xf32, #tpu.memory_space<vmem>>, vector<15x128xf32>
    tpu.vector_store %arg5[%c16_30, %c256_31], %33 {strides = array<i32>} : memref<32x384xf32, #tpu.memory_space<vmem>>, vector<15x128xf32>,
    %c0_32 = arith.constant 0 : index
    %c0_33 = arith.constant 0 : index
    %35 = vector.load %arg5[%c0_32, %c0_33] : memref<32x384xf32, #tpu.memory_space<vmem>>, vector<32x384xf32>
    %36 = arith.truncf %35 : vector<32x384xf32> to vector<32x384xbf16>
    %c1_34 = arith.constant 1 : index
    %c0_35 = arith.constant 0 : index
    %c0_36 = arith.constant 0 : index
    %37 = vector.load %arg2[%c1_34, %c0_35, %c0_36] : memref<11x384x128xbf16, #tpu.memory_space<vmem>>, vector<1x384x128xbf16>
    %38 = vector.shape_cast %37 : vector<1x384x128xbf16> to vector<384x128xbf16>
    %cst_37 = arith.constant dense<0.000000e+00> : vector<32x128xf32>
    %39 = tpu.matmul %36, %38, %cst_37 {dimension_numbers = #tpu.dot_dimension_numbers<[1], [0], [0], [1], [0, 0, 1, 1], [], []>} : vector<32x384xbf16>, vector<384x128xbf16>, vector<32x128xf32> -> vector<32x128xf32>
    %c1_38 = arith.constant 1 : index
    %c0_39 = arith.constant 0 : index
    %c0_40 = arith.constant 0 : index
    %40 = vector.load %arg3[%c1_38, %c0_39, %c0_40] : memref<11x1x128xf32, #tpu.memory_space<vmem>>, vector<1x1x128xf32>
    %41 = vector.shape_cast %40 : vector<1x1x128xf32> to vector<1x128xf32>
    %42 = vector.broadcast %41 : vector<1x128xf32> to vector<32x128xf32>
    %43 = arith.addf %39, %42 : vector<32x128xf32>
    %44 = arith.addf %43, %5 : vector<32x128xf32>
    %c0_41 = arith.constant 0 : index
    %c128_42 = arith.constant 128 : index
    %45 = vector.load %arg5[%c0_41, %c128_42] : memref<32x384xf32, #tpu.memory_space<vmem>>, vector<32x128xf32>
    tpu.vector_store %arg5[%c0_41, %c128_42], %44 {strides = array<i32>} : memref<32x384xf32, #tpu.memory_space<vmem>>, vector<32x128xf32>,
    %46 = vector.extract_strided_slice %44 {offsets = [0, 0], sizes = [15, 128], strides = [1, 1]} : vector<32x128xf32> to vector<15x128xf32>
    %c1_43 = arith.constant 1 : index
    %c0_44 = arith.constant 0 : index
    %47 = vector.load %arg5[%c1_43, %c0_44] : memref<32x384xf32, #tpu.memory_space<vmem>>, vector<15x128xf32>
    tpu.vector_store %arg5[%c1_43, %c0_44], %46 {strides = array<i32>} : memref<32x384xf32, #tpu.memory_space<vmem>>, vector<15x128xf32>,
    %48 = vector.extract_strided_slice %44 {offsets = [1, 0], sizes = [15, 128], strides = [1, 1]} : vector<32x128xf32> to vector<15x128xf32>
    %c0_45 = arith.constant 0 : index
    %c256_46 = arith.constant 256 : index
    %49 = vector.load %arg5[%c0_45, %c256_46] : memref<32x384xf32, #tpu.memory_space<vmem>>, vector<15x128xf32>
    tpu.vector_store %arg5[%c0_45, %c256_46], %48 {strides = array<i32>} : memref<32x384xf32, #tpu.memory_space<vmem>>, vector<15x128xf32>,
    %50 = vector.extract_strided_slice %44 {offsets = [16, 0], sizes = [15, 128], strides = [1, 1]} : vector<32x128xf32> to vector<15x128xf32>
    %c17_47 = arith.constant 17 : index
    %c0_48 = arith.constant 0 : index
    %51 = vector.load %arg5[%c17_47, %c0_48] : memref<32x384xf32, #tpu.memory_space<vmem>>, vector<15x128xf32>
    tpu.vector_store %arg5[%c17_47, %c0_48], %50 {strides = array<i32>} : memref<32x384xf32, #tpu.memory_space<vmem>>, vector<15x128xf32>,
    %52 = vector.extract_strided_slice %44 {offsets = [17, 0], sizes = [15, 128], strides = [1, 1]} : vector<32x128xf32> to vector<15x128xf32>
    %c16_49 = arith.constant 16 : index
    %c256_50 = arith.constant 256 : index
    %53 = vector.load %arg5[%c16_49, %c256_50] : memref<32x384xf32, #tpu.memory_space<vmem>>, vector<15x128xf32>
    tpu.vector_store %arg5[%c16_49, %c256_50], %52 {strides = array<i32>} : memref<32x384xf32, #tpu.memory_space<vmem>>, vector<15x128xf32>,
    %c0_51 = arith.constant 0 : index
    %c0_52 = arith.constant 0 : index
    %54 = vector.load %arg5[%c0_51, %c0_52] : memref<32x384xf32, #tpu.memory_space<vmem>>, vector<32x384xf32>
    %55 = arith.truncf %54 : vector<32x384xf32> to vector<32x384xbf16>
    %c2 = arith.constant 2 : index
    %c0_53 = arith.constant 0 : index
    %c0_54 = arith.constant 0 : index
    %56 = vector.load %arg2[%c2, %c0_53, %c0_54] : memref<11x384x128xbf16, #tpu.memory_space<vmem>>, vector<1x384x128xbf16>
    %57 = vector.shape_cast %56 : vector<1x384x128xbf16> to vector<384x128xbf16>
    %cst_55 = arith.constant dense<0.000000e+00> : vector<32x128xf32>
    %58 = tpu.matmul %55, %57, %cst_55 {dimension_numbers = #tpu.dot_dimension_numbers<[1], [0], [0], [1], [0, 0, 1, 1], [], []>} : vector<32x384xbf16>, vector<384x128xbf16>, vector<32x128xf32> -> vector<32x128xf32>
    %c2_56 = arith.constant 2 : index
    %c0_57 = arith.constant 0 : index
    %c0_58 = arith.constant 0 : index
    %59 = vector.load %arg3[%c2_56, %c0_57, %c0_58] : memref<11x1x128xf32, #tpu.memory_space<vmem>>, vector<1x1x128xf32>
    %60 = vector.shape_cast %59 : vector<1x1x128xf32> to vector<1x128xf32>
    %61 = vector.broadcast %60 : vector<1x128xf32> to vector<32x128xf32>
    %62 = arith.addf %58, %61 : vector<32x128xf32>
    %cst_59 = arith.constant 0.000000e+00 : f32
    %63 = vector.broadcast %cst_59 : f32 to vector<32x128xf32>
    %64 = arith.maximumf %62, %63 : vector<32x128xf32>
    %c0_60 = arith.constant 0 : index
    %c128_61 = arith.constant 128 : index
    %65 = vector.load %arg5[%c0_60, %c128_61] : memref<32x384xf32, #tpu.memory_space<vmem>>, vector<32x128xf32>
    tpu.vector_store %arg5[%c0_60, %c128_61], %64 {strides = array<i32>} : memref<32x384xf32, #tpu.memory_space<vmem>>, vector<32x128xf32>,
    %66 = vector.extract_strided_slice %64 {offsets = [0, 0], sizes = [15, 128], strides = [1, 1]} : vector<32x128xf32> to vector<15x128xf32>
    %c1_62 = arith.constant 1 : index
    %c0_63 = arith.constant 0 : index
    %67 = vector.load %arg5[%c1_62, %c0_63] : memref<32x384xf32, #tpu.memory_space<vmem>>, vector<15x128xf32>
    tpu.vector_store %arg5[%c1_62, %c0_63], %66 {strides = array<i32>} : memref<32x384xf32, #tpu.memory_space<vmem>>, vector<15x128xf32>,
    %68 = vector.extract_strided_slice %64 {offsets = [1, 0], sizes = [15, 128], strides = [1, 1]} : vector<32x128xf32> to vector<15x128xf32>
    %c0_64 = arith.constant 0 : index
    %c256_65 = arith.constant 256 : index
    %69 = vector.load %arg5[%c0_64, %c256_65] : memref<32x384xf32, #tpu.memory_space<vmem>>, vector<15x128xf32>
    tpu.vector_store %arg5[%c0_64, %c256_65], %68 {strides = array<i32>} : memref<32x384xf32, #tpu.memory_space<vmem>>, vector<15x128xf32>,
    %70 = vector.extract_strided_slice %64 {offsets = [16, 0], sizes = [15, 128], strides = [1, 1]} : vector<32x128xf32> to vector<15x128xf32>
    %c17_66 = arith.constant 17 : index
    %c0_67 = arith.constant 0 : index
    %71 = vector.load %arg5[%c17_66, %c0_67] : memref<32x384xf32, #tpu.memory_space<vmem>>, vector<15x128xf32>
    tpu.vector_store %arg5[%c17_66, %c0_67], %70 {strides = array<i32>} : memref<32x384xf32, #tpu.memory_space<vmem>>, vector<15x128xf32>,
    %72 = vector.extract_strided_slice %64 {offsets = [17, 0], sizes = [15, 128], strides = [1, 1]} : vector<32x128xf32> to vector<15x128xf32>
    %c16_68 = arith.constant 16 : index
    %c256_69 = arith.constant 256 : index
    %73 = vector.load %arg5[%c16_68, %c256_69] : memref<32x384xf32, #tpu.memory_space<vmem>>, vector<15x128xf32>
    tpu.vector_store %arg5[%c16_68, %c256_69], %72 {strides = array<i32>} : memref<32x384xf32, #tpu.memory_space<vmem>>, vector<15x128xf32>,
    %c0_70 = arith.constant 0 : index
    %c0_71 = arith.constant 0 : index
    %74 = vector.load %arg5[%c0_70, %c0_71] : memref<32x384xf32, #tpu.memory_space<vmem>>, vector<32x384xf32>
    %75 = arith.truncf %74 : vector<32x384xf32> to vector<32x384xbf16>
    %c3 = arith.constant 3 : index
    %c0_72 = arith.constant 0 : index
    %c0_73 = arith.constant 0 : index
    %76 = vector.load %arg2[%c3, %c0_72, %c0_73] : memref<11x384x128xbf16, #tpu.memory_space<vmem>>, vector<1x384x128xbf16>
    %77 = vector.shape_cast %76 : vector<1x384x128xbf16> to vector<384x128xbf16>
    %cst_74 = arith.constant dense<0.000000e+00> : vector<32x128xf32>
    %78 = tpu.matmul %75, %77, %cst_74 {dimension_numbers = #tpu.dot_dimension_numbers<[1], [0], [0], [1], [0, 0, 1, 1], [], []>} : vector<32x384xbf16>, vector<384x128xbf16>, vector<32x128xf32> -> vector<32x128xf32>
    %c3_75 = arith.constant 3 : index
    %c0_76 = arith.constant 0 : index
    %c0_77 = arith.constant 0 : index
    %79 = vector.load %arg3[%c3_75, %c0_76, %c0_77] : memref<11x1x128xf32, #tpu.memory_space<vmem>>, vector<1x1x128xf32>
    %80 = vector.shape_cast %79 : vector<1x1x128xf32> to vector<1x128xf32>
    %81 = vector.broadcast %80 : vector<1x128xf32> to vector<32x128xf32>
    %82 = arith.addf %78, %81 : vector<32x128xf32>
    %83 = arith.addf %82, %44 : vector<32x128xf32>
    %c0_78 = arith.constant 0 : index
    %c128_79 = arith.constant 128 : index
    %84 = vector.load %arg5[%c0_78, %c128_79] : memref<32x384xf32, #tpu.memory_space<vmem>>, vector<32x128xf32>
    tpu.vector_store %arg5[%c0_78, %c128_79], %83 {strides = array<i32>} : memref<32x384xf32, #tpu.memory_space<vmem>>, vector<32x128xf32>,
    %85 = vector.extract_strided_slice %83 {offsets = [0, 0], sizes = [15, 128], strides = [1, 1]} : vector<32x128xf32> to vector<15x128xf32>
    %c1_80 = arith.constant 1 : index
    %c0_81 = arith.constant 0 : index
    %86 = vector.load %arg5[%c1_80, %c0_81] : memref<32x384xf32, #tpu.memory_space<vmem>>, vector<15x128xf32>
    tpu.vector_store %arg5[%c1_80, %c0_81], %85 {strides = array<i32>} : memref<32x384xf32, #tpu.memory_space<vmem>>, vector<15x128xf32>,
    %87 = vector.extract_strided_slice %83 {offsets = [1, 0], sizes = [15, 128], strides = [1, 1]} : vector<32x128xf32> to vector<15x128xf32>
    %c0_82 = arith.constant 0 : index
    %c256_83 = arith.constant 256 : index
    %88 = vector.load %arg5[%c0_82, %c256_83] : memref<32x384xf32, #tpu.memory_space<vmem>>, vector<15x128xf32>
    tpu.vector_store %arg5[%c0_82, %c256_83], %87 {strides = array<i32>} : memref<32x384xf32, #tpu.memory_space<vmem>>, vector<15x128xf32>,
    %89 = vector.extract_strided_slice %83 {offsets = [16, 0], sizes = [15, 128], strides = [1, 1]} : vector<32x128xf32> to vector<15x128xf32>
    %c17_84 = arith.constant 17 : index
    %c0_85 = arith.constant 0 : index
    %90 = vector.load %arg5[%c17_84, %c0_85] : memref<32x384xf32, #tpu.memory_space<vmem>>, vector<15x128xf32>
    tpu.vector_store %arg5[%c17_84, %c0_85], %89 {strides = array<i32>} : memref<32x384xf32, #tpu.memory_space<vmem>>, vector<15x128xf32>,
    %91 = vector.extract_strided_slice %83 {offsets = [17, 0], sizes = [15, 128], strides = [1, 1]} : vector<32x128xf32> to vector<15x128xf32>
    %c16_86 = arith.constant 16 : index
    %c256_87 = arith.constant 256 : index
    %92 = vector.load %arg5[%c16_86, %c256_87] : memref<32x384xf32, #tpu.memory_space<vmem>>, vector<15x128xf32>
    tpu.vector_store %arg5[%c16_86, %c256_87], %91 {strides = array<i32>} : memref<32x384xf32, #tpu.memory_space<vmem>>, vector<15x128xf32>,
    %c0_88 = arith.constant 0 : index
    %c0_89 = arith.constant 0 : index
    %93 = vector.load %arg5[%c0_88, %c0_89] : memref<32x384xf32, #tpu.memory_space<vmem>>, vector<32x384xf32>
    %94 = arith.truncf %93 : vector<32x384xf32> to vector<32x384xbf16>
    %c4 = arith.constant 4 : index
    %c0_90 = arith.constant 0 : index
    %c0_91 = arith.constant 0 : index
    %95 = vector.load %arg2[%c4, %c0_90, %c0_91] : memref<11x384x128xbf16, #tpu.memory_space<vmem>>, vector<1x384x128xbf16>
    %96 = vector.shape_cast %95 : vector<1x384x128xbf16> to vector<384x128xbf16>
    %cst_92 = arith.constant dense<0.000000e+00> : vector<32x128xf32>
    %97 = tpu.matmul %94, %96, %cst_92 {dimension_numbers = #tpu.dot_dimension_numbers<[1], [0], [0], [1], [0, 0, 1, 1], [], []>} : vector<32x384xbf16>, vector<384x128xbf16>, vector<32x128xf32> -> vector<32x128xf32>
    %c4_93 = arith.constant 4 : index
    %c0_94 = arith.constant 0 : index
    %c0_95 = arith.constant 0 : index
    %98 = vector.load %arg3[%c4_93, %c0_94, %c0_95] : memref<11x1x128xf32, #tpu.memory_space<vmem>>, vector<1x1x128xf32>
    %99 = vector.shape_cast %98 : vector<1x1x128xf32> to vector<1x128xf32>
    %100 = vector.broadcast %99 : vector<1x128xf32> to vector<32x128xf32>
    %101 = arith.addf %97, %100 : vector<32x128xf32>
    %cst_96 = arith.constant 0.000000e+00 : f32
    %102 = vector.broadcast %cst_96 : f32 to vector<32x128xf32>
    %103 = arith.maximumf %101, %102 : vector<32x128xf32>
    %c0_97 = arith.constant 0 : index
    %c128_98 = arith.constant 128 : index
    %104 = vector.load %arg5[%c0_97, %c128_98] : memref<32x384xf32, #tpu.memory_space<vmem>>, vector<32x128xf32>
    tpu.vector_store %arg5[%c0_97, %c128_98], %103 {strides = array<i32>} : memref<32x384xf32, #tpu.memory_space<vmem>>, vector<32x128xf32>,
    %105 = vector.extract_strided_slice %103 {offsets = [0, 0], sizes = [15, 128], strides = [1, 1]} : vector<32x128xf32> to vector<15x128xf32>
    %c1_99 = arith.constant 1 : index
    %c0_100 = arith.constant 0 : index
    %106 = vector.load %arg5[%c1_99, %c0_100] : memref<32x384xf32, #tpu.memory_space<vmem>>, vector<15x128xf32>
    tpu.vector_store %arg5[%c1_99, %c0_100], %105 {strides = array<i32>} : memref<32x384xf32, #tpu.memory_space<vmem>>, vector<15x128xf32>,
    %107 = vector.extract_strided_slice %103 {offsets = [1, 0], sizes = [15, 128], strides = [1, 1]} : vector<32x128xf32> to vector<15x128xf32>
    %c0_101 = arith.constant 0 : index
    %c256_102 = arith.constant 256 : index
    %108 = vector.load %arg5[%c0_101, %c256_102] : memref<32x384xf32, #tpu.memory_space<vmem>>, vector<15x128xf32>
    tpu.vector_store %arg5[%c0_101, %c256_102], %107 {strides = array<i32>} : memref<32x384xf32, #tpu.memory_space<vmem>>, vector<15x128xf32>,
    %109 = vector.extract_strided_slice %103 {offsets = [16, 0], sizes = [15, 128], strides = [1, 1]} : vector<32x128xf32> to vector<15x128xf32>
    %c17_103 = arith.constant 17 : index
    %c0_104 = arith.constant 0 : index
    %110 = vector.load %arg5[%c17_103, %c0_104] : memref<32x384xf32, #tpu.memory_space<vmem>>, vector<15x128xf32>
    tpu.vector_store %arg5[%c17_103, %c0_104], %109 {strides = array<i32>} : memref<32x384xf32, #tpu.memory_space<vmem>>, vector<15x128xf32>,
    %111 = vector.extract_strided_slice %103 {offsets = [17, 0], sizes = [15, 128], strides = [1, 1]} : vector<32x128xf32> to vector<15x128xf32>
    %c16_105 = arith.constant 16 : index
    %c256_106 = arith.constant 256 : index
    %112 = vector.load %arg5[%c16_105, %c256_106] : memref<32x384xf32, #tpu.memory_space<vmem>>, vector<15x128xf32>
    tpu.vector_store %arg5[%c16_105, %c256_106], %111 {strides = array<i32>} : memref<32x384xf32, #tpu.memory_space<vmem>>, vector<15x128xf32>,
    %c0_107 = arith.constant 0 : index
    %c0_108 = arith.constant 0 : index
    %113 = vector.load %arg5[%c0_107, %c0_108] : memref<32x384xf32, #tpu.memory_space<vmem>>, vector<32x384xf32>
    %114 = arith.truncf %113 : vector<32x384xf32> to vector<32x384xbf16>
    %c5 = arith.constant 5 : index
    %c0_109 = arith.constant 0 : index
    %c0_110 = arith.constant 0 : index
    %115 = vector.load %arg2[%c5, %c0_109, %c0_110] : memref<11x384x128xbf16, #tpu.memory_space<vmem>>, vector<1x384x128xbf16>
    %116 = vector.shape_cast %115 : vector<1x384x128xbf16> to vector<384x128xbf16>
    %cst_111 = arith.constant dense<0.000000e+00> : vector<32x128xf32>
    %117 = tpu.matmul %114, %116, %cst_111 {dimension_numbers = #tpu.dot_dimension_numbers<[1], [0], [0], [1], [0, 0, 1, 1], [], []>} : vector<32x384xbf16>, vector<384x128xbf16>, vector<32x128xf32> -> vector<32x128xf32>
    %c5_112 = arith.constant 5 : index
    %c0_113 = arith.constant 0 : index
    %c0_114 = arith.constant 0 : index
    %118 = vector.load %arg3[%c5_112, %c0_113, %c0_114] : memref<11x1x128xf32, #tpu.memory_space<vmem>>, vector<1x1x128xf32>
    %119 = vector.shape_cast %118 : vector<1x1x128xf32> to vector<1x128xf32>
    %120 = vector.broadcast %119 : vector<1x128xf32> to vector<32x128xf32>
    %121 = arith.addf %117, %120 : vector<32x128xf32>
    %122 = arith.addf %121, %83 : vector<32x128xf32>
    %c0_115 = arith.constant 0 : index
    %c128_116 = arith.constant 128 : index
    %123 = vector.load %arg5[%c0_115, %c128_116] : memref<32x384xf32, #tpu.memory_space<vmem>>, vector<32x128xf32>
    tpu.vector_store %arg5[%c0_115, %c128_116], %122 {strides = array<i32>} : memref<32x384xf32, #tpu.memory_space<vmem>>, vector<32x128xf32>,
    %124 = vector.extract_strided_slice %122 {offsets = [0, 0], sizes = [15, 128], strides = [1, 1]} : vector<32x128xf32> to vector<15x128xf32>
    %c1_117 = arith.constant 1 : index
    %c0_118 = arith.constant 0 : index
    %125 = vector.load %arg5[%c1_117, %c0_118] : memref<32x384xf32, #tpu.memory_space<vmem>>, vector<15x128xf32>
    tpu.vector_store %arg5[%c1_117, %c0_118], %124 {strides = array<i32>} : memref<32x384xf32, #tpu.memory_space<vmem>>, vector<15x128xf32>,
    %126 = vector.extract_strided_slice %122 {offsets = [1, 0], sizes = [15, 128], strides = [1, 1]} : vector<32x128xf32> to vector<15x128xf32>
    %c0_119 = arith.constant 0 : index
    %c256_120 = arith.constant 256 : index
    %127 = vector.load %arg5[%c0_119, %c256_120] : memref<32x384xf32, #tpu.memory_space<vmem>>, vector<15x128xf32>
    tpu.vector_store %arg5[%c0_119, %c256_120], %126 {strides = array<i32>} : memref<32x384xf32, #tpu.memory_space<vmem>>, vector<15x128xf32>,
    %128 = vector.extract_strided_slice %122 {offsets = [16, 0], sizes = [15, 128], strides = [1, 1]} : vector<32x128xf32> to vector<15x128xf32>
    %c17_121 = arith.constant 17 : index
    %c0_122 = arith.constant 0 : index
    %129 = vector.load %arg5[%c17_121, %c0_122] : memref<32x384xf32, #tpu.memory_space<vmem>>, vector<15x128xf32>
    tpu.vector_store %arg5[%c17_121, %c0_122], %128 {strides = array<i32>} : memref<32x384xf32, #tpu.memory_space<vmem>>, vector<15x128xf32>,
    %130 = vector.extract_strided_slice %122 {offsets = [17, 0], sizes = [15, 128], strides = [1, 1]} : vector<32x128xf32> to vector<15x128xf32>
    %c16_123 = arith.constant 16 : index
    %c256_124 = arith.constant 256 : index
    %131 = vector.load %arg5[%c16_123, %c256_124] : memref<32x384xf32, #tpu.memory_space<vmem>>, vector<15x128xf32>
    tpu.vector_store %arg5[%c16_123, %c256_124], %130 {strides = array<i32>} : memref<32x384xf32, #tpu.memory_space<vmem>>, vector<15x128xf32>,
    %c0_125 = arith.constant 0 : index
    %c0_126 = arith.constant 0 : index
    %132 = vector.load %arg5[%c0_125, %c0_126] : memref<32x384xf32, #tpu.memory_space<vmem>>, vector<32x384xf32>
    %133 = arith.truncf %132 : vector<32x384xf32> to vector<32x384xbf16>
    %c6 = arith.constant 6 : index
    %c0_127 = arith.constant 0 : index
    %c0_128 = arith.constant 0 : index
    %134 = vector.load %arg2[%c6, %c0_127, %c0_128] : memref<11x384x128xbf16, #tpu.memory_space<vmem>>, vector<1x384x128xbf16>
    %135 = vector.shape_cast %134 : vector<1x384x128xbf16> to vector<384x128xbf16>
    %cst_129 = arith.constant dense<0.000000e+00> : vector<32x128xf32>
    %136 = tpu.matmul %133, %135, %cst_129 {dimension_numbers = #tpu.dot_dimension_numbers<[1], [0], [0], [1], [0, 0, 1, 1], [], []>} : vector<32x384xbf16>, vector<384x128xbf16>, vector<32x128xf32> -> vector<32x128xf32>
    %c6_130 = arith.constant 6 : index
    %c0_131 = arith.constant 0 : index
    %c0_132 = arith.constant 0 : index
    %137 = vector.load %arg3[%c6_130, %c0_131, %c0_132] : memref<11x1x128xf32, #tpu.memory_space<vmem>>, vector<1x1x128xf32>
    %138 = vector.shape_cast %137 : vector<1x1x128xf32> to vector<1x128xf32>
    %139 = vector.broadcast %138 : vector<1x128xf32> to vector<32x128xf32>
    %140 = arith.addf %136, %139 : vector<32x128xf32>
    %cst_133 = arith.constant 0.000000e+00 : f32
    %141 = vector.broadcast %cst_133 : f32 to vector<32x128xf32>
    %142 = arith.maximumf %140, %141 : vector<32x128xf32>
    %c0_134 = arith.constant 0 : index
    %c128_135 = arith.constant 128 : index
    %143 = vector.load %arg5[%c0_134, %c128_135] : memref<32x384xf32, #tpu.memory_space<vmem>>, vector<32x128xf32>
    tpu.vector_store %arg5[%c0_134, %c128_135], %142 {strides = array<i32>} : memref<32x384xf32, #tpu.memory_space<vmem>>, vector<32x128xf32>,
    %144 = vector.extract_strided_slice %142 {offsets = [0, 0], sizes = [15, 128], strides = [1, 1]} : vector<32x128xf32> to vector<15x128xf32>
    %c1_136 = arith.constant 1 : index
    %c0_137 = arith.constant 0 : index
    %145 = vector.load %arg5[%c1_136, %c0_137] : memref<32x384xf32, #tpu.memory_space<vmem>>, vector<15x128xf32>
    tpu.vector_store %arg5[%c1_136, %c0_137], %144 {strides = array<i32>} : memref<32x384xf32, #tpu.memory_space<vmem>>, vector<15x128xf32>,
    %146 = vector.extract_strided_slice %142 {offsets = [1, 0], sizes = [15, 128], strides = [1, 1]} : vector<32x128xf32> to vector<15x128xf32>
    %c0_138 = arith.constant 0 : index
    %c256_139 = arith.constant 256 : index
    %147 = vector.load %arg5[%c0_138, %c256_139] : memref<32x384xf32, #tpu.memory_space<vmem>>, vector<15x128xf32>
    tpu.vector_store %arg5[%c0_138, %c256_139], %146 {strides = array<i32>} : memref<32x384xf32, #tpu.memory_space<vmem>>, vector<15x128xf32>,
    %148 = vector.extract_strided_slice %142 {offsets = [16, 0], sizes = [15, 128], strides = [1, 1]} : vector<32x128xf32> to vector<15x128xf32>
    %c17_140 = arith.constant 17 : index
    %c0_141 = arith.constant 0 : index
    %149 = vector.load %arg5[%c17_140, %c0_141] : memref<32x384xf32, #tpu.memory_space<vmem>>, vector<15x128xf32>
    tpu.vector_store %arg5[%c17_140, %c0_141], %148 {strides = array<i32>} : memref<32x384xf32, #tpu.memory_space<vmem>>, vector<15x128xf32>,
    %150 = vector.extract_strided_slice %142 {offsets = [17, 0], sizes = [15, 128], strides = [1, 1]} : vector<32x128xf32> to vector<15x128xf32>
    %c16_142 = arith.constant 16 : index
    %c256_143 = arith.constant 256 : index
    %151 = vector.load %arg5[%c16_142, %c256_143] : memref<32x384xf32, #tpu.memory_space<vmem>>, vector<15x128xf32>
    tpu.vector_store %arg5[%c16_142, %c256_143], %150 {strides = array<i32>} : memref<32x384xf32, #tpu.memory_space<vmem>>, vector<15x128xf32>,
    %c0_144 = arith.constant 0 : index
    %c0_145 = arith.constant 0 : index
    %152 = vector.load %arg5[%c0_144, %c0_145] : memref<32x384xf32, #tpu.memory_space<vmem>>, vector<32x384xf32>
    %153 = arith.truncf %152 : vector<32x384xf32> to vector<32x384xbf16>
    %c7 = arith.constant 7 : index
    %c0_146 = arith.constant 0 : index
    %c0_147 = arith.constant 0 : index
    %154 = vector.load %arg2[%c7, %c0_146, %c0_147] : memref<11x384x128xbf16, #tpu.memory_space<vmem>>, vector<1x384x128xbf16>
    %155 = vector.shape_cast %154 : vector<1x384x128xbf16> to vector<384x128xbf16>
    %cst_148 = arith.constant dense<0.000000e+00> : vector<32x128xf32>
    %156 = tpu.matmul %153, %155, %cst_148 {dimension_numbers = #tpu.dot_dimension_numbers<[1], [0], [0], [1], [0, 0, 1, 1], [], []>} : vector<32x384xbf16>, vector<384x128xbf16>, vector<32x128xf32> -> vector<32x128xf32>
    %c7_149 = arith.constant 7 : index
    %c0_150 = arith.constant 0 : index
    %c0_151 = arith.constant 0 : index
    %157 = vector.load %arg3[%c7_149, %c0_150, %c0_151] : memref<11x1x128xf32, #tpu.memory_space<vmem>>, vector<1x1x128xf32>
    %158 = vector.shape_cast %157 : vector<1x1x128xf32> to vector<1x128xf32>
    %159 = vector.broadcast %158 : vector<1x128xf32> to vector<32x128xf32>
    %160 = arith.addf %156, %159 : vector<32x128xf32>
    %161 = arith.addf %160, %122 : vector<32x128xf32>
    %c0_152 = arith.constant 0 : index
    %c128_153 = arith.constant 128 : index
    %162 = vector.load %arg5[%c0_152, %c128_153] : memref<32x384xf32, #tpu.memory_space<vmem>>, vector<32x128xf32>
    tpu.vector_store %arg5[%c0_152, %c128_153], %161 {strides = array<i32>} : memref<32x384xf32, #tpu.memory_space<vmem>>, vector<32x128xf32>,
    %163 = vector.extract_strided_slice %161 {offsets = [0, 0], sizes = [15, 128], strides = [1, 1]} : vector<32x128xf32> to vector<15x128xf32>
    %c1_154 = arith.constant 1 : index
    %c0_155 = arith.constant 0 : index
    %164 = vector.load %arg5[%c1_154, %c0_155] : memref<32x384xf32, #tpu.memory_space<vmem>>, vector<15x128xf32>
    tpu.vector_store %arg5[%c1_154, %c0_155], %163 {strides = array<i32>} : memref<32x384xf32, #tpu.memory_space<vmem>>, vector<15x128xf32>,
    %165 = vector.extract_strided_slice %161 {offsets = [1, 0], sizes = [15, 128], strides = [1, 1]} : vector<32x128xf32> to vector<15x128xf32>
    %c0_156 = arith.constant 0 : index
    %c256_157 = arith.constant 256 : index
    %166 = vector.load %arg5[%c0_156, %c256_157] : memref<32x384xf32, #tpu.memory_space<vmem>>, vector<15x128xf32>
    tpu.vector_store %arg5[%c0_156, %c256_157], %165 {strides = array<i32>} : memref<32x384xf32, #tpu.memory_space<vmem>>, vector<15x128xf32>,
    %167 = vector.extract_strided_slice %161 {offsets = [16, 0], sizes = [15, 128], strides = [1, 1]} : vector<32x128xf32> to vector<15x128xf32>
    %c17_158 = arith.constant 17 : index
    %c0_159 = arith.constant 0 : index
    %168 = vector.load %arg5[%c17_158, %c0_159] : memref<32x384xf32, #tpu.memory_space<vmem>>, vector<15x128xf32>
    tpu.vector_store %arg5[%c17_158, %c0_159], %167 {strides = array<i32>} : memref<32x384xf32, #tpu.memory_space<vmem>>, vector<15x128xf32>,
    %169 = vector.extract_strided_slice %161 {offsets = [17, 0], sizes = [15, 128], strides = [1, 1]} : vector<32x128xf32> to vector<15x128xf32>
    %c16_160 = arith.constant 16 : index
    %c256_161 = arith.constant 256 : index
    %170 = vector.load %arg5[%c16_160, %c256_161] : memref<32x384xf32, #tpu.memory_space<vmem>>, vector<15x128xf32>
    tpu.vector_store %arg5[%c16_160, %c256_161], %169 {strides = array<i32>} : memref<32x384xf32, #tpu.memory_space<vmem>>, vector<15x128xf32>,
    %c0_162 = arith.constant 0 : index
    %c0_163 = arith.constant 0 : index
    %171 = vector.load %arg5[%c0_162, %c0_163] : memref<32x384xf32, #tpu.memory_space<vmem>>, vector<32x384xf32>
    %172 = arith.truncf %171 : vector<32x384xf32> to vector<32x384xbf16>
    %c8 = arith.constant 8 : index
    %c0_164 = arith.constant 0 : index
    %c0_165 = arith.constant 0 : index
    %173 = vector.load %arg2[%c8, %c0_164, %c0_165] : memref<11x384x128xbf16, #tpu.memory_space<vmem>>, vector<1x384x128xbf16>
    %174 = vector.shape_cast %173 : vector<1x384x128xbf16> to vector<384x128xbf16>
    %cst_166 = arith.constant dense<0.000000e+00> : vector<32x128xf32>
    %175 = tpu.matmul %172, %174, %cst_166 {dimension_numbers = #tpu.dot_dimension_numbers<[1], [0], [0], [1], [0, 0, 1, 1], [], []>} : vector<32x384xbf16>, vector<384x128xbf16>, vector<32x128xf32> -> vector<32x128xf32>
    %c8_167 = arith.constant 8 : index
    %c0_168 = arith.constant 0 : index
    %c0_169 = arith.constant 0 : index
    %176 = vector.load %arg3[%c8_167, %c0_168, %c0_169] : memref<11x1x128xf32, #tpu.memory_space<vmem>>, vector<1x1x128xf32>
    %177 = vector.shape_cast %176 : vector<1x1x128xf32> to vector<1x128xf32>
    %178 = vector.broadcast %177 : vector<1x128xf32> to vector<32x128xf32>
    %179 = arith.addf %175, %178 : vector<32x128xf32>
    %cst_170 = arith.constant 0.000000e+00 : f32
    %180 = vector.broadcast %cst_170 : f32 to vector<32x128xf32>
    %181 = arith.maximumf %179, %180 : vector<32x128xf32>
    %c0_171 = arith.constant 0 : index
    %c128_172 = arith.constant 128 : index
    %182 = vector.load %arg5[%c0_171, %c128_172] : memref<32x384xf32, #tpu.memory_space<vmem>>, vector<32x128xf32>
    tpu.vector_store %arg5[%c0_171, %c128_172], %181 {strides = array<i32>} : memref<32x384xf32, #tpu.memory_space<vmem>>, vector<32x128xf32>,
    %183 = vector.extract_strided_slice %181 {offsets = [0, 0], sizes = [15, 128], strides = [1, 1]} : vector<32x128xf32> to vector<15x128xf32>
    %c1_173 = arith.constant 1 : index
    %c0_174 = arith.constant 0 : index
    %184 = vector.load %arg5[%c1_173, %c0_174] : memref<32x384xf32, #tpu.memory_space<vmem>>, vector<15x128xf32>
    tpu.vector_store %arg5[%c1_173, %c0_174], %183 {strides = array<i32>} : memref<32x384xf32, #tpu.memory_space<vmem>>, vector<15x128xf32>,
    %185 = vector.extract_strided_slice %181 {offsets = [1, 0], sizes = [15, 128], strides = [1, 1]} : vector<32x128xf32> to vector<15x128xf32>
    %c0_175 = arith.constant 0 : index
    %c256_176 = arith.constant 256 : index
    %186 = vector.load %arg5[%c0_175, %c256_176] : memref<32x384xf32, #tpu.memory_space<vmem>>, vector<15x128xf32>
    tpu.vector_store %arg5[%c0_175, %c256_176], %185 {strides = array<i32>} : memref<32x384xf32, #tpu.memory_space<vmem>>, vector<15x128xf32>,
    %187 = vector.extract_strided_slice %181 {offsets = [16, 0], sizes = [15, 128], strides = [1, 1]} : vector<32x128xf32> to vector<15x128xf32>
    %c17_177 = arith.constant 17 : index
    %c0_178 = arith.constant 0 : index
    %188 = vector.load %arg5[%c17_177, %c0_178] : memref<32x384xf32, #tpu.memory_space<vmem>>, vector<15x128xf32>
    tpu.vector_store %arg5[%c17_177, %c0_178], %187 {strides = array<i32>} : memref<32x384xf32, #tpu.memory_space<vmem>>, vector<15x128xf32>,
    %189 = vector.extract_strided_slice %181 {offsets = [17, 0], sizes = [15, 128], strides = [1, 1]} : vector<32x128xf32> to vector<15x128xf32>
    %c16_179 = arith.constant 16 : index
    %c256_180 = arith.constant 256 : index
    %190 = vector.load %arg5[%c16_179, %c256_180] : memref<32x384xf32, #tpu.memory_space<vmem>>, vector<15x128xf32>
    tpu.vector_store %arg5[%c16_179, %c256_180], %189 {strides = array<i32>} : memref<32x384xf32, #tpu.memory_space<vmem>>, vector<15x128xf32>,
    %c0_181 = arith.constant 0 : index
    %c0_182 = arith.constant 0 : index
    %191 = vector.load %arg5[%c0_181, %c0_182] : memref<32x384xf32, #tpu.memory_space<vmem>>, vector<32x384xf32>
    %192 = arith.truncf %191 : vector<32x384xf32> to vector<32x384xbf16>
    %c9 = arith.constant 9 : index
    %c0_183 = arith.constant 0 : index
    %c0_184 = arith.constant 0 : index
    %193 = vector.load %arg2[%c9, %c0_183, %c0_184] : memref<11x384x128xbf16, #tpu.memory_space<vmem>>, vector<1x384x128xbf16>
    %194 = vector.shape_cast %193 : vector<1x384x128xbf16> to vector<384x128xbf16>
    %cst_185 = arith.constant dense<0.000000e+00> : vector<32x128xf32>
    %195 = tpu.matmul %192, %194, %cst_185 {dimension_numbers = #tpu.dot_dimension_numbers<[1], [0], [0], [1], [0, 0, 1, 1], [], []>} : vector<32x384xbf16>, vector<384x128xbf16>, vector<32x128xf32> -> vector<32x128xf32>
    %c9_186 = arith.constant 9 : index
    %c0_187 = arith.constant 0 : index
    %c0_188 = arith.constant 0 : index
    %196 = vector.load %arg3[%c9_186, %c0_187, %c0_188] : memref<11x1x128xf32, #tpu.memory_space<vmem>>, vector<1x1x128xf32>
    %197 = vector.shape_cast %196 : vector<1x1x128xf32> to vector<1x128xf32>
    %198 = vector.broadcast %197 : vector<1x128xf32> to vector<32x128xf32>
    %199 = arith.addf %195, %198 : vector<32x128xf32>
    %200 = arith.addf %199, %161 : vector<32x128xf32>
    %c0_189 = arith.constant 0 : index
    %c128_190 = arith.constant 128 : index
    %201 = vector.load %arg5[%c0_189, %c128_190] : memref<32x384xf32, #tpu.memory_space<vmem>>, vector<32x128xf32>
    tpu.vector_store %arg5[%c0_189, %c128_190], %200 {strides = array<i32>} : memref<32x384xf32, #tpu.memory_space<vmem>>, vector<32x128xf32>,
    %202 = vector.extract_strided_slice %200 {offsets = [0, 0], sizes = [15, 128], strides = [1, 1]} : vector<32x128xf32> to vector<15x128xf32>
    %c1_191 = arith.constant 1 : index
    %c0_192 = arith.constant 0 : index
    %203 = vector.load %arg5[%c1_191, %c0_192] : memref<32x384xf32, #tpu.memory_space<vmem>>, vector<15x128xf32>
    tpu.vector_store %arg5[%c1_191, %c0_192], %202 {strides = array<i32>} : memref<32x384xf32, #tpu.memory_space<vmem>>, vector<15x128xf32>,
    %204 = vector.extract_strided_slice %200 {offsets = [1, 0], sizes = [15, 128], strides = [1, 1]} : vector<32x128xf32> to vector<15x128xf32>
    %c0_193 = arith.constant 0 : index
    %c256_194 = arith.constant 256 : index
    %205 = vector.load %arg5[%c0_193, %c256_194] : memref<32x384xf32, #tpu.memory_space<vmem>>, vector<15x128xf32>
    tpu.vector_store %arg5[%c0_193, %c256_194], %204 {strides = array<i32>} : memref<32x384xf32, #tpu.memory_space<vmem>>, vector<15x128xf32>,
    %206 = vector.extract_strided_slice %200 {offsets = [16, 0], sizes = [15, 128], strides = [1, 1]} : vector<32x128xf32> to vector<15x128xf32>
    %c17_195 = arith.constant 17 : index
    %c0_196 = arith.constant 0 : index
    %207 = vector.load %arg5[%c17_195, %c0_196] : memref<32x384xf32, #tpu.memory_space<vmem>>, vector<15x128xf32>
    tpu.vector_store %arg5[%c17_195, %c0_196], %206 {strides = array<i32>} : memref<32x384xf32, #tpu.memory_space<vmem>>, vector<15x128xf32>,
    %208 = vector.extract_strided_slice %200 {offsets = [17, 0], sizes = [15, 128], strides = [1, 1]} : vector<32x128xf32> to vector<15x128xf32>
    %c16_197 = arith.constant 16 : index
    %c256_198 = arith.constant 256 : index
    %209 = vector.load %arg5[%c16_197, %c256_198] : memref<32x384xf32, #tpu.memory_space<vmem>>, vector<15x128xf32>
    tpu.vector_store %arg5[%c16_197, %c256_198], %208 {strides = array<i32>} : memref<32x384xf32, #tpu.memory_space<vmem>>, vector<15x128xf32>,
    %c0_199 = arith.constant 0 : index
    %c0_200 = arith.constant 0 : index
    %210 = vector.load %arg5[%c0_199, %c0_200] : memref<32x384xf32, #tpu.memory_space<vmem>>, vector<32x384xf32>
    %211 = arith.truncf %210 : vector<32x384xf32> to vector<32x384xbf16>
    %c10 = arith.constant 10 : index
    %c0_201 = arith.constant 0 : index
    %c0_202 = arith.constant 0 : index
    %212 = vector.load %arg2[%c10, %c0_201, %c0_202] : memref<11x384x128xbf16, #tpu.memory_space<vmem>>, vector<1x384x128xbf16>
    %213 = vector.shape_cast %212 : vector<1x384x128xbf16> to vector<384x128xbf16>
    %cst_203 = arith.constant dense<0.000000e+00> : vector<32x128xf32>
    %214 = tpu.matmul %211, %213, %cst_203 {dimension_numbers = #tpu.dot_dimension_numbers<[1], [0], [0], [1], [0, 0, 1, 1], [], []>} : vector<32x384xbf16>, vector<384x128xbf16>, vector<32x128xf32> -> vector<32x128xf32>
    %c10_204 = arith.constant 10 : index
    %c0_205 = arith.constant 0 : index
    %c0_206 = arith.constant 0 : index
    %215 = vector.load %arg3[%c10_204, %c0_205, %c0_206] : memref<11x1x128xf32, #tpu.memory_space<vmem>>, vector<1x1x128xf32>
    %216 = vector.shape_cast %215 : vector<1x1x128xf32> to vector<1x128xf32>
    %217 = vector.broadcast %216 : vector<1x128xf32> to vector<32x128xf32>
    %218 = arith.addf %214, %217 : vector<32x128xf32>
    %219 = arith.addf %218, %5 : vector<32x128xf32>
    %c0_207 = arith.constant 0 : index
    %c0_208 = arith.constant 0 : index
    %220 = vector.load %arg4[%c0_207, %c0_208] : memref<32x128xf32, #tpu.memory_space<vmem>>, vector<32x128xf32>
    tpu.vector_store %arg4[%c0_207, %c0_208], %219 {strides = array<i32>} : memref<32x128xf32, #tpu.memory_space<vmem>>, vector<32x128xf32>,
    return
  }
  func.func @transform_0(%arg0: i32) -> (i32, i32) {
    %c0_i32 = arith.constant 0 : i32
    %c0_i32_0 = arith.constant 0 : i32
    return %arg0, %c0_i32 : i32, i32
  }
  func.func @transform_1(%arg0: i32) -> (i32, i32, i32) {
    %c0_i32 = arith.constant 0 : i32
    %c0_i32_0 = arith.constant 0 : i32
    %c0_i32_1 = arith.constant 0 : i32
    %c0_i32_2 = arith.constant 0 : i32
    return %c0_i32, %c0_i32_0, %c0_i32_1 : i32, i32, i32
  }
  func.func @transform_2(%arg0: i32) -> (i32, i32, i32) {
    %c0_i32 = arith.constant 0 : i32
    %c0_i32_0 = arith.constant 0 : i32
    %c0_i32_1 = arith.constant 0 : i32
    %c0_i32_2 = arith.constant 0 : i32
    return %c0_i32, %c0_i32_0, %c0_i32_1 : i32, i32, i32
  }
  func.func @transform_3(%arg0: i32) -> (i32, i32) {
    %c0_i32 = arith.constant 0 : i32
    %c0_i32_0 = arith.constant 0 : i32
    return %arg0, %c0_i32 : i32, i32
  }
}

module attributes {stable_mosaic.version = 11 : i64} {
  func.func @_rir_kernel(%arg0: i32, %arg1: memref<32x128xf32, #tpu.memory_space<vmem>>, %arg2: memref<11x384x128xbf16, #tpu.memory_space<vmem>>, %arg3: memref<11x1x128xf32, #tpu.memory_space<vmem>>, %arg4: memref<32x128xf32, #tpu.memory_space<vmem>>, %arg5: memref<32x384xf32, #tpu.memory_space<vmem>>) attributes {dimension_semantics = [#tpu.dimension_semantics<parallel>], iteration_bounds = array<i64: 1>, scalar_prefetch = 0 : i64, scratch_operands = 1 : i64, tpu.core_type = #tpu.core_type<tc>, window_params = [{transform_indices = @transform_0, window_bounds = array<i64: 32, 128>}, {pipeline_mode = #tpu.pipeline_mode<synchronous>, transform_indices = @transform_1, window_bounds = array<i64: 11, 384, 128>}, {pipeline_mode = #tpu.pipeline_mode<synchronous>, transform_indices = @transform_2, window_bounds = array<i64: 11, 1, 128>}, {transform_indices = @transform_3, window_bounds = array<i64: 32, 128>}]} {
    %cst = arith.constant 0.000000e+00 : f32
    %0 = vector.broadcast %cst : f32 to vector<1x128xf32>
    %c0 = arith.constant 0 : index
    %c0_0 = arith.constant 0 : index
    %1 = vector.load %arg5[%c0, %c0_0] : memref<32x384xf32, #tpu.memory_space<vmem>>, vector<1x128xf32>
    tpu.vector_store %arg5[%c0, %c0_0], %0 {strides = array<i32>} : memref<32x384xf32, #tpu.memory_space<vmem>>, vector<1x128xf32>,
    %c15 = arith.constant 15 : index
    %c256 = arith.constant 256 : index
    %2 = vector.load %arg5[%c15, %c256] : memref<32x384xf32, #tpu.memory_space<vmem>>, vector<1x128xf32>
    tpu.vector_store %arg5[%c15, %c256], %0 {strides = array<i32>} : memref<32x384xf32, #tpu.memory_space<vmem>>, vector<1x128xf32>,
    %c16 = arith.constant 16 : index
    %c0_1 = arith.constant 0 : index
    %3 = vector.load %arg5[%c16, %c0_1] : memref<32x384xf32, #tpu.memory_space<vmem>>, vector<1x128xf32>
    tpu.vector_store %arg5[%c16, %c0_1], %0 {strides = array<i32>} : memref<32x384xf32, #tpu.memory_space<vmem>>, vector<1x128xf32>,
    %c31 = arith.constant 31 : index
    %c256_2 = arith.constant 256 : index
    %4 = vector.load %arg5[%c31, %c256_2] : memref<32x384xf32, #tpu.memory_space<vmem>>, vector<1x128xf32>
    tpu.vector_store %arg5[%c31, %c256_2], %0 {strides = array<i32>} : memref<32x384xf32, #tpu.memory_space<vmem>>, vector<1x128xf32>,
    %c0_3 = arith.constant 0 : index
    %c0_4 = arith.constant 0 : index
    %5 = vector.load %arg1[%c0_3, %c0_4] : memref<32x128xf32, #tpu.memory_space<vmem>>, vector<32x128xf32>
    %c0_5 = arith.constant 0 : index
    %c128 = arith.constant 128 : index
    %6 = vector.load %arg5[%c0_5, %c128] : memref<32x384xf32, #tpu.memory_space<vmem>>, vector<32x128xf32>
    tpu.vector_store %arg5[%c0_5, %c128], %5 {strides = array<i32>} : memref<32x384xf32, #tpu.memory_space<vmem>>, vector<32x128xf32>,
    %7 = vector.extract_strided_slice %5 {offsets = [0, 0], sizes = [15, 128], strides = [1, 1]} : vector<32x128xf32> to vector<15x128xf32>
    %c1 = arith.constant 1 : index
    %c0_6 = arith.constant 0 : index
    %8 = vector.load %arg5[%c1, %c0_6] : memref<32x384xf32, #tpu.memory_space<vmem>>, vector<15x128xf32>
    tpu.vector_store %arg5[%c1, %c0_6], %7 {strides = array<i32>} : memref<32x384xf32, #tpu.memory_space<vmem>>, vector<15x128xf32>,
    %9 = vector.extract_strided_slice %5 {offsets = [1, 0], sizes = [15, 128], strides = [1, 1]} : vector<32x128xf32> to vector<15x128xf32>
    %c0_7 = arith.constant 0 : index
    %c256_8 = arith.constant 256 : index
    %10 = vector.load %arg5[%c0_7, %c256_8] : memref<32x384xf32, #tpu.memory_space<vmem>>, vector<15x128xf32>
    tpu.vector_store %arg5[%c0_7, %c256_8], %9 {strides = array<i32>} : memref<32x384xf32, #tpu.memory_space<vmem>>, vector<15x128xf32>,
    %11 = vector.extract_strided_slice %5 {offsets = [16, 0], sizes = [15, 128], strides = [1, 1]} : vector<32x128xf32> to vector<15x128xf32>
    %c17 = arith.constant 17 : index
    %c0_9 = arith.constant 0 : index
    %12 = vector.load %arg5[%c17, %c0_9] : memref<32x384xf32, #tpu.memory_space<vmem>>, vector<15x128xf32>
    tpu.vector_store %arg5[%c17, %c0_9], %11 {strides = array<i32>} : memref<32x384xf32, #tpu.memory_space<vmem>>, vector<15x128xf32>,
    %13 = vector.extract_strided_slice %5 {offsets = [17, 0], sizes = [15, 128], strides = [1, 1]} : vector<32x128xf32> to vector<15x128xf32>
    %c16_10 = arith.constant 16 : index
    %c256_11 = arith.constant 256 : index
    %14 = vector.load %arg5[%c16_10, %c256_11] : memref<32x384xf32, #tpu.memory_space<vmem>>, vector<15x128xf32>
    tpu.vector_store %arg5[%c16_10, %c256_11], %13 {strides = array<i32>} : memref<32x384xf32, #tpu.memory_space<vmem>>, vector<15x128xf32>,
    %c0_12 = arith.constant 0 : index
    %c0_13 = arith.constant 0 : index
    %15 = vector.load %arg5[%c0_12, %c0_13] : memref<32x384xf32, #tpu.memory_space<vmem>>, vector<32x384xf32>
    %16 = arith.truncf %15 : vector<32x384xf32> to vector<32x384xbf16>
    %c0_14 = arith.constant 0 : index
    %c0_15 = arith.constant 0 : index
    %c0_16 = arith.constant 0 : index
    %17 = vector.load %arg2[%c0_14, %c0_15, %c0_16] : memref<11x384x128xbf16, #tpu.memory_space<vmem>>, vector<1x384x128xbf16>
    %18 = vector.shape_cast %17 : vector<1x384x128xbf16> to vector<384x128xbf16>
    %cst_17 = arith.constant dense<0.000000e+00> : vector<32x128xf32>
    %19 = tpu.matmul %16, %18, %cst_17 {dimension_numbers = #tpu.dot_dimension_numbers<[1], [0], [0], [1], [0, 0, 1, 1], [], []>} : vector<32x384xbf16>, vector<384x128xbf16>, vector<32x128xf32> -> vector<32x128xf32>
    %c0_18 = arith.constant 0 : index
    %c0_19 = arith.constant 0 : index
    %c0_20 = arith.constant 0 : index
    %20 = vector.load %arg3[%c0_18, %c0_19, %c0_20] : memref<11x1x128xf32, #tpu.memory_space<vmem>>, vector<1x1x128xf32>
    %21 = vector.shape_cast %20 : vector<1x1x128xf32> to vector<1x128xf32>
    %22 = vector.broadcast %21 : vector<1x128xf32> to vector<32x128xf32>
    %23 = arith.addf %19, %22 : vector<32x128xf32>
    %cst_21 = arith.constant 0.000000e+00 : f32
    %24 = vector.broadcast %cst_21 : f32 to vector<32x128xf32>
    %25 = arith.maximumf %23, %24 : vector<32x128xf32>
    %c0_22 = arith.constant 0 : index
    %c128_23 = arith.constant 128 : index
    %26 = vector.load %arg5[%c0_22, %c128_23] : memref<32x384xf32, #tpu.memory_space<vmem>>, vector<32x128xf32>
    tpu.vector_store %arg5[%c0_22, %c128_23], %25 {strides = array<i32>} : memref<32x384xf32, #tpu.memory_space<vmem>>, vector<32x128xf32>,
    %27 = vector.extract_strided_slice %25 {offsets = [0, 0], sizes = [15, 128], strides = [1, 1]} : vector<32x128xf32> to vector<15x128xf32>
    %c1_24 = arith.constant 1 : index
    %c0_25 = arith.constant 0 : index
    %28 = vector.load %arg5[%c1_24, %c0_25] : memref<32x384xf32, #tpu.memory_space<vmem>>, vector<15x128xf32>
    tpu.vector_store %arg5[%c1_24, %c0_25], %27 {strides = array<i32>} : memref<32x384xf32, #tpu.memory_space<vmem>>, vector<15x128xf32>,
    %29 = vector.extract_strided_slice %25 {offsets = [1, 0], sizes = [15, 128], strides = [1, 1]} : vector<32x128xf32> to vector<15x128xf32>
    %c0_26 = arith.constant 0 : index
    %c256_27 = arith.constant 256 : index
    %30 = vector.load %arg5[%c0_26, %c256_27] : memref<32x384xf32, #tpu.memory_space<vmem>>, vector<15x128xf32>
    tpu.vector_store %arg5[%c0_26, %c256_27], %29 {strides = array<i32>} : memref<32x384xf32, #tpu.memory_space<vmem>>, vector<15x128xf32>,
    %31 = vector.extract_strided_slice %25 {offsets = [16, 0], sizes = [15, 128], strides = [1, 1]} : vector<32x128xf32> to vector<15x128xf32>
    %c17_28 = arith.constant 17 : index
    %c0_29 = arith.constant 0 : index
    %32 = vector.load %arg5[%c17_28, %c0_29] : memref<32x384xf32, #tpu.memory_space<vmem>>, vector<15x128xf32>
    tpu.vector_store %arg5[%c17_28, %c0_29], %31 {strides = array<i32>} : memref<32x384xf32, #tpu.memory_space<vmem>>, vector<15x128xf32>,
    %33 = vector.extract_strided_slice %25 {offsets = [17, 0], sizes = [15, 128], strides = [1, 1]} : vector<32x128xf32> to vector<15x128xf32>
    %c16_30 = arith.constant 16 : index
    %c256_31 = arith.constant 256 : index
    %34 = vector.load %arg5[%c16_30, %c256_31] : memref<32x384xf32, #tpu.memory_space<vmem>>, vector<15x128xf32>
    tpu.vector_store %arg5[%c16_30, %c256_31], %33 {strides = array<i32>} : memref<32x384xf32, #tpu.memory_space<vmem>>, vector<15x128xf32>,
    %c0_32 = arith.constant 0 : index
    %c0_33 = arith.constant 0 : index
    %35 = vector.load %arg5[%c0_32, %c0_33] : memref<32x384xf32, #tpu.memory_space<vmem>>, vector<32x384xf32>
    %36 = arith.truncf %35 : vector<32x384xf32> to vector<32x384xbf16>
    %c1_34 = arith.constant 1 : index
    %c0_35 = arith.constant 0 : index
    %c0_36 = arith.constant 0 : index
    %37 = vector.load %arg2[%c1_34, %c0_35, %c0_36] : memref<11x384x128xbf16, #tpu.memory_space<vmem>>, vector<1x384x128xbf16>
    %38 = vector.shape_cast %37 : vector<1x384x128xbf16> to vector<384x128xbf16>
    %cst_37 = arith.constant dense<0.000000e+00> : vector<32x128xf32>
    %39 = tpu.matmul %36, %38, %cst_37 {dimension_numbers = #tpu.dot_dimension_numbers<[1], [0], [0], [1], [0, 0, 1, 1], [], []>} : vector<32x384xbf16>, vector<384x128xbf16>, vector<32x128xf32> -> vector<32x128xf32>
    %c1_38 = arith.constant 1 : index
    %c0_39 = arith.constant 0 : index
    %c0_40 = arith.constant 0 : index
    %40 = vector.load %arg3[%c1_38, %c0_39, %c0_40] : memref<11x1x128xf32, #tpu.memory_space<vmem>>, vector<1x1x128xf32>
    %41 = vector.shape_cast %40 : vector<1x1x128xf32> to vector<1x128xf32>
    %42 = vector.broadcast %41 : vector<1x128xf32> to vector<32x128xf32>
    %43 = arith.addf %39, %42 : vector<32x128xf32>
    %44 = arith.addf %43, %5 : vector<32x128xf32>
    %c0_41 = arith.constant 0 : index
    %c128_42 = arith.constant 128 : index
    %45 = vector.load %arg5[%c0_41, %c128_42] : memref<32x384xf32, #tpu.memory_space<vmem>>, vector<32x128xf32>
    tpu.vector_store %arg5[%c0_41, %c128_42], %44 {strides = array<i32>} : memref<32x384xf32, #tpu.memory_space<vmem>>, vector<32x128xf32>,
    %46 = vector.extract_strided_slice %44 {offsets = [0, 0], sizes = [15, 128], strides = [1, 1]} : vector<32x128xf32> to vector<15x128xf32>
    %c1_43 = arith.constant 1 : index
    %c0_44 = arith.constant 0 : index
    %47 = vector.load %arg5[%c1_43, %c0_44] : memref<32x384xf32, #tpu.memory_space<vmem>>, vector<15x128xf32>
    tpu.vector_store %arg5[%c1_43, %c0_44], %46 {strides = array<i32>} : memref<32x384xf32, #tpu.memory_space<vmem>>, vector<15x128xf32>,
    %48 = vector.extract_strided_slice %44 {offsets = [1, 0], sizes = [15, 128], strides = [1, 1]} : vector<32x128xf32> to vector<15x128xf32>
    %c0_45 = arith.constant 0 : index
    %c256_46 = arith.constant 256 : index
    %49 = vector.load %arg5[%c0_45, %c256_46] : memref<32x384xf32, #tpu.memory_space<vmem>>, vector<15x128xf32>
    tpu.vector_store %arg5[%c0_45, %c256_46], %48 {strides = array<i32>} : memref<32x384xf32, #tpu.memory_space<vmem>>, vector<15x128xf32>,
    %50 = vector.extract_strided_slice %44 {offsets = [16, 0], sizes = [15, 128], strides = [1, 1]} : vector<32x128xf32> to vector<15x128xf32>
    %c17_47 = arith.constant 17 : index
    %c0_48 = arith.constant 0 : index
    %51 = vector.load %arg5[%c17_47, %c0_48] : memref<32x384xf32, #tpu.memory_space<vmem>>, vector<15x128xf32>
    tpu.vector_store %arg5[%c17_47, %c0_48], %50 {strides = array<i32>} : memref<32x384xf32, #tpu.memory_space<vmem>>, vector<15x128xf32>,
    %52 = vector.extract_strided_slice %44 {offsets = [17, 0], sizes = [15, 128], strides = [1, 1]} : vector<32x128xf32> to vector<15x128xf32>
    %c16_49 = arith.constant 16 : index
    %c256_50 = arith.constant 256 : index
    %53 = vector.load %arg5[%c16_49, %c256_50] : memref<32x384xf32, #tpu.memory_space<vmem>>, vector<15x128xf32>
    tpu.vector_store %arg5[%c16_49, %c256_50], %52 {strides = array<i32>} : memref<32x384xf32, #tpu.memory_space<vmem>>, vector<15x128xf32>,
    %c0_51 = arith.constant 0 : index
    %c0_52 = arith.constant 0 : index
    %54 = vector.load %arg5[%c0_51, %c0_52] : memref<32x384xf32, #tpu.memory_space<vmem>>, vector<32x384xf32>
    %55 = arith.truncf %54 : vector<32x384xf32> to vector<32x384xbf16>
    %c2 = arith.constant 2 : index
    %c0_53 = arith.constant 0 : index
    %c0_54 = arith.constant 0 : index
    %56 = vector.load %arg2[%c2, %c0_53, %c0_54] : memref<11x384x128xbf16, #tpu.memory_space<vmem>>, vector<1x384x128xbf16>
    %57 = vector.shape_cast %56 : vector<1x384x128xbf16> to vector<384x128xbf16>
    %cst_55 = arith.constant dense<0.000000e+00> : vector<32x128xf32>
    %58 = tpu.matmul %55, %57, %cst_55 {dimension_numbers = #tpu.dot_dimension_numbers<[1], [0], [0], [1], [0, 0, 1, 1], [], []>} : vector<32x384xbf16>, vector<384x128xbf16>, vector<32x128xf32> -> vector<32x128xf32>
    %c2_56 = arith.constant 2 : index
    %c0_57 = arith.constant 0 : index
    %c0_58 = arith.constant 0 : index
    %59 = vector.load %arg3[%c2_56, %c0_57, %c0_58] : memref<11x1x128xf32, #tpu.memory_space<vmem>>, vector<1x1x128xf32>
    %60 = vector.shape_cast %59 : vector<1x1x128xf32> to vector<1x128xf32>
    %61 = vector.broadcast %60 : vector<1x128xf32> to vector<32x128xf32>
    %62 = arith.addf %58, %61 : vector<32x128xf32>
    %cst_59 = arith.constant 0.000000e+00 : f32
    %63 = vector.broadcast %cst_59 : f32 to vector<32x128xf32>
    %64 = arith.maximumf %62, %63 : vector<32x128xf32>
    %c0_60 = arith.constant 0 : index
    %c128_61 = arith.constant 128 : index
    %65 = vector.load %arg5[%c0_60, %c128_61] : memref<32x384xf32, #tpu.memory_space<vmem>>, vector<32x128xf32>
    tpu.vector_store %arg5[%c0_60, %c128_61], %64 {strides = array<i32>} : memref<32x384xf32, #tpu.memory_space<vmem>>, vector<32x128xf32>,
    %66 = vector.extract_strided_slice %64 {offsets = [0, 0], sizes = [15, 128], strides = [1, 1]} : vector<32x128xf32> to vector<15x128xf32>
    %c1_62 = arith.constant 1 : index
    %c0_63 = arith.constant 0 : index
    %67 = vector.load %arg5[%c1_62, %c0_63] : memref<32x384xf32, #tpu.memory_space<vmem>>, vector<15x128xf32>
    tpu.vector_store %arg5[%c1_62, %c0_63], %66 {strides = array<i32>} : memref<32x384xf32, #tpu.memory_space<vmem>>, vector<15x128xf32>,
    %68 = vector.extract_strided_slice %64 {offsets = [1, 0], sizes = [15, 128], strides = [1, 1]} : vector<32x128xf32> to vector<15x128xf32>
    %c0_64 = arith.constant 0 : index
    %c256_65 = arith.constant 256 : index
    %69 = vector.load %arg5[%c0_64, %c256_65] : memref<32x384xf32, #tpu.memory_space<vmem>>, vector<15x128xf32>
    tpu.vector_store %arg5[%c0_64, %c256_65], %68 {strides = array<i32>} : memref<32x384xf32, #tpu.memory_space<vmem>>, vector<15x128xf32>,
    %70 = vector.extract_strided_slice %64 {offsets = [16, 0], sizes = [15, 128], strides = [1, 1]} : vector<32x128xf32> to vector<15x128xf32>
    %c17_66 = arith.constant 17 : index
    %c0_67 = arith.constant 0 : index
    %71 = vector.load %arg5[%c17_66, %c0_67] : memref<32x384xf32, #tpu.memory_space<vmem>>, vector<15x128xf32>
    tpu.vector_store %arg5[%c17_66, %c0_67], %70 {strides = array<i32>} : memref<32x384xf32, #tpu.memory_space<vmem>>, vector<15x128xf32>,
    %72 = vector.extract_strided_slice %64 {offsets = [17, 0], sizes = [15, 128], strides = [1, 1]} : vector<32x128xf32> to vector<15x128xf32>
    %c16_68 = arith.constant 16 : index
    %c256_69 = arith.constant 256 : index
    %73 = vector.load %arg5[%c16_68, %c256_69] : memref<32x384xf32, #tpu.memory_space<vmem>>, vector<15x128xf32>
    tpu.vector_store %arg5[%c16_68, %c256_69], %72 {strides = array<i32>} : memref<32x384xf32, #tpu.memory_space<vmem>>, vector<15x128xf32>,
    %c0_70 = arith.constant 0 : index
    %c0_71 = arith.constant 0 : index
    %74 = vector.load %arg5[%c0_70, %c0_71] : memref<32x384xf32, #tpu.memory_space<vmem>>, vector<32x384xf32>
    %75 = arith.truncf %74 : vector<32x384xf32> to vector<32x384xbf16>
    %c3 = arith.constant 3 : index
    %c0_72 = arith.constant 0 : index
    %c0_73 = arith.constant 0 : index
    %76 = vector.load %arg2[%c3, %c0_72, %c0_73] : memref<11x384x128xbf16, #tpu.memory_space<vmem>>, vector<1x384x128xbf16>
    %77 = vector.shape_cast %76 : vector<1x384x128xbf16> to vector<384x128xbf16>
    %cst_74 = arith.constant dense<0.000000e+00> : vector<32x128xf32>
    %78 = tpu.matmul %75, %77, %cst_74 {dimension_numbers = #tpu.dot_dimension_numbers<[1], [0], [0], [1], [0, 0, 1, 1], [], []>} : vector<32x384xbf16>, vector<384x128xbf16>, vector<32x128xf32> -> vector<32x128xf32>
    %c3_75 = arith.constant 3 : index
    %c0_76 = arith.constant 0 : index
    %c0_77 = arith.constant 0 : index
    %79 = vector.load %arg3[%c3_75, %c0_76, %c0_77] : memref<11x1x128xf32, #tpu.memory_space<vmem>>, vector<1x1x128xf32>
    %80 = vector.shape_cast %79 : vector<1x1x128xf32> to vector<1x128xf32>
    %81 = vector.broadcast %80 : vector<1x128xf32> to vector<32x128xf32>
    %82 = arith.addf %78, %81 : vector<32x128xf32>
    %83 = arith.addf %82, %44 : vector<32x128xf32>
    %c0_78 = arith.constant 0 : index
    %c128_79 = arith.constant 128 : index
    %84 = vector.load %arg5[%c0_78, %c128_79] : memref<32x384xf32, #tpu.memory_space<vmem>>, vector<32x128xf32>
    tpu.vector_store %arg5[%c0_78, %c128_79], %83 {strides = array<i32>} : memref<32x384xf32, #tpu.memory_space<vmem>>, vector<32x128xf32>,
    %85 = vector.extract_strided_slice %83 {offsets = [0, 0], sizes = [15, 128], strides = [1, 1]} : vector<32x128xf32> to vector<15x128xf32>
    %c1_80 = arith.constant 1 : index
    %c0_81 = arith.constant 0 : index
    %86 = vector.load %arg5[%c1_80, %c0_81] : memref<32x384xf32, #tpu.memory_space<vmem>>, vector<15x128xf32>
    tpu.vector_store %arg5[%c1_80, %c0_81], %85 {strides = array<i32>} : memref<32x384xf32, #tpu.memory_space<vmem>>, vector<15x128xf32>,
    %87 = vector.extract_strided_slice %83 {offsets = [1, 0], sizes = [15, 128], strides = [1, 1]} : vector<32x128xf32> to vector<15x128xf32>
    %c0_82 = arith.constant 0 : index
    %c256_83 = arith.constant 256 : index
    %88 = vector.load %arg5[%c0_82, %c256_83] : memref<32x384xf32, #tpu.memory_space<vmem>>, vector<15x128xf32>
    tpu.vector_store %arg5[%c0_82, %c256_83], %87 {strides = array<i32>} : memref<32x384xf32, #tpu.memory_space<vmem>>, vector<15x128xf32>,
    %89 = vector.extract_strided_slice %83 {offsets = [16, 0], sizes = [15, 128], strides = [1, 1]} : vector<32x128xf32> to vector<15x128xf32>
    %c17_84 = arith.constant 17 : index
    %c0_85 = arith.constant 0 : index
    %90 = vector.load %arg5[%c17_84, %c0_85] : memref<32x384xf32, #tpu.memory_space<vmem>>, vector<15x128xf32>
    tpu.vector_store %arg5[%c17_84, %c0_85], %89 {strides = array<i32>} : memref<32x384xf32, #tpu.memory_space<vmem>>, vector<15x128xf32>,
    %91 = vector.extract_strided_slice %83 {offsets = [17, 0], sizes = [15, 128], strides = [1, 1]} : vector<32x128xf32> to vector<15x128xf32>
    %c16_86 = arith.constant 16 : index
    %c256_87 = arith.constant 256 : index
    %92 = vector.load %arg5[%c16_86, %c256_87] : memref<32x384xf32, #tpu.memory_space<vmem>>, vector<15x128xf32>
    tpu.vector_store %arg5[%c16_86, %c256_87], %91 {strides = array<i32>} : memref<32x384xf32, #tpu.memory_space<vmem>>, vector<15x128xf32>,
    %c0_88 = arith.constant 0 : index
    %c0_89 = arith.constant 0 : index
    %93 = vector.load %arg5[%c0_88, %c0_89] : memref<32x384xf32, #tpu.memory_space<vmem>>, vector<32x384xf32>
    %94 = arith.truncf %93 : vector<32x384xf32> to vector<32x384xbf16>
    %c4 = arith.constant 4 : index
    %c0_90 = arith.constant 0 : index
    %c0_91 = arith.constant 0 : index
    %95 = vector.load %arg2[%c4, %c0_90, %c0_91] : memref<11x384x128xbf16, #tpu.memory_space<vmem>>, vector<1x384x128xbf16>
    %96 = vector.shape_cast %95 : vector<1x384x128xbf16> to vector<384x128xbf16>
    %cst_92 = arith.constant dense<0.000000e+00> : vector<32x128xf32>
    %97 = tpu.matmul %94, %96, %cst_92 {dimension_numbers = #tpu.dot_dimension_numbers<[1], [0], [0], [1], [0, 0, 1, 1], [], []>} : vector<32x384xbf16>, vector<384x128xbf16>, vector<32x128xf32> -> vector<32x128xf32>
    %c4_93 = arith.constant 4 : index
    %c0_94 = arith.constant 0 : index
    %c0_95 = arith.constant 0 : index
    %98 = vector.load %arg3[%c4_93, %c0_94, %c0_95] : memref<11x1x128xf32, #tpu.memory_space<vmem>>, vector<1x1x128xf32>
    %99 = vector.shape_cast %98 : vector<1x1x128xf32> to vector<1x128xf32>
    %100 = vector.broadcast %99 : vector<1x128xf32> to vector<32x128xf32>
    %101 = arith.addf %97, %100 : vector<32x128xf32>
    %cst_96 = arith.constant 0.000000e+00 : f32
    %102 = vector.broadcast %cst_96 : f32 to vector<32x128xf32>
    %103 = arith.maximumf %101, %102 : vector<32x128xf32>
    %c0_97 = arith.constant 0 : index
    %c128_98 = arith.constant 128 : index
    %104 = vector.load %arg5[%c0_97, %c128_98] : memref<32x384xf32, #tpu.memory_space<vmem>>, vector<32x128xf32>
    tpu.vector_store %arg5[%c0_97, %c128_98], %103 {strides = array<i32>} : memref<32x384xf32, #tpu.memory_space<vmem>>, vector<32x128xf32>,
    %105 = vector.extract_strided_slice %103 {offsets = [0, 0], sizes = [15, 128], strides = [1, 1]} : vector<32x128xf32> to vector<15x128xf32>
    %c1_99 = arith.constant 1 : index
    %c0_100 = arith.constant 0 : index
    %106 = vector.load %arg5[%c1_99, %c0_100] : memref<32x384xf32, #tpu.memory_space<vmem>>, vector<15x128xf32>
    tpu.vector_store %arg5[%c1_99, %c0_100], %105 {strides = array<i32>} : memref<32x384xf32, #tpu.memory_space<vmem>>, vector<15x128xf32>,
    %107 = vector.extract_strided_slice %103 {offsets = [1, 0], sizes = [15, 128], strides = [1, 1]} : vector<32x128xf32> to vector<15x128xf32>
    %c0_101 = arith.constant 0 : index
    %c256_102 = arith.constant 256 : index
    %108 = vector.load %arg5[%c0_101, %c256_102] : memref<32x384xf32, #tpu.memory_space<vmem>>, vector<15x128xf32>
    tpu.vector_store %arg5[%c0_101, %c256_102], %107 {strides = array<i32>} : memref<32x384xf32, #tpu.memory_space<vmem>>, vector<15x128xf32>,
    %109 = vector.extract_strided_slice %103 {offsets = [16, 0], sizes = [15, 128], strides = [1, 1]} : vector<32x128xf32> to vector<15x128xf32>
    %c17_103 = arith.constant 17 : index
    %c0_104 = arith.constant 0 : index
    %110 = vector.load %arg5[%c17_103, %c0_104] : memref<32x384xf32, #tpu.memory_space<vmem>>, vector<15x128xf32>
    tpu.vector_store %arg5[%c17_103, %c0_104], %109 {strides = array<i32>} : memref<32x384xf32, #tpu.memory_space<vmem>>, vector<15x128xf32>,
    %111 = vector.extract_strided_slice %103 {offsets = [17, 0], sizes = [15, 128], strides = [1, 1]} : vector<32x128xf32> to vector<15x128xf32>
    %c16_105 = arith.constant 16 : index
    %c256_106 = arith.constant 256 : index
    %112 = vector.load %arg5[%c16_105, %c256_106] : memref<32x384xf32, #tpu.memory_space<vmem>>, vector<15x128xf32>
    tpu.vector_store %arg5[%c16_105, %c256_106], %111 {strides = array<i32>} : memref<32x384xf32, #tpu.memory_space<vmem>>, vector<15x128xf32>,
    %c0_107 = arith.constant 0 : index
    %c0_108 = arith.constant 0 : index
    %113 = vector.load %arg5[%c0_107, %c0_108] : memref<32x384xf32, #tpu.memory_space<vmem>>, vector<32x384xf32>
    %114 = arith.truncf %113 : vector<32x384xf32> to vector<32x384xbf16>
    %c5 = arith.constant 5 : index
    %c0_109 = arith.constant 0 : index
    %c0_110 = arith.constant 0 : index
    %115 = vector.load %arg2[%c5, %c0_109, %c0_110] : memref<11x384x128xbf16, #tpu.memory_space<vmem>>, vector<1x384x128xbf16>
    %116 = vector.shape_cast %115 : vector<1x384x128xbf16> to vector<384x128xbf16>
    %cst_111 = arith.constant dense<0.000000e+00> : vector<32x128xf32>
    %117 = tpu.matmul %114, %116, %cst_111 {dimension_numbers = #tpu.dot_dimension_numbers<[1], [0], [0], [1], [0, 0, 1, 1], [], []>} : vector<32x384xbf16>, vector<384x128xbf16>, vector<32x128xf32> -> vector<32x128xf32>
    %c5_112 = arith.constant 5 : index
    %c0_113 = arith.constant 0 : index
    %c0_114 = arith.constant 0 : index
    %118 = vector.load %arg3[%c5_112, %c0_113, %c0_114] : memref<11x1x128xf32, #tpu.memory_space<vmem>>, vector<1x1x128xf32>
    %119 = vector.shape_cast %118 : vector<1x1x128xf32> to vector<1x128xf32>
    %120 = vector.broadcast %119 : vector<1x128xf32> to vector<32x128xf32>
    %121 = arith.addf %117, %120 : vector<32x128xf32>
    %122 = arith.addf %121, %83 : vector<32x128xf32>
    %c0_115 = arith.constant 0 : index
    %c128_116 = arith.constant 128 : index
    %123 = vector.load %arg5[%c0_115, %c128_116] : memref<32x384xf32, #tpu.memory_space<vmem>>, vector<32x128xf32>
    tpu.vector_store %arg5[%c0_115, %c128_116], %122 {strides = array<i32>} : memref<32x384xf32, #tpu.memory_space<vmem>>, vector<32x128xf32>,
    %124 = vector.extract_strided_slice %122 {offsets = [0, 0], sizes = [15, 128], strides = [1, 1]} : vector<32x128xf32> to vector<15x128xf32>
    %c1_117 = arith.constant 1 : index
    %c0_118 = arith.constant 0 : index
    %125 = vector.load %arg5[%c1_117, %c0_118] : memref<32x384xf32, #tpu.memory_space<vmem>>, vector<15x128xf32>
    tpu.vector_store %arg5[%c1_117, %c0_118], %124 {strides = array<i32>} : memref<32x384xf32, #tpu.memory_space<vmem>>, vector<15x128xf32>,
    %126 = vector.extract_strided_slice %122 {offsets = [1, 0], sizes = [15, 128], strides = [1, 1]} : vector<32x128xf32> to vector<15x128xf32>
    %c0_119 = arith.constant 0 : index
    %c256_120 = arith.constant 256 : index
    %127 = vector.load %arg5[%c0_119, %c256_120] : memref<32x384xf32, #tpu.memory_space<vmem>>, vector<15x128xf32>
    tpu.vector_store %arg5[%c0_119, %c256_120], %126 {strides = array<i32>} : memref<32x384xf32, #tpu.memory_space<vmem>>, vector<15x128xf32>,
    %128 = vector.extract_strided_slice %122 {offsets = [16, 0], sizes = [15, 128], strides = [1, 1]} : vector<32x128xf32> to vector<15x128xf32>
    %c17_121 = arith.constant 17 : index
    %c0_122 = arith.constant 0 : index
    %129 = vector.load %arg5[%c17_121, %c0_122] : memref<32x384xf32, #tpu.memory_space<vmem>>, vector<15x128xf32>
    tpu.vector_store %arg5[%c17_121, %c0_122], %128 {strides = array<i32>} : memref<32x384xf32, #tpu.memory_space<vmem>>, vector<15x128xf32>,
    %130 = vector.extract_strided_slice %122 {offsets = [17, 0], sizes = [15, 128], strides = [1, 1]} : vector<32x128xf32> to vector<15x128xf32>
    %c16_123 = arith.constant 16 : index
    %c256_124 = arith.constant 256 : index
    %131 = vector.load %arg5[%c16_123, %c256_124] : memref<32x384xf32, #tpu.memory_space<vmem>>, vector<15x128xf32>
    tpu.vector_store %arg5[%c16_123, %c256_124], %130 {strides = array<i32>} : memref<32x384xf32, #tpu.memory_space<vmem>>, vector<15x128xf32>,
    %c0_125 = arith.constant 0 : index
    %c0_126 = arith.constant 0 : index
    %132 = vector.load %arg5[%c0_125, %c0_126] : memref<32x384xf32, #tpu.memory_space<vmem>>, vector<32x384xf32>
    %133 = arith.truncf %132 : vector<32x384xf32> to vector<32x384xbf16>
    %c6 = arith.constant 6 : index
    %c0_127 = arith.constant 0 : index
    %c0_128 = arith.constant 0 : index
    %134 = vector.load %arg2[%c6, %c0_127, %c0_128] : memref<11x384x128xbf16, #tpu.memory_space<vmem>>, vector<1x384x128xbf16>
    %135 = vector.shape_cast %134 : vector<1x384x128xbf16> to vector<384x128xbf16>
    %cst_129 = arith.constant dense<0.000000e+00> : vector<32x128xf32>
    %136 = tpu.matmul %133, %135, %cst_129 {dimension_numbers = #tpu.dot_dimension_numbers<[1], [0], [0], [1], [0, 0, 1, 1], [], []>} : vector<32x384xbf16>, vector<384x128xbf16>, vector<32x128xf32> -> vector<32x128xf32>
    %c6_130 = arith.constant 6 : index
    %c0_131 = arith.constant 0 : index
    %c0_132 = arith.constant 0 : index
    %137 = vector.load %arg3[%c6_130, %c0_131, %c0_132] : memref<11x1x128xf32, #tpu.memory_space<vmem>>, vector<1x1x128xf32>
    %138 = vector.shape_cast %137 : vector<1x1x128xf32> to vector<1x128xf32>
    %139 = vector.broadcast %138 : vector<1x128xf32> to vector<32x128xf32>
    %140 = arith.addf %136, %139 : vector<32x128xf32>
    %cst_133 = arith.constant 0.000000e+00 : f32
    %141 = vector.broadcast %cst_133 : f32 to vector<32x128xf32>
    %142 = arith.maximumf %140, %141 : vector<32x128xf32>
    %c0_134 = arith.constant 0 : index
    %c128_135 = arith.constant 128 : index
    %143 = vector.load %arg5[%c0_134, %c128_135] : memref<32x384xf32, #tpu.memory_space<vmem>>, vector<32x128xf32>
    tpu.vector_store %arg5[%c0_134, %c128_135], %142 {strides = array<i32>} : memref<32x384xf32, #tpu.memory_space<vmem>>, vector<32x128xf32>,
    %144 = vector.extract_strided_slice %142 {offsets = [0, 0], sizes = [15, 128], strides = [1, 1]} : vector<32x128xf32> to vector<15x128xf32>
    %c1_136 = arith.constant 1 : index
    %c0_137 = arith.constant 0 : index
    %145 = vector.load %arg5[%c1_136, %c0_137] : memref<32x384xf32, #tpu.memory_space<vmem>>, vector<15x128xf32>
    tpu.vector_store %arg5[%c1_136, %c0_137], %144 {strides = array<i32>} : memref<32x384xf32, #tpu.memory_space<vmem>>, vector<15x128xf32>,
    %146 = vector.extract_strided_slice %142 {offsets = [1, 0], sizes = [15, 128], strides = [1, 1]} : vector<32x128xf32> to vector<15x128xf32>
    %c0_138 = arith.constant 0 : index
    %c256_139 = arith.constant 256 : index
    %147 = vector.load %arg5[%c0_138, %c256_139] : memref<32x384xf32, #tpu.memory_space<vmem>>, vector<15x128xf32>
    tpu.vector_store %arg5[%c0_138, %c256_139], %146 {strides = array<i32>} : memref<32x384xf32, #tpu.memory_space<vmem>>, vector<15x128xf32>,
    %148 = vector.extract_strided_slice %142 {offsets = [16, 0], sizes = [15, 128], strides = [1, 1]} : vector<32x128xf32> to vector<15x128xf32>
    %c17_140 = arith.constant 17 : index
    %c0_141 = arith.constant 0 : index
    %149 = vector.load %arg5[%c17_140, %c0_141] : memref<32x384xf32, #tpu.memory_space<vmem>>, vector<15x128xf32>
    tpu.vector_store %arg5[%c17_140, %c0_141], %148 {strides = array<i32>} : memref<32x384xf32, #tpu.memory_space<vmem>>, vector<15x128xf32>,
    %150 = vector.extract_strided_slice %142 {offsets = [17, 0], sizes = [15, 128], strides = [1, 1]} : vector<32x128xf32> to vector<15x128xf32>
    %c16_142 = arith.constant 16 : index
    %c256_143 = arith.constant 256 : index
    %151 = vector.load %arg5[%c16_142, %c256_143] : memref<32x384xf32, #tpu.memory_space<vmem>>, vector<15x128xf32>
    tpu.vector_store %arg5[%c16_142, %c256_143], %150 {strides = array<i32>} : memref<32x384xf32, #tpu.memory_space<vmem>>, vector<15x128xf32>,
    %c0_144 = arith.constant 0 : index
    %c0_145 = arith.constant 0 : index
    %152 = vector.load %arg5[%c0_144, %c0_145] : memref<32x384xf32, #tpu.memory_space<vmem>>, vector<32x384xf32>
    %153 = arith.truncf %152 : vector<32x384xf32> to vector<32x384xbf16>
    %c7 = arith.constant 7 : index
    %c0_146 = arith.constant 0 : index
    %c0_147 = arith.constant 0 : index
    %154 = vector.load %arg2[%c7, %c0_146, %c0_147] : memref<11x384x128xbf16, #tpu.memory_space<vmem>>, vector<1x384x128xbf16>
    %155 = vector.shape_cast %154 : vector<1x384x128xbf16> to vector<384x128xbf16>
    %cst_148 = arith.constant dense<0.000000e+00> : vector<32x128xf32>
    %156 = tpu.matmul %153, %155, %cst_148 {dimension_numbers = #tpu.dot_dimension_numbers<[1], [0], [0], [1], [0, 0, 1, 1], [], []>} : vector<32x384xbf16>, vector<384x128xbf16>, vector<32x128xf32> -> vector<32x128xf32>
    %c7_149 = arith.constant 7 : index
    %c0_150 = arith.constant 0 : index
    %c0_151 = arith.constant 0 : index
    %157 = vector.load %arg3[%c7_149, %c0_150, %c0_151] : memref<11x1x128xf32, #tpu.memory_space<vmem>>, vector<1x1x128xf32>
    %158 = vector.shape_cast %157 : vector<1x1x128xf32> to vector<1x128xf32>
    %159 = vector.broadcast %158 : vector<1x128xf32> to vector<32x128xf32>
    %160 = arith.addf %156, %159 : vector<32x128xf32>
    %161 = arith.addf %160, %122 : vector<32x128xf32>
    %c0_152 = arith.constant 0 : index
    %c128_153 = arith.constant 128 : index
    %162 = vector.load %arg5[%c0_152, %c128_153] : memref<32x384xf32, #tpu.memory_space<vmem>>, vector<32x128xf32>
    tpu.vector_store %arg5[%c0_152, %c128_153], %161 {strides = array<i32>} : memref<32x384xf32, #tpu.memory_space<vmem>>, vector<32x128xf32>,
    %163 = vector.extract_strided_slice %161 {offsets = [0, 0], sizes = [15, 128], strides = [1, 1]} : vector<32x128xf32> to vector<15x128xf32>
    %c1_154 = arith.constant 1 : index
    %c0_155 = arith.constant 0 : index
    %164 = vector.load %arg5[%c1_154, %c0_155] : memref<32x384xf32, #tpu.memory_space<vmem>>, vector<15x128xf32>
    tpu.vector_store %arg5[%c1_154, %c0_155], %163 {strides = array<i32>} : memref<32x384xf32, #tpu.memory_space<vmem>>, vector<15x128xf32>,
    %165 = vector.extract_strided_slice %161 {offsets = [1, 0], sizes = [15, 128], strides = [1, 1]} : vector<32x128xf32> to vector<15x128xf32>
    %c0_156 = arith.constant 0 : index
    %c256_157 = arith.constant 256 : index
    %166 = vector.load %arg5[%c0_156, %c256_157] : memref<32x384xf32, #tpu.memory_space<vmem>>, vector<15x128xf32>
    tpu.vector_store %arg5[%c0_156, %c256_157], %165 {strides = array<i32>} : memref<32x384xf32, #tpu.memory_space<vmem>>, vector<15x128xf32>,
    %167 = vector.extract_strided_slice %161 {offsets = [16, 0], sizes = [15, 128], strides = [1, 1]} : vector<32x128xf32> to vector<15x128xf32>
    %c17_158 = arith.constant 17 : index
    %c0_159 = arith.constant 0 : index
    %168 = vector.load %arg5[%c17_158, %c0_159] : memref<32x384xf32, #tpu.memory_space<vmem>>, vector<15x128xf32>
    tpu.vector_store %arg5[%c17_158, %c0_159], %167 {strides = array<i32>} : memref<32x384xf32, #tpu.memory_space<vmem>>, vector<15x128xf32>,
    %169 = vector.extract_strided_slice %161 {offsets = [17, 0], sizes = [15, 128], strides = [1, 1]} : vector<32x128xf32> to vector<15x128xf32>
    %c16_160 = arith.constant 16 : index
    %c256_161 = arith.constant 256 : index
    %170 = vector.load %arg5[%c16_160, %c256_161] : memref<32x384xf32, #tpu.memory_space<vmem>>, vector<15x128xf32>
    tpu.vector_store %arg5[%c16_160, %c256_161], %169 {strides = array<i32>} : memref<32x384xf32, #tpu.memory_space<vmem>>, vector<15x128xf32>,
    %c0_162 = arith.constant 0 : index
    %c0_163 = arith.constant 0 : index
    %171 = vector.load %arg5[%c0_162, %c0_163] : memref<32x384xf32, #tpu.memory_space<vmem>>, vector<32x384xf32>
    %172 = arith.truncf %171 : vector<32x384xf32> to vector<32x384xbf16>
    %c8 = arith.constant 8 : index
    %c0_164 = arith.constant 0 : index
    %c0_165 = arith.constant 0 : index
    %173 = vector.load %arg2[%c8, %c0_164, %c0_165] : memref<11x384x128xbf16, #tpu.memory_space<vmem>>, vector<1x384x128xbf16>
    %174 = vector.shape_cast %173 : vector<1x384x128xbf16> to vector<384x128xbf16>
    %cst_166 = arith.constant dense<0.000000e+00> : vector<32x128xf32>
    %175 = tpu.matmul %172, %174, %cst_166 {dimension_numbers = #tpu.dot_dimension_numbers<[1], [0], [0], [1], [0, 0, 1, 1], [], []>} : vector<32x384xbf16>, vector<384x128xbf16>, vector<32x128xf32> -> vector<32x128xf32>
    %c8_167 = arith.constant 8 : index
    %c0_168 = arith.constant 0 : index
    %c0_169 = arith.constant 0 : index
    %176 = vector.load %arg3[%c8_167, %c0_168, %c0_169] : memref<11x1x128xf32, #tpu.memory_space<vmem>>, vector<1x1x128xf32>
    %177 = vector.shape_cast %176 : vector<1x1x128xf32> to vector<1x128xf32>
    %178 = vector.broadcast %177 : vector<1x128xf32> to vector<32x128xf32>
    %179 = arith.addf %175, %178 : vector<32x128xf32>
    %cst_170 = arith.constant 0.000000e+00 : f32
    %180 = vector.broadcast %cst_170 : f32 to vector<32x128xf32>
    %181 = arith.maximumf %179, %180 : vector<32x128xf32>
    %c0_171 = arith.constant 0 : index
    %c128_172 = arith.constant 128 : index
    %182 = vector.load %arg5[%c0_171, %c128_172] : memref<32x384xf32, #tpu.memory_space<vmem>>, vector<32x128xf32>
    tpu.vector_store %arg5[%c0_171, %c128_172], %181 {strides = array<i32>} : memref<32x384xf32, #tpu.memory_space<vmem>>, vector<32x128xf32>,
    %183 = vector.extract_strided_slice %181 {offsets = [0, 0], sizes = [15, 128], strides = [1, 1]} : vector<32x128xf32> to vector<15x128xf32>
    %c1_173 = arith.constant 1 : index
    %c0_174 = arith.constant 0 : index
    %184 = vector.load %arg5[%c1_173, %c0_174] : memref<32x384xf32, #tpu.memory_space<vmem>>, vector<15x128xf32>
    tpu.vector_store %arg5[%c1_173, %c0_174], %183 {strides = array<i32>} : memref<32x384xf32, #tpu.memory_space<vmem>>, vector<15x128xf32>,
    %185 = vector.extract_strided_slice %181 {offsets = [1, 0], sizes = [15, 128], strides = [1, 1]} : vector<32x128xf32> to vector<15x128xf32>
    %c0_175 = arith.constant 0 : index
    %c256_176 = arith.constant 256 : index
    %186 = vector.load %arg5[%c0_175, %c256_176] : memref<32x384xf32, #tpu.memory_space<vmem>>, vector<15x128xf32>
    tpu.vector_store %arg5[%c0_175, %c256_176], %185 {strides = array<i32>} : memref<32x384xf32, #tpu.memory_space<vmem>>, vector<15x128xf32>,
    %187 = vector.extract_strided_slice %181 {offsets = [16, 0], sizes = [15, 128], strides = [1, 1]} : vector<32x128xf32> to vector<15x128xf32>
    %c17_177 = arith.constant 17 : index
    %c0_178 = arith.constant 0 : index
    %188 = vector.load %arg5[%c17_177, %c0_178] : memref<32x384xf32, #tpu.memory_space<vmem>>, vector<15x128xf32>
    tpu.vector_store %arg5[%c17_177, %c0_178], %187 {strides = array<i32>} : memref<32x384xf32, #tpu.memory_space<vmem>>, vector<15x128xf32>,
    %189 = vector.extract_strided_slice %181 {offsets = [17, 0], sizes = [15, 128], strides = [1, 1]} : vector<32x128xf32> to vector<15x128xf32>
    %c16_179 = arith.constant 16 : index
    %c256_180 = arith.constant 256 : index
    %190 = vector.load %arg5[%c16_179, %c256_180] : memref<32x384xf32, #tpu.memory_space<vmem>>, vector<15x128xf32>
    tpu.vector_store %arg5[%c16_179, %c256_180], %189 {strides = array<i32>} : memref<32x384xf32, #tpu.memory_space<vmem>>, vector<15x128xf32>,
    %c0_181 = arith.constant 0 : index
    %c0_182 = arith.constant 0 : index
    %191 = vector.load %arg5[%c0_181, %c0_182] : memref<32x384xf32, #tpu.memory_space<vmem>>, vector<32x384xf32>
    %192 = arith.truncf %191 : vector<32x384xf32> to vector<32x384xbf16>
    %c9 = arith.constant 9 : index
    %c0_183 = arith.constant 0 : index
    %c0_184 = arith.constant 0 : index
    %193 = vector.load %arg2[%c9, %c0_183, %c0_184] : memref<11x384x128xbf16, #tpu.memory_space<vmem>>, vector<1x384x128xbf16>
    %194 = vector.shape_cast %193 : vector<1x384x128xbf16> to vector<384x128xbf16>
    %cst_185 = arith.constant dense<0.000000e+00> : vector<32x128xf32>
    %195 = tpu.matmul %192, %194, %cst_185 {dimension_numbers = #tpu.dot_dimension_numbers<[1], [0], [0], [1], [0, 0, 1, 1], [], []>} : vector<32x384xbf16>, vector<384x128xbf16>, vector<32x128xf32> -> vector<32x128xf32>
    %c9_186 = arith.constant 9 : index
    %c0_187 = arith.constant 0 : index
    %c0_188 = arith.constant 0 : index
    %196 = vector.load %arg3[%c9_186, %c0_187, %c0_188] : memref<11x1x128xf32, #tpu.memory_space<vmem>>, vector<1x1x128xf32>
    %197 = vector.shape_cast %196 : vector<1x1x128xf32> to vector<1x128xf32>
    %198 = vector.broadcast %197 : vector<1x128xf32> to vector<32x128xf32>
    %199 = arith.addf %195, %198 : vector<32x128xf32>
    %200 = arith.addf %199, %161 : vector<32x128xf32>
    %c0_189 = arith.constant 0 : index
    %c128_190 = arith.constant 128 : index
    %201 = vector.load %arg5[%c0_189, %c128_190] : memref<32x384xf32, #tpu.memory_space<vmem>>, vector<32x128xf32>
    tpu.vector_store %arg5[%c0_189, %c128_190], %200 {strides = array<i32>} : memref<32x384xf32, #tpu.memory_space<vmem>>, vector<32x128xf32>,
    %202 = vector.extract_strided_slice %200 {offsets = [0, 0], sizes = [15, 128], strides = [1, 1]} : vector<32x128xf32> to vector<15x128xf32>
    %c1_191 = arith.constant 1 : index
    %c0_192 = arith.constant 0 : index
    %203 = vector.load %arg5[%c1_191, %c0_192] : memref<32x384xf32, #tpu.memory_space<vmem>>, vector<15x128xf32>
    tpu.vector_store %arg5[%c1_191, %c0_192], %202 {strides = array<i32>} : memref<32x384xf32, #tpu.memory_space<vmem>>, vector<15x128xf32>,
    %204 = vector.extract_strided_slice %200 {offsets = [1, 0], sizes = [15, 128], strides = [1, 1]} : vector<32x128xf32> to vector<15x128xf32>
    %c0_193 = arith.constant 0 : index
    %c256_194 = arith.constant 256 : index
    %205 = vector.load %arg5[%c0_193, %c256_194] : memref<32x384xf32, #tpu.memory_space<vmem>>, vector<15x128xf32>
    tpu.vector_store %arg5[%c0_193, %c256_194], %204 {strides = array<i32>} : memref<32x384xf32, #tpu.memory_space<vmem>>, vector<15x128xf32>,
    %206 = vector.extract_strided_slice %200 {offsets = [16, 0], sizes = [15, 128], strides = [1, 1]} : vector<32x128xf32> to vector<15x128xf32>
    %c17_195 = arith.constant 17 : index
    %c0_196 = arith.constant 0 : index
    %207 = vector.load %arg5[%c17_195, %c0_196] : memref<32x384xf32, #tpu.memory_space<vmem>>, vector<15x128xf32>
    tpu.vector_store %arg5[%c17_195, %c0_196], %206 {strides = array<i32>} : memref<32x384xf32, #tpu.memory_space<vmem>>, vector<15x128xf32>,
    %208 = vector.extract_strided_slice %200 {offsets = [17, 0], sizes = [15, 128], strides = [1, 1]} : vector<32x128xf32> to vector<15x128xf32>
    %c16_197 = arith.constant 16 : index
    %c256_198 = arith.constant 256 : index
    %209 = vector.load %arg5[%c16_197, %c256_198] : memref<32x384xf32, #tpu.memory_space<vmem>>, vector<15x128xf32>
    tpu.vector_store %arg5[%c16_197, %c256_198], %208 {strides = array<i32>} : memref<32x384xf32, #tpu.memory_space<vmem>>, vector<15x128xf32>,
    %c0_199 = arith.constant 0 : index
    %c0_200 = arith.constant 0 : index
    %210 = vector.load %arg5[%c0_199, %c0_200] : memref<32x384xf32, #tpu.memory_space<vmem>>, vector<32x384xf32>
    %211 = arith.truncf %210 : vector<32x384xf32> to vector<32x384xbf16>
    %c10 = arith.constant 10 : index
    %c0_201 = arith.constant 0 : index
    %c0_202 = arith.constant 0 : index
    %212 = vector.load %arg2[%c10, %c0_201, %c0_202] : memref<11x384x128xbf16, #tpu.memory_space<vmem>>, vector<1x384x128xbf16>
    %213 = vector.shape_cast %212 : vector<1x384x128xbf16> to vector<384x128xbf16>
    %cst_203 = arith.constant dense<0.000000e+00> : vector<32x128xf32>
    %214 = tpu.matmul %211, %213, %cst_203 {dimension_numbers = #tpu.dot_dimension_numbers<[1], [0], [0], [1], [0, 0, 1, 1], [], []>} : vector<32x384xbf16>, vector<384x128xbf16>, vector<32x128xf32> -> vector<32x128xf32>
    %c10_204 = arith.constant 10 : index
    %c0_205 = arith.constant 0 : index
    %c0_206 = arith.constant 0 : index
    %215 = vector.load %arg3[%c10_204, %c0_205, %c0_206] : memref<11x1x128xf32, #tpu.memory_space<vmem>>, vector<1x1x128xf32>
    %216 = vector.shape_cast %215 : vector<1x1x128xf32> to vector<1x128xf32>
    %217 = vector.broadcast %216 : vector<1x128xf32> to vector<32x128xf32>
    %218 = arith.addf %214, %217 : vector<32x128xf32>
    %219 = arith.addf %218, %5 : vector<32x128xf32>
    %c0_207 = arith.constant 0 : index
    %c0_208 = arith.constant 0 : index
    %220 = vector.load %arg4[%c0_207, %c0_208] : memref<32x128xf32, #tpu.memory_space<vmem>>, vector<32x128xf32>
    tpu.vector_store %arg4[%c0_207, %c0_208], %219 {strides = array<i32>} : memref<32x128xf32, #tpu.memory_space<vmem>>, vector<32x128xf32>,
    return
  }
  func.func @transform_0(%arg0: i32) -> (i32, i32) {
    %c0_i32 = arith.constant 0 : i32
    %c0_i32_0 = arith.constant 0 : i32
    return %arg0, %c0_i32 : i32, i32
  }
  func.func @transform_1(%arg0: i32) -> (i32, i32, i32) {
    %c0_i32 = arith.constant 0 : i32
    %c0_i32_0 = arith.constant 0 : i32
    %c0_i32_1 = arith.constant 0 : i32
    %c0_i32_2 = arith.constant 0 : i32
    return %c0_i32, %c0_i32_0, %c0_i32_1 : i32, i32, i32
  }
  func.func @transform_2(%arg0: i32) -> (i32, i32, i32) {
    %c0_i32 = arith.constant 0 : i32
    %c0_i32_0 = arith.constant 0 : i32
    %c0_i32_1 = arith.constant 0 : i32
    %c0_i32_2 = arith.constant 0 : i32
    return %c0_i32, %c0_i32_0, %c0_i32_1 : i32, i32, i32
  }
  func.func @transform_3(%arg0: i32) -> (i32, i32) {
    %c0_i32 = arith.constant 0 : i32
    %c0_i32_0 = arith.constant 0 : i32
    return %arg0, %c0_i32 : i32, i32
  }
}

</mosaic_0001>

<llo_original>
// kernel: rir_block.1
$region0: #{rir_block.1}
  #allocation0 [shape = 'u32[]', space=smem, size = 0x4, offset = 0x4, fixed_abs, tag = 'smem constant byte address 0x4 - core index']
  #allocation1 [shape = 'u32[144,128]{1,0:T(1,128)}', space=vmem, size = 0x12000, scoped, tag = 'internal scratch']
  #allocation2 [shape = 'f32[32,384]{1,0:T(8,128)}', space=vmem, size = 0xc000, scoped, tag = 'scratch operand']
  %s0 = inlined_call_operand.vmem [shape: f32[32,128], index: 0, kind: input, shape index: {}]
  %s1 = inlined_call_operand.hbm [shape: bf16[11,384,128], index: 1, kind: input, shape index: {}]
  %s2 = inlined_call_operand.hbm [shape: f32[11,1,128], index: 2, kind: input, shape index: {}]
  %s3 = inlined_call_operand.vmem [shape: f32[32,128], index: 3, kind: output, shape index: {}]
  %s4 = sld [smem:[#allocation0]]
  $region30: #{rir_block.1} parent=0
    _
  %s6 = ssub.s32 1, %s4
  %s7 = scalar_select 0, %s6, %s4
  $region1: #{rir_block.1} parent=0
    #allocation3 [shape = 'u8[1081344]{0}', space=vmem, size = 0x108000, scoped, tag = 'input window, operand 1, single buffered']
    #allocation4 [shape = 's32[1]{0}', space=sflag, size = 0x4, scoped, tag = 'scoped memory for rir_block.1']
    #allocation5 [shape = 'u8[5632]{0}', space=vmem, size = 0x1800, scoped, tag = 'input window, operand 2, single buffered']
    #allocation6 [shape = 's32[1]{0}', space=sflag, size = 0x4, scoped, tag = 'scoped memory for rir_block.1']
    %8 = vsyncpa [#allocation4], 0
    %9 = vsyncpa [#allocation6], 0
    // Predicated region
    $region2: #{rir_block.1} parent=1 // pred_check
      _
    $region3: #{rir_block.1} parent=1 // pred_check_branch
      %11 = sbr.rel (0) target = $region5
    $region4: #{rir_block.1} parent=1 // pred_region
      _
    $region5: #{rir_block.1} parent=1 // pred_fallthru
      _
    // Predicated region
    $region6: #{rir_block.1} parent=1 // pred_check
      _
    $region7: #{rir_block.1} parent=1 // pred_check_branch
      %13 = sbr.rel (0) target = $region9
    $region8: #{rir_block.1} parent=1 // pred_region
      %s15 = ssub.s32 33792, 33792
      %16 = vsyncadd [#allocation4], %s15
      %s17 = sshll.u32 [#allocation3], 4
      %s18 = int_to_ptr.vmem [resolvable:$true] %s17
      %23 = dma.hbm_to_vmem [thread:$0]  %s1, 33792, %s18, [#allocation4], 64, 64, 4
    $region9: #{rir_block.1} parent=1 // pred_fallthru
      _
    // Predicated region
    $region10: #{rir_block.1} parent=1 // pred_check
      _
    $region11: #{rir_block.1} parent=1 // pred_check_branch
      %25 = sbr.rel (0) target = $region13
    $region12: #{rir_block.1} parent=1 // pred_region
      %s27 = ssub.s32 176, 176
      %28 = vsyncadd [#allocation6], %s27
      %s29 = sshll.u32 [#allocation5], 4
      %s30 = int_to_ptr.vmem [resolvable:$true] %s29
      %35 = dma.hbm_to_vmem [thread:$0]  %s2, 176, %s30, [#allocation6], 16, 16, 1
    $region13: #{rir_block.1} parent=1 // pred_fallthru
      _
    // Predicated region
    $region14: #{rir_block.1} parent=1 // pred_check
      _
    $region15: #{rir_block.1} parent=1 // pred_check_branch
      %37 = sbr.rel (0) target = $region17
    $region16: #{rir_block.1} parent=1 // pred_region
      %38 = dma.done [#allocation4], 33792
    $region17: #{rir_block.1} parent=1 // pred_fallthru
      _
    // Predicated region
    $region18: #{rir_block.1} parent=1 // pred_check
      _
    $region19: #{rir_block.1} parent=1 // pred_check_branch
      %40 = sbr.rel (0) target = $region21
    $region20: #{rir_block.1} parent=1 // pred_region
      %41 = dma.done [#allocation6], 176
    $region21: #{rir_block.1} parent=1 // pred_fallthru
      _
    %43 = vst [vmem:[#allocation2] sm:$0x1] 0.0
    %44 = vst [vmem:[#allocation2 + $0x2f] sm:$0x1] 0.0
    %45 = vst [vmem:[#allocation2 + $0x30] sm:$0x1] 0.0
    %46 = vst [vmem:[#allocation2 + $0x5f] sm:$0x1] 0.0
    %v47 = vld [vmem:[%s0] sm:$0xff]
    %v48 = vld [vmem:[%s0 + $0x8] sm:$0xff]
    %v49 = vld [vmem:[%s0 + $0x10] sm:$0xff]
    %v50 = vld [vmem:[%s0 + $0x18] sm:$0xff]
    %51 = vst [vmem:[#allocation2 + $0x8] sm:$0xff] %v47
    %52 = vst [vmem:[#allocation2 + $0x20] sm:$0xff] %v48
    %53 = vst [vmem:[#allocation2 + $0x38] sm:$0xff] %v49
    %54 = vst [vmem:[#allocation2 + $0x50] sm:$0xff] %v50
    %vm57 = vcmask 1040384
    %v58 = vrot.slane %v47, 7
    %v59 = vrot.slane %v48, 7
    %v60 = vsel %vm57, %v58, %v59
    %63 = vst [vmem:[#allocation2] sm:$0xfe] %v58
    %64 = vst [vmem:[#allocation2 + $0x18] sm:$0xff] %v60
    %vm65 = vcmask 1046528
    %v66 = vrot.slane %v47, 1
    %v67 = vrot.slane %v48, 1
    %v68 = vsel %vm65, %v66, %v67
    %71 = vst [vmem:[#allocation2 + $0x10] sm:$0xff] %v68
    %72 = vst [vmem:[#allocation2 + $0x28] sm:$0x7f] %v67
    %v75 = vrot.slane %v49, 7
    %v76 = vrot.slane %v50, 7
    %v77 = vsel %vm57, %v75, %v76
    %80 = vst [vmem:[#allocation2 + $0x30] sm:$0xfe] %v75
    %81 = vst [vmem:[#allocation2 + $0x48] sm:$0xff] %v77
    %v82 = vrot.slane %v49, 1
    %v83 = vrot.slane %v50, 1
    %v84 = vsel %vm65, %v82, %v83
    %87 = vst [vmem:[#allocation2 + $0x40] sm:$0xff] %v84
    %88 = vst [vmem:[#allocation2 + $0x58] sm:$0x7f] %v83
    %v89 = vld [vmem:[#allocation2] sm:$0xff]
    %v90 = vld [vmem:[#allocation2 + $0x8] sm:$0xff]
    %v91 = vld [vmem:[#allocation2 + $0x10] sm:$0xff]
    %v92 = vld [vmem:[#allocation2 + $0x18] sm:$0xff]
    %v93 = vld [vmem:[#allocation2 + $0x20] sm:$0xff]
    %v94 = vld [vmem:[#allocation2 + $0x28] sm:$0xff]
    %v95 = vld [vmem:[#allocation2 + $0x30] sm:$0xff]
    %v96 = vld [vmem:[#allocation2 + $0x38] sm:$0xff]
    %v97 = vld [vmem:[#allocation2 + $0x40] sm:$0xff]
    %v98 = vld [vmem:[#allocation2 + $0x48] sm:$0xff]
    %v99 = vld [vmem:[#allocation2 + $0x50] sm:$0xff]
    %v100 = vld [vmem:[#allocation2 + $0x58] sm:$0xff]
    %v101 = vpack.c.bf16 %v92, %v89
    %v102 = vpack.c.bf16 %v93, %v90
    %v103 = vpack.c.bf16 %v94, %v91
    %v104 = vpack.c.bf16 %v98, %v95
    %v105 = vpack.c.bf16 %v99, %v96
    %v106 = vpack.c.bf16 %v100, %v97
    %v107 = vld [vmem:[#allocation3] sm:$0xf]
    %v108 = vld [vmem:[#allocation3 + $0x4] sm:$0xf]
    %v109 = vld [vmem:[#allocation3 + $0x8] sm:$0xf]
    %v110 = vld [vmem:[#allocation3 + $0xc] sm:$0xf]
    %v111 = vld [vmem:[#allocation3 + $0x10] sm:$0xf]
    %v112 = vld [vmem:[#allocation3 + $0x14] sm:$0xf]
    %v113 = vld [vmem:[#allocation3 + $0x18] sm:$0xf]
    %v114 = vld [vmem:[#allocation3 + $0x1c] sm:$0xf]
    %v115 = vld [vmem:[#allocation3 + $0x20] sm:$0xf]
    %v116 = vld [vmem:[#allocation3 + $0x24] sm:$0xf]
    %v117 = vld [vmem:[#allocation3 + $0x28] sm:$0xf]
    %v118 = vld [vmem:[#allocation3 + $0x2c] sm:$0xf]
    %v119 = vld [vmem:[#allocation3 + $0x30] sm:$0xf]
    %v120 = vld [vmem:[#allocation3 + $0x34] sm:$0xf]
    %v121 = vld [vmem:[#allocation3 + $0x38] sm:$0xf]
    %v122 = vld [vmem:[#allocation3 + $0x3c] sm:$0xf]
    %v123 = vld [vmem:[#allocation3 + $0x40] sm:$0xf]
    %v124 = vld [vmem:[#allocation3 + $0x44] sm:$0xf]
    %v125 = vld [vmem:[#allocation3 + $0x48] sm:$0xf]
    %v126 = vld [vmem:[#allocation3 + $0x4c] sm:$0xf]
    %v127 = vld [vmem:[#allocation3 + $0x50] sm:$0xf]
    %v128 = vld [vmem:[#allocation3 + $0x54] sm:$0xf]
    %v129 = vld [vmem:[#allocation3 + $0x58] sm:$0xf]
    %v130 = vld [vmem:[#allocation3 + $0x5c] sm:$0xf]
    %v131 = vld [vmem:[#allocation3 + $0x60] sm:$0xf]
    %v132 = vld [vmem:[#allocation3 + $0x64] sm:$0xf]
    %v133 = vld [vmem:[#allocation3 + $0x68] sm:$0xf]
    %v134 = vld [vmem:[#allocation3 + $0x6c] sm:$0xf]
    %v135 = vld [vmem:[#allocation3 + $0x70] sm:$0xf]
    %v136 = vld [vmem:[#allocation3 + $0x74] sm:$0xf]
    %v137 = vld [vmem:[#allocation3 + $0x78] sm:$0xf]
    %v138 = vld [vmem:[#allocation3 + $0x7c] sm:$0xf]
    %v139 = vld [vmem:[#allocation3 + $0x80] sm:$0xf]
    %v140 = vld [vmem:[#allocation3 + $0x84] sm:$0xf]
    %v141 = vld [vmem:[#allocation3 + $0x88] sm:$0xf]
    %v142 = vld [vmem:[#allocation3 + $0x8c] sm:$0xf]
    %v143 = vld [vmem:[#allocation3 + $0x90] sm:$0xf]
    %v144 = vld [vmem:[#allocation3 + $0x94] sm:$0xf]
    %v145 = vld [vmem:[#allocation3 + $0x98] sm:$0xf]
    %v146 = vld [vmem:[#allocation3 + $0x9c] sm:$0xf]
    %v147 = vld [vmem:[#allocation3 + $0xa0] sm:$0xf]
    %v148 = vld [vmem:[#allocation3 + $0xa4] sm:$0xf]
    %v149 = vld [vmem:[#allocation3 + $0xa8] sm:$0xf]
    %v150 = vld [vmem:[#allocation3 + $0xac] sm:$0xf]
    %v151 = vld [vmem:[#allocation3 + $0xb0] sm:$0xf]
    %v152 = vld [vmem:[#allocation3 + $0xb4] sm:$0xf]
    %v153 = vld [vmem:[#allocation3 + $0xb8] sm:$0xf]
    %v154 = vld [vmem:[#allocation3 + $0xbc] sm:$0xf]
    %v155 = vld [vmem:[#allocation5] sm:$0x1]
    %v157 = vlaneseq
    %v158 = vshrl.u32 %v157, 7
    %v159 = vsub.s32 0, %v158
    %v160 = vrot.slane %v155, %v159
    %v210 = vunpack.c.l.b16 %v107
    %v211 = vunpack.c.l.b16 %v108
    %v212 = vunpack.c.l.b16 %v109
    %v213 = vunpack.c.l.b16 %v110
    %v214 = vunpack.c.l.b16 %v111
    %v215 = vunpack.c.l.b16 %v112
    %v216 = vunpack.c.l.b16 %v113
    %v217 = vunpack.c.l.b16 %v114
    %v218 = vunpack.c.l.b16 %v115
    %v219 = vunpack.c.l.b16 %v116
    %v220 = vunpack.c.l.b16 %v117
    %v221 = vunpack.c.l.b16 %v118
    %v222 = vunpack.c.l.b16 %v119
    %v223 = vunpack.c.l.b16 %v120
    %v224 = vunpack.c.l.b16 %v121
    %v225 = vunpack.c.l.b16 %v122
    %v226 = vunpack.c.l.b16 %v123
    %v227 = vunpack.c.l.b16 %v124
    %v228 = vunpack.c.l.b16 %v125
    %v229 = vunpack.c.l.b16 %v126
    %v230 = vunpack.c.l.b16 %v127
    %v231 = vunpack.c.l.b16 %v128
    %v232 = vunpack.c.l.b16 %v129
    %v233 = vunpack.c.l.b16 %v130
    %v234 = vunpack.c.l.b16 %v131
    %v235 = vunpack.c.l.b16 %v132
    %v236 = vunpack.c.l.b16 %v133
    %v237 = vunpack.c.l.b16 %v134
    %v238 = vunpack.c.l.b16 %v135
    %v239 = vunpack.c.l.b16 %v136
    %v240 = vunpack.c.l.b16 %v137
    %v241 = vunpack.c.l.b16 %v138
    %v242 = vunpack.c.l.b16 %v139
    %v243 = vunpack.c.l.b16 %v140
    %v244 = vunpack.c.l.b16 %v141
    %v245 = vunpack.c.l.b16 %v142
    %v246 = vunpack.c.l.b16 %v143
    %v247 = vunpack.c.l.b16 %v144
    %v248 = vunpack.c.l.b16 %v145
    %v249 = vunpack.c.l.b16 %v146
    %v250 = vunpack.c.l.b16 %v147
    %v251 = vunpack.c.l.b16 %v148
    %v252 = vunpack.c.l.b16 %v149
    %v253 = vunpack.c.l.b16 %v150
    %v254 = vunpack.c.l.b16 %v151
    %v255 = vunpack.c.l.b16 %v152
    %v256 = vunpack.c.l.b16 %v153
    %v257 = vunpack.c.l.b16 %v154
    %v258 = vpack.c.b16 %v211, %v210
    %v259 = vpack.c.b16 %v213, %v212
    %v260 = vpack.c.b16 %v215, %v214
    %v261 = vpack.c.b16 %v217, %v216
    %v262 = vpack.c.b16 %v219, %v218
    %v263 = vpack.c.b16 %v221, %v220
    %v264 = vpack.c.b16 %v223, %v222
    %v265 = vpack.c.b16 %v225, %v224
    %v266 = vpack.c.b16 %v227, %v226
    %v267 = vpack.c.b16 %v229, %v228
    %v268 = vpack.c.b16 %v231, %v230
    %v269 = vpack.c.b16 %v233, %v232
    %v270 = vpack.c.b16 %v235, %v234
    %v271 = vpack.c.b16 %v237, %v236
    %v272 = vpack.c.b16 %v239, %v238
    %v273 = vpack.c.b16 %v241, %v240
    %v274 = vpack.c.b16 %v243, %v242
    %v275 = vpack.c.b16 %v245, %v244
    %v276 = vpack.c.b16 %v247, %v246
    %v277 = vpack.c.b16 %v249, %v248
    %v278 = vpack.c.b16 %v251, %v250
    %v279 = vpack.c.b16 %v253, %v252
    %v280 = vpack.c.b16 %v255, %v254
    %v281 = vpack.c.b16 %v257, %v256
    %306 = vmatprep.subr.bf16.mxu0 0
    %307 = vmatpush1.bf16.msra.mxu0 %v258
    %308 = vmatprep.subr.bf16.mxu0 0
    %309 = vmatpush1.bf16.msra.mxu0 %v259
    %310 = vmatprep.subr.bf16.mxu0 0
    %311 = vmatpush1.bf16.msra.mxu0 %v260
    %312 = vmatprep.subr.bf16.mxu0 0
    %313 = vmatpush1.bf16.msra.mxu0 %v261
    %314 = vmatprep.subr.bf16.mxu0 0
    %315 = vmatpush1.bf16.msra.mxu0 %v262
    %316 = vmatprep.subr.bf16.mxu0 0
    %317 = vmatpush1.bf16.msra.mxu0 %v263
    %318 = vmatprep.subr.bf16.mxu0 0
    %319 = vmatpush1.bf16.msra.mxu0 %v264
    %320 = vmatprep.subr.bf16.mxu0 0
    %321 = vmatpush1.bf16.msra.mxu0 %v265
    %322 = vmatprep.subr.bf16.mxu0 0
    %323 = vmatpush1.bf16.msra.mxu0 %v266
    %324 = vmatprep.subr.bf16.mxu0 0
    %325 = vmatpush1.bf16.msra.mxu0 %v267
    %326 = vmatprep.subr.bf16.mxu0 0
    %327 = vmatpush1.bf16.msra.mxu0 %v268
    %328 = vmatprep.subr.bf16.mxu0 0
    %329 = vmatpush1.bf16.msra.mxu0 %v269
    %330 = vmatprep.subr.bf16.mxu0 0
    %331 = vmatpush1.bf16.msra.mxu0 %v270
    %332 = vmatprep.subr.bf16.mxu0 0
    %333 = vmatpush1.bf16.msra.mxu0 %v271
    %334 = vmatprep.subr.bf16.mxu0 0
    %335 = vmatpush1.bf16.msra.mxu0 %v272
    %336 = vmatprep.subr.bf16.mxu0 0
    %337 = vmatpush1.bf16.msra.mxu0 %v273
    %338 = vmatprep.mubr.bf16.mxu0 %v102
    %339 = vmatmul.mubr.bf16.gmra.mrb[0].mxu0 %v101
    %v340 = vpop.f32.mrb[0].mxu0
    %v341 = vadd.f32 %v160, %v340
    %v342 = vpop.f32.mrb[0].mxu0
    %v343 = vpop.f32.mrb[0].mxu0
    %v344 = vadd.f32 %v160, %v343
    %v345 = vpop.f32.mrb[0].mxu0
    %346 = vmatprep.mubr.bf16.mxu0 %v105
    %347 = vmatmul.mubr.bf16.gmra.mrb[0].mxu0 %v104
    %v348 = vpop.f32.mrb[0].mxu0
    %v349 = vadd.f32 %v160, %v348
    %v350 = vpop.f32.mrb[0].mxu0
    %v351 = vpop.f32.mrb[0].mxu0
    %v352 = vadd.f32 %v160, %v351
    %v353 = vpop.f32.mrb[0].mxu0
    %354 = vdwg.mxu0
    %355 = vmatprep.subr.bf16.mxu0 0
    %356 = vmatpush1.bf16.msra.mxu0 %v274
    %357 = vmatprep.subr.bf16.mxu0 0
    %358 = vmatpush1.bf16.msra.mxu0 %v275
    %359 = vmatprep.subr.bf16.mxu0 0
    %360 = vmatpush1.bf16.msra.mxu0 %v276
    %361 = vmatprep.subr.bf16.mxu0 0
    %362 = vmatpush1.bf16.msra.mxu0 %v277
    %363 = vmatprep.subr.bf16.mxu0 0
    %364 = vmatpush1.bf16.msra.mxu0 %v278
    %365 = vmatprep.subr.bf16.mxu0 0
    %366 = vmatpush1.bf16.msra.mxu0 %v279
    %367 = vmatprep.subr.bf16.mxu0 0
    %368 = vmatpush1.bf16.msra.mxu0 %v280
    %369 = vmatprep.subr.bf16.mxu0 0
    %370 = vmatpush1.bf16.msra.mxu0 %v281
    %371 = vmatprep.subr.bf16.mxu0 0
    %372 = vmatpush1.bf16.msra.mxu0 0
    %373 = vmatprep.subr.bf16.mxu0 0
    %374 = vmatpush1.bf16.msra.mxu0 0
    %375 = vmatprep.subr.bf16.mxu0 0
    %376 = vmatpush1.bf16.msra.mxu0 0
    %377 = vmatprep.subr.bf16.mxu0 0
    %378 = vmatpush1.bf16.msra.mxu0 0
    %379 = vmatprep.subr.bf16.mxu0 0
    %380 = vmatpush1.bf16.msra.mxu0 0
    %381 = vmatprep.subr.bf16.mxu0 0
    %382 = vmatpush1.bf16.msra.mxu0 0
    %383 = vmatprep.subr.bf16.mxu0 0
    %384 = vmatpush1.bf16.msra.mxu0 0
    %385 = vmatprep.subr.bf16.mxu0 0
    %386 = vmatpush1.bf16.msra.mxu0 0
    %387 = vmatprep.mubr.bf16.mxu0 0
    %388 = vmatmul.mubr.bf16.gmra.mrb[0].mxu0 %v103
    %v389 = vpop.f32.mrb[0].mxu0
    %v390 = vadd.f32 %v341, %v389
    %v391 = vpop.f32.mrb[0].mxu0
    %v392 = vpop.f32.mrb[0].mxu0
    %v393 = vadd.f32 %v344, %v392
    %v394 = vpop.f32.mrb[0].mxu0
    %395 = vmatprep.mubr.bf16.mxu0 0
    %396 = vmatmul.mubr.bf16.gmra.mrb[0].mxu0 %v106
    %v397 = vpop.f32.mrb[0].mxu0
    %v398 = vadd.f32 %v349, %v397
    %v399 = vpop.f32.mrb[0].mxu0
    %v400 = vpop.f32.mrb[0].mxu0
    %v401 = vadd.f32 %v352, %v400
    %v402 = vpop.f32.mrb[0].mxu0
    %403 = vdwg.mxu0
    %v404 = vmax.f32 %v390, 0.0
    %v405 = vmax.f32 %v393, 0.0
    %v406 = vmax.f32 %v398, 0.0
    %v407 = vmax.f32 %v401, 0.0
    %408 = vst [vmem:[#allocation2 + $0x8] sm:$0xff] %v404
    %409 = vst [vmem:[#allocation2 + $0x20] sm:$0xff] %v405
    %410 = vst [vmem:[#allocation2 + $0x38] sm:$0xff] %v406
    %411 = vst [vmem:[#allocation2 + $0x50] sm:$0xff] %v407
    %v414 = vrot.slane %v404, 7
    %v415 = vrot.slane %v405, 7
    %v416 = vsel %vm57, %v414, %v415
    %419 = vst [vmem:[#allocation2] sm:$0xfe] %v414
    %420 = vst [vmem:[#allocation2 + $0x18] sm:$0xff] %v416
    %v421 = vrot.slane %v404, 1
    %v422 = vrot.slane %v405, 1
    %v423 = vsel %vm65, %v421, %v422
    %426 = vst [vmem:[#allocation2 + $0x10] sm:$0xff] %v423
    %427 = vst [vmem:[#allocation2 + $0x28] sm:$0x7f] %v422
    %v430 = vrot.slane %v406, 7
    %v431 = vrot.slane %v407, 7
    %v432 = vsel %vm57, %v430, %v431
    %435 = vst [vmem:[#allocation2 + $0x30] sm:$0xfe] %v430
    %436 = vst [vmem:[#allocation2 + $0x48] sm:$0xff] %v432
    %v437 = vrot.slane %v406, 1
    %v438 = vrot.slane %v407, 1
    %v439 = vsel %vm65, %v437, %v438
    %442 = vst [vmem:[#allocation2 + $0x40] sm:$0xff] %v439
    %443 = vst [vmem:[#allocation2 + $0x58] sm:$0x7f] %v438
    %v444 = vld [vmem:[#allocation2] sm:$0xff]
    %v445 = vld [vmem:[#allocation2 + $0x8] sm:$0xff]
    %v446 = vld [vmem:[#allocation2 + $0x10] sm:$0xff]
    %v447 = vld [vmem:[#allocation2 + $0x18] sm:$0xff]
    %v448 = vld [vmem:[#allocation2 + $0x20] sm:$0xff]
    %v449 = vld [vmem:[#allocation2 + $0x28] sm:$0xff]
    %v450 = vld [vmem:[#allocation2 + $0x30] sm:$0xff]
    %v451 = vld [vmem:[#allocation2 + $0x38] sm:$0xff]
    %v452 = vld [vmem:[#allocation2 + $0x40] sm:$0xff]
    %v453 = vld [vmem:[#allocation2 + $0x48] sm:$0xff]
    %v454 = vld [vmem:[#allocation2 + $0x50] sm:$0xff]
    %v455 = vld [vmem:[#allocation2 + $0x58] sm:$0xff]
    %v456 = vpack.c.bf16 %v447, %v444
    %v457 = vpack.c.bf16 %v448, %v445
    %v458 = vpack.c.bf16 %v449, %v446
    %v459 = vpack.c.bf16 %v453, %v450
    %v460 = vpack.c.bf16 %v454, %v451
    %v461 = vpack.c.bf16 %v455, %v452
    %s462 = scalar_lea.vmem [#allocation3], 192
    %v463 = vld [vmem:[%s462] sm:$0xf]
    %v464 = vld [vmem:[%s462 + $0x4] sm:$0xf]
    %v465 = vld [vmem:[%s462 + $0x8] sm:$0xf]
    %v466 = vld [vmem:[%s462 + $0xc] sm:$0xf]
    %v467 = vld [vmem:[%s462 + $0x10] sm:$0xf]
    %v468 = vld [vmem:[%s462 + $0x14] sm:$0xf]
    %v469 = vld [vmem:[%s462 + $0x18] sm:$0xf]
    %v470 = vld [vmem:[%s462 + $0x1c] sm:$0xf]
    %v471 = vld [vmem:[%s462 + $0x20] sm:$0xf]
    %v472 = vld [vmem:[%s462 + $0x24] sm:$0xf]
    %v473 = vld [vmem:[%s462 + $0x28] sm:$0xf]
    %v474 = vld [vmem:[%s462 + $0x2c] sm:$0xf]
    %v475 = vld [vmem:[%s462 + $0x30] sm:$0xf]
    %v476 = vld [vmem:[%s462 + $0x34] sm:$0xf]
    %v477 = vld [vmem:[%s462 + $0x38] sm:$0xf]
    %v478 = vld [vmem:[%s462 + $0x3c] sm:$0xf]
    %v479 = vld [vmem:[%s462 + $0x40] sm:$0xf]
    %v480 = vld [vmem:[%s462 + $0x44] sm:$0xf]
    %v481 = vld [vmem:[%s462 + $0x48] sm:$0xf]
    %v482 = vld [vmem:[%s462 + $0x4c] sm:$0xf]
    %v483 = vld [vmem:[%s462 + $0x50] sm:$0xf]
    %v484 = vld [vmem:[%s462 + $0x54] sm:$0xf]
    %v485 = vld [vmem:[%s462 + $0x58] sm:$0xf]
    %v486 = vld [vmem:[%s462 + $0x5c] sm:$0xf]
    %v487 = vld [vmem:[%s462 + $0x60] sm:$0xf]
    %v488 = vld [vmem:[%s462 + $0x64] sm:$0xf]
    %v489 = vld [vmem:[%s462 + $0x68] sm:$0xf]
    %v490 = vld [vmem:[%s462 + $0x6c] sm:$0xf]
    %v491 = vld [vmem:[%s462 + $0x70] sm:$0xf]
    %v492 = vld [vmem:[%s462 + $0x74] sm:$0xf]
    %v493 = vld [vmem:[%s462 + $0x78] sm:$0xf]
    %v494 = vld [vmem:[%s462 + $0x7c] sm:$0xf]
    %v495 = vld [vmem:[%s462 + $0x80] sm:$0xf]
    %v496 = vld [vmem:[%s462 + $0x84] sm:$0xf]
    %v497 = vld [vmem:[%s462 + $0x88] sm:$0xf]
    %v498 = vld [vmem:[%s462 + $0x8c] sm:$0xf]
    %v499 = vld [vmem:[%s462 + $0x90] sm:$0xf]
    %v500 = vld [vmem:[%s462 + $0x94] sm:$0xf]
    %v501 = vld [vmem:[%s462 + $0x98] sm:$0xf]
    %v502 = vld [vmem:[%s462 + $0x9c] sm:$0xf]
    %v503 = vld [vmem:[%s462 + $0xa0] sm:$0xf]
    %v504 = vld [vmem:[%s462 + $0xa4] sm:$0xf]
    %v505 = vld [vmem:[%s462 + $0xa8] sm:$0xf]
    %v506 = vld [vmem:[%s462 + $0xac] sm:$0xf]
    %v507 = vld [vmem:[%s462 + $0xb0] sm:$0xf]
    %v508 = vld [vmem:[%s462 + $0xb4] sm:$0xf]
    %v509 = vld [vmem:[%s462 + $0xb8] sm:$0xf]
    %v510 = vld [vmem:[%s462 + $0xbc] sm:$0xf]
    %s511 = scalar_lea.vmem [#allocation5], 1
    %v512 = vld [vmem:[%s511] sm:$0x1]
    %v514 = vlaneseq
    %v515 = vshrl.u32 %v514, 7
    %v516 = vsub.s32 0, %v515
    %v517 = vrot.slane %v512, %v516
    %v567 = vunpack.c.l.b16 %v463
    %v568 = vunpack.c.l.b16 %v464
    %v569 = vunpack.c.l.b16 %v465
    %v570 = vunpack.c.l.b16 %v466
    %v571 = vunpack.c.l.b16 %v467
    %v572 = vunpack.c.l.b16 %v468
    %v573 = vunpack.c.l.b16 %v469
    %v574 = vunpack.c.l.b16 %v470
    %v575 = vunpack.c.l.b16 %v471
    %v576 = vunpack.c.l.b16 %v472
    %v577 = vunpack.c.l.b16 %v473
    %v578 = vunpack.c.l.b16 %v474
    %v579 = vunpack.c.l.b16 %v475
    %v580 = vunpack.c.l.b16 %v476
    %v581 = vunpack.c.l.b16 %v477
    %v582 = vunpack.c.l.b16 %v478
    %v583 = vunpack.c.l.b16 %v479
    %v584 = vunpack.c.l.b16 %v480
    %v585 = vunpack.c.l.b16 %v481
    %v586 = vunpack.c.l.b16 %v482
    %v587 = vunpack.c.l.b16 %v483
    %v588 = vunpack.c.l.b16 %v484
    %v589 = vunpack.c.l.b16 %v485
    %v590 = vunpack.c.l.b16 %v486
    %v591 = vunpack.c.l.b16 %v487
    %v592 = vunpack.c.l.b16 %v488
    %v593 = vunpack.c.l.b16 %v489
    %v594 = vunpack.c.l.b16 %v490
    %v595 = vunpack.c.l.b16 %v491
    %v596 = vunpack.c.l.b16 %v492
    %v597 = vunpack.c.l.b16 %v493
    %v598 = vunpack.c.l.b16 %v494
    %v599 = vunpack.c.l.b16 %v495
    %v600 = vunpack.c.l.b16 %v496
    %v601 = vunpack.c.l.b16 %v497
    %v602 = vunpack.c.l.b16 %v498
    %v603 = vunpack.c.l.b16 %v499
    %v604 = vunpack.c.l.b16 %v500
    %v605 = vunpack.c.l.b16 %v501
    %v606 = vunpack.c.l.b16 %v502
    %v607 = vunpack.c.l.b16 %v503
    %v608 = vunpack.c.l.b16 %v504
    %v609 = vunpack.c.l.b16 %v505
    %v610 = vunpack.c.l.b16 %v506
    %v611 = vunpack.c.l.b16 %v507
    %v612 = vunpack.c.l.b16 %v508
    %v613 = vunpack.c.l.b16 %v509
    %v614 = vunpack.c.l.b16 %v510
    %v615 = vpack.c.b16 %v568, %v567
    %v616 = vpack.c.b16 %v570, %v569
    %v617 = vpack.c.b16 %v572, %v571
    %v618 = vpack.c.b16 %v574, %v573
    %v619 = vpack.c.b16 %v576, %v575
    %v620 = vpack.c.b16 %v578, %v577
    %v621 = vpack.c.b16 %v580, %v579
    %v622 = vpack.c.b16 %v582, %v581
    %v623 = vpack.c.b16 %v584, %v583
    %v624 = vpack.c.b16 %v586, %v585
    %v625 = vpack.c.b16 %v588, %v587
    %v626 = vpack.c.b16 %v590, %v589
    %v627 = vpack.c.b16 %v592, %v591
    %v628 = vpack.c.b16 %v594, %v593
    %v629 = vpack.c.b16 %v596, %v595
    %v630 = vpack.c.b16 %v598, %v597
    %v631 = vpack.c.b16 %v600, %v599
    %v632 = vpack.c.b16 %v602, %v601
    %v633 = vpack.c.b16 %v604, %v603
    %v634 = vpack.c.b16 %v606, %v605
    %v635 = vpack.c.b16 %v608, %v607
    %v636 = vpack.c.b16 %v610, %v609
    %v637 = vpack.c.b16 %v612, %v611
    %v638 = vpack.c.b16 %v614, %v613
    %663 = vmatprep.subr.bf16.mxu0 0
    %664 = vmatpush1.bf16.msra.mxu0 %v615
    %665 = vmatprep.subr.bf16.mxu0 0
    %666 = vmatpush1.bf16.msra.mxu0 %v616
    %667 = vmatprep.subr.bf16.mxu0 0
    %668 = vmatpush1.bf16.msra.mxu0 %v617
    %669 = vmatprep.subr.bf16.mxu0 0
    %670 = vmatpush1.bf16.msra.mxu0 %v618
    %671 = vmatprep.subr.bf16.mxu0 0
    %672 = vmatpush1.bf16.msra.mxu0 %v619
    %673 = vmatprep.subr.bf16.mxu0 0
    %674 = vmatpush1.bf16.msra.mxu0 %v620
    %675 = vmatprep.subr.bf16.mxu0 0
    %676 = vmatpush1.bf16.msra.mxu0 %v621
    %677 = vmatprep.subr.bf16.mxu0 0
    %678 = vmatpush1.bf16.msra.mxu0 %v622
    %679 = vmatprep.subr.bf16.mxu0 0
    %680 = vmatpush1.bf16.msra.mxu0 %v623
    %681 = vmatprep.subr.bf16.mxu0 0
    %682 = vmatpush1.bf16.msra.mxu0 %v624
    %683 = vmatprep.subr.bf16.mxu0 0
    %684 = vmatpush1.bf16.msra.mxu0 %v625
    %685 = vmatprep.subr.bf16.mxu0 0
    %686 = vmatpush1.bf16.msra.mxu0 %v626
    %687 = vmatprep.subr.bf16.mxu0 0
    %688 = vmatpush1.bf16.msra.mxu0 %v627
    %689 = vmatprep.subr.bf16.mxu0 0
    %690 = vmatpush1.bf16.msra.mxu0 %v628
    %691 = vmatprep.subr.bf16.mxu0 0
    %692 = vmatpush1.bf16.msra.mxu0 %v629
    %693 = vmatprep.subr.bf16.mxu0 0
    %694 = vmatpush1.bf16.msra.mxu0 %v630
    %695 = vmatprep.mubr.bf16.mxu0 %v457
    %696 = vmatmul.mubr.bf16.gmra.mrb[0].mxu0 %v456
    %v697 = vpop.f32.mrb[0].mxu0
    %v698 = vadd.f32 %v517, %v697
    %v699 = vpop.f32.mrb[0].mxu0
    %v700 = vpop.f32.mrb[0].mxu0
    %v701 = vadd.f32 %v517, %v700
    %v702 = vpop.f32.mrb[0].mxu0
    %703 = vmatprep.mubr.bf16.mxu0 %v460
    %704 = vmatmul.mubr.bf16.gmra.mrb[0].mxu0 %v459
    %v705 = vpop.f32.mrb[0].mxu0
    %v706 = vadd.f32 %v517, %v705
    %v707 = vpop.f32.mrb[0].mxu0
    %v708 = vpop.f32.mrb[0].mxu0
    %v709 = vadd.f32 %v517, %v708
    %v710 = vpop.f32.mrb[0].mxu0
    %711 = vdwg.mxu0
    %712 = vmatprep.subr.bf16.mxu0 0
    %713 = vmatpush1.bf16.msra.mxu0 %v631
    %714 = vmatprep.subr.bf16.mxu0 0
    %715 = vmatpush1.bf16.msra.mxu0 %v632
    %716 = vmatprep.subr.bf16.mxu0 0
    %717 = vmatpush1.bf16.msra.mxu0 %v633
    %718 = vmatprep.subr.bf16.mxu0 0
    %719 = vmatpush1.bf16.msra.mxu0 %v634
    %720 = vmatprep.subr.bf16.mxu0 0
    %721 = vmatpush1.bf16.msra.mxu0 %v635
    %722 = vmatprep.subr.bf16.mxu0 0
    %723 = vmatpush1.bf16.msra.mxu0 %v636
    %724 = vmatprep.subr.bf16.mxu0 0
    %725 = vmatpush1.bf16.msra.mxu0 %v637
    %726 = vmatprep.subr.bf16.mxu0 0
    %727 = vmatpush1.bf16.msra.mxu0 %v638
    %728 = vmatprep.subr.bf16.mxu0 0
    %729 = vmatpush1.bf16.msra.mxu0 0
    %730 = vmatprep.subr.bf16.mxu0 0
    %731 = vmatpush1.bf16.msra.mxu0 0
    %732 = vmatprep.subr.bf16.mxu0 0
    %733 = vmatpush1.bf16.msra.mxu0 0
    %734 = vmatprep.subr.bf16.mxu0 0
    %735 = vmatpush1.bf16.msra.mxu0 0
    %736 = vmatprep.subr.bf16.mxu0 0
    %737 = vmatpush1.bf16.msra.mxu0 0
    %738 = vmatprep.subr.bf16.mxu0 0
    %739 = vmatpush1.bf16.msra.mxu0 0
    %740 = vmatprep.subr.bf16.mxu0 0
    %741 = vmatpush1.bf16.msra.mxu0 0
    %742 = vmatprep.subr.bf16.mxu0 0
    %743 = vmatpush1.bf16.msra.mxu0 0
    %744 = vmatprep.mubr.bf16.mxu0 0
    %745 = vmatmul.mubr.bf16.gmra.mrb[0].mxu0 %v458
    %v746 = vpop.f32.mrb[0].mxu0
    %v747 = vadd.f32 %v698, %v746
    %v748 = vpop.f32.mrb[0].mxu0
    %v749 = vpop.f32.mrb[0].mxu0
    %v750 = vadd.f32 %v701, %v749
    %v751 = vpop.f32.mrb[0].mxu0
    %752 = vmatprep.mubr.bf16.mxu0 0
    %753 = vmatmul.mubr.bf16.gmra.mrb[0].mxu0 %v461
    %v754 = vpop.f32.mrb[0].mxu0
    %v755 = vadd.f32 %v706, %v754
    %v756 = vpop.f32.mrb[0].mxu0
    %v757 = vpop.f32.mrb[0].mxu0
    %v758 = vadd.f32 %v709, %v757
    %v759 = vpop.f32.mrb[0].mxu0
    %760 = vdwg.mxu0
    %v761 = vadd.f32 %v747, %v47
    %v762 = vadd.f32 %v750, %v48
    %v763 = vadd.f32 %v755, %v49
    %v764 = vadd.f32 %v758, %v50
    %765 = vst [vmem:[#allocation2 + $0x8] sm:$0xff] %v761
    %766 = vst [vmem:[#allocation2 + $0x20] sm:$0xff] %v762
    %767 = vst [vmem:[#allocation2 + $0x38] sm:$0xff] %v763
    %768 = vst [vmem:[#allocation2 + $0x50] sm:$0xff] %v764
    %v771 = vrot.slane %v761, 7
    %v772 = vrot.slane %v762, 7
    %v773 = vsel %vm57, %v771, %v772
    %776 = vst [vmem:[#allocation2] sm:$0xfe] %v771
    %777 = vst [vmem:[#allocation2 + $0x18] sm:$0xff] %v773
    %v778 = vrot.slane %v761, 1
    %v779 = vrot.slane %v762, 1
    %v780 = vsel %vm65, %v778, %v779
    %783 = vst [vmem:[#allocation2 + $0x10] sm:$0xff] %v780
    %784 = vst [vmem:[#allocation2 + $0x28] sm:$0x7f] %v779
    %v787 = vrot.slane %v763, 7
    %v788 = vrot.slane %v764, 7
    %v789 = vsel %vm57, %v787, %v788
    %792 = vst [vmem:[#allocation2 + $0x30] sm:$0xfe] %v787
    %793 = vst [vmem:[#allocation2 + $0x48] sm:$0xff] %v789
    %v794 = vrot.slane %v763, 1
    %v795 = vrot.slane %v764, 1
    %v796 = vsel %vm65, %v794, %v795
    %799 = vst [vmem:[#allocation2 + $0x40] sm:$0xff] %v796
    %800 = vst [vmem:[#allocation2 + $0x58] sm:$0x7f] %v795
    %v801 = vld [vmem:[#allocation2] sm:$0xff]
    %v802 = vld [vmem:[#allocation2 + $0x8] sm:$0xff]
    %v803 = vld [vmem:[#allocation2 + $0x10] sm:$0xff]
    %v804 = vld [vmem:[#allocation2 + $0x18] sm:$0xff]
    %v805 = vld [vmem:[#allocation2 + $0x20] sm:$0xff]
    %v806 = vld [vmem:[#allocation2 + $0x28] sm:$0xff]
    %v807 = vld [vmem:[#allocation2 + $0x30] sm:$0xff]
    %v808 = vld [vmem:[#allocation2 + $0x38] sm:$0xff]
    %v809 = vld [vmem:[#allocation2 + $0x40] sm:$0xff]
    %v810 = vld [vmem:[#allocation2 + $0x48] sm:$0xff]
    %v811 = vld [vmem:[#allocation2 + $0x50] sm:$0xff]
    %v812 = vld [vmem:[#allocation2 + $0x58] sm:$0xff]
    %v813 = vpack.c.bf16 %v804, %v801
    %v814 = vpack.c.bf16 %v805, %v802
    %v815 = vpack.c.bf16 %v806, %v803
    %v816 = vpack.c.bf16 %v810, %v807
    %v817 = vpack.c.bf16 %v811, %v808
    %v818 = vpack.c.bf16 %v812, %v809
    %s819 = scalar_lea.vmem [#allocation3], 384
    %v820 = vld [vmem:[%s819] sm:$0xf]
    %v821 = vld [vmem:[%s819 + $0x4] sm:$0xf]
    %v822 = vld [vmem:[%s819 + $0x8] sm:$0xf]
    %v823 = vld [vmem:[%s819 + $0xc] sm:$0xf]
    %v824 = vld [vmem:[%s819 + $0x10] sm:$0xf]
    %v825 = vld [vmem:[%s819 + $0x14] sm:$0xf]
    %v826 = vld [vmem:[%s819 + $0x18] sm:$0xf]
    %v827 = vld [vmem:[%s819 + $0x1c] sm:$0xf]
    %v828 = vld [vmem:[%s819 + $0x20] sm:$0xf]
    %v829 = vld [vmem:[%s819 + $0x24] sm:$0xf]
    %v830 = vld [vmem:[%s819 + $0x28] sm:$0xf]
    %v831 = vld [vmem:[%s819 + $0x2c] sm:$0xf]
    %v832 = vld [vmem:[%s819 + $0x30] sm:$0xf]
    %v833 = vld [vmem:[%s819 + $0x34] sm:$0xf]
    %v834 = vld [vmem:[%s819 + $0x38] sm:$0xf]
    %v835 = vld [vmem:[%s819 + $0x3c] sm:$0xf]
    %v836 = vld [vmem:[%s819 + $0x40] sm:$0xf]
    %v837 = vld [vmem:[%s819 + $0x44] sm:$0xf]
    %v838 = vld [vmem:[%s819 + $0x48] sm:$0xf]
    %v839 = vld [vmem:[%s819 + $0x4c] sm:$0xf]
    %v840 = vld [vmem:[%s819 + $0x50] sm:$0xf]
    %v841 = vld [vmem:[%s819 + $0x54] sm:$0xf]
    %v842 = vld [vmem:[%s819 + $0x58] sm:$0xf]
    %v843 = vld [vmem:[%s819 + $0x5c] sm:$0xf]
    %v844 = vld [vmem:[%s819 + $0x60] sm:$0xf]
    %v845 = vld [vmem:[%s819 + $0x64] sm:$0xf]
    %v846 = vld [vmem:[%s819 + $0x68] sm:$0xf]
    %v847 = vld [vmem:[%s819 + $0x6c] sm:$0xf]
    %v848 = vld [vmem:[%s819 + $0x70] sm:$0xf]
    %v849 = vld [vmem:[%s819 + $0x74] sm:$0xf]
    %v850 = vld [vmem:[%s819 + $0x78] sm:$0xf]
    %v851 = vld [vmem:[%s819 + $0x7c] sm:$0xf]
    %v852 = vld [vmem:[%s819 + $0x80] sm:$0xf]
    %v853 = vld [vmem:[%s819 + $0x84] sm:$0xf]
    %v854 = vld [vmem:[%s819 + $0x88] sm:$0xf]
    %v855 = vld [vmem:[%s819 + $0x8c] sm:$0xf]
    %v856 = vld [vmem:[%s819 + $0x90] sm:$0xf]
    %v857 = vld [vmem:[%s819 + $0x94] sm:$0xf]
    %v858 = vld [vmem:[%s819 + $0x98] sm:$0xf]
    %v859 = vld [vmem:[%s819 + $0x9c] sm:$0xf]
    %v860 = vld [vmem:[%s819 + $0xa0] sm:$0xf]
    %v861 = vld [vmem:[%s819 + $0xa4] sm:$0xf]
    %v862 = vld [vmem:[%s819 + $0xa8] sm:$0xf]
    %v863 = vld [vmem:[%s819 + $0xac] sm:$0xf]
    %v864 = vld [vmem:[%s819 + $0xb0] sm:$0xf]
    %v865 = vld [vmem:[%s819 + $0xb4] sm:$0xf]
    %v866 = vld [vmem:[%s819 + $0xb8] sm:$0xf]
    %v867 = vld [vmem:[%s819 + $0xbc] sm:$0xf]
    %s868 = scalar_lea.vmem [#allocation5], 2
    %v869 = vld [vmem:[%s868] sm:$0x1]
    %v871 = vlaneseq
    %v872 = vshrl.u32 %v871, 7
    %v873 = vsub.s32 0, %v872
    %v874 = vrot.slane %v869, %v873
    %v924 = vunpack.c.l.b16 %v820
    %v925 = vunpack.c.l.b16 %v821
    %v926 = vunpack.c.l.b16 %v822
    %v927 = vunpack.c.l.b16 %v823
    %v928 = vunpack.c.l.b16 %v824
    %v929 = vunpack.c.l.b16 %v825
    %v930 = vunpack.c.l.b16 %v826
    %v931 = vunpack.c.l.b16 %v827
    %v932 = vunpack.c.l.b16 %v828
    %v933 = vunpack.c.l.b16 %v829
    %v934 = vunpack.c.l.b16 %v830
    %v935 = vunpack.c.l.b16 %v831
    %v936 = vunpack.c.l.b16 %v832
    %v937 = vunpack.c.l.b16 %v833
    %v938 = vunpack.c.l.b16 %v834
    %v939 = vunpack.c.l.b16 %v835
    %v940 = vunpack.c.l.b16 %v836
    %v941 = vunpack.c.l.b16 %v837
    %v942 = vunpack.c.l.b16 %v838
    %v943 = vunpack.c.l.b16 %v839
    %v944 = vunpack.c.l.b16 %v840
    %v945 = vunpack.c.l.b16 %v841
    %v946 = vunpack.c.l.b16 %v842
    %v947 = vunpack.c.l.b16 %v843
    %v948 = vunpack.c.l.b16 %v844
    %v949 = vunpack.c.l.b16 %v845
    %v950 = vunpack.c.l.b16 %v846
    %v951 = vunpack.c.l.b16 %v847
    %v952 = vunpack.c.l.b16 %v848
    %v953 = vunpack.c.l.b16 %v849
    %v954 = vunpack.c.l.b16 %v850
    %v955 = vunpack.c.l.b16 %v851
    %v956 = vunpack.c.l.b16 %v852
    %v957 = vunpack.c.l.b16 %v853
    %v958 = vunpack.c.l.b16 %v854
    %v959 = vunpack.c.l.b16 %v855
    %v960 = vunpack.c.l.b16 %v856
    %v961 = vunpack.c.l.b16 %v857
    %v962 = vunpack.c.l.b16 %v858
    %v963 = vunpack.c.l.b16 %v859
    %v964 = vunpack.c.l.b16 %v860
    %v965 = vunpack.c.l.b16 %v861
    %v966 = vunpack.c.l.b16 %v862
    %v967 = vunpack.c.l.b16 %v863
    %v968 = vunpack.c.l.b16 %v864
    %v969 = vunpack.c.l.b16 %v865
    %v970 = vunpack.c.l.b16 %v866
    %v971 = vunpack.c.l.b16 %v867
    %v972 = vpack.c.b16 %v925, %v924
    %v973 = vpack.c.b16 %v927, %v926
    %v974 = vpack.c.b16 %v929, %v928
    %v975 = vpack.c.b16 %v931, %v930
    %v976 = vpack.c.b16 %v933, %v932
    %v977 = vpack.c.b16 %v935, %v934
    %v978 = vpack.c.b16 %v937, %v936
    %v979 = vpack.c.b16 %v939, %v938
    %v980 = vpack.c.b16 %v941, %v940
    %v981 = vpack.c.b16 %v943, %v942
    %v982 = vpack.c.b16 %v945, %v944
    %v983 = vpack.c.b16 %v947, %v946
    %v984 = vpack.c.b16 %v949, %v948
    %v985 = vpack.c.b16 %v951, %v950
    %v986 = vpack.c.b16 %v953, %v952
    %v987 = vpack.c.b16 %v955, %v954
    %v988 = vpack.c.b16 %v957, %v956
    %v989 = vpack.c.b16 %v959, %v958
    %v990 = vpack.c.b16 %v961, %v960
    %v991 = vpack.c.b16 %v963, %v962
    %v992 = vpack.c.b16 %v965, %v964
    %v993 = vpack.c.b16 %v967, %v966
    %v994 = vpack.c.b16 %v969, %v968
    %v995 = vpack.c.b16 %v971, %v970
    %1020 = vmatprep.subr.bf16.mxu0 0
    %1021 = vmatpush1.bf16.msra.mxu0 %v972
    %1022 = vmatprep.subr.bf16.mxu0 0
    %1023 = vmatpush1.bf16.msra.mxu0 %v973
    %1024 = vmatprep.subr.bf16.mxu0 0
    %1025 = vmatpush1.bf16.msra.mxu0 %v974
    %1026 = vmatprep.subr.bf16.mxu0 0
    %1027 = vmatpush1.bf16.msra.mxu0 %v975
    %1028 = vmatprep.subr.bf16.mxu0 0
    %1029 = vmatpush1.bf16.msra.mxu0 %v976
    %1030 = vmatprep.subr.bf16.mxu0 0
    %1031 = vmatpush1.bf16.msra.mxu0 %v977
    %1032 = vmatprep.subr.bf16.mxu0 0
    %1033 = vmatpush1.bf16.msra.mxu0 %v978
    %1034 = vmatprep.subr.bf16.mxu0 0
    %1035 = vmatpush1.bf16.msra.mxu0 %v979
    %1036 = vmatprep.subr.bf16.mxu0 0
    %1037 = vmatpush1.bf16.msra.mxu0 %v980
    %1038 = vmatprep.subr.bf16.mxu0 0
    %1039 = vmatpush1.bf16.msra.mxu0 %v981
    %1040 = vmatprep.subr.bf16.mxu0 0
    %1041 = vmatpush1.bf16.msra.mxu0 %v982
    %1042 = vmatprep.subr.bf16.mxu0 0
    %1043 = vmatpush1.bf16.msra.mxu0 %v983
    %1044 = vmatprep.subr.bf16.mxu0 0
    %1045 = vmatpush1.bf16.msra.mxu0 %v984
    %1046 = vmatprep.subr.bf16.mxu0 0
    %1047 = vmatpush1.bf16.msra.mxu0 %v985
    %1048 = vmatprep.subr.bf16.mxu0 0
    %1049 = vmatpush1.bf16.msra.mxu0 %v986
    %1050 = vmatprep.subr.bf16.mxu0 0
    %1051 = vmatpush1.bf16.msra.mxu0 %v987
    %1052 = vmatprep.mubr.bf16.mxu0 %v814
    %1053 = vmatmul.mubr.bf16.gmra.mrb[0].mxu0 %v813
    %v1054 = vpop.f32.mrb[0].mxu0
    %v1055 = vadd.f32 %v874, %v1054
    %v1056 = vpop.f32.mrb[0].mxu0
    %v1057 = vpop.f32.mrb[0].mxu0
    %v1058 = vadd.f32 %v874, %v1057
    %v1059 = vpop.f32.mrb[0].mxu0
    %1060 = vmatprep.mubr.bf16.mxu0 %v817
    %1061 = vmatmul.mubr.bf16.gmra.mrb[0].mxu0 %v816
    %v1062 = vpop.f32.mrb[0].mxu0
    %v1063 = vadd.f32 %v874, %v1062
    %v1064 = vpop.f32.mrb[0].mxu0
    %v1065 = vpop.f32.mrb[0].mxu0
    %v1066 = vadd.f32 %v874, %v1065
    %v1067 = vpop.f32.mrb[0].mxu0
    %1068 = vdwg.mxu0
    %1069 = vmatprep.subr.bf16.mxu0 0
    %1070 = vmatpush1.bf16.msra.mxu0 %v988
    %1071 = vmatprep.subr.bf16.mxu0 0
    %1072 = vmatpush1.bf16.msra.mxu0 %v989
    %1073 = vmatprep.subr.bf16.mxu0 0
    %1074 = vmatpush1.bf16.msra.mxu0 %v990
    %1075 = vmatprep.subr.bf16.mxu0 0
    %1076 = vmatpush1.bf16.msra.mxu0 %v991
    %1077 = vmatprep.subr.bf16.mxu0 0
    %1078 = vmatpush1.bf16.msra.mxu0 %v992
    %1079 = vmatprep.subr.bf16.mxu0 0
    %1080 = vmatpush1.bf16.msra.mxu0 %v993
    %1081 = vmatprep.subr.bf16.mxu0 0
    %1082 = vmatpush1.bf16.msra.mxu0 %v994
    %1083 = vmatprep.subr.bf16.mxu0 0
    %1084 = vmatpush1.bf16.msra.mxu0 %v995
    %1085 = vmatprep.subr.bf16.mxu0 0
    %1086 = vmatpush1.bf16.msra.mxu0 0
    %1087 = vmatprep.subr.bf16.mxu0 0
    %1088 = vmatpush1.bf16.msra.mxu0 0
    %1089 = vmatprep.subr.bf16.mxu0 0
    %1090 = vmatpush1.bf16.msra.mxu0 0
    %1091 = vmatprep.subr.bf16.mxu0 0
    %1092 = vmatpush1.bf16.msra.mxu0 0
    %1093 = vmatprep.subr.bf16.mxu0 0
    %1094 = vmatpush1.bf16.msra.mxu0 0
    %1095 = vmatprep.subr.bf16.mxu0 0
    %1096 = vmatpush1.bf16.msra.mxu0 0
    %1097 = vmatprep.subr.bf16.mxu0 0
    %1098 = vmatpush1.bf16.msra.mxu0 0
    %1099 = vmatprep.subr.bf16.mxu0 0
    %1100 = vmatpush1.bf16.msra.mxu0 0
    %1101 = vmatprep.mubr.bf16.mxu0 0
    %1102 = vmatmul.mubr.bf16.gmra.mrb[0].mxu0 %v815
    %v1103 = vpop.f32.mrb[0].mxu0
    %v1104 = vadd.f32 %v1055, %v1103
    %v1105 = vpop.f32.mrb[0].mxu0
    %v1106 = vpop.f32.mrb[0].mxu0
    %v1107 = vadd.f32 %v1058, %v1106
    %v1108 = vpop.f32.mrb[0].mxu0
    %1109 = vmatprep.mubr.bf16.mxu0 0
    %1110 = vmatmul.mubr.bf16.gmra.mrb[0].mxu0 %v818
    %v1111 = vpop.f32.mrb[0].mxu0
    %v1112 = vadd.f32 %v1063, %v1111
    %v1113 = vpop.f32.mrb[0].mxu0
    %v1114 = vpop.f32.mrb[0].mxu0
    %v1115 = vadd.f32 %v1066, %v1114
    %v1116 = vpop.f32.mrb[0].mxu0
    %1117 = vdwg.mxu0
    %v1118 = vmax.f32 %v1104, 0.0
    %v1119 = vmax.f32 %v1107, 0.0
    %v1120 = vmax.f32 %v1112, 0.0
    %v1121 = vmax.f32 %v1115, 0.0
    %1122 = vst [vmem:[#allocation2 + $0x8] sm:$0xff] %v1118
    %1123 = vst [vmem:[#allocation2 + $0x20] sm:$0xff] %v1119
    %1124 = vst [vmem:[#allocation2 + $0x38] sm:$0xff] %v1120
    %1125 = vst [vmem:[#allocation2 + $0x50] sm:$0xff] %v1121
    %v1128 = vrot.slane %v1118, 7
    %v1129 = vrot.slane %v1119, 7
    %v1130 = vsel %vm57, %v1128, %v1129
    %1133 = vst [vmem:[#allocation2] sm:$0xfe] %v1128
    %1134 = vst [vmem:[#allocation2 + $0x18] sm:$0xff] %v1130
    %v1135 = vrot.slane %v1118, 1
    %v1136 = vrot.slane %v1119, 1
    %v1137 = vsel %vm65, %v1135, %v1136
    %1140 = vst [vmem:[#allocation2 + $0x10] sm:$0xff] %v1137
    %1141 = vst [vmem:[#allocation2 + $0x28] sm:$0x7f] %v1136
    %v1144 = vrot.slane %v1120, 7
    %v1145 = vrot.slane %v1121, 7
    %v1146 = vsel %vm57, %v1144, %v1145
    %1149 = vst [vmem:[#allocation2 + $0x30] sm:$0xfe] %v1144
    %1150 = vst [vmem:[#allocation2 + $0x48] sm:$0xff] %v1146
    %v1151 = vrot.slane %v1120, 1
    %v1152 = vrot.slane %v1121, 1
    %v1153 = vsel %vm65, %v1151, %v1152
    %1156 = vst [vmem:[#allocation2 + $0x40] sm:$0xff] %v1153
    %1157 = vst [vmem:[#allocation2 + $0x58] sm:$0x7f] %v1152
    %v1158 = vld [vmem:[#allocation2] sm:$0xff]
    %v1159 = vld [vmem:[#allocation2 + $0x8] sm:$0xff]
    %v1160 = vld [vmem:[#allocation2 + $0x10] sm:$0xff]
    %v1161 = vld [vmem:[#allocation2 + $0x18] sm:$0xff]
    %v1162 = vld [vmem:[#allocation2 + $0x20] sm:$0xff]
    %v1163 = vld [vmem:[#allocation2 + $0x28] sm:$0xff]
    %v1164 = vld [vmem:[#allocation2 + $0x30] sm:$0xff]
    %v1165 = vld [vmem:[#allocation2 + $0x38] sm:$0xff]
    %v1166 = vld [vmem:[#allocation2 + $0x40] sm:$0xff]
    %v1167 = vld [vmem:[#allocation2 + $0x48] sm:$0xff]
    %v1168 = vld [vmem:[#allocation2 + $0x50] sm:$0xff]
    %v1169 = vld [vmem:[#allocation2 + $0x58] sm:$0xff]
    %v1170 = vpack.c.bf16 %v1161, %v1158
    %v1171 = vpack.c.bf16 %v1162, %v1159
    %v1172 = vpack.c.bf16 %v1163, %v1160
    %v1173 = vpack.c.bf16 %v1167, %v1164
    %v1174 = vpack.c.bf16 %v1168, %v1165
    %v1175 = vpack.c.bf16 %v1169, %v1166
    %s1176 = scalar_lea.vmem [#allocation3], 576
    %v1177 = vld [vmem:[%s1176] sm:$0xf]
    %v1178 = vld [vmem:[%s1176 + $0x4] sm:$0xf]
    %v1179 = vld [vmem:[%s1176 + $0x8] sm:$0xf]
    %v1180 = vld [vmem:[%s1176 + $0xc] sm:$0xf]
    %v1181 = vld [vmem:[%s1176 + $0x10] sm:$0xf]
    %v1182 = vld [vmem:[%s1176 + $0x14] sm:$0xf]
    %v1183 = vld [vmem:[%s1176 + $0x18] sm:$0xf]
    %v1184 = vld [vmem:[%s1176 + $0x1c] sm:$0xf]
    %v1185 = vld [vmem:[%s1176 + $0x20] sm:$0xf]
    %v1186 = vld [vmem:[%s1176 + $0x24] sm:$0xf]
    %v1187 = vld [vmem:[%s1176 + $0x28] sm:$0xf]
    %v1188 = vld [vmem:[%s1176 + $0x2c] sm:$0xf]
    %v1189 = vld [vmem:[%s1176 + $0x30] sm:$0xf]
    %v1190 = vld [vmem:[%s1176 + $0x34] sm:$0xf]
    %v1191 = vld [vmem:[%s1176 + $0x38] sm:$0xf]
    %v1192 = vld [vmem:[%s1176 + $0x3c] sm:$0xf]
    %v1193 = vld [vmem:[%s1176 + $0x40] sm:$0xf]
    %v1194 = vld [vmem:[%s1176 + $0x44] sm:$0xf]
    %v1195 = vld [vmem:[%s1176 + $0x48] sm:$0xf]
    %v1196 = vld [vmem:[%s1176 + $0x4c] sm:$0xf]
    %v1197 = vld [vmem:[%s1176 + $0x50] sm:$0xf]
    %v1198 = vld [vmem:[%s1176 + $0x54] sm:$0xf]
    %v1199 = vld [vmem:[%s1176 + $0x58] sm:$0xf]
    %v1200 = vld [vmem:[%s1176 + $0x5c] sm:$0xf]
    %v1201 = vld [vmem:[%s1176 + $0x60] sm:$0xf]
    %v1202 = vld [vmem:[%s1176 + $0x64] sm:$0xf]
    %v1203 = vld [vmem:[%s1176 + $0x68] sm:$0xf]
    %v1204 = vld [vmem:[%s1176 + $0x6c] sm:$0xf]
    %v1205 = vld [vmem:[%s1176 + $0x70] sm:$0xf]
    %v1206 = vld [vmem:[%s1176 + $0x74] sm:$0xf]
    %v1207 = vld [vmem:[%s1176 + $0x78] sm:$0xf]
    %v1208 = vld [vmem:[%s1176 + $0x7c] sm:$0xf]
    %v1209 = vld [vmem:[%s1176 + $0x80] sm:$0xf]
    %v1210 = vld [vmem:[%s1176 + $0x84] sm:$0xf]
    %v1211 = vld [vmem:[%s1176 + $0x88] sm:$0xf]
    %v1212 = vld [vmem:[%s1176 + $0x8c] sm:$0xf]
    %v1213 = vld [vmem:[%s1176 + $0x90] sm:$0xf]
    %v1214 = vld [vmem:[%s1176 + $0x94] sm:$0xf]
    %v1215 = vld [vmem:[%s1176 + $0x98] sm:$0xf]
    %v1216 = vld [vmem:[%s1176 + $0x9c] sm:$0xf]
    %v1217 = vld [vmem:[%s1176 + $0xa0] sm:$0xf]
    %v1218 = vld [vmem:[%s1176 + $0xa4] sm:$0xf]
    %v1219 = vld [vmem:[%s1176 + $0xa8] sm:$0xf]
    %v1220 = vld [vmem:[%s1176 + $0xac] sm:$0xf]
    %v1221 = vld [vmem:[%s1176 + $0xb0] sm:$0xf]
    %v1222 = vld [vmem:[%s1176 + $0xb4] sm:$0xf]
    %v1223 = vld [vmem:[%s1176 + $0xb8] sm:$0xf]
    %v1224 = vld [vmem:[%s1176 + $0xbc] sm:$0xf]
    %s1225 = scalar_lea.vmem [#allocation5], 3
    %v1226 = vld [vmem:[%s1225] sm:$0x1]
    %v1228 = vlaneseq
    %v1229 = vshrl.u32 %v1228, 7
    %v1230 = vsub.s32 0, %v1229
    %v1231 = vrot.slane %v1226, %v1230
    %v1281 = vunpack.c.l.b16 %v1177
    %v1282 = vunpack.c.l.b16 %v1178
    %v1283 = vunpack.c.l.b16 %v1179
    %v1284 = vunpack.c.l.b16 %v1180
    %v1285 = vunpack.c.l.b16 %v1181
    %v1286 = vunpack.c.l.b16 %v1182
    %v1287 = vunpack.c.l.b16 %v1183
    %v1288 = vunpack.c.l.b16 %v1184
    %v1289 = vunpack.c.l.b16 %v1185
    %v1290 = vunpack.c.l.b16 %v1186
    %v1291 = vunpack.c.l.b16 %v1187
    %v1292 = vunpack.c.l.b16 %v1188
    %v1293 = vunpack.c.l.b16 %v1189
    %v1294 = vunpack.c.l.b16 %v1190
    %v1295 = vunpack.c.l.b16 %v1191
    %v1296 = vunpack.c.l.b16 %v1192
    %v1297 = vunpack.c.l.b16 %v1193
    %v1298 = vunpack.c.l.b16 %v1194
    %v1299 = vunpack.c.l.b16 %v1195
    %v1300 = vunpack.c.l.b16 %v1196
    %v1301 = vunpack.c.l.b16 %v1197
    %v1302 = vunpack.c.l.b16 %v1198
    %v1303 = vunpack.c.l.b16 %v1199
    %v1304 = vunpack.c.l.b16 %v1200
    %v1305 = vunpack.c.l.b16 %v1201
    %v1306 = vunpack.c.l.b16 %v1202
    %v1307 = vunpack.c.l.b16 %v1203
    %v1308 = vunpack.c.l.b16 %v1204
    %v1309 = vunpack.c.l.b16 %v1205
    %v1310 = vunpack.c.l.b16 %v1206
    %v1311 = vunpack.c.l.b16 %v1207
    %v1312 = vunpack.c.l.b16 %v1208
    %v1313 = vunpack.c.l.b16 %v1209
    %v1314 = vunpack.c.l.b16 %v1210
    %v1315 = vunpack.c.l.b16 %v1211
    %v1316 = vunpack.c.l.b16 %v1212
    %v1317 = vunpack.c.l.b16 %v1213
    %v1318 = vunpack.c.l.b16 %v1214
    %v1319 = vunpack.c.l.b16 %v1215
    %v1320 = vunpack.c.l.b16 %v1216
    %v1321 = vunpack.c.l.b16 %v1217
    %v1322 = vunpack.c.l.b16 %v1218
    %v1323 = vunpack.c.l.b16 %v1219
    %v1324 = vunpack.c.l.b16 %v1220
    %v1325 = vunpack.c.l.b16 %v1221
    %v1326 = vunpack.c.l.b16 %v1222
    %v1327 = vunpack.c.l.b16 %v1223
    %v1328 = vunpack.c.l.b16 %v1224
    %v1329 = vpack.c.b16 %v1282, %v1281
    %v1330 = vpack.c.b16 %v1284, %v1283
    %v1331 = vpack.c.b16 %v1286, %v1285
    %v1332 = vpack.c.b16 %v1288, %v1287
    %v1333 = vpack.c.b16 %v1290, %v1289
    %v1334 = vpack.c.b16 %v1292, %v1291
    %v1335 = vpack.c.b16 %v1294, %v1293
    %v1336 = vpack.c.b16 %v1296, %v1295
    %v1337 = vpack.c.b16 %v1298, %v1297
    %v1338 = vpack.c.b16 %v1300, %v1299
    %v1339 = vpack.c.b16 %v1302, %v1301
    %v1340 = vpack.c.b16 %v1304, %v1303
    %v1341 = vpack.c.b16 %v1306, %v1305
    %v1342 = vpack.c.b16 %v1308, %v1307
    %v1343 = vpack.c.b16 %v1310, %v1309
    %v1344 = vpack.c.b16 %v1312, %v1311
    %v1345 = vpack.c.b16 %v1314, %v1313
    %v1346 = vpack.c.b16 %v1316, %v1315
    %v1347 = vpack.c.b16 %v1318, %v1317
    %v1348 = vpack.c.b16 %v1320, %v1319
    %v1349 = vpack.c.b16 %v1322, %v1321
    %v1350 = vpack.c.b16 %v1324, %v1323
    %v1351 = vpack.c.b16 %v1326, %v1325
    %v1352 = vpack.c.b16 %v1328, %v1327
    %1377 = vmatprep.subr.bf16.mxu0 0
    %1378 = vmatpush1.bf16.msra.mxu0 %v1329
    %1379 = vmatprep.subr.bf16.mxu0 0
    %1380 = vmatpush1.bf16.msra.mxu0 %v1330
    %1381 = vmatprep.subr.bf16.mxu0 0
    %1382 = vmatpush1.bf16.msra.mxu0 %v1331
    %1383 = vmatprep.subr.bf16.mxu0 0
    %1384 = vmatpush1.bf16.msra.mxu0 %v1332
    %1385 = vmatprep.subr.bf16.mxu0 0
    %1386 = vmatpush1.bf16.msra.mxu0 %v1333
    %1387 = vmatprep.subr.bf16.mxu0 0
    %1388 = vmatpush1.bf16.msra.mxu0 %v1334
    %1389 = vmatprep.subr.bf16.mxu0 0
    %1390 = vmatpush1.bf16.msra.mxu0 %v1335
    %1391 = vmatprep.subr.bf16.mxu0 0
    %1392 = vmatpush1.bf16.msra.mxu0 %v1336
    %1393 = vmatprep.subr.bf16.mxu0 0
    %1394 = vmatpush1.bf16.msra.mxu0 %v1337
    %1395 = vmatprep.subr.bf16.mxu0 0
    %1396 = vmatpush1.bf16.msra.mxu0 %v1338
    %1397 = vmatprep.subr.bf16.mxu0 0
    %1398 = vmatpush1.bf16.msra.mxu0 %v1339
    %1399 = vmatprep.subr.bf16.mxu0 0
    %1400 = vmatpush1.bf16.msra.mxu0 %v1340
    %1401 = vmatprep.subr.bf16.mxu0 0
    %1402 = vmatpush1.bf16.msra.mxu0 %v1341
    %1403 = vmatprep.subr.bf16.mxu0 0
    %1404 = vmatpush1.bf16.msra.mxu0 %v1342
    %1405 = vmatprep.subr.bf16.mxu0 0
    %1406 = vmatpush1.bf16.msra.mxu0 %v1343
    %1407 = vmatprep.subr.bf16.mxu0 0
    %1408 = vmatpush1.bf16.msra.mxu0 %v1344
    %1409 = vmatprep.mubr.bf16.mxu0 %v1171
    %1410 = vmatmul.mubr.bf16.gmra.mrb[0].mxu0 %v1170
    %v1411 = vpop.f32.mrb[0].mxu0
    %v1412 = vadd.f32 %v1231, %v1411
    %v1413 = vpop.f32.mrb[0].mxu0
    %v1414 = vpop.f32.mrb[0].mxu0
    %v1415 = vadd.f32 %v1231, %v1414
    %v1416 = vpop.f32.mrb[0].mxu0
    %1417 = vmatprep.mubr.bf16.mxu0 %v1174
    %1418 = vmatmul.mubr.bf16.gmra.mrb[0].mxu0 %v1173
    %v1419 = vpop.f32.mrb[0].mxu0
    %v1420 = vadd.f32 %v1231, %v1419
    %v1421 = vpop.f32.mrb[0].mxu0
    %v1422 = vpop.f32.mrb[0].mxu0
    %v1423 = vadd.f32 %v1231, %v1422
    %v1424 = vpop.f32.mrb[0].mxu0
    %1425 = vdwg.mxu0
    %1426 = vmatprep.subr.bf16.mxu0 0
    %1427 = vmatpush1.bf16.msra.mxu0 %v1345
    %1428 = vmatprep.subr.bf16.mxu0 0
    %1429 = vmatpush1.bf16.msra.mxu0 %v1346
    %1430 = vmatprep.subr.bf16.mxu0 0
    %1431 = vmatpush1.bf16.msra.mxu0 %v1347
    %1432 = vmatprep.subr.bf16.mxu0 0
    %1433 = vmatpush1.bf16.msra.mxu0 %v1348
    %1434 = vmatprep.subr.bf16.mxu0 0
    %1435 = vmatpush1.bf16.msra.mxu0 %v1349
    %1436 = vmatprep.subr.bf16.mxu0 0
    %1437 = vmatpush1.bf16.msra.mxu0 %v1350
    %1438 = vmatprep.subr.bf16.mxu0 0
    %1439 = vmatpush1.bf16.msra.mxu0 %v1351
    %1440 = vmatprep.subr.bf16.mxu0 0
    %1441 = vmatpush1.bf16.msra.mxu0 %v1352
    %1442 = vmatprep.subr.bf16.mxu0 0
    %1443 = vmatpush1.bf16.msra.mxu0 0
    %1444 = vmatprep.subr.bf16.mxu0 0
    %1445 = vmatpush1.bf16.msra.mxu0 0
    %1446 = vmatprep.subr.bf16.mxu0 0
    %1447 = vmatpush1.bf16.msra.mxu0 0
    %1448 = vmatprep.subr.bf16.mxu0 0
    %1449 = vmatpush1.bf16.msra.mxu0 0
    %1450 = vmatprep.subr.bf16.mxu0 0
    %1451 = vmatpush1.bf16.msra.mxu0 0
    %1452 = vmatprep.subr.bf16.mxu0 0
    %1453 = vmatpush1.bf16.msra.mxu0 0
    %1454 = vmatprep.subr.bf16.mxu0 0
    %1455 = vmatpush1.bf16.msra.mxu0 0
    %1456 = vmatprep.subr.bf16.mxu0 0
    %1457 = vmatpush1.bf16.msra.mxu0 0
    %1458 = vmatprep.mubr.bf16.mxu0 0
    %1459 = vmatmul.mubr.bf16.gmra.mrb[0].mxu0 %v1172
    %v1460 = vpop.f32.mrb[0].mxu0
    %v1461 = vadd.f32 %v1412, %v1460
    %v1462 = vpop.f32.mrb[0].mxu0
    %v1463 = vpop.f32.mrb[0].mxu0
    %v1464 = vadd.f32 %v1415, %v1463
    %v1465 = vpop.f32.mrb[0].mxu0
    %1466 = vmatprep.mubr.bf16.mxu0 0
    %1467 = vmatmul.mubr.bf16.gmra.mrb[0].mxu0 %v1175
    %v1468 = vpop.f32.mrb[0].mxu0
    %v1469 = vadd.f32 %v1420, %v1468
    %v1470 = vpop.f32.mrb[0].mxu0
    %v1471 = vpop.f32.mrb[0].mxu0
    %v1472 = vadd.f32 %v1423, %v1471
    %v1473 = vpop.f32.mrb[0].mxu0
    %1474 = vdwg.mxu0
    %v1475 = vadd.f32 %v1461, %v761
    %v1476 = vadd.f32 %v1464, %v762
    %v1477 = vadd.f32 %v1469, %v763
    %v1478 = vadd.f32 %v1472, %v764
    %1479 = vst [vmem:[#allocation2 + $0x8] sm:$0xff] %v1475
    %1480 = vst [vmem:[#allocation2 + $0x20] sm:$0xff] %v1476
    %1481 = vst [vmem:[#allocation2 + $0x38] sm:$0xff] %v1477
    %1482 = vst [vmem:[#allocation2 + $0x50] sm:$0xff] %v1478
    %v1485 = vrot.slane %v1475, 7
    %v1486 = vrot.slane %v1476, 7
    %v1487 = vsel %vm57, %v1485, %v1486
    %1490 = vst [vmem:[#allocation2] sm:$0xfe] %v1485
    %1491 = vst [vmem:[#allocation2 + $0x18] sm:$0xff] %v1487
    %v1492 = vrot.slane %v1475, 1
    %v1493 = vrot.slane %v1476, 1
    %v1494 = vsel %vm65, %v1492, %v1493
    %1497 = vst [vmem:[#allocation2 + $0x10] sm:$0xff] %v1494
    %1498 = vst [vmem:[#allocation2 + $0x28] sm:$0x7f] %v1493
    %v1501 = vrot.slane %v1477, 7
    %v1502 = vrot.slane %v1478, 7
    %v1503 = vsel %vm57, %v1501, %v1502
    %1506 = vst [vmem:[#allocation2 + $0x30] sm:$0xfe] %v1501
    %1507 = vst [vmem:[#allocation2 + $0x48] sm:$0xff] %v1503
    %v1508 = vrot.slane %v1477, 1
    %v1509 = vrot.slane %v1478, 1
    %v1510 = vsel %vm65, %v1508, %v1509
    %1513 = vst [vmem:[#allocation2 + $0x40] sm:$0xff] %v1510
    %1514 = vst [vmem:[#allocation2 + $0x58] sm:$0x7f] %v1509
    %v1515 = vld [vmem:[#allocation2] sm:$0xff]
    %v1516 = vld [vmem:[#allocation2 + $0x8] sm:$0xff]
    %v1517 = vld [vmem:[#allocation2 + $0x10] sm:$0xff]
    %v1518 = vld [vmem:[#allocation2 + $0x18] sm:$0xff]
    %v1519 = vld [vmem:[#allocation2 + $0x20] sm:$0xff]
    %v1520 = vld [vmem:[#allocation2 + $0x28] sm:$0xff]
    %v1521 = vld [vmem:[#allocation2 + $0x30] sm:$0xff]
    %v1522 = vld [vmem:[#allocation2 + $0x38] sm:$0xff]
    %v1523 = vld [vmem:[#allocation2 + $0x40] sm:$0xff]
    %v1524 = vld [vmem:[#allocation2 + $0x48] sm:$0xff]
    %v1525 = vld [vmem:[#allocation2 + $0x50] sm:$0xff]
    %v1526 = vld [vmem:[#allocation2 + $0x58] sm:$0xff]
    %v1527 = vpack.c.bf16 %v1518, %v1515
    %v1528 = vpack.c.bf16 %v1519, %v1516
    %v1529 = vpack.c.bf16 %v1520, %v1517
    %v1530 = vpack.c.bf16 %v1524, %v1521
    %v1531 = vpack.c.bf16 %v1525, %v1522
    %v1532 = vpack.c.bf16 %v1526, %v1523
    %s1533 = scalar_lea.vmem [#allocation3], 768
    %v1534 = vld [vmem:[%s1533] sm:$0xf]
    %v1535 = vld [vmem:[%s1533 + $0x4] sm:$0xf]
    %v1536 = vld [vmem:[%s1533 + $0x8] sm:$0xf]
    %v1537 = vld [vmem:[%s1533 + $0xc] sm:$0xf]
    %v1538 = vld [vmem:[%s1533 + $0x10] sm:$0xf]
    %v1539 = vld [vmem:[%s1533 + $0x14] sm:$0xf]
    %v1540 = vld [vmem:[%s1533 + $0x18] sm:$0xf]
    %v1541 = vld [vmem:[%s1533 + $0x1c] sm:$0xf]
    %v1542 = vld [vmem:[%s1533 + $0x20] sm:$0xf]
    %v1543 = vld [vmem:[%s1533 + $0x24] sm:$0xf]
    %v1544 = vld [vmem:[%s1533 + $0x28] sm:$0xf]
    %v1545 = vld [vmem:[%s1533 + $0x2c] sm:$0xf]
    %v1546 = vld [vmem:[%s1533 + $0x30] sm:$0xf]
    %v1547 = vld [vmem:[%s1533 + $0x34] sm:$0xf]
    %v1548 = vld [vmem:[%s1533 + $0x38] sm:$0xf]
    %v1549 = vld [vmem:[%s1533 + $0x3c] sm:$0xf]
    %v1550 = vld [vmem:[%s1533 + $0x40] sm:$0xf]
    %v1551 = vld [vmem:[%s1533 + $0x44] sm:$0xf]
    %v1552 = vld [vmem:[%s1533 + $0x48] sm:$0xf]
    %v1553 = vld [vmem:[%s1533 + $0x4c] sm:$0xf]
    %v1554 = vld [vmem:[%s1533 + $0x50] sm:$0xf]
    %v1555 = vld [vmem:[%s1533 + $0x54] sm:$0xf]
    %v1556 = vld [vmem:[%s1533 + $0x58] sm:$0xf]
    %v1557 = vld [vmem:[%s1533 + $0x5c] sm:$0xf]
    %v1558 = vld [vmem:[%s1533 + $0x60] sm:$0xf]
    %v1559 = vld [vmem:[%s1533 + $0x64] sm:$0xf]
    %v1560 = vld [vmem:[%s1533 + $0x68] sm:$0xf]
    %v1561 = vld [vmem:[%s1533 + $0x6c] sm:$0xf]
    %v1562 = vld [vmem:[%s1533 + $0x70] sm:$0xf]
    %v1563 = vld [vmem:[%s1533 + $0x74] sm:$0xf]
    %v1564 = vld [vmem:[%s1533 + $0x78] sm:$0xf]
    %v1565 = vld [vmem:[%s1533 + $0x7c] sm:$0xf]
    %v1566 = vld [vmem:[%s1533 + $0x80] sm:$0xf]
    %v1567 = vld [vmem:[%s1533 + $0x84] sm:$0xf]
    %v1568 = vld [vmem:[%s1533 + $0x88] sm:$0xf]
    %v1569 = vld [vmem:[%s1533 + $0x8c] sm:$0xf]
    %v1570 = vld [vmem:[%s1533 + $0x90] sm:$0xf]
    %v1571 = vld [vmem:[%s1533 + $0x94] sm:$0xf]
    %v1572 = vld [vmem:[%s1533 + $0x98] sm:$0xf]
    %v1573 = vld [vmem:[%s1533 + $0x9c] sm:$0xf]
    %v1574 = vld [vmem:[%s1533 + $0xa0] sm:$0xf]
    %v1575 = vld [vmem:[%s1533 + $0xa4] sm:$0xf]
    %v1576 = vld [vmem:[%s1533 + $0xa8] sm:$0xf]
    %v1577 = vld [vmem:[%s1533 + $0xac] sm:$0xf]
    %v1578 = vld [vmem:[%s1533 + $0xb0] sm:$0xf]
    %v1579 = vld [vmem:[%s1533 + $0xb4] sm:$0xf]
    %v1580 = vld [vmem:[%s1533 + $0xb8] sm:$0xf]
    %v1581 = vld [vmem:[%s1533 + $0xbc] sm:$0xf]
    %s1582 = scalar_lea.vmem [#allocation5], 4
    %v1583 = vld [vmem:[%s1582] sm:$0x1]
    %v1585 = vlaneseq
    %v1586 = vshrl.u32 %v1585, 7
    %v1587 = vsub.s32 0, %v1586
    %v1588 = vrot.slane %v1583, %v1587
    %v1638 = vunpack.c.l.b16 %v1534
    %v1639 = vunpack.c.l.b16 %v1535
    %v1640 = vunpack.c.l.b16 %v1536
    %v1641 = vunpack.c.l.b16 %v1537
    %v1642 = vunpack.c.l.b16 %v1538
    %v1643 = vunpack.c.l.b16 %v1539
    %v1644 = vunpack.c.l.b16 %v1540
    %v1645 = vunpack.c.l.b16 %v1541
    %v1646 = vunpack.c.l.b16 %v1542
    %v1647 = vunpack.c.l.b16 %v1543
    %v1648 = vunpack.c.l.b16 %v1544
    %v1649 = vunpack.c.l.b16 %v1545
    %v1650 = vunpack.c.l.b16 %v1546
    %v1651 = vunpack.c.l.b16 %v1547
    %v1652 = vunpack.c.l.b16 %v1548
    %v1653 = vunpack.c.l.b16 %v1549
    %v1654 = vunpack.c.l.b16 %v1550
    %v1655 = vunpack.c.l.b16 %v1551
    %v1656 = vunpack.c.l.b16 %v1552
    %v1657 = vunpack.c.l.b16 %v1553
    %v1658 = vunpack.c.l.b16 %v1554
    %v1659 = vunpack.c.l.b16 %v1555
    %v1660 = vunpack.c.l.b16 %v1556
    %v1661 = vunpack.c.l.b16 %v1557
    %v1662 = vunpack.c.l.b16 %v1558
    %v1663 = vunpack.c.l.b16 %v1559
    %v1664 = vunpack.c.l.b16 %v1560
    %v1665 = vunpack.c.l.b16 %v1561
    %v1666 = vunpack.c.l.b16 %v1562
    %v1667 = vunpack.c.l.b16 %v1563
    %v1668 = vunpack.c.l.b16 %v1564
    %v1669 = vunpack.c.l.b16 %v1565
    %v1670 = vunpack.c.l.b16 %v1566
    %v1671 = vunpack.c.l.b16 %v1567
    %v1672 = vunpack.c.l.b16 %v1568
    %v1673 = vunpack.c.l.b16 %v1569
    %v1674 = vunpack.c.l.b16 %v1570
    %v1675 = vunpack.c.l.b16 %v1571
    %v1676 = vunpack.c.l.b16 %v1572
    %v1677 = vunpack.c.l.b16 %v1573
    %v1678 = vunpack.c.l.b16 %v1574
    %v1679 = vunpack.c.l.b16 %v1575
    %v1680 = vunpack.c.l.b16 %v1576
    %v1681 = vunpack.c.l.b16 %v1577
    %v1682 = vunpack.c.l.b16 %v1578
    %v1683 = vunpack.c.l.b16 %v1579
    %v1684 = vunpack.c.l.b16 %v1580
    %v1685 = vunpack.c.l.b16 %v1581
    %v1686 = vpack.c.b16 %v1639, %v1638
    %v1687 = vpack.c.b16 %v1641, %v1640
    %v1688 = vpack.c.b16 %v1643, %v1642
    %v1689 = vpack.c.b16 %v1645, %v1644
    %v1690 = vpack.c.b16 %v1647, %v1646
    %v1691 = vpack.c.b16 %v1649, %v1648
    %v1692 = vpack.c.b16 %v1651, %v1650
    %v1693 = vpack.c.b16 %v1653, %v1652
    %v1694 = vpack.c.b16 %v1655, %v1654
    %v1695 = vpack.c.b16 %v1657, %v1656
    %v1696 = vpack.c.b16 %v1659, %v1658
    %v1697 = vpack.c.b16 %v1661, %v1660
    %v1698 = vpack.c.b16 %v1663, %v1662
    %v1699 = vpack.c.b16 %v1665, %v1664
    %v1700 = vpack.c.b16 %v1667, %v1666
    %v1701 = vpack.c.b16 %v1669, %v1668
    %v1702 = vpack.c.b16 %v1671, %v1670
    %v1703 = vpack.c.b16 %v1673, %v1672
    %v1704 = vpack.c.b16 %v1675, %v1674
    %v1705 = vpack.c.b16 %v1677, %v1676
    %v1706 = vpack.c.b16 %v1679, %v1678
    %v1707 = vpack.c.b16 %v1681, %v1680
    %v1708 = vpack.c.b16 %v1683, %v1682
    %v1709 = vpack.c.b16 %v1685, %v1684
    %1734 = vmatprep.subr.bf16.mxu0 0
    %1735 = vmatpush1.bf16.msra.mxu0 %v1686
    %1736 = vmatprep.subr.bf16.mxu0 0
    %1737 = vmatpush1.bf16.msra.mxu0 %v1687
    %1738 = vmatprep.subr.bf16.mxu0 0
    %1739 = vmatpush1.bf16.msra.mxu0 %v1688
    %1740 = vmatprep.subr.bf16.mxu0 0
    %1741 = vmatpush1.bf16.msra.mxu0 %v1689
    %1742 = vmatprep.subr.bf16.mxu0 0
    %1743 = vmatpush1.bf16.msra.mxu0 %v1690
    %1744 = vmatprep.subr.bf16.mxu0 0
    %1745 = vmatpush1.bf16.msra.mxu0 %v1691
    %1746 = vmatprep.subr.bf16.mxu0 0
    %1747 = vmatpush1.bf16.msra.mxu0 %v1692
    %1748 = vmatprep.subr.bf16.mxu0 0
    %1749 = vmatpush1.bf16.msra.mxu0 %v1693
    %1750 = vmatprep.subr.bf16.mxu0 0
    %1751 = vmatpush1.bf16.msra.mxu0 %v1694
    %1752 = vmatprep.subr.bf16.mxu0 0
    %1753 = vmatpush1.bf16.msra.mxu0 %v1695
    %1754 = vmatprep.subr.bf16.mxu0 0
    %1755 = vmatpush1.bf16.msra.mxu0 %v1696
    %1756 = vmatprep.subr.bf16.mxu0 0
    %1757 = vmatpush1.bf16.msra.mxu0 %v1697
    %1758 = vmatprep.subr.bf16.mxu0 0
    %1759 = vmatpush1.bf16.msra.mxu0 %v1698
    %1760 = vmatprep.subr.bf16.mxu0 0
    %1761 = vmatpush1.bf16.msra.mxu0 %v1699
    %1762 = vmatprep.subr.bf16.mxu0 0
    %1763 = vmatpush1.bf16.msra.mxu0 %v1700
    %1764 = vmatprep.subr.bf16.mxu0 0
    %1765 = vmatpush1.bf16.msra.mxu0 %v1701
    %1766 = vmatprep.mubr.bf16.mxu0 %v1528
    %1767 = vmatmul.mubr.bf16.gmra.mrb[0].mxu0 %v1527
    %v1768 = vpop.f32.mrb[0].mxu0
    %v1769 = vadd.f32 %v1588, %v1768
    %v1770 = vpop.f32.mrb[0].mxu0
    %v1771 = vpop.f32.mrb[0].mxu0
    %v1772 = vadd.f32 %v1588, %v1771
    %v1773 = vpop.f32.mrb[0].mxu0
    %1774 = vmatprep.mubr.bf16.mxu0 %v1531
    %1775 = vmatmul.mubr.bf16.gmra.mrb[0].mxu0 %v1530
    %v1776 = vpop.f32.mrb[0].mxu0
    %v1777 = vadd.f32 %v1588, %v1776
    %v1778 = vpop.f32.mrb[0].mxu0
    %v1779 = vpop.f32.mrb[0].mxu0
    %v1780 = vadd.f32 %v1588, %v1779
    %v1781 = vpop.f32.mrb[0].mxu0
    %1782 = vdwg.mxu0
    %1783 = vmatprep.subr.bf16.mxu0 0
    %1784 = vmatpush1.bf16.msra.mxu0 %v1702
    %1785 = vmatprep.subr.bf16.mxu0 0
    %1786 = vmatpush1.bf16.msra.mxu0 %v1703
    %1787 = vmatprep.subr.bf16.mxu0 0
    %1788 = vmatpush1.bf16.msra.mxu0 %v1704
    %1789 = vmatprep.subr.bf16.mxu0 0
    %1790 = vmatpush1.bf16.msra.mxu0 %v1705
    %1791 = vmatprep.subr.bf16.mxu0 0
    %1792 = vmatpush1.bf16.msra.mxu0 %v1706
    %1793 = vmatprep.subr.bf16.mxu0 0
    %1794 = vmatpush1.bf16.msra.mxu0 %v1707
    %1795 = vmatprep.subr.bf16.mxu0 0
    %1796 = vmatpush1.bf16.msra.mxu0 %v1708
    %1797 = vmatprep.subr.bf16.mxu0 0
    %1798 = vmatpush1.bf16.msra.mxu0 %v1709
    %1799 = vmatprep.subr.bf16.mxu0 0
    %1800 = vmatpush1.bf16.msra.mxu0 0
    %1801 = vmatprep.subr.bf16.mxu0 0
    %1802 = vmatpush1.bf16.msra.mxu0 0
    %1803 = vmatprep.subr.bf16.mxu0 0
    %1804 = vmatpush1.bf16.msra.mxu0 0
    %1805 = vmatprep.subr.bf16.mxu0 0
    %1806 = vmatpush1.bf16.msra.mxu0 0
    %1807 = vmatprep.subr.bf16.mxu0 0
    %1808 = vmatpush1.bf16.msra.mxu0 0
    %1809 = vmatprep.subr.bf16.mxu0 0
    %1810 = vmatpush1.bf16.msra.mxu0 0
    %1811 = vmatprep.subr.bf16.mxu0 0
    %1812 = vmatpush1.bf16.msra.mxu0 0
    %1813 = vmatprep.subr.bf16.mxu0 0
    %1814 = vmatpush1.bf16.msra.mxu0 0
    %1815 = vmatprep.mubr.bf16.mxu0 0
    %1816 = vmatmul.mubr.bf16.gmra.mrb[0].mxu0 %v1529
    %v1817 = vpop.f32.mrb[0].mxu0
    %v1818 = vadd.f32 %v1769, %v1817
    %v1819 = vpop.f32.mrb[0].mxu0
    %v1820 = vpop.f32.mrb[0].mxu0
    %v1821 = vadd.f32 %v1772, %v1820
    %v1822 = vpop.f32.mrb[0].mxu0
    %1823 = vmatprep.mubr.bf16.mxu0 0
    %1824 = vmatmul.mubr.bf16.gmra.mrb[0].mxu0 %v1532
    %v1825 = vpop.f32.mrb[0].mxu0
    %v1826 = vadd.f32 %v1777, %v1825
    %v1827 = vpop.f32.mrb[0].mxu0
    %v1828 = vpop.f32.mrb[0].mxu0
    %v1829 = vadd.f32 %v1780, %v1828
    %v1830 = vpop.f32.mrb[0].mxu0
    %1831 = vdwg.mxu0
    %v1832 = vmax.f32 %v1818, 0.0
    %v1833 = vmax.f32 %v1821, 0.0
    %v1834 = vmax.f32 %v1826, 0.0
    %v1835 = vmax.f32 %v1829, 0.0
    %1836 = vst [vmem:[#allocation2 + $0x8] sm:$0xff] %v1832
    %1837 = vst [vmem:[#allocation2 + $0x20] sm:$0xff] %v1833
    %1838 = vst [vmem:[#allocation2 + $0x38] sm:$0xff] %v1834
    %1839 = vst [vmem:[#allocation2 + $0x50] sm:$0xff] %v1835
    %v1842 = vrot.slane %v1832, 7
    %v1843 = vrot.slane %v1833, 7
    %v1844 = vsel %vm57, %v1842, %v1843
    %1847 = vst [vmem:[#allocation2] sm:$0xfe] %v1842
    %1848 = vst [vmem:[#allocation2 + $0x18] sm:$0xff] %v1844
    %v1849 = vrot.slane %v1832, 1
    %v1850 = vrot.slane %v1833, 1
    %v1851 = vsel %vm65, %v1849, %v1850
    %1854 = vst [vmem:[#allocation2 + $0x10] sm:$0xff] %v1851
    %1855 = vst [vmem:[#allocation2 + $0x28] sm:$0x7f] %v1850
    %v1858 = vrot.slane %v1834, 7
    %v1859 = vrot.slane %v1835, 7
    %v1860 = vsel %vm57, %v1858, %v1859
    %1863 = vst [vmem:[#allocation2 + $0x30] sm:$0xfe] %v1858
    %1864 = vst [vmem:[#allocation2 + $0x48] sm:$0xff] %v1860
    %v1865 = vrot.slane %v1834, 1
    %v1866 = vrot.slane %v1835, 1
    %v1867 = vsel %vm65, %v1865, %v1866
    %1870 = vst [vmem:[#allocation2 + $0x40] sm:$0xff] %v1867
    %1871 = vst [vmem:[#allocation2 + $0x58] sm:$0x7f] %v1866
    %v1872 = vld [vmem:[#allocation2] sm:$0xff]
    %v1873 = vld [vmem:[#allocation2 + $0x8] sm:$0xff]
    %v1874 = vld [vmem:[#allocation2 + $0x10] sm:$0xff]
    %v1875 = vld [vmem:[#allocation2 + $0x18] sm:$0xff]
    %v1876 = vld [vmem:[#allocation2 + $0x20] sm:$0xff]
    %v1877 = vld [vmem:[#allocation2 + $0x28] sm:$0xff]
    %v1878 = vld [vmem:[#allocation2 + $0x30] sm:$0xff]
    %v1879 = vld [vmem:[#allocation2 + $0x38] sm:$0xff]
    %v1880 = vld [vmem:[#allocation2 + $0x40] sm:$0xff]
    %v1881 = vld [vmem:[#allocation2 + $0x48] sm:$0xff]
    %v1882 = vld [vmem:[#allocation2 + $0x50] sm:$0xff]
    %v1883 = vld [vmem:[#allocation2 + $0x58] sm:$0xff]
    %v1884 = vpack.c.bf16 %v1875, %v1872
    %v1885 = vpack.c.bf16 %v1876, %v1873
    %v1886 = vpack.c.bf16 %v1877, %v1874
    %v1887 = vpack.c.bf16 %v1881, %v1878
    %v1888 = vpack.c.bf16 %v1882, %v1879
    %v1889 = vpack.c.bf16 %v1883, %v1880
    %s1890 = scalar_lea.vmem [#allocation3], 960
    %v1891 = vld [vmem:[%s1890] sm:$0xf]
    %v1892 = vld [vmem:[%s1890 + $0x4] sm:$0xf]
    %v1893 = vld [vmem:[%s1890 + $0x8] sm:$0xf]
    %v1894 = vld [vmem:[%s1890 + $0xc] sm:$0xf]
    %v1895 = vld [vmem:[%s1890 + $0x10] sm:$0xf]
    %v1896 = vld [vmem:[%s1890 + $0x14] sm:$0xf]
    %v1897 = vld [vmem:[%s1890 + $0x18] sm:$0xf]
    %v1898 = vld [vmem:[%s1890 + $0x1c] sm:$0xf]
    %v1899 = vld [vmem:[%s1890 + $0x20] sm:$0xf]
    %v1900 = vld [vmem:[%s1890 + $0x24] sm:$0xf]
    %v1901 = vld [vmem:[%s1890 + $0x28] sm:$0xf]
    %v1902 = vld [vmem:[%s1890 + $0x2c] sm:$0xf]
    %v1903 = vld [vmem:[%s1890 + $0x30] sm:$0xf]
    %v1904 = vld [vmem:[%s1890 + $0x34] sm:$0xf]
    %v1905 = vld [vmem:[%s1890 + $0x38] sm:$0xf]
    %v1906 = vld [vmem:[%s1890 + $0x3c] sm:$0xf]
    %v1907 = vld [vmem:[%s1890 + $0x40] sm:$0xf]
    %v1908 = vld [vmem:[%s1890 + $0x44] sm:$0xf]
    %v1909 = vld [vmem:[%s1890 + $0x48] sm:$0xf]
    %v1910 = vld [vmem:[%s1890 + $0x4c] sm:$0xf]
    %v1911 = vld [vmem:[%s1890 + $0x50] sm:$0xf]
    %v1912 = vld [vmem:[%s1890 + $0x54] sm:$0xf]
    %v1913 = vld [vmem:[%s1890 + $0x58] sm:$0xf]
    %v1914 = vld [vmem:[%s1890 + $0x5c] sm:$0xf]
    %v1915 = vld [vmem:[%s1890 + $0x60] sm:$0xf]
    %v1916 = vld [vmem:[%s1890 + $0x64] sm:$0xf]
    %v1917 = vld [vmem:[%s1890 + $0x68] sm:$0xf]
    %v1918 = vld [vmem:[%s1890 + $0x6c] sm:$0xf]
    %v1919 = vld [vmem:[%s1890 + $0x70] sm:$0xf]
    %v1920 = vld [vmem:[%s1890 + $0x74] sm:$0xf]
    %v1921 = vld [vmem:[%s1890 + $0x78] sm:$0xf]
    %v1922 = vld [vmem:[%s1890 + $0x7c] sm:$0xf]
    %v1923 = vld [vmem:[%s1890 + $0x80] sm:$0xf]
    %v1924 = vld [vmem:[%s1890 + $0x84] sm:$0xf]
    %v1925 = vld [vmem:[%s1890 + $0x88] sm:$0xf]
    %v1926 = vld [vmem:[%s1890 + $0x8c] sm:$0xf]
    %v1927 = vld [vmem:[%s1890 + $0x90] sm:$0xf]
    %v1928 = vld [vmem:[%s1890 + $0x94] sm:$0xf]
    %v1929 = vld [vmem:[%s1890 + $0x98] sm:$0xf]
    %v1930 = vld [vmem:[%s1890 + $0x9c] sm:$0xf]
    %v1931 = vld [vmem:[%s1890 + $0xa0] sm:$0xf]
    %v1932 = vld [vmem:[%s1890 + $0xa4] sm:$0xf]
    %v1933 = vld [vmem:[%s1890 + $0xa8] sm:$0xf]
    %v1934 = vld [vmem:[%s1890 + $0xac] sm:$0xf]
    %v1935 = vld [vmem:[%s1890 + $0xb0] sm:$0xf]
    %v1936 = vld [vmem:[%s1890 + $0xb4] sm:$0xf]
    %v1937 = vld [vmem:[%s1890 + $0xb8] sm:$0xf]
    %v1938 = vld [vmem:[%s1890 + $0xbc] sm:$0xf]
    %s1939 = scalar_lea.vmem [#allocation5], 5
    %v1940 = vld [vmem:[%s1939] sm:$0x1]
    %v1942 = vlaneseq
    %v1943 = vshrl.u32 %v1942, 7
    %v1944 = vsub.s32 0, %v1943
    %v1945 = vrot.slane %v1940, %v1944
    %v1995 = vunpack.c.l.b16 %v1891
    %v1996 = vunpack.c.l.b16 %v1892
    %v1997 = vunpack.c.l.b16 %v1893
    %v1998 = vunpack.c.l.b16 %v1894
    %v1999 = vunpack.c.l.b16 %v1895
    %v2000 = vunpack.c.l.b16 %v1896
    %v2001 = vunpack.c.l.b16 %v1897
    %v2002 = vunpack.c.l.b16 %v1898
    %v2003 = vunpack.c.l.b16 %v1899
    %v2004 = vunpack.c.l.b16 %v1900
    %v2005 = vunpack.c.l.b16 %v1901
    %v2006 = vunpack.c.l.b16 %v1902
    %v2007 = vunpack.c.l.b16 %v1903
    %v2008 = vunpack.c.l.b16 %v1904
    %v2009 = vunpack.c.l.b16 %v1905
    %v2010 = vunpack.c.l.b16 %v1906
    %v2011 = vunpack.c.l.b16 %v1907
    %v2012 = vunpack.c.l.b16 %v1908
    %v2013 = vunpack.c.l.b16 %v1909
    %v2014 = vunpack.c.l.b16 %v1910
    %v2015 = vunpack.c.l.b16 %v1911
    %v2016 = vunpack.c.l.b16 %v1912
    %v2017 = vunpack.c.l.b16 %v1913
    %v2018 = vunpack.c.l.b16 %v1914
    %v2019 = vunpack.c.l.b16 %v1915
    %v2020 = vunpack.c.l.b16 %v1916
    %v2021 = vunpack.c.l.b16 %v1917
    %v2022 = vunpack.c.l.b16 %v1918
    %v2023 = vunpack.c.l.b16 %v1919
    %v2024 = vunpack.c.l.b16 %v1920
    %v2025 = vunpack.c.l.b16 %v1921
    %v2026 = vunpack.c.l.b16 %v1922
    %v2027 = vunpack.c.l.b16 %v1923
    %v2028 = vunpack.c.l.b16 %v1924
    %v2029 = vunpack.c.l.b16 %v1925
    %v2030 = vunpack.c.l.b16 %v1926
    %v2031 = vunpack.c.l.b16 %v1927
    %v2032 = vunpack.c.l.b16 %v1928
    %v2033 = vunpack.c.l.b16 %v1929
    %v2034 = vunpack.c.l.b16 %v1930
    %v2035 = vunpack.c.l.b16 %v1931
    %v2036 = vunpack.c.l.b16 %v1932
    %v2037 = vunpack.c.l.b16 %v1933
    %v2038 = vunpack.c.l.b16 %v1934
    %v2039 = vunpack.c.l.b16 %v1935
    %v2040 = vunpack.c.l.b16 %v1936
    %v2041 = vunpack.c.l.b16 %v1937
    %v2042 = vunpack.c.l.b16 %v1938
    %v2043 = vpack.c.b16 %v1996, %v1995
    %v2044 = vpack.c.b16 %v1998, %v1997
    %v2045 = vpack.c.b16 %v2000, %v1999
    %v2046 = vpack.c.b16 %v2002, %v2001
    %v2047 = vpack.c.b16 %v2004, %v2003
    %v2048 = vpack.c.b16 %v2006, %v2005
    %v2049 = vpack.c.b16 %v2008, %v2007
    %v2050 = vpack.c.b16 %v2010, %v2009
    %v2051 = vpack.c.b16 %v2012, %v2011
    %v2052 = vpack.c.b16 %v2014, %v2013
    %v2053 = vpack.c.b16 %v2016, %v2015
    %v2054 = vpack.c.b16 %v2018, %v2017
    %v2055 = vpack.c.b16 %v2020, %v2019
    %v2056 = vpack.c.b16 %v2022, %v2021
    %v2057 = vpack.c.b16 %v2024, %v2023
    %v2058 = vpack.c.b16 %v2026, %v2025
    %v2059 = vpack.c.b16 %v2028, %v2027
    %v2060 = vpack.c.b16 %v2030, %v2029
    %v2061 = vpack.c.b16 %v2032, %v2031
    %v2062 = vpack.c.b16 %v2034, %v2033
    %v2063 = vpack.c.b16 %v2036, %v2035
    %v2064 = vpack.c.b16 %v2038, %v2037
    %v2065 = vpack.c.b16 %v2040, %v2039
    %v2066 = vpack.c.b16 %v2042, %v2041
    %2091 = vmatprep.subr.bf16.mxu0 0
    %2092 = vmatpush1.bf16.msra.mxu0 %v2043
    %2093 = vmatprep.subr.bf16.mxu0 0
    %2094 = vmatpush1.bf16.msra.mxu0 %v2044
    %2095 = vmatprep.subr.bf16.mxu0 0
    %2096 = vmatpush1.bf16.msra.mxu0 %v2045
    %2097 = vmatprep.subr.bf16.mxu0 0
    %2098 = vmatpush1.bf16.msra.mxu0 %v2046
    %2099 = vmatprep.subr.bf16.mxu0 0
    %2100 = vmatpush1.bf16.msra.mxu0 %v2047
    %2101 = vmatprep.subr.bf16.mxu0 0
    %2102 = vmatpush1.bf16.msra.mxu0 %v2048
    %2103 = vmatprep.subr.bf16.mxu0 0
    %2104 = vmatpush1.bf16.msra.mxu0 %v2049
    %2105 = vmatprep.subr.bf16.mxu0 0
    %2106 = vmatpush1.bf16.msra.mxu0 %v2050
    %2107 = vmatprep.subr.bf16.mxu0 0
    %2108 = vmatpush1.bf16.msra.mxu0 %v2051
    %2109 = vmatprep.subr.bf16.mxu0 0
    %2110 = vmatpush1.bf16.msra.mxu0 %v2052
    %2111 = vmatprep.subr.bf16.mxu0 0
    %2112 = vmatpush1.bf16.msra.mxu0 %v2053
    %2113 = vmatprep.subr.bf16.mxu0 0
    %2114 = vmatpush1.bf16.msra.mxu0 %v2054
    %2115 = vmatprep.subr.bf16.mxu0 0
    %2116 = vmatpush1.bf16.msra.mxu0 %v2055
    %2117 = vmatprep.subr.bf16.mxu0 0
    %2118 = vmatpush1.bf16.msra.mxu0 %v2056
    %2119 = vmatprep.subr.bf16.mxu0 0
    %2120 = vmatpush1.bf16.msra.mxu0 %v2057
    %2121 = vmatprep.subr.bf16.mxu0 0
    %2122 = vmatpush1.bf16.msra.mxu0 %v2058
    %2123 = vmatprep.mubr.bf16.mxu0 %v1885
    %2124 = vmatmul.mubr.bf16.gmra.mrb[0].mxu0 %v1884
    %v2125 = vpop.f32.mrb[0].mxu0
    %v2126 = vadd.f32 %v1945, %v2125
    %v2127 = vpop.f32.mrb[0].mxu0
    %v2128 = vpop.f32.mrb[0].mxu0
    %v2129 = vadd.f32 %v1945, %v2128
    %v2130 = vpop.f32.mrb[0].mxu0
    %2131 = vmatprep.mubr.bf16.mxu0 %v1888
    %2132 = vmatmul.mubr.bf16.gmra.mrb[0].mxu0 %v1887
    %v2133 = vpop.f32.mrb[0].mxu0
    %v2134 = vadd.f32 %v1945, %v2133
    %v2135 = vpop.f32.mrb[0].mxu0
    %v2136 = vpop.f32.mrb[0].mxu0
    %v2137 = vadd.f32 %v1945, %v2136
    %v2138 = vpop.f32.mrb[0].mxu0
    %2139 = vdwg.mxu0
    %2140 = vmatprep.subr.bf16.mxu0 0
    %2141 = vmatpush1.bf16.msra.mxu0 %v2059
    %2142 = vmatprep.subr.bf16.mxu0 0
    %2143 = vmatpush1.bf16.msra.mxu0 %v2060
    %2144 = vmatprep.subr.bf16.mxu0 0
    %2145 = vmatpush1.bf16.msra.mxu0 %v2061
    %2146 = vmatprep.subr.bf16.mxu0 0
    %2147 = vmatpush1.bf16.msra.mxu0 %v2062
    %2148 = vmatprep.subr.bf16.mxu0 0
    %2149 = vmatpush1.bf16.msra.mxu0 %v2063
    %2150 = vmatprep.subr.bf16.mxu0 0
    %2151 = vmatpush1.bf16.msra.mxu0 %v2064
    %2152 = vmatprep.subr.bf16.mxu0 0
    %2153 = vmatpush1.bf16.msra.mxu0 %v2065
    %2154 = vmatprep.subr.bf16.mxu0 0
    %2155 = vmatpush1.bf16.msra.mxu0 %v2066
    %2156 = vmatprep.subr.bf16.mxu0 0
    %2157 = vmatpush1.bf16.msra.mxu0 0
    %2158 = vmatprep.subr.bf16.mxu0 0
    %2159 = vmatpush1.bf16.msra.mxu0 0
    %2160 = vmatprep.subr.bf16.mxu0 0
    %2161 = vmatpush1.bf16.msra.mxu0 0
    %2162 = vmatprep.subr.bf16.mxu0 0
    %2163 = vmatpush1.bf16.msra.mxu0 0
    %2164 = vmatprep.subr.bf16.mxu0 0
    %2165 = vmatpush1.bf16.msra.mxu0 0
    %2166 = vmatprep.subr.bf16.mxu0 0
    %2167 = vmatpush1.bf16.msra.mxu0 0
    %2168 = vmatprep.subr.bf16.mxu0 0
    %2169 = vmatpush1.bf16.msra.mxu0 0
    %2170 = vmatprep.subr.bf16.mxu0 0
    %2171 = vmatpush1.bf16.msra.mxu0 0
    %2172 = vmatprep.mubr.bf16.mxu0 0
    %2173 = vmatmul.mubr.bf16.gmra.mrb[0].mxu0 %v1886
    %v2174 = vpop.f32.mrb[0].mxu0
    %v2175 = vadd.f32 %v2126, %v2174
    %v2176 = vpop.f32.mrb[0].mxu0
    %v2177 = vpop.f32.mrb[0].mxu0
    %v2178 = vadd.f32 %v2129, %v2177
    %v2179 = vpop.f32.mrb[0].mxu0
    %2180 = vmatprep.mubr.bf16.mxu0 0
    %2181 = vmatmul.mubr.bf16.gmra.mrb[0].mxu0 %v1889
    %v2182 = vpop.f32.mrb[0].mxu0
    %v2183 = vadd.f32 %v2134, %v2182
    %v2184 = vpop.f32.mrb[0].mxu0
    %v2185 = vpop.f32.mrb[0].mxu0
    %v2186 = vadd.f32 %v2137, %v2185
    %v2187 = vpop.f32.mrb[0].mxu0
    %2188 = vdwg.mxu0
    %v2189 = vadd.f32 %v2175, %v1475
    %v2190 = vadd.f32 %v2178, %v1476
    %v2191 = vadd.f32 %v2183, %v1477
    %v2192 = vadd.f32 %v2186, %v1478
    %2193 = vst [vmem:[#allocation2 + $0x8] sm:$0xff] %v2189
    %2194 = vst [vmem:[#allocation2 + $0x20] sm:$0xff] %v2190
    %2195 = vst [vmem:[#allocation2 + $0x38] sm:$0xff] %v2191
    %2196 = vst [vmem:[#allocation2 + $0x50] sm:$0xff] %v2192
    %v2199 = vrot.slane %v2189, 7
    %v2200 = vrot.slane %v2190, 7
    %v2201 = vsel %vm57, %v2199, %v2200
    %2204 = vst [vmem:[#allocation2] sm:$0xfe] %v2199
    %2205 = vst [vmem:[#allocation2 + $0x18] sm:$0xff] %v2201
    %v2206 = vrot.slane %v2189, 1
    %v2207 = vrot.slane %v2190, 1
    %v2208 = vsel %vm65, %v2206, %v2207
    %2211 = vst [vmem:[#allocation2 + $0x10] sm:$0xff] %v2208
    %2212 = vst [vmem:[#allocation2 + $0x28] sm:$0x7f] %v2207
    %v2215 = vrot.slane %v2191, 7
    %v2216 = vrot.slane %v2192, 7
    %v2217 = vsel %vm57, %v2215, %v2216
    %2220 = vst [vmem:[#allocation2 + $0x30] sm:$0xfe] %v2215
    %2221 = vst [vmem:[#allocation2 + $0x48] sm:$0xff] %v2217
    %v2222 = vrot.slane %v2191, 1
    %v2223 = vrot.slane %v2192, 1
    %v2224 = vsel %vm65, %v2222, %v2223
    %2227 = vst [vmem:[#allocation2 + $0x40] sm:$0xff] %v2224
    %2228 = vst [vmem:[#allocation2 + $0x58] sm:$0x7f] %v2223
    %v2229 = vld [vmem:[#allocation2] sm:$0xff]
    %v2230 = vld [vmem:[#allocation2 + $0x8] sm:$0xff]
    %v2231 = vld [vmem:[#allocation2 + $0x10] sm:$0xff]
    %v2232 = vld [vmem:[#allocation2 + $0x18] sm:$0xff]
    %v2233 = vld [vmem:[#allocation2 + $0x20] sm:$0xff]
    %v2234 = vld [vmem:[#allocation2 + $0x28] sm:$0xff]
    %v2235 = vld [vmem:[#allocation2 + $0x30] sm:$0xff]
    %v2236 = vld [vmem:[#allocation2 + $0x38] sm:$0xff]
    %v2237 = vld [vmem:[#allocation2 + $0x40] sm:$0xff]
    %v2238 = vld [vmem:[#allocation2 + $0x48] sm:$0xff]
    %v2239 = vld [vmem:[#allocation2 + $0x50] sm:$0xff]
    %v2240 = vld [vmem:[#allocation2 + $0x58] sm:$0xff]
    %v2241 = vpack.c.bf16 %v2232, %v2229
    %v2242 = vpack.c.bf16 %v2233, %v2230
    %v2243 = vpack.c.bf16 %v2234, %v2231
    %v2244 = vpack.c.bf16 %v2238, %v2235
    %v2245 = vpack.c.bf16 %v2239, %v2236
    %v2246 = vpack.c.bf16 %v2240, %v2237
    %s2247 = scalar_lea.vmem [#allocation3], 1152
    %v2248 = vld [vmem:[%s2247] sm:$0xf]
    %v2249 = vld [vmem:[%s2247 + $0x4] sm:$0xf]
    %v2250 = vld [vmem:[%s2247 + $0x8] sm:$0xf]
    %v2251 = vld [vmem:[%s2247 + $0xc] sm:$0xf]
    %v2252 = vld [vmem:[%s2247 + $0x10] sm:$0xf]
    %v2253 = vld [vmem:[%s2247 + $0x14] sm:$0xf]
    %v2254 = vld [vmem:[%s2247 + $0x18] sm:$0xf]
    %v2255 = vld [vmem:[%s2247 + $0x1c] sm:$0xf]
    %v2256 = vld [vmem:[%s2247 + $0x20] sm:$0xf]
    %v2257 = vld [vmem:[%s2247 + $0x24] sm:$0xf]
    %v2258 = vld [vmem:[%s2247 + $0x28] sm:$0xf]
    %v2259 = vld [vmem:[%s2247 + $0x2c] sm:$0xf]
    %v2260 = vld [vmem:[%s2247 + $0x30] sm:$0xf]
    %v2261 = vld [vmem:[%s2247 + $0x34] sm:$0xf]
    %v2262 = vld [vmem:[%s2247 + $0x38] sm:$0xf]
    %v2263 = vld [vmem:[%s2247 + $0x3c] sm:$0xf]
    %v2264 = vld [vmem:[%s2247 + $0x40] sm:$0xf]
    %v2265 = vld [vmem:[%s2247 + $0x44] sm:$0xf]
    %v2266 = vld [vmem:[%s2247 + $0x48] sm:$0xf]
    %v2267 = vld [vmem:[%s2247 + $0x4c] sm:$0xf]
    %v2268 = vld [vmem:[%s2247 + $0x50] sm:$0xf]
    %v2269 = vld [vmem:[%s2247 + $0x54] sm:$0xf]
    %v2270 = vld [vmem:[%s2247 + $0x58] sm:$0xf]
    %v2271 = vld [vmem:[%s2247 + $0x5c] sm:$0xf]
    %v2272 = vld [vmem:[%s2247 + $0x60] sm:$0xf]
    %v2273 = vld [vmem:[%s2247 + $0x64] sm:$0xf]
    %v2274 = vld [vmem:[%s2247 + $0x68] sm:$0xf]
    %v2275 = vld [vmem:[%s2247 + $0x6c] sm:$0xf]
    %v2276 = vld [vmem:[%s2247 + $0x70] sm:$0xf]
    %v2277 = vld [vmem:[%s2247 + $0x74] sm:$0xf]
    %v2278 = vld [vmem:[%s2247 + $0x78] sm:$0xf]
    %v2279 = vld [vmem:[%s2247 + $0x7c] sm:$0xf]
    %v2280 = vld [vmem:[%s2247 + $0x80] sm:$0xf]
    %v2281 = vld [vmem:[%s2247 + $0x84] sm:$0xf]
    %v2282 = vld [vmem:[%s2247 + $0x88] sm:$0xf]
    %v2283 = vld [vmem:[%s2247 + $0x8c] sm:$0xf]
    %v2284 = vld [vmem:[%s2247 + $0x90] sm:$0xf]
    %v2285 = vld [vmem:[%s2247 + $0x94] sm:$0xf]
    %v2286 = vld [vmem:[%s2247 + $0x98] sm:$0xf]
    %v2287 = vld [vmem:[%s2247 + $0x9c] sm:$0xf]
    %v2288 = vld [vmem:[%s2247 + $0xa0] sm:$0xf]
    %v2289 = vld [vmem:[%s2247 + $0xa4] sm:$0xf]
    %v2290 = vld [vmem:[%s2247 + $0xa8] sm:$0xf]
    %v2291 = vld [vmem:[%s2247 + $0xac] sm:$0xf]
    %v2292 = vld [vmem:[%s2247 + $0xb0] sm:$0xf]
    %v2293 = vld [vmem:[%s2247 + $0xb4] sm:$0xf]
    %v2294 = vld [vmem:[%s2247 + $0xb8] sm:$0xf]
    %v2295 = vld [vmem:[%s2247 + $0xbc] sm:$0xf]
    %s2296 = scalar_lea.vmem [#allocation5], 6
    %v2297 = vld [vmem:[%s2296] sm:$0x1]
    %v2299 = vlaneseq
    %v2300 = vshrl.u32 %v2299, 7
    %v2301 = vsub.s32 0, %v2300
    %v2302 = vrot.slane %v2297, %v2301
    %v2352 = vunpack.c.l.b16 %v2248
    %v2353 = vunpack.c.l.b16 %v2249
    %v2354 = vunpack.c.l.b16 %v2250
    %v2355 = vunpack.c.l.b16 %v2251
    %v2356 = vunpack.c.l.b16 %v2252
    %v2357 = vunpack.c.l.b16 %v2253
    %v2358 = vunpack.c.l.b16 %v2254
    %v2359 = vunpack.c.l.b16 %v2255
    %v2360 = vunpack.c.l.b16 %v2256
    %v2361 = vunpack.c.l.b16 %v2257
    %v2362 = vunpack.c.l.b16 %v2258
    %v2363 = vunpack.c.l.b16 %v2259
    %v2364 = vunpack.c.l.b16 %v2260
    %v2365 = vunpack.c.l.b16 %v2261
    %v2366 = vunpack.c.l.b16 %v2262
    %v2367 = vunpack.c.l.b16 %v2263
    %v2368 = vunpack.c.l.b16 %v2264
    %v2369 = vunpack.c.l.b16 %v2265
    %v2370 = vunpack.c.l.b16 %v2266
    %v2371 = vunpack.c.l.b16 %v2267
    %v2372 = vunpack.c.l.b16 %v2268
    %v2373 = vunpack.c.l.b16 %v2269
    %v2374 = vunpack.c.l.b16 %v2270
    %v2375 = vunpack.c.l.b16 %v2271
    %v2376 = vunpack.c.l.b16 %v2272
    %v2377 = vunpack.c.l.b16 %v2273
    %v2378 = vunpack.c.l.b16 %v2274
    %v2379 = vunpack.c.l.b16 %v2275
    %v2380 = vunpack.c.l.b16 %v2276
    %v2381 = vunpack.c.l.b16 %v2277
    %v2382 = vunpack.c.l.b16 %v2278
    %v2383 = vunpack.c.l.b16 %v2279
    %v2384 = vunpack.c.l.b16 %v2280
    %v2385 = vunpack.c.l.b16 %v2281
    %v2386 = vunpack.c.l.b16 %v2282
    %v2387 = vunpack.c.l.b16 %v2283
    %v2388 = vunpack.c.l.b16 %v2284
    %v2389 = vunpack.c.l.b16 %v2285
    %v2390 = vunpack.c.l.b16 %v2286
    %v2391 = vunpack.c.l.b16 %v2287
    %v2392 = vunpack.c.l.b16 %v2288
    %v2393 = vunpack.c.l.b16 %v2289
    %v2394 = vunpack.c.l.b16 %v2290
    %v2395 = vunpack.c.l.b16 %v2291
    %v2396 = vunpack.c.l.b16 %v2292
    %v2397 = vunpack.c.l.b16 %v2293
    %v2398 = vunpack.c.l.b16 %v2294
    %v2399 = vunpack.c.l.b16 %v2295
    %v2400 = vpack.c.b16 %v2353, %v2352
    %v2401 = vpack.c.b16 %v2355, %v2354
    %v2402 = vpack.c.b16 %v2357, %v2356
    %v2403 = vpack.c.b16 %v2359, %v2358
    %v2404 = vpack.c.b16 %v2361, %v2360
    %v2405 = vpack.c.b16 %v2363, %v2362
    %v2406 = vpack.c.b16 %v2365, %v2364
    %v2407 = vpack.c.b16 %v2367, %v2366
    %v2408 = vpack.c.b16 %v2369, %v2368
    %v2409 = vpack.c.b16 %v2371, %v2370
    %v2410 = vpack.c.b16 %v2373, %v2372
    %v2411 = vpack.c.b16 %v2375, %v2374
    %v2412 = vpack.c.b16 %v2377, %v2376
    %v2413 = vpack.c.b16 %v2379, %v2378
    %v2414 = vpack.c.b16 %v2381, %v2380
    %v2415 = vpack.c.b16 %v2383, %v2382
    %v2416 = vpack.c.b16 %v2385, %v2384
    %v2417 = vpack.c.b16 %v2387, %v2386
    %v2418 = vpack.c.b16 %v2389, %v2388
    %v2419 = vpack.c.b16 %v2391, %v2390
    %v2420 = vpack.c.b16 %v2393, %v2392
    %v2421 = vpack.c.b16 %v2395, %v2394
    %v2422 = vpack.c.b16 %v2397, %v2396
    %v2423 = vpack.c.b16 %v2399, %v2398
    %2448 = vmatprep.subr.bf16.mxu0 0
    %2449 = vmatpush1.bf16.msra.mxu0 %v2400
    %2450 = vmatprep.subr.bf16.mxu0 0
    %2451 = vmatpush1.bf16.msra.mxu0 %v2401
    %2452 = vmatprep.subr.bf16.mxu0 0
    %2453 = vmatpush1.bf16.msra.mxu0 %v2402
    %2454 = vmatprep.subr.bf16.mxu0 0
    %2455 = vmatpush1.bf16.msra.mxu0 %v2403
    %2456 = vmatprep.subr.bf16.mxu0 0
    %2457 = vmatpush1.bf16.msra.mxu0 %v2404
    %2458 = vmatprep.subr.bf16.mxu0 0
    %2459 = vmatpush1.bf16.msra.mxu0 %v2405
    %2460 = vmatprep.subr.bf16.mxu0 0
    %2461 = vmatpush1.bf16.msra.mxu0 %v2406
    %2462 = vmatprep.subr.bf16.mxu0 0
    %2463 = vmatpush1.bf16.msra.mxu0 %v2407
    %2464 = vmatprep.subr.bf16.mxu0 0
    %2465 = vmatpush1.bf16.msra.mxu0 %v2408
    %2466 = vmatprep.subr.bf16.mxu0 0
    %2467 = vmatpush1.bf16.msra.mxu0 %v2409
    %2468 = vmatprep.subr.bf16.mxu0 0
    %2469 = vmatpush1.bf16.msra.mxu0 %v2410
    %2470 = vmatprep.subr.bf16.mxu0 0
    %2471 = vmatpush1.bf16.msra.mxu0 %v2411
    %2472 = vmatprep.subr.bf16.mxu0 0
    %2473 = vmatpush1.bf16.msra.mxu0 %v2412
    %2474 = vmatprep.subr.bf16.mxu0 0
    %2475 = vmatpush1.bf16.msra.mxu0 %v2413
    %2476 = vmatprep.subr.bf16.mxu0 0
    %2477 = vmatpush1.bf16.msra.mxu0 %v2414
    %2478 = vmatprep.subr.bf16.mxu0 0
    %2479 = vmatpush1.bf16.msra.mxu0 %v2415
    %2480 = vmatprep.mubr.bf16.mxu0 %v2242
    %2481 = vmatmul.mubr.bf16.gmra.mrb[0].mxu0 %v2241
    %v2482 = vpop.f32.mrb[0].mxu0
    %v2483 = vadd.f32 %v2302, %v2482
    %v2484 = vpop.f32.mrb[0].mxu0
    %v2485 = vpop.f32.mrb[0].mxu0
    %v2486 = vadd.f32 %v2302, %v2485
    %v2487 = vpop.f32.mrb[0].mxu0
    %2488 = vmatprep.mubr.bf16.mxu0 %v2245
    %2489 = vmatmul.mubr.bf16.gmra.mrb[0].mxu0 %v2244
    %v2490 = vpop.f32.mrb[0].mxu0
    %v2491 = vadd.f32 %v2302, %v2490
    %v2492 = vpop.f32.mrb[0].mxu0
    %v2493 = vpop.f32.mrb[0].mxu0
    %v2494 = vadd.f32 %v2302, %v2493
    %v2495 = vpop.f32.mrb[0].mxu0
    %2496 = vdwg.mxu0
    %2497 = vmatprep.subr.bf16.mxu0 0
    %2498 = vmatpush1.bf16.msra.mxu0 %v2416
    %2499 = vmatprep.subr.bf16.mxu0 0
    %2500 = vmatpush1.bf16.msra.mxu0 %v2417
    %2501 = vmatprep.subr.bf16.mxu0 0
    %2502 = vmatpush1.bf16.msra.mxu0 %v2418
    %2503 = vmatprep.subr.bf16.mxu0 0
    %2504 = vmatpush1.bf16.msra.mxu0 %v2419
    %2505 = vmatprep.subr.bf16.mxu0 0
    %2506 = vmatpush1.bf16.msra.mxu0 %v2420
    %2507 = vmatprep.subr.bf16.mxu0 0
    %2508 = vmatpush1.bf16.msra.mxu0 %v2421
    %2509 = vmatprep.subr.bf16.mxu0 0
    %2510 = vmatpush1.bf16.msra.mxu0 %v2422
    %2511 = vmatprep.subr.bf16.mxu0 0
    %2512 = vmatpush1.bf16.msra.mxu0 %v2423
    %2513 = vmatprep.subr.bf16.mxu0 0
    %2514 = vmatpush1.bf16.msra.mxu0 0
    %2515 = vmatprep.subr.bf16.mxu0 0
    %2516 = vmatpush1.bf16.msra.mxu0 0
    %2517 = vmatprep.subr.bf16.mxu0 0
    %2518 = vmatpush1.bf16.msra.mxu0 0
    %2519 = vmatprep.subr.bf16.mxu0 0
    %2520 = vmatpush1.bf16.msra.mxu0 0
    %2521 = vmatprep.subr.bf16.mxu0 0
    %2522 = vmatpush1.bf16.msra.mxu0 0
    %2523 = vmatprep.subr.bf16.mxu0 0
    %2524 = vmatpush1.bf16.msra.mxu0 0
    %2525 = vmatprep.subr.bf16.mxu0 0
    %2526 = vmatpush1.bf16.msra.mxu0 0
    %2527 = vmatprep.subr.bf16.mxu0 0
    %2528 = vmatpush1.bf16.msra.mxu0 0
    %2529 = vmatprep.mubr.bf16.mxu0 0
    %2530 = vmatmul.mubr.bf16.gmra.mrb[0].mxu0 %v2243
    %v2531 = vpop.f32.mrb[0].mxu0
    %v2532 = vadd.f32 %v2483, %v2531
    %v2533 = vpop.f32.mrb[0].mxu0
    %v2534 = vpop.f32.mrb[0].mxu0
    %v2535 = vadd.f32 %v2486, %v2534
    %v2536 = vpop.f32.mrb[0].mxu0
    %2537 = vmatprep.mubr.bf16.mxu0 0
    %2538 = vmatmul.mubr.bf16.gmra.mrb[0].mxu0 %v2246
    %v2539 = vpop.f32.mrb[0].mxu0
    %v2540 = vadd.f32 %v2491, %v2539
    %v2541 = vpop.f32.mrb[0].mxu0
    %v2542 = vpop.f32.mrb[0].mxu0
    %v2543 = vadd.f32 %v2494, %v2542
    %v2544 = vpop.f32.mrb[0].mxu0
    %2545 = vdwg.mxu0
    %v2546 = vmax.f32 %v2532, 0.0
    %v2547 = vmax.f32 %v2535, 0.0
    %v2548 = vmax.f32 %v2540, 0.0
    %v2549 = vmax.f32 %v2543, 0.0
    %2550 = vst [vmem:[#allocation2 + $0x8] sm:$0xff] %v2546
    %2551 = vst [vmem:[#allocation2 + $0x20] sm:$0xff] %v2547
    %2552 = vst [vmem:[#allocation2 + $0x38] sm:$0xff] %v2548
    %2553 = vst [vmem:[#allocation2 + $0x50] sm:$0xff] %v2549
    %v2556 = vrot.slane %v2546, 7
    %v2557 = vrot.slane %v2547, 7
    %v2558 = vsel %vm57, %v2556, %v2557
    %2561 = vst [vmem:[#allocation2] sm:$0xfe] %v2556
    %2562 = vst [vmem:[#allocation2 + $0x18] sm:$0xff] %v2558
    %v2563 = vrot.slane %v2546, 1
    %v2564 = vrot.slane %v2547, 1
    %v2565 = vsel %vm65, %v2563, %v2564
    %2568 = vst [vmem:[#allocation2 + $0x10] sm:$0xff] %v2565
    %2569 = vst [vmem:[#allocation2 + $0x28] sm:$0x7f] %v2564
    %v2572 = vrot.slane %v2548, 7
    %v2573 = vrot.slane %v2549, 7
    %v2574 = vsel %vm57, %v2572, %v2573
    %2577 = vst [vmem:[#allocation2 + $0x30] sm:$0xfe] %v2572
    %2578 = vst [vmem:[#allocation2 + $0x48] sm:$0xff] %v2574
    %v2579 = vrot.slane %v2548, 1
    %v2580 = vrot.slane %v2549, 1
    %v2581 = vsel %vm65, %v2579, %v2580
    %2584 = vst [vmem:[#allocation2 + $0x40] sm:$0xff] %v2581
    %2585 = vst [vmem:[#allocation2 + $0x58] sm:$0x7f] %v2580
    %v2586 = vld [vmem:[#allocation2] sm:$0xff]
    %v2587 = vld [vmem:[#allocation2 + $0x8] sm:$0xff]
    %v2588 = vld [vmem:[#allocation2 + $0x10] sm:$0xff]
    %v2589 = vld [vmem:[#allocation2 + $0x18] sm:$0xff]
    %v2590 = vld [vmem:[#allocation2 + $0x20] sm:$0xff]
    %v2591 = vld [vmem:[#allocation2 + $0x28] sm:$0xff]
    %v2592 = vld [vmem:[#allocation2 + $0x30] sm:$0xff]
    %v2593 = vld [vmem:[#allocation2 + $0x38] sm:$0xff]
    %v2594 = vld [vmem:[#allocation2 + $0x40] sm:$0xff]
    %v2595 = vld [vmem:[#allocation2 + $0x48] sm:$0xff]
    %v2596 = vld [vmem:[#allocation2 + $0x50] sm:$0xff]
    %v2597 = vld [vmem:[#allocation2 + $0x58] sm:$0xff]
    %v2598 = vpack.c.bf16 %v2589, %v2586
    %v2599 = vpack.c.bf16 %v2590, %v2587
    %v2600 = vpack.c.bf16 %v2591, %v2588
    %v2601 = vpack.c.bf16 %v2595, %v2592
    %v2602 = vpack.c.bf16 %v2596, %v2593
    %v2603 = vpack.c.bf16 %v2597, %v2594
    %s2604 = scalar_lea.vmem [#allocation3], 1344
    %v2605 = vld [vmem:[%s2604] sm:$0xf]
    %v2606 = vld [vmem:[%s2604 + $0x4] sm:$0xf]
    %v2607 = vld [vmem:[%s2604 + $0x8] sm:$0xf]
    %v2608 = vld [vmem:[%s2604 + $0xc] sm:$0xf]
    %v2609 = vld [vmem:[%s2604 + $0x10] sm:$0xf]
    %v2610 = vld [vmem:[%s2604 + $0x14] sm:$0xf]
    %v2611 = vld [vmem:[%s2604 + $0x18] sm:$0xf]
    %v2612 = vld [vmem:[%s2604 + $0x1c] sm:$0xf]
    %v2613 = vld [vmem:[%s2604 + $0x20] sm:$0xf]
    %v2614 = vld [vmem:[%s2604 + $0x24] sm:$0xf]
    %v2615 = vld [vmem:[%s2604 + $0x28] sm:$0xf]
    %v2616 = vld [vmem:[%s2604 + $0x2c] sm:$0xf]
    %v2617 = vld [vmem:[%s2604 + $0x30] sm:$0xf]
    %v2618 = vld [vmem:[%s2604 + $0x34] sm:$0xf]
    %v2619 = vld [vmem:[%s2604 + $0x38] sm:$0xf]
    %v2620 = vld [vmem:[%s2604 + $0x3c] sm:$0xf]
    %v2621 = vld [vmem:[%s2604 + $0x40] sm:$0xf]
    %v2622 = vld [vmem:[%s2604 + $0x44] sm:$0xf]
    %v2623 = vld [vmem:[%s2604 + $0x48] sm:$0xf]
    %v2624 = vld [vmem:[%s2604 + $0x4c] sm:$0xf]
    %v2625 = vld [vmem:[%s2604 + $0x50] sm:$0xf]
    %v2626 = vld [vmem:[%s2604 + $0x54] sm:$0xf]
    %v2627 = vld [vmem:[%s2604 + $0x58] sm:$0xf]
    %v2628 = vld [vmem:[%s2604 + $0x5c] sm:$0xf]
    %v2629 = vld [vmem:[%s2604 + $0x60] sm:$0xf]
    %v2630 = vld [vmem:[%s2604 + $0x64] sm:$0xf]
    %v2631 = vld [vmem:[%s2604 + $0x68] sm:$0xf]
    %v2632 = vld [vmem:[%s2604 + $0x6c] sm:$0xf]
    %v2633 = vld [vmem:[%s2604 + $0x70] sm:$0xf]
    %v2634 = vld [vmem:[%s2604 + $0x74] sm:$0xf]
    %v2635 = vld [vmem:[%s2604 + $0x78] sm:$0xf]
    %v2636 = vld [vmem:[%s2604 + $0x7c] sm:$0xf]
    %v2637 = vld [vmem:[%s2604 + $0x80] sm:$0xf]
    %v2638 = vld [vmem:[%s2604 + $0x84] sm:$0xf]
    %v2639 = vld [vmem:[%s2604 + $0x88] sm:$0xf]
    %v2640 = vld [vmem:[%s2604 + $0x8c] sm:$0xf]
    %v2641 = vld [vmem:[%s2604 + $0x90] sm:$0xf]
    %v2642 = vld [vmem:[%s2604 + $0x94] sm:$0xf]
    %v2643 = vld [vmem:[%s2604 + $0x98] sm:$0xf]
    %v2644 = vld [vmem:[%s2604 + $0x9c] sm:$0xf]
    %v2645 = vld [vmem:[%s2604 + $0xa0] sm:$0xf]
    %v2646 = vld [vmem:[%s2604 + $0xa4] sm:$0xf]
    %v2647 = vld [vmem:[%s2604 + $0xa8] sm:$0xf]
    %v2648 = vld [vmem:[%s2604 + $0xac] sm:$0xf]
    %v2649 = vld [vmem:[%s2604 + $0xb0] sm:$0xf]
    %v2650 = vld [vmem:[%s2604 + $0xb4] sm:$0xf]
    %v2651 = vld [vmem:[%s2604 + $0xb8] sm:$0xf]
    %v2652 = vld [vmem:[%s2604 + $0xbc] sm:$0xf]
    %s2653 = scalar_lea.vmem [#allocation5], 7
    %v2654 = vld [vmem:[%s2653] sm:$0x1]
    %v2656 = vlaneseq
    %v2657 = vshrl.u32 %v2656, 7
    %v2658 = vsub.s32 0, %v2657
    %v2659 = vrot.slane %v2654, %v2658
    %v2709 = vunpack.c.l.b16 %v2605
    %v2710 = vunpack.c.l.b16 %v2606
    %v2711 = vunpack.c.l.b16 %v2607
    %v2712 = vunpack.c.l.b16 %v2608
    %v2713 = vunpack.c.l.b16 %v2609
    %v2714 = vunpack.c.l.b16 %v2610
    %v2715 = vunpack.c.l.b16 %v2611
    %v2716 = vunpack.c.l.b16 %v2612
    %v2717 = vunpack.c.l.b16 %v2613
    %v2718 = vunpack.c.l.b16 %v2614
    %v2719 = vunpack.c.l.b16 %v2615
    %v2720 = vunpack.c.l.b16 %v2616
    %v2721 = vunpack.c.l.b16 %v2617
    %v2722 = vunpack.c.l.b16 %v2618
    %v2723 = vunpack.c.l.b16 %v2619
    %v2724 = vunpack.c.l.b16 %v2620
    %v2725 = vunpack.c.l.b16 %v2621
    %v2726 = vunpack.c.l.b16 %v2622
    %v2727 = vunpack.c.l.b16 %v2623
    %v2728 = vunpack.c.l.b16 %v2624
    %v2729 = vunpack.c.l.b16 %v2625
    %v2730 = vunpack.c.l.b16 %v2626
    %v2731 = vunpack.c.l.b16 %v2627
    %v2732 = vunpack.c.l.b16 %v2628
    %v2733 = vunpack.c.l.b16 %v2629
    %v2734 = vunpack.c.l.b16 %v2630
    %v2735 = vunpack.c.l.b16 %v2631
    %v2736 = vunpack.c.l.b16 %v2632
    %v2737 = vunpack.c.l.b16 %v2633
    %v2738 = vunpack.c.l.b16 %v2634
    %v2739 = vunpack.c.l.b16 %v2635
    %v2740 = vunpack.c.l.b16 %v2636
    %v2741 = vunpack.c.l.b16 %v2637
    %v2742 = vunpack.c.l.b16 %v2638
    %v2743 = vunpack.c.l.b16 %v2639
    %v2744 = vunpack.c.l.b16 %v2640
    %v2745 = vunpack.c.l.b16 %v2641
    %v2746 = vunpack.c.l.b16 %v2642
    %v2747 = vunpack.c.l.b16 %v2643
    %v2748 = vunpack.c.l.b16 %v2644
    %v2749 = vunpack.c.l.b16 %v2645
    %v2750 = vunpack.c.l.b16 %v2646
    %v2751 = vunpack.c.l.b16 %v2647
    %v2752 = vunpack.c.l.b16 %v2648
    %v2753 = vunpack.c.l.b16 %v2649
    %v2754 = vunpack.c.l.b16 %v2650
    %v2755 = vunpack.c.l.b16 %v2651
    %v2756 = vunpack.c.l.b16 %v2652
    %v2757 = vpack.c.b16 %v2710, %v2709
    %v2758 = vpack.c.b16 %v2712, %v2711
    %v2759 = vpack.c.b16 %v2714, %v2713
    %v2760 = vpack.c.b16 %v2716, %v2715
    %v2761 = vpack.c.b16 %v2718, %v2717
    %v2762 = vpack.c.b16 %v2720, %v2719
    %v2763 = vpack.c.b16 %v2722, %v2721
    %v2764 = vpack.c.b16 %v2724, %v2723
    %v2765 = vpack.c.b16 %v2726, %v2725
    %v2766 = vpack.c.b16 %v2728, %v2727
    %v2767 = vpack.c.b16 %v2730, %v2729
    %v2768 = vpack.c.b16 %v2732, %v2731
    %v2769 = vpack.c.b16 %v2734, %v2733
    %v2770 = vpack.c.b16 %v2736, %v2735
    %v2771 = vpack.c.b16 %v2738, %v2737
    %v2772 = vpack.c.b16 %v2740, %v2739
    %v2773 = vpack.c.b16 %v2742, %v2741
    %v2774 = vpack.c.b16 %v2744, %v2743
    %v2775 = vpack.c.b16 %v2746, %v2745
    %v2776 = vpack.c.b16 %v2748, %v2747
    %v2777 = vpack.c.b16 %v2750, %v2749
    %v2778 = vpack.c.b16 %v2752, %v2751
    %v2779 = vpack.c.b16 %v2754, %v2753
    %v2780 = vpack.c.b16 %v2756, %v2755
    %2805 = vmatprep.subr.bf16.mxu0 0
    %2806 = vmatpush1.bf16.msra.mxu0 %v2757
    %2807 = vmatprep.subr.bf16.mxu0 0
    %2808 = vmatpush1.bf16.msra.mxu0 %v2758
    %2809 = vmatprep.subr.bf16.mxu0 0
    %2810 = vmatpush1.bf16.msra.mxu0 %v2759
    %2811 = vmatprep.subr.bf16.mxu0 0
    %2812 = vmatpush1.bf16.msra.mxu0 %v2760
    %2813 = vmatprep.subr.bf16.mxu0 0
    %2814 = vmatpush1.bf16.msra.mxu0 %v2761
    %2815 = vmatprep.subr.bf16.mxu0 0
    %2816 = vmatpush1.bf16.msra.mxu0 %v2762
    %2817 = vmatprep.subr.bf16.mxu0 0
    %2818 = vmatpush1.bf16.msra.mxu0 %v2763
    %2819 = vmatprep.subr.bf16.mxu0 0
    %2820 = vmatpush1.bf16.msra.mxu0 %v2764
    %2821 = vmatprep.subr.bf16.mxu0 0
    %2822 = vmatpush1.bf16.msra.mxu0 %v2765
    %2823 = vmatprep.subr.bf16.mxu0 0
    %2824 = vmatpush1.bf16.msra.mxu0 %v2766
    %2825 = vmatprep.subr.bf16.mxu0 0
    %2826 = vmatpush1.bf16.msra.mxu0 %v2767
    %2827 = vmatprep.subr.bf16.mxu0 0
    %2828 = vmatpush1.bf16.msra.mxu0 %v2768
    %2829 = vmatprep.subr.bf16.mxu0 0
    %2830 = vmatpush1.bf16.msra.mxu0 %v2769
    %2831 = vmatprep.subr.bf16.mxu0 0
    %2832 = vmatpush1.bf16.msra.mxu0 %v2770
    %2833 = vmatprep.subr.bf16.mxu0 0
    %2834 = vmatpush1.bf16.msra.mxu0 %v2771
    %2835 = vmatprep.subr.bf16.mxu0 0
    %2836 = vmatpush1.bf16.msra.mxu0 %v2772
    %2837 = vmatprep.mubr.bf16.mxu0 %v2599
    %2838 = vmatmul.mubr.bf16.gmra.mrb[0].mxu0 %v2598
    %v2839 = vpop.f32.mrb[0].mxu0
    %v2840 = vadd.f32 %v2659, %v2839
    %v2841 = vpop.f32.mrb[0].mxu0
    %v2842 = vpop.f32.mrb[0].mxu0
    %v2843 = vadd.f32 %v2659, %v2842
    %v2844 = vpop.f32.mrb[0].mxu0
    %2845 = vmatprep.mubr.bf16.mxu0 %v2602
    %2846 = vmatmul.mubr.bf16.gmra.mrb[0].mxu0 %v2601
    %v2847 = vpop.f32.mrb[0].mxu0
    %v2848 = vadd.f32 %v2659, %v2847
    %v2849 = vpop.f32.mrb[0].mxu0
    %v2850 = vpop.f32.mrb[0].mxu0
    %v2851 = vadd.f32 %v2659, %v2850
    %v2852 = vpop.f32.mrb[0].mxu0
    %2853 = vdwg.mxu0
    %2854 = vmatprep.subr.bf16.mxu0 0
    %2855 = vmatpush1.bf16.msra.mxu0 %v2773
    %2856 = vmatprep.subr.bf16.mxu0 0
    %2857 = vmatpush1.bf16.msra.mxu0 %v2774
    %2858 = vmatprep.subr.bf16.mxu0 0
    %2859 = vmatpush1.bf16.msra.mxu0 %v2775
    %2860 = vmatprep.subr.bf16.mxu0 0
    %2861 = vmatpush1.bf16.msra.mxu0 %v2776
    %2862 = vmatprep.subr.bf16.mxu0 0
    %2863 = vmatpush1.bf16.msra.mxu0 %v2777
    %2864 = vmatprep.subr.bf16.mxu0 0
    %2865 = vmatpush1.bf16.msra.mxu0 %v2778
    %2866 = vmatprep.subr.bf16.mxu0 0
    %2867 = vmatpush1.bf16.msra.mxu0 %v2779
    %2868 = vmatprep.subr.bf16.mxu0 0
    %2869 = vmatpush1.bf16.msra.mxu0 %v2780
    %2870 = vmatprep.subr.bf16.mxu0 0
    %2871 = vmatpush1.bf16.msra.mxu0 0
    %2872 = vmatprep.subr.bf16.mxu0 0
    %2873 = vmatpush1.bf16.msra.mxu0 0
    %2874 = vmatprep.subr.bf16.mxu0 0
    %2875 = vmatpush1.bf16.msra.mxu0 0
    %2876 = vmatprep.subr.bf16.mxu0 0
    %2877 = vmatpush1.bf16.msra.mxu0 0
    %2878 = vmatprep.subr.bf16.mxu0 0
    %2879 = vmatpush1.bf16.msra.mxu0 0
    %2880 = vmatprep.subr.bf16.mxu0 0
    %2881 = vmatpush1.bf16.msra.mxu0 0
    %2882 = vmatprep.subr.bf16.mxu0 0
    %2883 = vmatpush1.bf16.msra.mxu0 0
    %2884 = vmatprep.subr.bf16.mxu0 0
    %2885 = vmatpush1.bf16.msra.mxu0 0
    %2886 = vmatprep.mubr.bf16.mxu0 0
    %2887 = vmatmul.mubr.bf16.gmra.mrb[0].mxu0 %v2600
    %v2888 = vpop.f32.mrb[0].mxu0
    %v2889 = vadd.f32 %v2840, %v2888
    %v2890 = vpop.f32.mrb[0].mxu0
    %v2891 = vpop.f32.mrb[0].mxu0
    %v2892 = vadd.f32 %v2843, %v2891
    %v2893 = vpop.f32.mrb[0].mxu0
    %2894 = vmatprep.mubr.bf16.mxu0 0
    %2895 = vmatmul.mubr.bf16.gmra.mrb[0].mxu0 %v2603
    %v2896 = vpop.f32.mrb[0].mxu0
    %v2897 = vadd.f32 %v2848, %v2896
    %v2898 = vpop.f32.mrb[0].mxu0
    %v2899 = vpop.f32.mrb[0].mxu0
    %v2900 = vadd.f32 %v2851, %v2899
    %v2901 = vpop.f32.mrb[0].mxu0
    %2902 = vdwg.mxu0
    %v2903 = vadd.f32 %v2889, %v2189
    %v2904 = vadd.f32 %v2892, %v2190
    %v2905 = vadd.f32 %v2897, %v2191
    %v2906 = vadd.f32 %v2900, %v2192
    %2907 = vst [vmem:[#allocation2 + $0x8] sm:$0xff] %v2903
    %2908 = vst [vmem:[#allocation2 + $0x20] sm:$0xff] %v2904
    %2909 = vst [vmem:[#allocation2 + $0x38] sm:$0xff] %v2905
    %2910 = vst [vmem:[#allocation2 + $0x50] sm:$0xff] %v2906
    %v2913 = vrot.slane %v2903, 7
    %v2914 = vrot.slane %v2904, 7
    %v2915 = vsel %vm57, %v2913, %v2914
    %2918 = vst [vmem:[#allocation2] sm:$0xfe] %v2913
    %2919 = vst [vmem:[#allocation2 + $0x18] sm:$0xff] %v2915
    %v2920 = vrot.slane %v2903, 1
    %v2921 = vrot.slane %v2904, 1
    %v2922 = vsel %vm65, %v2920, %v2921
    %2925 = vst [vmem:[#allocation2 + $0x10] sm:$0xff] %v2922
    %2926 = vst [vmem:[#allocation2 + $0x28] sm:$0x7f] %v2921
    %v2929 = vrot.slane %v2905, 7
    %v2930 = vrot.slane %v2906, 7
    %v2931 = vsel %vm57, %v2929, %v2930
    %2934 = vst [vmem:[#allocation2 + $0x30] sm:$0xfe] %v2929
    %2935 = vst [vmem:[#allocation2 + $0x48] sm:$0xff] %v2931
    %v2936 = vrot.slane %v2905, 1
    %v2937 = vrot.slane %v2906, 1
    %v2938 = vsel %vm65, %v2936, %v2937
    %2941 = vst [vmem:[#allocation2 + $0x40] sm:$0xff] %v2938
    %2942 = vst [vmem:[#allocation2 + $0x58] sm:$0x7f] %v2937
    %v2943 = vld [vmem:[#allocation2] sm:$0xff]
    %v2944 = vld [vmem:[#allocation2 + $0x8] sm:$0xff]
    %v2945 = vld [vmem:[#allocation2 + $0x10] sm:$0xff]
    %v2946 = vld [vmem:[#allocation2 + $0x18] sm:$0xff]
    %v2947 = vld [vmem:[#allocation2 + $0x20] sm:$0xff]
    %v2948 = vld [vmem:[#allocation2 + $0x28] sm:$0xff]
    %v2949 = vld [vmem:[#allocation2 + $0x30] sm:$0xff]
    %v2950 = vld [vmem:[#allocation2 + $0x38] sm:$0xff]
    %v2951 = vld [vmem:[#allocation2 + $0x40] sm:$0xff]
    %v2952 = vld [vmem:[#allocation2 + $0x48] sm:$0xff]
    %v2953 = vld [vmem:[#allocation2 + $0x50] sm:$0xff]
    %v2954 = vld [vmem:[#allocation2 + $0x58] sm:$0xff]
    %v2955 = vpack.c.bf16 %v2946, %v2943
    %v2956 = vpack.c.bf16 %v2947, %v2944
    %v2957 = vpack.c.bf16 %v2948, %v2945
    %v2958 = vpack.c.bf16 %v2952, %v2949
    %v2959 = vpack.c.bf16 %v2953, %v2950
    %v2960 = vpack.c.bf16 %v2954, %v2951
    %s2961 = scalar_lea.vmem [#allocation3], 1536
    %v2962 = vld [vmem:[%s2961] sm:$0xf]
    %v2963 = vld [vmem:[%s2961 + $0x4] sm:$0xf]
    %v2964 = vld [vmem:[%s2961 + $0x8] sm:$0xf]
    %v2965 = vld [vmem:[%s2961 + $0xc] sm:$0xf]
    %v2966 = vld [vmem:[%s2961 + $0x10] sm:$0xf]
    %v2967 = vld [vmem:[%s2961 + $0x14] sm:$0xf]
    %v2968 = vld [vmem:[%s2961 + $0x18] sm:$0xf]
    %v2969 = vld [vmem:[%s2961 + $0x1c] sm:$0xf]
    %v2970 = vld [vmem:[%s2961 + $0x20] sm:$0xf]
    %v2971 = vld [vmem:[%s2961 + $0x24] sm:$0xf]
    %v2972 = vld [vmem:[%s2961 + $0x28] sm:$0xf]
    %v2973 = vld [vmem:[%s2961 + $0x2c] sm:$0xf]
    %v2974 = vld [vmem:[%s2961 + $0x30] sm:$0xf]
    %v2975 = vld [vmem:[%s2961 + $0x34] sm:$0xf]
    %v2976 = vld [vmem:[%s2961 + $0x38] sm:$0xf]
    %v2977 = vld [vmem:[%s2961 + $0x3c] sm:$0xf]
    %v2978 = vld [vmem:[%s2961 + $0x40] sm:$0xf]
    %v2979 = vld [vmem:[%s2961 + $0x44] sm:$0xf]
    %v2980 = vld [vmem:[%s2961 + $0x48] sm:$0xf]
    %v2981 = vld [vmem:[%s2961 + $0x4c] sm:$0xf]
    %v2982 = vld [vmem:[%s2961 + $0x50] sm:$0xf]
    %v2983 = vld [vmem:[%s2961 + $0x54] sm:$0xf]
    %v2984 = vld [vmem:[%s2961 + $0x58] sm:$0xf]
    %v2985 = vld [vmem:[%s2961 + $0x5c] sm:$0xf]
    %v2986 = vld [vmem:[%s2961 + $0x60] sm:$0xf]
    %v2987 = vld [vmem:[%s2961 + $0x64] sm:$0xf]
    %v2988 = vld [vmem:[%s2961 + $0x68] sm:$0xf]
    %v2989 = vld [vmem:[%s2961 + $0x6c] sm:$0xf]
    %v2990 = vld [vmem:[%s2961 + $0x70] sm:$0xf]
    %v2991 = vld [vmem:[%s2961 + $0x74] sm:$0xf]
    %v2992 = vld [vmem:[%s2961 + $0x78] sm:$0xf]
    %v2993 = vld [vmem:[%s2961 + $0x7c] sm:$0xf]
    %v2994 = vld [vmem:[%s2961 + $0x80] sm:$0xf]
    %v2995 = vld [vmem:[%s2961 + $0x84] sm:$0xf]
    %v2996 = vld [vmem:[%s2961 + $0x88] sm:$0xf]
    %v2997 = vld [vmem:[%s2961 + $0x8c] sm:$0xf]
    %v2998 = vld [vmem:[%s2961 + $0x90] sm:$0xf]
    %v2999 = vld [vmem:[%s2961 + $0x94] sm:$0xf]
    %v3000 = vld [vmem:[%s2961 + $0x98] sm:$0xf]
    %v3001 = vld [vmem:[%s2961 + $0x9c] sm:$0xf]
    %v3002 = vld [vmem:[%s2961 + $0xa0] sm:$0xf]
    %v3003 = vld [vmem:[%s2961 + $0xa4] sm:$0xf]
    %v3004 = vld [vmem:[%s2961 + $0xa8] sm:$0xf]
    %v3005 = vld [vmem:[%s2961 + $0xac] sm:$0xf]
    %v3006 = vld [vmem:[%s2961 + $0xb0] sm:$0xf]
    %v3007 = vld [vmem:[%s2961 + $0xb4] sm:$0xf]
    %v3008 = vld [vmem:[%s2961 + $0xb8] sm:$0xf]
    %v3009 = vld [vmem:[%s2961 + $0xbc] sm:$0xf]
    %s3010 = scalar_lea.vmem [#allocation5], 8
    %v3011 = vld [vmem:[%s3010] sm:$0x1]
    %v3013 = vlaneseq
    %v3014 = vshrl.u32 %v3013, 7
    %v3015 = vsub.s32 0, %v3014
    %v3016 = vrot.slane %v3011, %v3015
    %v3066 = vunpack.c.l.b16 %v2962
    %v3067 = vunpack.c.l.b16 %v2963
    %v3068 = vunpack.c.l.b16 %v2964
    %v3069 = vunpack.c.l.b16 %v2965
    %v3070 = vunpack.c.l.b16 %v2966
    %v3071 = vunpack.c.l.b16 %v2967
    %v3072 = vunpack.c.l.b16 %v2968
    %v3073 = vunpack.c.l.b16 %v2969
    %v3074 = vunpack.c.l.b16 %v2970
    %v3075 = vunpack.c.l.b16 %v2971
    %v3076 = vunpack.c.l.b16 %v2972
    %v3077 = vunpack.c.l.b16 %v2973
    %v3078 = vunpack.c.l.b16 %v2974
    %v3079 = vunpack.c.l.b16 %v2975
    %v3080 = vunpack.c.l.b16 %v2976
    %v3081 = vunpack.c.l.b16 %v2977
    %v3082 = vunpack.c.l.b16 %v2978
    %v3083 = vunpack.c.l.b16 %v2979
    %v3084 = vunpack.c.l.b16 %v2980
    %v3085 = vunpack.c.l.b16 %v2981
    %v3086 = vunpack.c.l.b16 %v2982
    %v3087 = vunpack.c.l.b16 %v2983
    %v3088 = vunpack.c.l.b16 %v2984
    %v3089 = vunpack.c.l.b16 %v2985
    %v3090 = vunpack.c.l.b16 %v2986
    %v3091 = vunpack.c.l.b16 %v2987
    %v3092 = vunpack.c.l.b16 %v2988
    %v3093 = vunpack.c.l.b16 %v2989
    %v3094 = vunpack.c.l.b16 %v2990
    %v3095 = vunpack.c.l.b16 %v2991
    %v3096 = vunpack.c.l.b16 %v2992
    %v3097 = vunpack.c.l.b16 %v2993
    %v3098 = vunpack.c.l.b16 %v2994
    %v3099 = vunpack.c.l.b16 %v2995
    %v3100 = vunpack.c.l.b16 %v2996
    %v3101 = vunpack.c.l.b16 %v2997
    %v3102 = vunpack.c.l.b16 %v2998
    %v3103 = vunpack.c.l.b16 %v2999
    %v3104 = vunpack.c.l.b16 %v3000
    %v3105 = vunpack.c.l.b16 %v3001
    %v3106 = vunpack.c.l.b16 %v3002
    %v3107 = vunpack.c.l.b16 %v3003
    %v3108 = vunpack.c.l.b16 %v3004
    %v3109 = vunpack.c.l.b16 %v3005
    %v3110 = vunpack.c.l.b16 %v3006
    %v3111 = vunpack.c.l.b16 %v3007
    %v3112 = vunpack.c.l.b16 %v3008
    %v3113 = vunpack.c.l.b16 %v3009
    %v3114 = vpack.c.b16 %v3067, %v3066
    %v3115 = vpack.c.b16 %v3069, %v3068
    %v3116 = vpack.c.b16 %v3071, %v3070
    %v3117 = vpack.c.b16 %v3073, %v3072
    %v3118 = vpack.c.b16 %v3075, %v3074
    %v3119 = vpack.c.b16 %v3077, %v3076
    %v3120 = vpack.c.b16 %v3079, %v3078
    %v3121 = vpack.c.b16 %v3081, %v3080
    %v3122 = vpack.c.b16 %v3083, %v3082
    %v3123 = vpack.c.b16 %v3085, %v3084
    %v3124 = vpack.c.b16 %v3087, %v3086
    %v3125 = vpack.c.b16 %v3089, %v3088
    %v3126 = vpack.c.b16 %v3091, %v3090
    %v3127 = vpack.c.b16 %v3093, %v3092
    %v3128 = vpack.c.b16 %v3095, %v3094
    %v3129 = vpack.c.b16 %v3097, %v3096
    %v3130 = vpack.c.b16 %v3099, %v3098
    %v3131 = vpack.c.b16 %v3101, %v3100
    %v3132 = vpack.c.b16 %v3103, %v3102
    %v3133 = vpack.c.b16 %v3105, %v3104
    %v3134 = vpack.c.b16 %v3107, %v3106
    %v3135 = vpack.c.b16 %v3109, %v3108
    %v3136 = vpack.c.b16 %v3111, %v3110
    %v3137 = vpack.c.b16 %v3113, %v3112
    %3162 = vmatprep.subr.bf16.mxu0 0
    %3163 = vmatpush1.bf16.msra.mxu0 %v3114
    %3164 = vmatprep.subr.bf16.mxu0 0
    %3165 = vmatpush1.bf16.msra.mxu0 %v3115
    %3166 = vmatprep.subr.bf16.mxu0 0
    %3167 = vmatpush1.bf16.msra.mxu0 %v3116
    %3168 = vmatprep.subr.bf16.mxu0 0
    %3169 = vmatpush1.bf16.msra.mxu0 %v3117
    %3170 = vmatprep.subr.bf16.mxu0 0
    %3171 = vmatpush1.bf16.msra.mxu0 %v3118
    %3172 = vmatprep.subr.bf16.mxu0 0
    %3173 = vmatpush1.bf16.msra.mxu0 %v3119
    %3174 = vmatprep.subr.bf16.mxu0 0
    %3175 = vmatpush1.bf16.msra.mxu0 %v3120
    %3176 = vmatprep.subr.bf16.mxu0 0
    %3177 = vmatpush1.bf16.msra.mxu0 %v3121
    %3178 = vmatprep.subr.bf16.mxu0 0
    %3179 = vmatpush1.bf16.msra.mxu0 %v3122
    %3180 = vmatprep.subr.bf16.mxu0 0
    %3181 = vmatpush1.bf16.msra.mxu0 %v3123
    %3182 = vmatprep.subr.bf16.mxu0 0
    %3183 = vmatpush1.bf16.msra.mxu0 %v3124
    %3184 = vmatprep.subr.bf16.mxu0 0
    %3185 = vmatpush1.bf16.msra.mxu0 %v3125
    %3186 = vmatprep.subr.bf16.mxu0 0
    %3187 = vmatpush1.bf16.msra.mxu0 %v3126
    %3188 = vmatprep.subr.bf16.mxu0 0
    %3189 = vmatpush1.bf16.msra.mxu0 %v3127
    %3190 = vmatprep.subr.bf16.mxu0 0
    %3191 = vmatpush1.bf16.msra.mxu0 %v3128
    %3192 = vmatprep.subr.bf16.mxu0 0
    %3193 = vmatpush1.bf16.msra.mxu0 %v3129
    %3194 = vmatprep.mubr.bf16.mxu0 %v2956
    %3195 = vmatmul.mubr.bf16.gmra.mrb[0].mxu0 %v2955
    %v3196 = vpop.f32.mrb[0].mxu0
    %v3197 = vadd.f32 %v3016, %v3196
    %v3198 = vpop.f32.mrb[0].mxu0
    %v3199 = vpop.f32.mrb[0].mxu0
    %v3200 = vadd.f32 %v3016, %v3199
    %v3201 = vpop.f32.mrb[0].mxu0
    %3202 = vmatprep.mubr.bf16.mxu0 %v2959
    %3203 = vmatmul.mubr.bf16.gmra.mrb[0].mxu0 %v2958
    %v3204 = vpop.f32.mrb[0].mxu0
    %v3205 = vadd.f32 %v3016, %v3204
    %v3206 = vpop.f32.mrb[0].mxu0
    %v3207 = vpop.f32.mrb[0].mxu0
    %v3208 = vadd.f32 %v3016, %v3207
    %v3209 = vpop.f32.mrb[0].mxu0
    %3210 = vdwg.mxu0
    %3211 = vmatprep.subr.bf16.mxu0 0
    %3212 = vmatpush1.bf16.msra.mxu0 %v3130
    %3213 = vmatprep.subr.bf16.mxu0 0
    %3214 = vmatpush1.bf16.msra.mxu0 %v3131
    %3215 = vmatprep.subr.bf16.mxu0 0
    %3216 = vmatpush1.bf16.msra.mxu0 %v3132
    %3217 = vmatprep.subr.bf16.mxu0 0
    %3218 = vmatpush1.bf16.msra.mxu0 %v3133
    %3219 = vmatprep.subr.bf16.mxu0 0
    %3220 = vmatpush1.bf16.msra.mxu0 %v3134
    %3221 = vmatprep.subr.bf16.mxu0 0
    %3222 = vmatpush1.bf16.msra.mxu0 %v3135
    %3223 = vmatprep.subr.bf16.mxu0 0
    %3224 = vmatpush1.bf16.msra.mxu0 %v3136
    %3225 = vmatprep.subr.bf16.mxu0 0
    %3226 = vmatpush1.bf16.msra.mxu0 %v3137
    %3227 = vmatprep.subr.bf16.mxu0 0
    %3228 = vmatpush1.bf16.msra.mxu0 0
    %3229 = vmatprep.subr.bf16.mxu0 0
    %3230 = vmatpush1.bf16.msra.mxu0 0
    %3231 = vmatprep.subr.bf16.mxu0 0
    %3232 = vmatpush1.bf16.msra.mxu0 0
    %3233 = vmatprep.subr.bf16.mxu0 0
    %3234 = vmatpush1.bf16.msra.mxu0 0
    %3235 = vmatprep.subr.bf16.mxu0 0
    %3236 = vmatpush1.bf16.msra.mxu0 0
    %3237 = vmatprep.subr.bf16.mxu0 0
    %3238 = vmatpush1.bf16.msra.mxu0 0
    %3239 = vmatprep.subr.bf16.mxu0 0
    %3240 = vmatpush1.bf16.msra.mxu0 0
    %3241 = vmatprep.subr.bf16.mxu0 0
    %3242 = vmatpush1.bf16.msra.mxu0 0
    %3243 = vmatprep.mubr.bf16.mxu0 0
    %3244 = vmatmul.mubr.bf16.gmra.mrb[0].mxu0 %v2957
    %v3245 = vpop.f32.mrb[0].mxu0
    %v3246 = vadd.f32 %v3197, %v3245
    %v3247 = vpop.f32.mrb[0].mxu0
    %v3248 = vpop.f32.mrb[0].mxu0
    %v3249 = vadd.f32 %v3200, %v3248
    %v3250 = vpop.f32.mrb[0].mxu0
    %3251 = vmatprep.mubr.bf16.mxu0 0
    %3252 = vmatmul.mubr.bf16.gmra.mrb[0].mxu0 %v2960
    %v3253 = vpop.f32.mrb[0].mxu0
    %v3254 = vadd.f32 %v3205, %v3253
    %v3255 = vpop.f32.mrb[0].mxu0
    %v3256 = vpop.f32.mrb[0].mxu0
    %v3257 = vadd.f32 %v3208, %v3256
    %v3258 = vpop.f32.mrb[0].mxu0
    %3259 = vdwg.mxu0
    %v3260 = vmax.f32 %v3246, 0.0
    %v3261 = vmax.f32 %v3249, 0.0
    %v3262 = vmax.f32 %v3254, 0.0
    %v3263 = vmax.f32 %v3257, 0.0
    %3264 = vst [vmem:[#allocation2 + $0x8] sm:$0xff] %v3260
    %3265 = vst [vmem:[#allocation2 + $0x20] sm:$0xff] %v3261
    %3266 = vst [vmem:[#allocation2 + $0x38] sm:$0xff] %v3262
    %3267 = vst [vmem:[#allocation2 + $0x50] sm:$0xff] %v3263
    %v3270 = vrot.slane %v3260, 7
    %v3271 = vrot.slane %v3261, 7
    %v3272 = vsel %vm57, %v3270, %v3271
    %3275 = vst [vmem:[#allocation2] sm:$0xfe] %v3270
    %3276 = vst [vmem:[#allocation2 + $0x18] sm:$0xff] %v3272
    %v3277 = vrot.slane %v3260, 1
    %v3278 = vrot.slane %v3261, 1
    %v3279 = vsel %vm65, %v3277, %v3278
    %3282 = vst [vmem:[#allocation2 + $0x10] sm:$0xff] %v3279
    %3283 = vst [vmem:[#allocation2 + $0x28] sm:$0x7f] %v3278
    %v3286 = vrot.slane %v3262, 7
    %v3287 = vrot.slane %v3263, 7
    %v3288 = vsel %vm57, %v3286, %v3287
    %3291 = vst [vmem:[#allocation2 + $0x30] sm:$0xfe] %v3286
    %3292 = vst [vmem:[#allocation2 + $0x48] sm:$0xff] %v3288
    %v3293 = vrot.slane %v3262, 1
    %v3294 = vrot.slane %v3263, 1
    %v3295 = vsel %vm65, %v3293, %v3294
    %3298 = vst [vmem:[#allocation2 + $0x40] sm:$0xff] %v3295
    %3299 = vst [vmem:[#allocation2 + $0x58] sm:$0x7f] %v3294
    %v3300 = vld [vmem:[#allocation2] sm:$0xff]
    %v3301 = vld [vmem:[#allocation2 + $0x8] sm:$0xff]
    %v3302 = vld [vmem:[#allocation2 + $0x10] sm:$0xff]
    %v3303 = vld [vmem:[#allocation2 + $0x18] sm:$0xff]
    %v3304 = vld [vmem:[#allocation2 + $0x20] sm:$0xff]
    %v3305 = vld [vmem:[#allocation2 + $0x28] sm:$0xff]
    %v3306 = vld [vmem:[#allocation2 + $0x30] sm:$0xff]
    %v3307 = vld [vmem:[#allocation2 + $0x38] sm:$0xff]
    %v3308 = vld [vmem:[#allocation2 + $0x40] sm:$0xff]
    %v3309 = vld [vmem:[#allocation2 + $0x48] sm:$0xff]
    %v3310 = vld [vmem:[#allocation2 + $0x50] sm:$0xff]
    %v3311 = vld [vmem:[#allocation2 + $0x58] sm:$0xff]
    %v3312 = vpack.c.bf16 %v3303, %v3300
    %v3313 = vpack.c.bf16 %v3304, %v3301
    %v3314 = vpack.c.bf16 %v3305, %v3302
    %v3315 = vpack.c.bf16 %v3309, %v3306
    %v3316 = vpack.c.bf16 %v3310, %v3307
    %v3317 = vpack.c.bf16 %v3311, %v3308
    %s3318 = scalar_lea.vmem [#allocation3], 1728
    %v3319 = vld [vmem:[%s3318] sm:$0xf]
    %v3320 = vld [vmem:[%s3318 + $0x4] sm:$0xf]
    %v3321 = vld [vmem:[%s3318 + $0x8] sm:$0xf]
    %v3322 = vld [vmem:[%s3318 + $0xc] sm:$0xf]
    %v3323 = vld [vmem:[%s3318 + $0x10] sm:$0xf]
    %v3324 = vld [vmem:[%s3318 + $0x14] sm:$0xf]
    %v3325 = vld [vmem:[%s3318 + $0x18] sm:$0xf]
    %v3326 = vld [vmem:[%s3318 + $0x1c] sm:$0xf]
    %v3327 = vld [vmem:[%s3318 + $0x20] sm:$0xf]
    %v3328 = vld [vmem:[%s3318 + $0x24] sm:$0xf]
    %v3329 = vld [vmem:[%s3318 + $0x28] sm:$0xf]
    %v3330 = vld [vmem:[%s3318 + $0x2c] sm:$0xf]
    %v3331 = vld [vmem:[%s3318 + $0x30] sm:$0xf]
    %v3332 = vld [vmem:[%s3318 + $0x34] sm:$0xf]
    %v3333 = vld [vmem:[%s3318 + $0x38] sm:$0xf]
    %v3334 = vld [vmem:[%s3318 + $0x3c] sm:$0xf]
    %v3335 = vld [vmem:[%s3318 + $0x40] sm:$0xf]
    %v3336 = vld [vmem:[%s3318 + $0x44] sm:$0xf]
    %v3337 = vld [vmem:[%s3318 + $0x48] sm:$0xf]
    %v3338 = vld [vmem:[%s3318 + $0x4c] sm:$0xf]
    %v3339 = vld [vmem:[%s3318 + $0x50] sm:$0xf]
    %v3340 = vld [vmem:[%s3318 + $0x54] sm:$0xf]
    %v3341 = vld [vmem:[%s3318 + $0x58] sm:$0xf]
    %v3342 = vld [vmem:[%s3318 + $0x5c] sm:$0xf]
    %v3343 = vld [vmem:[%s3318 + $0x60] sm:$0xf]
    %v3344 = vld [vmem:[%s3318 + $0x64] sm:$0xf]
    %v3345 = vld [vmem:[%s3318 + $0x68] sm:$0xf]
    %v3346 = vld [vmem:[%s3318 + $0x6c] sm:$0xf]
    %v3347 = vld [vmem:[%s3318 + $0x70] sm:$0xf]
    %v3348 = vld [vmem:[%s3318 + $0x74] sm:$0xf]
    %v3349 = vld [vmem:[%s3318 + $0x78] sm:$0xf]
    %v3350 = vld [vmem:[%s3318 + $0x7c] sm:$0xf]
    %v3351 = vld [vmem:[%s3318 + $0x80] sm:$0xf]
    %v3352 = vld [vmem:[%s3318 + $0x84] sm:$0xf]
    %v3353 = vld [vmem:[%s3318 + $0x88] sm:$0xf]
    %v3354 = vld [vmem:[%s3318 + $0x8c] sm:$0xf]
    %v3355 = vld [vmem:[%s3318 + $0x90] sm:$0xf]
    %v3356 = vld [vmem:[%s3318 + $0x94] sm:$0xf]
    %v3357 = vld [vmem:[%s3318 + $0x98] sm:$0xf]
    %v3358 = vld [vmem:[%s3318 + $0x9c] sm:$0xf]
    %v3359 = vld [vmem:[%s3318 + $0xa0] sm:$0xf]
    %v3360 = vld [vmem:[%s3318 + $0xa4] sm:$0xf]
    %v3361 = vld [vmem:[%s3318 + $0xa8] sm:$0xf]
    %v3362 = vld [vmem:[%s3318 + $0xac] sm:$0xf]
    %v3363 = vld [vmem:[%s3318 + $0xb0] sm:$0xf]
    %v3364 = vld [vmem:[%s3318 + $0xb4] sm:$0xf]
    %v3365 = vld [vmem:[%s3318 + $0xb8] sm:$0xf]
    %v3366 = vld [vmem:[%s3318 + $0xbc] sm:$0xf]
    %s3367 = scalar_lea.vmem [#allocation5], 9
    %v3368 = vld [vmem:[%s3367] sm:$0x1]
    %v3370 = vlaneseq
    %v3371 = vshrl.u32 %v3370, 7
    %v3372 = vsub.s32 0, %v3371
    %v3373 = vrot.slane %v3368, %v3372
    %v3423 = vunpack.c.l.b16 %v3319
    %v3424 = vunpack.c.l.b16 %v3320
    %v3425 = vunpack.c.l.b16 %v3321
    %v3426 = vunpack.c.l.b16 %v3322
    %v3427 = vunpack.c.l.b16 %v3323
    %v3428 = vunpack.c.l.b16 %v3324
    %v3429 = vunpack.c.l.b16 %v3325
    %v3430 = vunpack.c.l.b16 %v3326
    %v3431 = vunpack.c.l.b16 %v3327
    %v3432 = vunpack.c.l.b16 %v3328
    %v3433 = vunpack.c.l.b16 %v3329
    %v3434 = vunpack.c.l.b16 %v3330
    %v3435 = vunpack.c.l.b16 %v3331
    %v3436 = vunpack.c.l.b16 %v3332
    %v3437 = vunpack.c.l.b16 %v3333
    %v3438 = vunpack.c.l.b16 %v3334
    %v3439 = vunpack.c.l.b16 %v3335
    %v3440 = vunpack.c.l.b16 %v3336
    %v3441 = vunpack.c.l.b16 %v3337
    %v3442 = vunpack.c.l.b16 %v3338
    %v3443 = vunpack.c.l.b16 %v3339
    %v3444 = vunpack.c.l.b16 %v3340
    %v3445 = vunpack.c.l.b16 %v3341
    %v3446 = vunpack.c.l.b16 %v3342
    %v3447 = vunpack.c.l.b16 %v3343
    %v3448 = vunpack.c.l.b16 %v3344
    %v3449 = vunpack.c.l.b16 %v3345
    %v3450 = vunpack.c.l.b16 %v3346
    %v3451 = vunpack.c.l.b16 %v3347
    %v3452 = vunpack.c.l.b16 %v3348
    %v3453 = vunpack.c.l.b16 %v3349
    %v3454 = vunpack.c.l.b16 %v3350
    %v3455 = vunpack.c.l.b16 %v3351
    %v3456 = vunpack.c.l.b16 %v3352
    %v3457 = vunpack.c.l.b16 %v3353
    %v3458 = vunpack.c.l.b16 %v3354
    %v3459 = vunpack.c.l.b16 %v3355
    %v3460 = vunpack.c.l.b16 %v3356
    %v3461 = vunpack.c.l.b16 %v3357
    %v3462 = vunpack.c.l.b16 %v3358
    %v3463 = vunpack.c.l.b16 %v3359
    %v3464 = vunpack.c.l.b16 %v3360
    %v3465 = vunpack.c.l.b16 %v3361
    %v3466 = vunpack.c.l.b16 %v3362
    %v3467 = vunpack.c.l.b16 %v3363
    %v3468 = vunpack.c.l.b16 %v3364
    %v3469 = vunpack.c.l.b16 %v3365
    %v3470 = vunpack.c.l.b16 %v3366
    %v3471 = vpack.c.b16 %v3424, %v3423
    %v3472 = vpack.c.b16 %v3426, %v3425
    %v3473 = vpack.c.b16 %v3428, %v3427
    %v3474 = vpack.c.b16 %v3430, %v3429
    %v3475 = vpack.c.b16 %v3432, %v3431
    %v3476 = vpack.c.b16 %v3434, %v3433
    %v3477 = vpack.c.b16 %v3436, %v3435
    %v3478 = vpack.c.b16 %v3438, %v3437
    %v3479 = vpack.c.b16 %v3440, %v3439
    %v3480 = vpack.c.b16 %v3442, %v3441
    %v3481 = vpack.c.b16 %v3444, %v3443
    %v3482 = vpack.c.b16 %v3446, %v3445
    %v3483 = vpack.c.b16 %v3448, %v3447
    %v3484 = vpack.c.b16 %v3450, %v3449
    %v3485 = vpack.c.b16 %v3452, %v3451
    %v3486 = vpack.c.b16 %v3454, %v3453
    %v3487 = vpack.c.b16 %v3456, %v3455
    %v3488 = vpack.c.b16 %v3458, %v3457
    %v3489 = vpack.c.b16 %v3460, %v3459
    %v3490 = vpack.c.b16 %v3462, %v3461
    %v3491 = vpack.c.b16 %v3464, %v3463
    %v3492 = vpack.c.b16 %v3466, %v3465
    %v3493 = vpack.c.b16 %v3468, %v3467
    %v3494 = vpack.c.b16 %v3470, %v3469
    %3519 = vmatprep.subr.bf16.mxu0 0
    %3520 = vmatpush1.bf16.msra.mxu0 %v3471
    %3521 = vmatprep.subr.bf16.mxu0 0
    %3522 = vmatpush1.bf16.msra.mxu0 %v3472
    %3523 = vmatprep.subr.bf16.mxu0 0
    %3524 = vmatpush1.bf16.msra.mxu0 %v3473
    %3525 = vmatprep.subr.bf16.mxu0 0
    %3526 = vmatpush1.bf16.msra.mxu0 %v3474
    %3527 = vmatprep.subr.bf16.mxu0 0
    %3528 = vmatpush1.bf16.msra.mxu0 %v3475
    %3529 = vmatprep.subr.bf16.mxu0 0
    %3530 = vmatpush1.bf16.msra.mxu0 %v3476
    %3531 = vmatprep.subr.bf16.mxu0 0
    %3532 = vmatpush1.bf16.msra.mxu0 %v3477
    %3533 = vmatprep.subr.bf16.mxu0 0
    %3534 = vmatpush1.bf16.msra.mxu0 %v3478
    %3535 = vmatprep.subr.bf16.mxu0 0
    %3536 = vmatpush1.bf16.msra.mxu0 %v3479
    %3537 = vmatprep.subr.bf16.mxu0 0
    %3538 = vmatpush1.bf16.msra.mxu0 %v3480
    %3539 = vmatprep.subr.bf16.mxu0 0
    %3540 = vmatpush1.bf16.msra.mxu0 %v3481
    %3541 = vmatprep.subr.bf16.mxu0 0
    %3542 = vmatpush1.bf16.msra.mxu0 %v3482
    %3543 = vmatprep.subr.bf16.mxu0 0
    %3544 = vmatpush1.bf16.msra.mxu0 %v3483
    %3545 = vmatprep.subr.bf16.mxu0 0
    %3546 = vmatpush1.bf16.msra.mxu0 %v3484
    %3547 = vmatprep.subr.bf16.mxu0 0
    %3548 = vmatpush1.bf16.msra.mxu0 %v3485
    %3549 = vmatprep.subr.bf16.mxu0 0
    %3550 = vmatpush1.bf16.msra.mxu0 %v3486
    %3551 = vmatprep.mubr.bf16.mxu0 %v3313
    %3552 = vmatmul.mubr.bf16.gmra.mrb[0].mxu0 %v3312
    %v3553 = vpop.f32.mrb[0].mxu0
    %v3554 = vadd.f32 %v3373, %v3553
    %v3555 = vpop.f32.mrb[0].mxu0
    %v3556 = vpop.f32.mrb[0].mxu0
    %v3557 = vadd.f32 %v3373, %v3556
    %v3558 = vpop.f32.mrb[0].mxu0
    %3559 = vmatprep.mubr.bf16.mxu0 %v3316
    %3560 = vmatmul.mubr.bf16.gmra.mrb[0].mxu0 %v3315
    %v3561 = vpop.f32.mrb[0].mxu0
    %v3562 = vadd.f32 %v3373, %v3561
    %v3563 = vpop.f32.mrb[0].mxu0
    %v3564 = vpop.f32.mrb[0].mxu0
    %v3565 = vadd.f32 %v3373, %v3564
    %v3566 = vpop.f32.mrb[0].mxu0
    %3567 = vdwg.mxu0
    %3568 = vmatprep.subr.bf16.mxu0 0
    %3569 = vmatpush1.bf16.msra.mxu0 %v3487
    %3570 = vmatprep.subr.bf16.mxu0 0
    %3571 = vmatpush1.bf16.msra.mxu0 %v3488
    %3572 = vmatprep.subr.bf16.mxu0 0
    %3573 = vmatpush1.bf16.msra.mxu0 %v3489
    %3574 = vmatprep.subr.bf16.mxu0 0
    %3575 = vmatpush1.bf16.msra.mxu0 %v3490
    %3576 = vmatprep.subr.bf16.mxu0 0
    %3577 = vmatpush1.bf16.msra.mxu0 %v3491
    %3578 = vmatprep.subr.bf16.mxu0 0
    %3579 = vmatpush1.bf16.msra.mxu0 %v3492
    %3580 = vmatprep.subr.bf16.mxu0 0
    %3581 = vmatpush1.bf16.msra.mxu0 %v3493
    %3582 = vmatprep.subr.bf16.mxu0 0
    %3583 = vmatpush1.bf16.msra.mxu0 %v3494
    %3584 = vmatprep.subr.bf16.mxu0 0
    %3585 = vmatpush1.bf16.msra.mxu0 0
    %3586 = vmatprep.subr.bf16.mxu0 0
    %3587 = vmatpush1.bf16.msra.mxu0 0
    %3588 = vmatprep.subr.bf16.mxu0 0
    %3589 = vmatpush1.bf16.msra.mxu0 0
    %3590 = vmatprep.subr.bf16.mxu0 0
    %3591 = vmatpush1.bf16.msra.mxu0 0
    %3592 = vmatprep.subr.bf16.mxu0 0
    %3593 = vmatpush1.bf16.msra.mxu0 0
    %3594 = vmatprep.subr.bf16.mxu0 0
    %3595 = vmatpush1.bf16.msra.mxu0 0
    %3596 = vmatprep.subr.bf16.mxu0 0
    %3597 = vmatpush1.bf16.msra.mxu0 0
    %3598 = vmatprep.subr.bf16.mxu0 0
    %3599 = vmatpush1.bf16.msra.mxu0 0
    %3600 = vmatprep.mubr.bf16.mxu0 0
    %3601 = vmatmul.mubr.bf16.gmra.mrb[0].mxu0 %v3314
    %v3602 = vpop.f32.mrb[0].mxu0
    %v3603 = vadd.f32 %v3554, %v3602
    %v3604 = vpop.f32.mrb[0].mxu0
    %v3605 = vpop.f32.mrb[0].mxu0
    %v3606 = vadd.f32 %v3557, %v3605
    %v3607 = vpop.f32.mrb[0].mxu0
    %3608 = vmatprep.mubr.bf16.mxu0 0
    %3609 = vmatmul.mubr.bf16.gmra.mrb[0].mxu0 %v3317
    %v3610 = vpop.f32.mrb[0].mxu0
    %v3611 = vadd.f32 %v3562, %v3610
    %v3612 = vpop.f32.mrb[0].mxu0
    %v3613 = vpop.f32.mrb[0].mxu0
    %v3614 = vadd.f32 %v3565, %v3613
    %v3615 = vpop.f32.mrb[0].mxu0
    %3616 = vdwg.mxu0
    %v3617 = vadd.f32 %v3603, %v2903
    %v3618 = vadd.f32 %v3606, %v2904
    %v3619 = vadd.f32 %v3611, %v2905
    %v3620 = vadd.f32 %v3614, %v2906
    %3621 = vst [vmem:[#allocation2 + $0x8] sm:$0xff] %v3617
    %3622 = vst [vmem:[#allocation2 + $0x20] sm:$0xff] %v3618
    %3623 = vst [vmem:[#allocation2 + $0x38] sm:$0xff] %v3619
    %3624 = vst [vmem:[#allocation2 + $0x50] sm:$0xff] %v3620
    %v3627 = vrot.slane %v3617, 7
    %v3628 = vrot.slane %v3618, 7
    %v3629 = vsel %vm57, %v3627, %v3628
    %3632 = vst [vmem:[#allocation2] sm:$0xfe] %v3627
    %3633 = vst [vmem:[#allocation2 + $0x18] sm:$0xff] %v3629
    %v3634 = vrot.slane %v3617, 1
    %v3635 = vrot.slane %v3618, 1
    %v3636 = vsel %vm65, %v3634, %v3635
    %3639 = vst [vmem:[#allocation2 + $0x10] sm:$0xff] %v3636
    %3640 = vst [vmem:[#allocation2 + $0x28] sm:$0x7f] %v3635
    %v3643 = vrot.slane %v3619, 7
    %v3644 = vrot.slane %v3620, 7
    %v3645 = vsel %vm57, %v3643, %v3644
    %3648 = vst [vmem:[#allocation2 + $0x30] sm:$0xfe] %v3643
    %3649 = vst [vmem:[#allocation2 + $0x48] sm:$0xff] %v3645
    %v3650 = vrot.slane %v3619, 1
    %v3651 = vrot.slane %v3620, 1
    %v3652 = vsel %vm65, %v3650, %v3651
    %3655 = vst [vmem:[#allocation2 + $0x40] sm:$0xff] %v3652
    %3656 = vst [vmem:[#allocation2 + $0x58] sm:$0x7f] %v3651
    %v3657 = vld [vmem:[#allocation2] sm:$0xff]
    %v3658 = vld [vmem:[#allocation2 + $0x8] sm:$0xff]
    %v3659 = vld [vmem:[#allocation2 + $0x10] sm:$0xff]
    %v3660 = vld [vmem:[#allocation2 + $0x18] sm:$0xff]
    %v3661 = vld [vmem:[#allocation2 + $0x20] sm:$0xff]
    %v3662 = vld [vmem:[#allocation2 + $0x28] sm:$0xff]
    %v3663 = vld [vmem:[#allocation2 + $0x30] sm:$0xff]
    %v3664 = vld [vmem:[#allocation2 + $0x38] sm:$0xff]
    %v3665 = vld [vmem:[#allocation2 + $0x40] sm:$0xff]
    %v3666 = vld [vmem:[#allocation2 + $0x48] sm:$0xff]
    %v3667 = vld [vmem:[#allocation2 + $0x50] sm:$0xff]
    %v3668 = vld [vmem:[#allocation2 + $0x58] sm:$0xff]
    %v3669 = vpack.c.bf16 %v3660, %v3657
    %v3670 = vpack.c.bf16 %v3661, %v3658
    %v3671 = vpack.c.bf16 %v3662, %v3659
    %v3672 = vpack.c.bf16 %v3666, %v3663
    %v3673 = vpack.c.bf16 %v3667, %v3664
    %v3674 = vpack.c.bf16 %v3668, %v3665
    %s3675 = scalar_lea.vmem [#allocation3], 1920
    %v3676 = vld [vmem:[%s3675] sm:$0xf]
    %v3677 = vld [vmem:[%s3675 + $0x4] sm:$0xf]
    %v3678 = vld [vmem:[%s3675 + $0x8] sm:$0xf]
    %v3679 = vld [vmem:[%s3675 + $0xc] sm:$0xf]
    %v3680 = vld [vmem:[%s3675 + $0x10] sm:$0xf]
    %v3681 = vld [vmem:[%s3675 + $0x14] sm:$0xf]
    %v3682 = vld [vmem:[%s3675 + $0x18] sm:$0xf]
    %v3683 = vld [vmem:[%s3675 + $0x1c] sm:$0xf]
    %v3684 = vld [vmem:[%s3675 + $0x20] sm:$0xf]
    %v3685 = vld [vmem:[%s3675 + $0x24] sm:$0xf]
    %v3686 = vld [vmem:[%s3675 + $0x28] sm:$0xf]
    %v3687 = vld [vmem:[%s3675 + $0x2c] sm:$0xf]
    %v3688 = vld [vmem:[%s3675 + $0x30] sm:$0xf]
    %v3689 = vld [vmem:[%s3675 + $0x34] sm:$0xf]
    %v3690 = vld [vmem:[%s3675 + $0x38] sm:$0xf]
    %v3691 = vld [vmem:[%s3675 + $0x3c] sm:$0xf]
    %v3692 = vld [vmem:[%s3675 + $0x40] sm:$0xf]
    %v3693 = vld [vmem:[%s3675 + $0x44] sm:$0xf]
    %v3694 = vld [vmem:[%s3675 + $0x48] sm:$0xf]
    %v3695 = vld [vmem:[%s3675 + $0x4c] sm:$0xf]
    %v3696 = vld [vmem:[%s3675 + $0x50] sm:$0xf]
    %v3697 = vld [vmem:[%s3675 + $0x54] sm:$0xf]
    %v3698 = vld [vmem:[%s3675 + $0x58] sm:$0xf]
    %v3699 = vld [vmem:[%s3675 + $0x5c] sm:$0xf]
    %v3700 = vld [vmem:[%s3675 + $0x60] sm:$0xf]
    %v3701 = vld [vmem:[%s3675 + $0x64] sm:$0xf]
    %v3702 = vld [vmem:[%s3675 + $0x68] sm:$0xf]
    %v3703 = vld [vmem:[%s3675 + $0x6c] sm:$0xf]
    %v3704 = vld [vmem:[%s3675 + $0x70] sm:$0xf]
    %v3705 = vld [vmem:[%s3675 + $0x74] sm:$0xf]
    %v3706 = vld [vmem:[%s3675 + $0x78] sm:$0xf]
    %v3707 = vld [vmem:[%s3675 + $0x7c] sm:$0xf]
    %v3708 = vld [vmem:[%s3675 + $0x80] sm:$0xf]
    %v3709 = vld [vmem:[%s3675 + $0x84] sm:$0xf]
    %v3710 = vld [vmem:[%s3675 + $0x88] sm:$0xf]
    %v3711 = vld [vmem:[%s3675 + $0x8c] sm:$0xf]
    %v3712 = vld [vmem:[%s3675 + $0x90] sm:$0xf]
    %v3713 = vld [vmem:[%s3675 + $0x94] sm:$0xf]
    %v3714 = vld [vmem:[%s3675 + $0x98] sm:$0xf]
    %v3715 = vld [vmem:[%s3675 + $0x9c] sm:$0xf]
    %v3716 = vld [vmem:[%s3675 + $0xa0] sm:$0xf]
    %v3717 = vld [vmem:[%s3675 + $0xa4] sm:$0xf]
    %v3718 = vld [vmem:[%s3675 + $0xa8] sm:$0xf]
    %v3719 = vld [vmem:[%s3675 + $0xac] sm:$0xf]
    %v3720 = vld [vmem:[%s3675 + $0xb0] sm:$0xf]
    %v3721 = vld [vmem:[%s3675 + $0xb4] sm:$0xf]
    %v3722 = vld [vmem:[%s3675 + $0xb8] sm:$0xf]
    %v3723 = vld [vmem:[%s3675 + $0xbc] sm:$0xf]
    %s3724 = scalar_lea.vmem [#allocation5], 10
    %v3725 = vld [vmem:[%s3724] sm:$0x1]
    %v3727 = vlaneseq
    %v3728 = vshrl.u32 %v3727, 7
    %v3729 = vsub.s32 0, %v3728
    %v3730 = vrot.slane %v3725, %v3729
    %v3780 = vunpack.c.l.b16 %v3676
    %v3781 = vunpack.c.l.b16 %v3677
    %v3782 = vunpack.c.l.b16 %v3678
    %v3783 = vunpack.c.l.b16 %v3679
    %v3784 = vunpack.c.l.b16 %v3680
    %v3785 = vunpack.c.l.b16 %v3681
    %v3786 = vunpack.c.l.b16 %v3682
    %v3787 = vunpack.c.l.b16 %v3683
    %v3788 = vunpack.c.l.b16 %v3684
    %v3789 = vunpack.c.l.b16 %v3685
    %v3790 = vunpack.c.l.b16 %v3686
    %v3791 = vunpack.c.l.b16 %v3687
    %v3792 = vunpack.c.l.b16 %v3688
    %v3793 = vunpack.c.l.b16 %v3689
    %v3794 = vunpack.c.l.b16 %v3690
    %v3795 = vunpack.c.l.b16 %v3691
    %v3796 = vunpack.c.l.b16 %v3692
    %v3797 = vunpack.c.l.b16 %v3693
    %v3798 = vunpack.c.l.b16 %v3694
    %v3799 = vunpack.c.l.b16 %v3695
    %v3800 = vunpack.c.l.b16 %v3696
    %v3801 = vunpack.c.l.b16 %v3697
    %v3802 = vunpack.c.l.b16 %v3698
    %v3803 = vunpack.c.l.b16 %v3699
    %v3804 = vunpack.c.l.b16 %v3700
    %v3805 = vunpack.c.l.b16 %v3701
    %v3806 = vunpack.c.l.b16 %v3702
    %v3807 = vunpack.c.l.b16 %v3703
    %v3808 = vunpack.c.l.b16 %v3704
    %v3809 = vunpack.c.l.b16 %v3705
    %v3810 = vunpack.c.l.b16 %v3706
    %v3811 = vunpack.c.l.b16 %v3707
    %v3812 = vunpack.c.l.b16 %v3708
    %v3813 = vunpack.c.l.b16 %v3709
    %v3814 = vunpack.c.l.b16 %v3710
    %v3815 = vunpack.c.l.b16 %v3711
    %v3816 = vunpack.c.l.b16 %v3712
    %v3817 = vunpack.c.l.b16 %v3713
    %v3818 = vunpack.c.l.b16 %v3714
    %v3819 = vunpack.c.l.b16 %v3715
    %v3820 = vunpack.c.l.b16 %v3716
    %v3821 = vunpack.c.l.b16 %v3717
    %v3822 = vunpack.c.l.b16 %v3718
    %v3823 = vunpack.c.l.b16 %v3719
    %v3824 = vunpack.c.l.b16 %v3720
    %v3825 = vunpack.c.l.b16 %v3721
    %v3826 = vunpack.c.l.b16 %v3722
    %v3827 = vunpack.c.l.b16 %v3723
    %v3828 = vpack.c.b16 %v3781, %v3780
    %v3829 = vpack.c.b16 %v3783, %v3782
    %v3830 = vpack.c.b16 %v3785, %v3784
    %v3831 = vpack.c.b16 %v3787, %v3786
    %v3832 = vpack.c.b16 %v3789, %v3788
    %v3833 = vpack.c.b16 %v3791, %v3790
    %v3834 = vpack.c.b16 %v3793, %v3792
    %v3835 = vpack.c.b16 %v3795, %v3794
    %v3836 = vpack.c.b16 %v3797, %v3796
    %v3837 = vpack.c.b16 %v3799, %v3798
    %v3838 = vpack.c.b16 %v3801, %v3800
    %v3839 = vpack.c.b16 %v3803, %v3802
    %v3840 = vpack.c.b16 %v3805, %v3804
    %v3841 = vpack.c.b16 %v3807, %v3806
    %v3842 = vpack.c.b16 %v3809, %v3808
    %v3843 = vpack.c.b16 %v3811, %v3810
    %v3844 = vpack.c.b16 %v3813, %v3812
    %v3845 = vpack.c.b16 %v3815, %v3814
    %v3846 = vpack.c.b16 %v3817, %v3816
    %v3847 = vpack.c.b16 %v3819, %v3818
    %v3848 = vpack.c.b16 %v3821, %v3820
    %v3849 = vpack.c.b16 %v3823, %v3822
    %v3850 = vpack.c.b16 %v3825, %v3824
    %v3851 = vpack.c.b16 %v3827, %v3826
    %3876 = vmatprep.subr.bf16.mxu0 0
    %3877 = vmatpush1.bf16.msra.mxu0 %v3828
    %3878 = vmatprep.subr.bf16.mxu0 0
    %3879 = vmatpush1.bf16.msra.mxu0 %v3829
    %3880 = vmatprep.subr.bf16.mxu0 0
    %3881 = vmatpush1.bf16.msra.mxu0 %v3830
    %3882 = vmatprep.subr.bf16.mxu0 0
    %3883 = vmatpush1.bf16.msra.mxu0 %v3831
    %3884 = vmatprep.subr.bf16.mxu0 0
    %3885 = vmatpush1.bf16.msra.mxu0 %v3832
    %3886 = vmatprep.subr.bf16.mxu0 0
    %3887 = vmatpush1.bf16.msra.mxu0 %v3833
    %3888 = vmatprep.subr.bf16.mxu0 0
    %3889 = vmatpush1.bf16.msra.mxu0 %v3834
    %3890 = vmatprep.subr.bf16.mxu0 0
    %3891 = vmatpush1.bf16.msra.mxu0 %v3835
    %3892 = vmatprep.subr.bf16.mxu0 0
    %3893 = vmatpush1.bf16.msra.mxu0 %v3836
    %3894 = vmatprep.subr.bf16.mxu0 0
    %3895 = vmatpush1.bf16.msra.mxu0 %v3837
    %3896 = vmatprep.subr.bf16.mxu0 0
    %3897 = vmatpush1.bf16.msra.mxu0 %v3838
    %3898 = vmatprep.subr.bf16.mxu0 0
    %3899 = vmatpush1.bf16.msra.mxu0 %v3839
    %3900 = vmatprep.subr.bf16.mxu0 0
    %3901 = vmatpush1.bf16.msra.mxu0 %v3840
    %3902 = vmatprep.subr.bf16.mxu0 0
    %3903 = vmatpush1.bf16.msra.mxu0 %v3841
    %3904 = vmatprep.subr.bf16.mxu0 0
    %3905 = vmatpush1.bf16.msra.mxu0 %v3842
    %3906 = vmatprep.subr.bf16.mxu0 0
    %3907 = vmatpush1.bf16.msra.mxu0 %v3843
    %3908 = vmatprep.mubr.bf16.mxu0 %v3670
    %3909 = vmatmul.mubr.bf16.gmra.mrb[0].mxu0 %v3669
    %v3910 = vpop.f32.mrb[0].mxu0
    %v3911 = vadd.f32 %v3730, %v3910
    %v3912 = vpop.f32.mrb[0].mxu0
    %v3913 = vpop.f32.mrb[0].mxu0
    %v3914 = vadd.f32 %v3730, %v3913
    %v3915 = vpop.f32.mrb[0].mxu0
    %3916 = vmatprep.mubr.bf16.mxu0 %v3673
    %3917 = vmatmul.mubr.bf16.gmra.mrb[0].mxu0 %v3672
    %v3918 = vpop.f32.mrb[0].mxu0
    %v3919 = vadd.f32 %v3730, %v3918
    %v3920 = vpop.f32.mrb[0].mxu0
    %v3921 = vpop.f32.mrb[0].mxu0
    %v3922 = vadd.f32 %v3730, %v3921
    %v3923 = vpop.f32.mrb[0].mxu0
    %3924 = vdwg.mxu0
    %3925 = vmatprep.subr.bf16.mxu0 0
    %3926 = vmatpush1.bf16.msra.mxu0 %v3844
    %3927 = vmatprep.subr.bf16.mxu0 0
    %3928 = vmatpush1.bf16.msra.mxu0 %v3845
    %3929 = vmatprep.subr.bf16.mxu0 0
    %3930 = vmatpush1.bf16.msra.mxu0 %v3846
    %3931 = vmatprep.subr.bf16.mxu0 0
    %3932 = vmatpush1.bf16.msra.mxu0 %v3847
    %3933 = vmatprep.subr.bf16.mxu0 0
    %3934 = vmatpush1.bf16.msra.mxu0 %v3848
    %3935 = vmatprep.subr.bf16.mxu0 0
    %3936 = vmatpush1.bf16.msra.mxu0 %v3849
    %3937 = vmatprep.subr.bf16.mxu0 0
    %3938 = vmatpush1.bf16.msra.mxu0 %v3850
    %3939 = vmatprep.subr.bf16.mxu0 0
    %3940 = vmatpush1.bf16.msra.mxu0 %v3851
    %3941 = vmatprep.subr.bf16.mxu0 0
    %3942 = vmatpush1.bf16.msra.mxu0 0
    %3943 = vmatprep.subr.bf16.mxu0 0
    %3944 = vmatpush1.bf16.msra.mxu0 0
    %3945 = vmatprep.subr.bf16.mxu0 0
    %3946 = vmatpush1.bf16.msra.mxu0 0
    %3947 = vmatprep.subr.bf16.mxu0 0
    %3948 = vmatpush1.bf16.msra.mxu0 0
    %3949 = vmatprep.subr.bf16.mxu0 0
    %3950 = vmatpush1.bf16.msra.mxu0 0
    %3951 = vmatprep.subr.bf16.mxu0 0
    %3952 = vmatpush1.bf16.msra.mxu0 0
    %3953 = vmatprep.subr.bf16.mxu0 0
    %3954 = vmatpush1.bf16.msra.mxu0 0
    %3955 = vmatprep.subr.bf16.mxu0 0
    %3956 = vmatpush1.bf16.msra.mxu0 0
    %3957 = vmatprep.mubr.bf16.mxu0 0
    %3958 = vmatmul.mubr.bf16.gmra.mrb[0].mxu0 %v3671
    %v3959 = vpop.f32.mrb[0].mxu0
    %v3960 = vadd.f32 %v3911, %v3959
    %v3961 = vpop.f32.mrb[0].mxu0
    %v3962 = vpop.f32.mrb[0].mxu0
    %v3963 = vadd.f32 %v3914, %v3962
    %v3964 = vpop.f32.mrb[0].mxu0
    %3965 = vmatprep.mubr.bf16.mxu0 0
    %3966 = vmatmul.mubr.bf16.gmra.mrb[0].mxu0 %v3674
    %v3967 = vpop.f32.mrb[0].mxu0
    %v3968 = vadd.f32 %v3919, %v3967
    %v3969 = vpop.f32.mrb[0].mxu0
    %v3970 = vpop.f32.mrb[0].mxu0
    %v3971 = vadd.f32 %v3922, %v3970
    %v3972 = vpop.f32.mrb[0].mxu0
    %3973 = vdwg.mxu0
    %v3974 = vadd.f32 %v3960, %v47
    %v3975 = vadd.f32 %v3963, %v48
    %v3976 = vadd.f32 %v3968, %v49
    %v3977 = vadd.f32 %v3971, %v50
    %3978 = vst [vmem:[%s3] sm:$0xff] %v3974
    %3979 = vst [vmem:[%s3 + $0x8] sm:$0xff] %v3975
    %3980 = vst [vmem:[%s3 + $0x10] sm:$0xff] %v3976
    %3981 = vst [vmem:[%s3 + $0x18] sm:$0xff] %v3977
    // Predicated region
    $region22: #{rir_block.1} parent=1 // pred_check
      _
    $region23: #{rir_block.1} parent=1 // pred_check_branch
      %3983 = sbr.rel (0) target = $region25
    $region24: #{rir_block.1} parent=1 // pred_region
      _
    $region25: #{rir_block.1} parent=1 // pred_fallthru
      _
    // Predicated region
    $region26: #{rir_block.1} parent=1 // pred_check
      _
    $region27: #{rir_block.1} parent=1 // pred_check_branch
      %3985 = sbr.rel (0) target = $region29
    $region28: #{rir_block.1} parent=1 // pred_region
      _
    $region29: #{rir_block.1} parent=1 // pred_fallthru
      _
    %3986 = vsyncpa [#allocation4], 1
    %3987 = vsyncpa [#allocation6], 1

// kernel: rir_block.1
$region0: #{rir_block.1}
  #allocation0 [shape = 'u32[]', space=smem, size = 0x4, offset = 0x4, fixed_abs, tag = 'smem constant byte address 0x4 - core index']
  #allocation1 [shape = 'u32[144,128]{1,0:T(1,128)}', space=vmem, size = 0x12000, scoped, tag = 'internal scratch']
  #allocation2 [shape = 'f32[32,384]{1,0:T(8,128)}', space=vmem, size = 0xc000, scoped, tag = 'scratch operand']
  %s0 = inlined_call_operand.vmem [shape: f32[32,128], index: 0, kind: input, shape index: {}]
  %s1 = inlined_call_operand.hbm [shape: bf16[11,384,128], index: 1, kind: input, shape index: {}]
  %s2 = inlined_call_operand.hbm [shape: f32[11,1,128], index: 2, kind: input, shape index: {}]
  %s3 = inlined_call_operand.vmem [shape: f32[32,128], index: 3, kind: output, shape index: {}]
  %s4 = sld [smem:[#allocation0]]
  $region30: #{rir_block.1} parent=0
    _
  %s6 = ssub.s32 1, %s4
  %s7 = scalar_select 0, %s6, %s4
  $region1: #{rir_block.1} parent=0
    #allocation3 [shape = 'u8[1081344]{0}', space=vmem, size = 0x108000, scoped, tag = 'input window, operand 1, single buffered']
    #allocation4 [shape = 's32[1]{0}', space=sflag, size = 0x4, scoped, tag = 'scoped memory for rir_block.1']
    #allocation5 [shape = 'u8[5632]{0}', space=vmem, size = 0x1800, scoped, tag = 'input window, operand 2, single buffered']
    #allocation6 [shape = 's32[1]{0}', space=sflag, size = 0x4, scoped, tag = 'scoped memory for rir_block.1']
    %8 = vsyncpa [#allocation4], 0
    %9 = vsyncpa [#allocation6], 0
    // Predicated region
    $region2: #{rir_block.1} parent=1 // pred_check
      _
    $region3: #{rir_block.1} parent=1 // pred_check_branch
      %11 = sbr.rel (0) target = $region5
    $region4: #{rir_block.1} parent=1 // pred_region
      _
    $region5: #{rir_block.1} parent=1 // pred_fallthru
      _
    // Predicated region
    $region6: #{rir_block.1} parent=1 // pred_check
      _
    $region7: #{rir_block.1} parent=1 // pred_check_branch
      %13 = sbr.rel (0) target = $region9
    $region8: #{rir_block.1} parent=1 // pred_region
      %s15 = ssub.s32 33792, 33792
      %16 = vsyncadd [#allocation4], %s15
      %s17 = sshll.u32 [#allocation3], 4
      %s18 = int_to_ptr.vmem [resolvable:$true] %s17
      %23 = dma.hbm_to_vmem [thread:$0]  %s1, 33792, %s18, [#allocation4], 64, 64, 4
    $region9: #{rir_block.1} parent=1 // pred_fallthru
      _
    // Predicated region
    $region10: #{rir_block.1} parent=1 // pred_check
      _
    $region11: #{rir_block.1} parent=1 // pred_check_branch
      %25 = sbr.rel (0) target = $region13
    $region12: #{rir_block.1} parent=1 // pred_region
      %s27 = ssub.s32 176, 176
      %28 = vsyncadd [#allocation6], %s27
      %s29 = sshll.u32 [#allocation5], 4
      %s30 = int_to_ptr.vmem [resolvable:$true] %s29
      %35 = dma.hbm_to_vmem [thread:$0]  %s2, 176, %s30, [#allocation6], 16, 16, 1
    $region13: #{rir_block.1} parent=1 // pred_fallthru
      _
    // Predicated region
    $region14: #{rir_block.1} parent=1 // pred_check
      _
    $region15: #{rir_block.1} parent=1 // pred_check_branch
      %37 = sbr.rel (0) target = $region17
    $region16: #{rir_block.1} parent=1 // pred_region
      %38 = dma.done [#allocation4], 33792
    $region17: #{rir_block.1} parent=1 // pred_fallthru
      _
    // Predicated region
    $region18: #{rir_block.1} parent=1 // pred_check
      _
    $region19: #{rir_block.1} parent=1 // pred_check_branch
      %40 = sbr.rel (0) target = $region21
    $region20: #{rir_block.1} parent=1 // pred_region
      %41 = dma.done [#allocation6], 176
    $region21: #{rir_block.1} parent=1 // pred_fallthru
      _
    %43 = vst [vmem:[#allocation2] sm:$0x1] 0.0
    %44 = vst [vmem:[#allocation2 + $0x2f] sm:$0x1] 0.0
    %45 = vst [vmem:[#allocation2 + $0x30] sm:$0x1] 0.0
    %46 = vst [vmem:[#allocation2 + $0x5f] sm:$0x1] 0.0
    %v47 = vld [vmem:[%s0] sm:$0xff]
    %v48 = vld [vmem:[%s0 + $0x8] sm:$0xff]
    %v49 = vld [vmem:[%s0 + $0x10] sm:$0xff]
    %v50 = vld [vmem:[%s0 + $0x18] sm:$0xff]
    %51 = vst [vmem:[#allocation2 + $0x8] sm:$0xff] %v47
    %52 = vst [vmem:[#allocation2 + $0x20] sm:$0xff] %v48
    %53 = vst [vmem:[#allocation2 + $0x38] sm:$0xff] %v49
    %54 = vst [vmem:[#allocation2 + $0x50] sm:$0xff] %v50
    %vm57 = vcmask 1040384
    %v58 = vrot.slane %v47, 7
    %v59 = vrot.slane %v48, 7
    %v60 = vsel %vm57, %v58, %v59
    %63 = vst [vmem:[#allocation2] sm:$0xfe] %v58
    %64 = vst [vmem:[#allocation2 + $0x18] sm:$0xff] %v60
    %vm65 = vcmask 1046528
    %v66 = vrot.slane %v47, 1
    %v67 = vrot.slane %v48, 1
    %v68 = vsel %vm65, %v66, %v67
    %71 = vst [vmem:[#allocation2 + $0x10] sm:$0xff] %v68
    %72 = vst [vmem:[#allocation2 + $0x28] sm:$0x7f] %v67
    %v75 = vrot.slane %v49, 7
    %v76 = vrot.slane %v50, 7
    %v77 = vsel %vm57, %v75, %v76
    %80 = vst [vmem:[#allocation2 + $0x30] sm:$0xfe] %v75
    %81 = vst [vmem:[#allocation2 + $0x48] sm:$0xff] %v77
    %v82 = vrot.slane %v49, 1
    %v83 = vrot.slane %v50, 1
    %v84 = vsel %vm65, %v82, %v83
    %87 = vst [vmem:[#allocation2 + $0x40] sm:$0xff] %v84
    %88 = vst [vmem:[#allocation2 + $0x58] sm:$0x7f] %v83
    %v89 = vld [vmem:[#allocation2] sm:$0xff]
    %v90 = vld [vmem:[#allocation2 + $0x8] sm:$0xff]
    %v91 = vld [vmem:[#allocation2 + $0x10] sm:$0xff]
    %v92 = vld [vmem:[#allocation2 + $0x18] sm:$0xff]
    %v93 = vld [vmem:[#allocation2 + $0x20] sm:$0xff]
    %v94 = vld [vmem:[#allocation2 + $0x28] sm:$0xff]
    %v95 = vld [vmem:[#allocation2 + $0x30] sm:$0xff]
    %v96 = vld [vmem:[#allocation2 + $0x38] sm:$0xff]
    %v97 = vld [vmem:[#allocation2 + $0x40] sm:$0xff]
    %v98 = vld [vmem:[#allocation2 + $0x48] sm:$0xff]
    %v99 = vld [vmem:[#allocation2 + $0x50] sm:$0xff]
    %v100 = vld [vmem:[#allocation2 + $0x58] sm:$0xff]
    %v101 = vpack.c.bf16 %v92, %v89
    %v102 = vpack.c.bf16 %v93, %v90
    %v103 = vpack.c.bf16 %v94, %v91
    %v104 = vpack.c.bf16 %v98, %v95
    %v105 = vpack.c.bf16 %v99, %v96
    %v106 = vpack.c.bf16 %v100, %v97
    %v107 = vld [vmem:[#allocation3] sm:$0xf]
    %v108 = vld [vmem:[#allocation3 + $0x4] sm:$0xf]
    %v109 = vld [vmem:[#allocation3 + $0x8] sm:$0xf]
    %v110 = vld [vmem:[#allocation3 + $0xc] sm:$0xf]
    %v111 = vld [vmem:[#allocation3 + $0x10] sm:$0xf]
    %v112 = vld [vmem:[#allocation3 + $0x14] sm:$0xf]
    %v113 = vld [vmem:[#allocation3 + $0x18] sm:$0xf]
    %v114 = vld [vmem:[#allocation3 + $0x1c] sm:$0xf]
    %v115 = vld [vmem:[#allocation3 + $0x20] sm:$0xf]
    %v116 = vld [vmem:[#allocation3 + $0x24] sm:$0xf]
    %v117 = vld [vmem:[#allocation3 + $0x28] sm:$0xf]
    %v118 = vld [vmem:[#allocation3 + $0x2c] sm:$0xf]
    %v119 = vld [vmem:[#allocation3 + $0x30] sm:$0xf]
    %v120 = vld [vmem:[#allocation3 + $0x34] sm:$0xf]
    %v121 = vld [vmem:[#allocation3 + $0x38] sm:$0xf]
    %v122 = vld [vmem:[#allocation3 + $0x3c] sm:$0xf]
    %v123 = vld [vmem:[#allocation3 + $0x40] sm:$0xf]
    %v124 = vld [vmem:[#allocation3 + $0x44] sm:$0xf]
    %v125 = vld [vmem:[#allocation3 + $0x48] sm:$0xf]
    %v126 = vld [vmem:[#allocation3 + $0x4c] sm:$0xf]
    %v127 = vld [vmem:[#allocation3 + $0x50] sm:$0xf]
    %v128 = vld [vmem:[#allocation3 + $0x54] sm:$0xf]
    %v129 = vld [vmem:[#allocation3 + $0x58] sm:$0xf]
    %v130 = vld [vmem:[#allocation3 + $0x5c] sm:$0xf]
    %v131 = vld [vmem:[#allocation3 + $0x60] sm:$0xf]
    %v132 = vld [vmem:[#allocation3 + $0x64] sm:$0xf]
    %v133 = vld [vmem:[#allocation3 + $0x68] sm:$0xf]
    %v134 = vld [vmem:[#allocation3 + $0x6c] sm:$0xf]
    %v135 = vld [vmem:[#allocation3 + $0x70] sm:$0xf]
    %v136 = vld [vmem:[#allocation3 + $0x74] sm:$0xf]
    %v137 = vld [vmem:[#allocation3 + $0x78] sm:$0xf]
    %v138 = vld [vmem:[#allocation3 + $0x7c] sm:$0xf]
    %v139 = vld [vmem:[#allocation3 + $0x80] sm:$0xf]
    %v140 = vld [vmem:[#allocation3 + $0x84] sm:$0xf]
    %v141 = vld [vmem:[#allocation3 + $0x88] sm:$0xf]
    %v142 = vld [vmem:[#allocation3 + $0x8c] sm:$0xf]
    %v143 = vld [vmem:[#allocation3 + $0x90] sm:$0xf]
    %v144 = vld [vmem:[#allocation3 + $0x94] sm:$0xf]
    %v145 = vld [vmem:[#allocation3 + $0x98] sm:$0xf]
    %v146 = vld [vmem:[#allocation3 + $0x9c] sm:$0xf]
    %v147 = vld [vmem:[#allocation3 + $0xa0] sm:$0xf]
    %v148 = vld [vmem:[#allocation3 + $0xa4] sm:$0xf]
    %v149 = vld [vmem:[#allocation3 + $0xa8] sm:$0xf]
    %v150 = vld [vmem:[#allocation3 + $0xac] sm:$0xf]
    %v151 = vld [vmem:[#allocation3 + $0xb0] sm:$0xf]
    %v152 = vld [vmem:[#allocation3 + $0xb4] sm:$0xf]
    %v153 = vld [vmem:[#allocation3 + $0xb8] sm:$0xf]
    %v154 = vld [vmem:[#allocation3 + $0xbc] sm:$0xf]
    %v155 = vld [vmem:[#allocation5] sm:$0x1]
    %v157 = vlaneseq
    %v158 = vshrl.u32 %v157, 7
    %v159 = vsub.s32 0, %v158
    %v160 = vrot.slane %v155, %v159
    %v210 = vunpack.c.l.b16 %v107
    %v211 = vunpack.c.l.b16 %v108
    %v212 = vunpack.c.l.b16 %v109
    %v213 = vunpack.c.l.b16 %v110
    %v214 = vunpack.c.l.b16 %v111
    %v215 = vunpack.c.l.b16 %v112
    %v216 = vunpack.c.l.b16 %v113
    %v217 = vunpack.c.l.b16 %v114
    %v218 = vunpack.c.l.b16 %v115
    %v219 = vunpack.c.l.b16 %v116
    %v220 = vunpack.c.l.b16 %v117
    %v221 = vunpack.c.l.b16 %v118
    %v222 = vunpack.c.l.b16 %v119
    %v223 = vunpack.c.l.b16 %v120
    %v224 = vunpack.c.l.b16 %v121
    %v225 = vunpack.c.l.b16 %v122
    %v226 = vunpack.c.l.b16 %v123
    %v227 = vunpack.c.l.b16 %v124
    %v228 = vunpack.c.l.b16 %v125
    %v229 = vunpack.c.l.b16 %v126
    %v230 = vunpack.c.l.b16 %v127
    %v231 = vunpack.c.l.b16 %v128
    %v232 = vunpack.c.l.b16 %v129
    %v233 = vunpack.c.l.b16 %v130
    %v234 = vunpack.c.l.b16 %v131
    %v235 = vunpack.c.l.b16 %v132
    %v236 = vunpack.c.l.b16 %v133
    %v237 = vunpack.c.l.b16 %v134
    %v238 = vunpack.c.l.b16 %v135
    %v239 = vunpack.c.l.b16 %v136
    %v240 = vunpack.c.l.b16 %v137
    %v241 = vunpack.c.l.b16 %v138
    %v242 = vunpack.c.l.b16 %v139
    %v243 = vunpack.c.l.b16 %v140
    %v244 = vunpack.c.l.b16 %v141
    %v245 = vunpack.c.l.b16 %v142
    %v246 = vunpack.c.l.b16 %v143
    %v247 = vunpack.c.l.b16 %v144
    %v248 = vunpack.c.l.b16 %v145
    %v249 = vunpack.c.l.b16 %v146
    %v250 = vunpack.c.l.b16 %v147
    %v251 = vunpack.c.l.b16 %v148
    %v252 = vunpack.c.l.b16 %v149
    %v253 = vunpack.c.l.b16 %v150
    %v254 = vunpack.c.l.b16 %v151
    %v255 = vunpack.c.l.b16 %v152
    %v256 = vunpack.c.l.b16 %v153
    %v257 = vunpack.c.l.b16 %v154
    %v258 = vpack.c.b16 %v211, %v210
    %v259 = vpack.c.b16 %v213, %v212
    %v260 = vpack.c.b16 %v215, %v214
    %v261 = vpack.c.b16 %v217, %v216
    %v262 = vpack.c.b16 %v219, %v218
    %v263 = vpack.c.b16 %v221, %v220
    %v264 = vpack.c.b16 %v223, %v222
    %v265 = vpack.c.b16 %v225, %v224
    %v266 = vpack.c.b16 %v227, %v226
    %v267 = vpack.c.b16 %v229, %v228
    %v268 = vpack.c.b16 %v231, %v230
    %v269 = vpack.c.b16 %v233, %v232
    %v270 = vpack.c.b16 %v235, %v234
    %v271 = vpack.c.b16 %v237, %v236
    %v272 = vpack.c.b16 %v239, %v238
    %v273 = vpack.c.b16 %v241, %v240
    %v274 = vpack.c.b16 %v243, %v242
    %v275 = vpack.c.b16 %v245, %v244
    %v276 = vpack.c.b16 %v247, %v246
    %v277 = vpack.c.b16 %v249, %v248
    %v278 = vpack.c.b16 %v251, %v250
    %v279 = vpack.c.b16 %v253, %v252
    %v280 = vpack.c.b16 %v255, %v254
    %v281 = vpack.c.b16 %v257, %v256
    %306 = vmatprep.subr.bf16.mxu0 0
    %307 = vmatpush1.bf16.msra.mxu0 %v258
    %308 = vmatprep.subr.bf16.mxu0 0
    %309 = vmatpush1.bf16.msra.mxu0 %v259
    %310 = vmatprep.subr.bf16.mxu0 0
    %311 = vmatpush1.bf16.msra.mxu0 %v260
    %312 = vmatprep.subr.bf16.mxu0 0
    %313 = vmatpush1.bf16.msra.mxu0 %v261
    %314 = vmatprep.subr.bf16.mxu0 0
    %315 = vmatpush1.bf16.msra.mxu0 %v262
    %316 = vmatprep.subr.bf16.mxu0 0
    %317 = vmatpush1.bf16.msra.mxu0 %v263
    %318 = vmatprep.subr.bf16.mxu0 0
    %319 = vmatpush1.bf16.msra.mxu0 %v264
    %320 = vmatprep.subr.bf16.mxu0 0
    %321 = vmatpush1.bf16.msra.mxu0 %v265
    %322 = vmatprep.subr.bf16.mxu0 0
    %323 = vmatpush1.bf16.msra.mxu0 %v266
    %324 = vmatprep.subr.bf16.mxu0 0
    %325 = vmatpush1.bf16.msra.mxu0 %v267
    %326 = vmatprep.subr.bf16.mxu0 0
    %327 = vmatpush1.bf16.msra.mxu0 %v268
    %328 = vmatprep.subr.bf16.mxu0 0
    %329 = vmatpush1.bf16.msra.mxu0 %v269
    %330 = vmatprep.subr.bf16.mxu0 0
    %331 = vmatpush1.bf16.msra.mxu0 %v270
    %332 = vmatprep.subr.bf16.mxu0 0
    %333 = vmatpush1.bf16.msra.mxu0 %v271
    %334 = vmatprep.subr.bf16.mxu0 0
    %335 = vmatpush1.bf16.msra.mxu0 %v272
    %336 = vmatprep.subr.bf16.mxu0 0
    %337 = vmatpush1.bf16.msra.mxu0 %v273
    %338 = vmatprep.mubr.bf16.mxu0 %v102
    %339 = vmatmul.mubr.bf16.gmra.mrb[0].mxu0 %v101
    %v340 = vpop.f32.mrb[0].mxu0
    %v341 = vadd.f32 %v160, %v340
    %v342 = vpop.f32.mrb[0].mxu0
    %v343 = vpop.f32.mrb[0].mxu0
    %v344 = vadd.f32 %v160, %v343
    %v345 = vpop.f32.mrb[0].mxu0
    %346 = vmatprep.mubr.bf16.mxu0 %v105
    %347 = vmatmul.mubr.bf16.gmra.mrb[0].mxu0 %v104
    %v348 = vpop.f32.mrb[0].mxu0
    %v349 = vadd.f32 %v160, %v348
    %v350 = vpop.f32.mrb[0].mxu0
    %v351 = vpop.f32.mrb[0].mxu0
    %v352 = vadd.f32 %v160, %v351
    %v353 = vpop.f32.mrb[0].mxu0
    %354 = vdwg.mxu0
    %355 = vmatprep.subr.bf16.mxu0 0
    %356 = vmatpush1.bf16.msra.mxu0 %v274
    %357 = vmatprep.subr.bf16.mxu0 0
    %358 = vmatpush1.bf16.msra.mxu0 %v275
    %359 = vmatprep.subr.bf16.mxu0 0
    %360 = vmatpush1.bf16.msra.mxu0 %v276
    %361 = vmatprep.subr.bf16.mxu0 0
    %362 = vmatpush1.bf16.msra.mxu0 %v277
    %363 = vmatprep.subr.bf16.mxu0 0
    %364 = vmatpush1.bf16.msra.mxu0 %v278
    %365 = vmatprep.subr.bf16.mxu0 0
    %366 = vmatpush1.bf16.msra.mxu0 %v279
    %367 = vmatprep.subr.bf16.mxu0 0
    %368 = vmatpush1.bf16.msra.mxu0 %v280
    %369 = vmatprep.subr.bf16.mxu0 0
    %370 = vmatpush1.bf16.msra.mxu0 %v281
    %371 = vmatprep.subr.bf16.mxu0 0
    %372 = vmatpush1.bf16.msra.mxu0 0
    %373 = vmatprep.subr.bf16.mxu0 0
    %374 = vmatpush1.bf16.msra.mxu0 0
    %375 = vmatprep.subr.bf16.mxu0 0
    %376 = vmatpush1.bf16.msra.mxu0 0
    %377 = vmatprep.subr.bf16.mxu0 0
    %378 = vmatpush1.bf16.msra.mxu0 0
    %379 = vmatprep.subr.bf16.mxu0 0
    %380 = vmatpush1.bf16.msra.mxu0 0
    %381 = vmatprep.subr.bf16.mxu0 0
    %382 = vmatpush1.bf16.msra.mxu0 0
    %383 = vmatprep.subr.bf16.mxu0 0
    %384 = vmatpush1.bf16.msra.mxu0 0
    %385 = vmatprep.subr.bf16.mxu0 0
    %386 = vmatpush1.bf16.msra.mxu0 0
    %387 = vmatprep.mubr.bf16.mxu0 0
    %388 = vmatmul.mubr.bf16.gmra.mrb[0].mxu0 %v103
    %v389 = vpop.f32.mrb[0].mxu0
    %v390 = vadd.f32 %v341, %v389
    %v391 = vpop.f32.mrb[0].mxu0
    %v392 = vpop.f32.mrb[0].mxu0
    %v393 = vadd.f32 %v344, %v392
    %v394 = vpop.f32.mrb[0].mxu0
    %395 = vmatprep.mubr.bf16.mxu0 0
    %396 = vmatmul.mubr.bf16.gmra.mrb[0].mxu0 %v106
    %v397 = vpop.f32.mrb[0].mxu0
    %v398 = vadd.f32 %v349, %v397
    %v399 = vpop.f32.mrb[0].mxu0
    %v400 = vpop.f32.mrb[0].mxu0
    %v401 = vadd.f32 %v352, %v400
    %v402 = vpop.f32.mrb[0].mxu0
    %403 = vdwg.mxu0
    %v404 = vmax.f32 %v390, 0.0
    %v405 = vmax.f32 %v393, 0.0
    %v406 = vmax.f32 %v398, 0.0
    %v407 = vmax.f32 %v401, 0.0
    %408 = vst [vmem:[#allocation2 + $0x8] sm:$0xff] %v404
    %409 = vst [vmem:[#allocation2 + $0x20] sm:$0xff] %v405
    %410 = vst [vmem:[#allocation2 + $0x38] sm:$0xff] %v406
    %411 = vst [vmem:[#allocation2 + $0x50] sm:$0xff] %v407
    %v414 = vrot.slane %v404, 7
    %v415 = vrot.slane %v405, 7
    %v416 = vsel %vm57, %v414, %v415
    %419 = vst [vmem:[#allocation2] sm:$0xfe] %v414
    %420 = vst [vmem:[#allocation2 + $0x18] sm:$0xff] %v416
    %v421 = vrot.slane %v404, 1
    %v422 = vrot.slane %v405, 1
    %v423 = vsel %vm65, %v421, %v422
    %426 = vst [vmem:[#allocation2 + $0x10] sm:$0xff] %v423
    %427 = vst [vmem:[#allocation2 + $0x28] sm:$0x7f] %v422
    %v430 = vrot.slane %v406, 7
    %v431 = vrot.slane %v407, 7
    %v432 = vsel %vm57, %v430, %v431
    %435 = vst [vmem:[#allocation2 + $0x30] sm:$0xfe] %v430
    %436 = vst [vmem:[#allocation2 + $0x48] sm:$0xff] %v432
    %v437 = vrot.slane %v406, 1
    %v438 = vrot.slane %v407, 1
    %v439 = vsel %vm65, %v437, %v438
    %442 = vst [vmem:[#allocation2 + $0x40] sm:$0xff] %v439
    %443 = vst [vmem:[#allocation2 + $0x58] sm:$0x7f] %v438
    %v444 = vld [vmem:[#allocation2] sm:$0xff]
    %v445 = vld [vmem:[#allocation2 + $0x8] sm:$0xff]
    %v446 = vld [vmem:[#allocation2 + $0x10] sm:$0xff]
    %v447 = vld [vmem:[#allocation2 + $0x18] sm:$0xff]
    %v448 = vld [vmem:[#allocation2 + $0x20] sm:$0xff]
    %v449 = vld [vmem:[#allocation2 + $0x28] sm:$0xff]
    %v450 = vld [vmem:[#allocation2 + $0x30] sm:$0xff]
    %v451 = vld [vmem:[#allocation2 + $0x38] sm:$0xff]
    %v452 = vld [vmem:[#allocation2 + $0x40] sm:$0xff]
    %v453 = vld [vmem:[#allocation2 + $0x48] sm:$0xff]
    %v454 = vld [vmem:[#allocation2 + $0x50] sm:$0xff]
    %v455 = vld [vmem:[#allocation2 + $0x58] sm:$0xff]
    %v456 = vpack.c.bf16 %v447, %v444
    %v457 = vpack.c.bf16 %v448, %v445
    %v458 = vpack.c.bf16 %v449, %v446
    %v459 = vpack.c.bf16 %v453, %v450
    %v460 = vpack.c.bf16 %v454, %v451
    %v461 = vpack.c.bf16 %v455, %v452
    %s462 = scalar_lea.vmem [#allocation3], 192
    %v463 = vld [vmem:[%s462] sm:$0xf]
    %v464 = vld [vmem:[%s462 + $0x4] sm:$0xf]
    %v465 = vld [vmem:[%s462 + $0x8] sm:$0xf]
    %v466 = vld [vmem:[%s462 + $0xc] sm:$0xf]
    %v467 = vld [vmem:[%s462 + $0x10] sm:$0xf]
    %v468 = vld [vmem:[%s462 + $0x14] sm:$0xf]
    %v469 = vld [vmem:[%s462 + $0x18] sm:$0xf]
    %v470 = vld [vmem:[%s462 + $0x1c] sm:$0xf]
    %v471 = vld [vmem:[%s462 + $0x20] sm:$0xf]
    %v472 = vld [vmem:[%s462 + $0x24] sm:$0xf]
    %v473 = vld [vmem:[%s462 + $0x28] sm:$0xf]
    %v474 = vld [vmem:[%s462 + $0x2c] sm:$0xf]
    %v475 = vld [vmem:[%s462 + $0x30] sm:$0xf]
    %v476 = vld [vmem:[%s462 + $0x34] sm:$0xf]
    %v477 = vld [vmem:[%s462 + $0x38] sm:$0xf]
    %v478 = vld [vmem:[%s462 + $0x3c] sm:$0xf]
    %v479 = vld [vmem:[%s462 + $0x40] sm:$0xf]
    %v480 = vld [vmem:[%s462 + $0x44] sm:$0xf]
    %v481 = vld [vmem:[%s462 + $0x48] sm:$0xf]
    %v482 = vld [vmem:[%s462 + $0x4c] sm:$0xf]
    %v483 = vld [vmem:[%s462 + $0x50] sm:$0xf]
    %v484 = vld [vmem:[%s462 + $0x54] sm:$0xf]
    %v485 = vld [vmem:[%s462 + $0x58] sm:$0xf]
    %v486 = vld [vmem:[%s462 + $0x5c] sm:$0xf]
    %v487 = vld [vmem:[%s462 + $0x60] sm:$0xf]
    %v488 = vld [vmem:[%s462 + $0x64] sm:$0xf]
    %v489 = vld [vmem:[%s462 + $0x68] sm:$0xf]
    %v490 = vld [vmem:[%s462 + $0x6c] sm:$0xf]
    %v491 = vld [vmem:[%s462 + $0x70] sm:$0xf]
    %v492 = vld [vmem:[%s462 + $0x74] sm:$0xf]
    %v493 = vld [vmem:[%s462 + $0x78] sm:$0xf]
    %v494 = vld [vmem:[%s462 + $0x7c] sm:$0xf]
    %v495 = vld [vmem:[%s462 + $0x80] sm:$0xf]
    %v496 = vld [vmem:[%s462 + $0x84] sm:$0xf]
    %v497 = vld [vmem:[%s462 + $0x88] sm:$0xf]
    %v498 = vld [vmem:[%s462 + $0x8c] sm:$0xf]
    %v499 = vld [vmem:[%s462 + $0x90] sm:$0xf]
    %v500 = vld [vmem:[%s462 + $0x94] sm:$0xf]
    %v501 = vld [vmem:[%s462 + $0x98] sm:$0xf]
    %v502 = vld [vmem:[%s462 + $0x9c] sm:$0xf]
    %v503 = vld [vmem:[%s462 + $0xa0] sm:$0xf]
    %v504 = vld [vmem:[%s462 + $0xa4] sm:$0xf]
    %v505 = vld [vmem:[%s462 + $0xa8] sm:$0xf]
    %v506 = vld [vmem:[%s462 + $0xac] sm:$0xf]
    %v507 = vld [vmem:[%s462 + $0xb0] sm:$0xf]
    %v508 = vld [vmem:[%s462 + $0xb4] sm:$0xf]
    %v509 = vld [vmem:[%s462 + $0xb8] sm:$0xf]
    %v510 = vld [vmem:[%s462 + $0xbc] sm:$0xf]
    %s511 = scalar_lea.vmem [#allocation5], 1
    %v512 = vld [vmem:[%s511] sm:$0x1]
    %v514 = vlaneseq
    %v515 = vshrl.u32 %v514, 7
    %v516 = vsub.s32 0, %v515
    %v517 = vrot.slane %v512, %v516
    %v567 = vunpack.c.l.b16 %v463
    %v568 = vunpack.c.l.b16 %v464
    %v569 = vunpack.c.l.b16 %v465
    %v570 = vunpack.c.l.b16 %v466
    %v571 = vunpack.c.l.b16 %v467
    %v572 = vunpack.c.l.b16 %v468
    %v573 = vunpack.c.l.b16 %v469
    %v574 = vunpack.c.l.b16 %v470
    %v575 = vunpack.c.l.b16 %v471
    %v576 = vunpack.c.l.b16 %v472
    %v577 = vunpack.c.l.b16 %v473
    %v578 = vunpack.c.l.b16 %v474
    %v579 = vunpack.c.l.b16 %v475
    %v580 = vunpack.c.l.b16 %v476
    %v581 = vunpack.c.l.b16 %v477
    %v582 = vunpack.c.l.b16 %v478
    %v583 = vunpack.c.l.b16 %v479
    %v584 = vunpack.c.l.b16 %v480
    %v585 = vunpack.c.l.b16 %v481
    %v586 = vunpack.c.l.b16 %v482
    %v587 = vunpack.c.l.b16 %v483
    %v588 = vunpack.c.l.b16 %v484
    %v589 = vunpack.c.l.b16 %v485
    %v590 = vunpack.c.l.b16 %v486
    %v591 = vunpack.c.l.b16 %v487
    %v592 = vunpack.c.l.b16 %v488
    %v593 = vunpack.c.l.b16 %v489
    %v594 = vunpack.c.l.b16 %v490
    %v595 = vunpack.c.l.b16 %v491
    %v596 = vunpack.c.l.b16 %v492
    %v597 = vunpack.c.l.b16 %v493
    %v598 = vunpack.c.l.b16 %v494
    %v599 = vunpack.c.l.b16 %v495
    %v600 = vunpack.c.l.b16 %v496
    %v601 = vunpack.c.l.b16 %v497
    %v602 = vunpack.c.l.b16 %v498
    %v603 = vunpack.c.l.b16 %v499
    %v604 = vunpack.c.l.b16 %v500
    %v605 = vunpack.c.l.b16 %v501
    %v606 = vunpack.c.l.b16 %v502
    %v607 = vunpack.c.l.b16 %v503
    %v608 = vunpack.c.l.b16 %v504
    %v609 = vunpack.c.l.b16 %v505
    %v610 = vunpack.c.l.b16 %v506
    %v611 = vunpack.c.l.b16 %v507
    %v612 = vunpack.c.l.b16 %v508
    %v613 = vunpack.c.l.b16 %v509
    %v614 = vunpack.c.l.b16 %v510
    %v615 = vpack.c.b16 %v568, %v567
    %v616 = vpack.c.b16 %v570, %v569
    %v617 = vpack.c.b16 %v572, %v571
    %v618 = vpack.c.b16 %v574, %v573
    %v619 = vpack.c.b16 %v576, %v575
    %v620 = vpack.c.b16 %v578, %v577
    %v621 = vpack.c.b16 %v580, %v579
    %v622 = vpack.c.b16 %v582, %v581
    %v623 = vpack.c.b16 %v584, %v583
    %v624 = vpack.c.b16 %v586, %v585
    %v625 = vpack.c.b16 %v588, %v587
    %v626 = vpack.c.b16 %v590, %v589
    %v627 = vpack.c.b16 %v592, %v591
    %v628 = vpack.c.b16 %v594, %v593
    %v629 = vpack.c.b16 %v596, %v595
    %v630 = vpack.c.b16 %v598, %v597
    %v631 = vpack.c.b16 %v600, %v599
    %v632 = vpack.c.b16 %v602, %v601
    %v633 = vpack.c.b16 %v604, %v603
    %v634 = vpack.c.b16 %v606, %v605
    %v635 = vpack.c.b16 %v608, %v607
    %v636 = vpack.c.b16 %v610, %v609
    %v637 = vpack.c.b16 %v612, %v611
    %v638 = vpack.c.b16 %v614, %v613
    %663 = vmatprep.subr.bf16.mxu0 0
    %664 = vmatpush1.bf16.msra.mxu0 %v615
    %665 = vmatprep.subr.bf16.mxu0 0
    %666 = vmatpush1.bf16.msra.mxu0 %v616
    %667 = vmatprep.subr.bf16.mxu0 0
    %668 = vmatpush1.bf16.msra.mxu0 %v617
    %669 = vmatprep.subr.bf16.mxu0 0
    %670 = vmatpush1.bf16.msra.mxu0 %v618
    %671 = vmatprep.subr.bf16.mxu0 0
    %672 = vmatpush1.bf16.msra.mxu0 %v619
    %673 = vmatprep.subr.bf16.mxu0 0
    %674 = vmatpush1.bf16.msra.mxu0 %v620
    %675 = vmatprep.subr.bf16.mxu0 0
    %676 = vmatpush1.bf16.msra.mxu0 %v621
    %677 = vmatprep.subr.bf16.mxu0 0
    %678 = vmatpush1.bf16.msra.mxu0 %v622
    %679 = vmatprep.subr.bf16.mxu0 0
    %680 = vmatpush1.bf16.msra.mxu0 %v623
    %681 = vmatprep.subr.bf16.mxu0 0
    %682 = vmatpush1.bf16.msra.mxu0 %v624
    %683 = vmatprep.subr.bf16.mxu0 0
    %684 = vmatpush1.bf16.msra.mxu0 %v625
    %685 = vmatprep.subr.bf16.mxu0 0
    %686 = vmatpush1.bf16.msra.mxu0 %v626
    %687 = vmatprep.subr.bf16.mxu0 0
    %688 = vmatpush1.bf16.msra.mxu0 %v627
    %689 = vmatprep.subr.bf16.mxu0 0
    %690 = vmatpush1.bf16.msra.mxu0 %v628
    %691 = vmatprep.subr.bf16.mxu0 0
    %692 = vmatpush1.bf16.msra.mxu0 %v629
    %693 = vmatprep.subr.bf16.mxu0 0
    %694 = vmatpush1.bf16.msra.mxu0 %v630
    %695 = vmatprep.mubr.bf16.mxu0 %v457
    %696 = vmatmul.mubr.bf16.gmra.mrb[0].mxu0 %v456
    %v697 = vpop.f32.mrb[0].mxu0
    %v698 = vadd.f32 %v517, %v697
    %v699 = vpop.f32.mrb[0].mxu0
    %v700 = vpop.f32.mrb[0].mxu0
    %v701 = vadd.f32 %v517, %v700
    %v702 = vpop.f32.mrb[0].mxu0
    %703 = vmatprep.mubr.bf16.mxu0 %v460
    %704 = vmatmul.mubr.bf16.gmra.mrb[0].mxu0 %v459
    %v705 = vpop.f32.mrb[0].mxu0
    %v706 = vadd.f32 %v517, %v705
    %v707 = vpop.f32.mrb[0].mxu0
    %v708 = vpop.f32.mrb[0].mxu0
    %v709 = vadd.f32 %v517, %v708
    %v710 = vpop.f32.mrb[0].mxu0
    %711 = vdwg.mxu0
    %712 = vmatprep.subr.bf16.mxu0 0
    %713 = vmatpush1.bf16.msra.mxu0 %v631
    %714 = vmatprep.subr.bf16.mxu0 0
    %715 = vmatpush1.bf16.msra.mxu0 %v632
    %716 = vmatprep.subr.bf16.mxu0 0
    %717 = vmatpush1.bf16.msra.mxu0 %v633
    %718 = vmatprep.subr.bf16.mxu0 0
    %719 = vmatpush1.bf16.msra.mxu0 %v634
    %720 = vmatprep.subr.bf16.mxu0 0
    %721 = vmatpush1.bf16.msra.mxu0 %v635
    %722 = vmatprep.subr.bf16.mxu0 0
    %723 = vmatpush1.bf16.msra.mxu0 %v636
    %724 = vmatprep.subr.bf16.mxu0 0
    %725 = vmatpush1.bf16.msra.mxu0 %v637
    %726 = vmatprep.subr.bf16.mxu0 0
    %727 = vmatpush1.bf16.msra.mxu0 %v638
    %728 = vmatprep.subr.bf16.mxu0 0
    %729 = vmatpush1.bf16.msra.mxu0 0
    %730 = vmatprep.subr.bf16.mxu0 0
    %731 = vmatpush1.bf16.msra.mxu0 0
    %732 = vmatprep.subr.bf16.mxu0 0
    %733 = vmatpush1.bf16.msra.mxu0 0
    %734 = vmatprep.subr.bf16.mxu0 0
    %735 = vmatpush1.bf16.msra.mxu0 0
    %736 = vmatprep.subr.bf16.mxu0 0
    %737 = vmatpush1.bf16.msra.mxu0 0
    %738 = vmatprep.subr.bf16.mxu0 0
    %739 = vmatpush1.bf16.msra.mxu0 0
    %740 = vmatprep.subr.bf16.mxu0 0
    %741 = vmatpush1.bf16.msra.mxu0 0
    %742 = vmatprep.subr.bf16.mxu0 0
    %743 = vmatpush1.bf16.msra.mxu0 0
    %744 = vmatprep.mubr.bf16.mxu0 0
    %745 = vmatmul.mubr.bf16.gmra.mrb[0].mxu0 %v458
    %v746 = vpop.f32.mrb[0].mxu0
    %v747 = vadd.f32 %v698, %v746
    %v748 = vpop.f32.mrb[0].mxu0
    %v749 = vpop.f32.mrb[0].mxu0
    %v750 = vadd.f32 %v701, %v749
    %v751 = vpop.f32.mrb[0].mxu0
    %752 = vmatprep.mubr.bf16.mxu0 0
    %753 = vmatmul.mubr.bf16.gmra.mrb[0].mxu0 %v461
    %v754 = vpop.f32.mrb[0].mxu0
    %v755 = vadd.f32 %v706, %v754
    %v756 = vpop.f32.mrb[0].mxu0
    %v757 = vpop.f32.mrb[0].mxu0
    %v758 = vadd.f32 %v709, %v757
    %v759 = vpop.f32.mrb[0].mxu0
    %760 = vdwg.mxu0
    %v761 = vadd.f32 %v747, %v47
    %v762 = vadd.f32 %v750, %v48
    %v763 = vadd.f32 %v755, %v49
    %v764 = vadd.f32 %v758, %v50
    %765 = vst [vmem:[#allocation2 + $0x8] sm:$0xff] %v761
    %766 = vst [vmem:[#allocation2 + $0x20] sm:$0xff] %v762
    %767 = vst [vmem:[#allocation2 + $0x38] sm:$0xff] %v763
    %768 = vst [vmem:[#allocation2 + $0x50] sm:$0xff] %v764
    %v771 = vrot.slane %v761, 7
    %v772 = vrot.slane %v762, 7
    %v773 = vsel %vm57, %v771, %v772
    %776 = vst [vmem:[#allocation2] sm:$0xfe] %v771
    %777 = vst [vmem:[#allocation2 + $0x18] sm:$0xff] %v773
    %v778 = vrot.slane %v761, 1
    %v779 = vrot.slane %v762, 1
    %v780 = vsel %vm65, %v778, %v779
    %783 = vst [vmem:[#allocation2 + $0x10] sm:$0xff] %v780
    %784 = vst [vmem:[#allocation2 + $0x28] sm:$0x7f] %v779
    %v787 = vrot.slane %v763, 7
    %v788 = vrot.slane %v764, 7
    %v789 = vsel %vm57, %v787, %v788
    %792 = vst [vmem:[#allocation2 + $0x30] sm:$0xfe] %v787
    %793 = vst [vmem:[#allocation2 + $0x48] sm:$0xff] %v789
    %v794 = vrot.slane %v763, 1
    %v795 = vrot.slane %v764, 1
    %v796 = vsel %vm65, %v794, %v795
    %799 = vst [vmem:[#allocation2 + $0x40] sm:$0xff] %v796
    %800 = vst [vmem:[#allocation2 + $0x58] sm:$0x7f] %v795
    %v801 = vld [vmem:[#allocation2] sm:$0xff]
    %v802 = vld [vmem:[#allocation2 + $0x8] sm:$0xff]
    %v803 = vld [vmem:[#allocation2 + $0x10] sm:$0xff]
    %v804 = vld [vmem:[#allocation2 + $0x18] sm:$0xff]
    %v805 = vld [vmem:[#allocation2 + $0x20] sm:$0xff]
    %v806 = vld [vmem:[#allocation2 + $0x28] sm:$0xff]
    %v807 = vld [vmem:[#allocation2 + $0x30] sm:$0xff]
    %v808 = vld [vmem:[#allocation2 + $0x38] sm:$0xff]
    %v809 = vld [vmem:[#allocation2 + $0x40] sm:$0xff]
    %v810 = vld [vmem:[#allocation2 + $0x48] sm:$0xff]
    %v811 = vld [vmem:[#allocation2 + $0x50] sm:$0xff]
    %v812 = vld [vmem:[#allocation2 + $0x58] sm:$0xff]
    %v813 = vpack.c.bf16 %v804, %v801
    %v814 = vpack.c.bf16 %v805, %v802
    %v815 = vpack.c.bf16 %v806, %v803
    %v816 = vpack.c.bf16 %v810, %v807
    %v817 = vpack.c.bf16 %v811, %v808
    %v818 = vpack.c.bf16 %v812, %v809
    %s819 = scalar_lea.vmem [#allocation3], 384
    %v820 = vld [vmem:[%s819] sm:$0xf]
    %v821 = vld [vmem:[%s819 + $0x4] sm:$0xf]
    %v822 = vld [vmem:[%s819 + $0x8] sm:$0xf]
    %v823 = vld [vmem:[%s819 + $0xc] sm:$0xf]
    %v824 = vld [vmem:[%s819 + $0x10] sm:$0xf]
    %v825 = vld [vmem:[%s819 + $0x14] sm:$0xf]
    %v826 = vld [vmem:[%s819 + $0x18] sm:$0xf]
    %v827 = vld [vmem:[%s819 + $0x1c] sm:$0xf]
    %v828 = vld [vmem:[%s819 + $0x20] sm:$0xf]
    %v829 = vld [vmem:[%s819 + $0x24] sm:$0xf]
    %v830 = vld [vmem:[%s819 + $0x28] sm:$0xf]
    %v831 = vld [vmem:[%s819 + $0x2c] sm:$0xf]
    %v832 = vld [vmem:[%s819 + $0x30] sm:$0xf]
    %v833 = vld [vmem:[%s819 + $0x34] sm:$0xf]
    %v834 = vld [vmem:[%s819 + $0x38] sm:$0xf]
    %v835 = vld [vmem:[%s819 + $0x3c] sm:$0xf]
    %v836 = vld [vmem:[%s819 + $0x40] sm:$0xf]
    %v837 = vld [vmem:[%s819 + $0x44] sm:$0xf]
    %v838 = vld [vmem:[%s819 + $0x48] sm:$0xf]
    %v839 = vld [vmem:[%s819 + $0x4c] sm:$0xf]
    %v840 = vld [vmem:[%s819 + $0x50] sm:$0xf]
    %v841 = vld [vmem:[%s819 + $0x54] sm:$0xf]
    %v842 = vld [vmem:[%s819 + $0x58] sm:$0xf]
    %v843 = vld [vmem:[%s819 + $0x5c] sm:$0xf]
    %v844 = vld [vmem:[%s819 + $0x60] sm:$0xf]
    %v845 = vld [vmem:[%s819 + $0x64] sm:$0xf]
    %v846 = vld [vmem:[%s819 + $0x68] sm:$0xf]
    %v847 = vld [vmem:[%s819 + $0x6c] sm:$0xf]
    %v848 = vld [vmem:[%s819 + $0x70] sm:$0xf]
    %v849 = vld [vmem:[%s819 + $0x74] sm:$0xf]
    %v850 = vld [vmem:[%s819 + $0x78] sm:$0xf]
    %v851 = vld [vmem:[%s819 + $0x7c] sm:$0xf]
    %v852 = vld [vmem:[%s819 + $0x80] sm:$0xf]
    %v853 = vld [vmem:[%s819 + $0x84] sm:$0xf]
    %v854 = vld [vmem:[%s819 + $0x88] sm:$0xf]
    %v855 = vld [vmem:[%s819 + $0x8c] sm:$0xf]
    %v856 = vld [vmem:[%s819 + $0x90] sm:$0xf]
    %v857 = vld [vmem:[%s819 + $0x94] sm:$0xf]
    %v858 = vld [vmem:[%s819 + $0x98] sm:$0xf]
    %v859 = vld [vmem:[%s819 + $0x9c] sm:$0xf]
    %v860 = vld [vmem:[%s819 + $0xa0] sm:$0xf]
    %v861 = vld [vmem:[%s819 + $0xa4] sm:$0xf]
    %v862 = vld [vmem:[%s819 + $0xa8] sm:$0xf]
    %v863 = vld [vmem:[%s819 + $0xac] sm:$0xf]
    %v864 = vld [vmem:[%s819 + $0xb0] sm:$0xf]
    %v865 = vld [vmem:[%s819 + $0xb4] sm:$0xf]
    %v866 = vld [vmem:[%s819 + $0xb8] sm:$0xf]
    %v867 = vld [vmem:[%s819 + $0xbc] sm:$0xf]
    %s868 = scalar_lea.vmem [#allocation5], 2
    %v869 = vld [vmem:[%s868] sm:$0x1]
    %v871 = vlaneseq
    %v872 = vshrl.u32 %v871, 7
    %v873 = vsub.s32 0, %v872
    %v874 = vrot.slane %v869, %v873
    %v924 = vunpack.c.l.b16 %v820
    %v925 = vunpack.c.l.b16 %v821
    %v926 = vunpack.c.l.b16 %v822
    %v927 = vunpack.c.l.b16 %v823
    %v928 = vunpack.c.l.b16 %v824
    %v929 = vunpack.c.l.b16 %v825
    %v930 = vunpack.c.l.b16 %v826
    %v931 = vunpack.c.l.b16 %v827
    %v932 = vunpack.c.l.b16 %v828
    %v933 = vunpack.c.l.b16 %v829
    %v934 = vunpack.c.l.b16 %v830
    %v935 = vunpack.c.l.b16 %v831
    %v936 = vunpack.c.l.b16 %v832
    %v937 = vunpack.c.l.b16 %v833
    %v938 = vunpack.c.l.b16 %v834
    %v939 = vunpack.c.l.b16 %v835
    %v940 = vunpack.c.l.b16 %v836
    %v941 = vunpack.c.l.b16 %v837
    %v942 = vunpack.c.l.b16 %v838
    %v943 = vunpack.c.l.b16 %v839
    %v944 = vunpack.c.l.b16 %v840
    %v945 = vunpack.c.l.b16 %v841
    %v946 = vunpack.c.l.b16 %v842
    %v947 = vunpack.c.l.b16 %v843
    %v948 = vunpack.c.l.b16 %v844
    %v949 = vunpack.c.l.b16 %v845
    %v950 = vunpack.c.l.b16 %v846
    %v951 = vunpack.c.l.b16 %v847
    %v952 = vunpack.c.l.b16 %v848
    %v953 = vunpack.c.l.b16 %v849
    %v954 = vunpack.c.l.b16 %v850
    %v955 = vunpack.c.l.b16 %v851
    %v956 = vunpack.c.l.b16 %v852
    %v957 = vunpack.c.l.b16 %v853
    %v958 = vunpack.c.l.b16 %v854
    %v959 = vunpack.c.l.b16 %v855
    %v960 = vunpack.c.l.b16 %v856
    %v961 = vunpack.c.l.b16 %v857
    %v962 = vunpack.c.l.b16 %v858
    %v963 = vunpack.c.l.b16 %v859
    %v964 = vunpack.c.l.b16 %v860
    %v965 = vunpack.c.l.b16 %v861
    %v966 = vunpack.c.l.b16 %v862
    %v967 = vunpack.c.l.b16 %v863
    %v968 = vunpack.c.l.b16 %v864
    %v969 = vunpack.c.l.b16 %v865
    %v970 = vunpack.c.l.b16 %v866
    %v971 = vunpack.c.l.b16 %v867
    %v972 = vpack.c.b16 %v925, %v924
    %v973 = vpack.c.b16 %v927, %v926
    %v974 = vpack.c.b16 %v929, %v928
    %v975 = vpack.c.b16 %v931, %v930
    %v976 = vpack.c.b16 %v933, %v932
    %v977 = vpack.c.b16 %v935, %v934
    %v978 = vpack.c.b16 %v937, %v936
    %v979 = vpack.c.b16 %v939, %v938
    %v980 = vpack.c.b16 %v941, %v940
    %v981 = vpack.c.b16 %v943, %v942
    %v982 = vpack.c.b16 %v945, %v944
    %v983 = vpack.c.b16 %v947, %v946
    %v984 = vpack.c.b16 %v949, %v948
    %v985 = vpack.c.b16 %v951, %v950
    %v986 = vpack.c.b16 %v953, %v952
    %v987 = vpack.c.b16 %v955, %v954
    %v988 = vpack.c.b16 %v957, %v956
    %v989 = vpack.c.b16 %v959, %v958
    %v990 = vpack.c.b16 %v961, %v960
    %v991 = vpack.c.b16 %v963, %v962
    %v992 = vpack.c.b16 %v965, %v964
    %v993 = vpack.c.b16 %v967, %v966
    %v994 = vpack.c.b16 %v969, %v968
    %v995 = vpack.c.b16 %v971, %v970
    %1020 = vmatprep.subr.bf16.mxu0 0
    %1021 = vmatpush1.bf16.msra.mxu0 %v972
    %1022 = vmatprep.subr.bf16.mxu0 0
    %1023 = vmatpush1.bf16.msra.mxu0 %v973
    %1024 = vmatprep.subr.bf16.mxu0 0
    %1025 = vmatpush1.bf16.msra.mxu0 %v974
    %1026 = vmatprep.subr.bf16.mxu0 0
    %1027 = vmatpush1.bf16.msra.mxu0 %v975
    %1028 = vmatprep.subr.bf16.mxu0 0
    %1029 = vmatpush1.bf16.msra.mxu0 %v976
    %1030 = vmatprep.subr.bf16.mxu0 0
    %1031 = vmatpush1.bf16.msra.mxu0 %v977
    %1032 = vmatprep.subr.bf16.mxu0 0
    %1033 = vmatpush1.bf16.msra.mxu0 %v978
    %1034 = vmatprep.subr.bf16.mxu0 0
    %1035 = vmatpush1.bf16.msra.mxu0 %v979
    %1036 = vmatprep.subr.bf16.mxu0 0
    %1037 = vmatpush1.bf16.msra.mxu0 %v980
    %1038 = vmatprep.subr.bf16.mxu0 0
    %1039 = vmatpush1.bf16.msra.mxu0 %v981
    %1040 = vmatprep.subr.bf16.mxu0 0
    %1041 = vmatpush1.bf16.msra.mxu0 %v982
    %1042 = vmatprep.subr.bf16.mxu0 0
    %1043 = vmatpush1.bf16.msra.mxu0 %v983
    %1044 = vmatprep.subr.bf16.mxu0 0
    %1045 = vmatpush1.bf16.msra.mxu0 %v984
    %1046 = vmatprep.subr.bf16.mxu0 0
    %1047 = vmatpush1.bf16.msra.mxu0 %v985
    %1048 = vmatprep.subr.bf16.mxu0 0
    %1049 = vmatpush1.bf16.msra.mxu0 %v986
    %1050 = vmatprep.subr.bf16.mxu0 0
    %1051 = vmatpush1.bf16.msra.mxu0 %v987
    %1052 = vmatprep.mubr.bf16.mxu0 %v814
    %1053 = vmatmul.mubr.bf16.gmra.mrb[0].mxu0 %v813
    %v1054 = vpop.f32.mrb[0].mxu0
    %v1055 = vadd.f32 %v874, %v1054
    %v1056 = vpop.f32.mrb[0].mxu0
    %v1057 = vpop.f32.mrb[0].mxu0
    %v1058 = vadd.f32 %v874, %v1057
    %v1059 = vpop.f32.mrb[0].mxu0
    %1060 = vmatprep.mubr.bf16.mxu0 %v817
    %1061 = vmatmul.mubr.bf16.gmra.mrb[0].mxu0 %v816
    %v1062 = vpop.f32.mrb[0].mxu0
    %v1063 = vadd.f32 %v874, %v1062
    %v1064 = vpop.f32.mrb[0].mxu0
    %v1065 = vpop.f32.mrb[0].mxu0
    %v1066 = vadd.f32 %v874, %v1065
    %v1067 = vpop.f32.mrb[0].mxu0
    %1068 = vdwg.mxu0
    %1069 = vmatprep.subr.bf16.mxu0 0
    %1070 = vmatpush1.bf16.msra.mxu0 %v988
    %1071 = vmatprep.subr.bf16.mxu0 0
    %1072 = vmatpush1.bf16.msra.mxu0 %v989
    %1073 = vmatprep.subr.bf16.mxu0 0
    %1074 = vmatpush1.bf16.msra.mxu0 %v990
    %1075 = vmatprep.subr.bf16.mxu0 0
    %1076 = vmatpush1.bf16.msra.mxu0 %v991
    %1077 = vmatprep.subr.bf16.mxu0 0
    %1078 = vmatpush1.bf16.msra.mxu0 %v992
    %1079 = vmatprep.subr.bf16.mxu0 0
    %1080 = vmatpush1.bf16.msra.mxu0 %v993
    %1081 = vmatprep.subr.bf16.mxu0 0
    %1082 = vmatpush1.bf16.msra.mxu0 %v994
    %1083 = vmatprep.subr.bf16.mxu0 0
    %1084 = vmatpush1.bf16.msra.mxu0 %v995
    %1085 = vmatprep.subr.bf16.mxu0 0
    %1086 = vmatpush1.bf16.msra.mxu0 0
    %1087 = vmatprep.subr.bf16.mxu0 0
    %1088 = vmatpush1.bf16.msra.mxu0 0
    %1089 = vmatprep.subr.bf16.mxu0 0
    %1090 = vmatpush1.bf16.msra.mxu0 0
    %1091 = vmatprep.subr.bf16.mxu0 0
    %1092 = vmatpush1.bf16.msra.mxu0 0
    %1093 = vmatprep.subr.bf16.mxu0 0
    %1094 = vmatpush1.bf16.msra.mxu0 0
    %1095 = vmatprep.subr.bf16.mxu0 0
    %1096 = vmatpush1.bf16.msra.mxu0 0
    %1097 = vmatprep.subr.bf16.mxu0 0
    %1098 = vmatpush1.bf16.msra.mxu0 0
    %1099 = vmatprep.subr.bf16.mxu0 0
    %1100 = vmatpush1.bf16.msra.mxu0 0
    %1101 = vmatprep.mubr.bf16.mxu0 0
    %1102 = vmatmul.mubr.bf16.gmra.mrb[0].mxu0 %v815
    %v1103 = vpop.f32.mrb[0].mxu0
    %v1104 = vadd.f32 %v1055, %v1103
    %v1105 = vpop.f32.mrb[0].mxu0
    %v1106 = vpop.f32.mrb[0].mxu0
    %v1107 = vadd.f32 %v1058, %v1106
    %v1108 = vpop.f32.mrb[0].mxu0
    %1109 = vmatprep.mubr.bf16.mxu0 0
    %1110 = vmatmul.mubr.bf16.gmra.mrb[0].mxu0 %v818
    %v1111 = vpop.f32.mrb[0].mxu0
    %v1112 = vadd.f32 %v1063, %v1111
    %v1113 = vpop.f32.mrb[0].mxu0
    %v1114 = vpop.f32.mrb[0].mxu0
    %v1115 = vadd.f32 %v1066, %v1114
    %v1116 = vpop.f32.mrb[0].mxu0
    %1117 = vdwg.mxu0
    %v1118 = vmax.f32 %v1104, 0.0
    %v1119 = vmax.f32 %v1107, 0.0
    %v1120 = vmax.f32 %v1112, 0.0
    %v1121 = vmax.f32 %v1115, 0.0
    %1122 = vst [vmem:[#allocation2 + $0x8] sm:$0xff] %v1118
    %1123 = vst [vmem:[#allocation2 + $0x20] sm:$0xff] %v1119
    %1124 = vst [vmem:[#allocation2 + $0x38] sm:$0xff] %v1120
    %1125 = vst [vmem:[#allocation2 + $0x50] sm:$0xff] %v1121
    %v1128 = vrot.slane %v1118, 7
    %v1129 = vrot.slane %v1119, 7
    %v1130 = vsel %vm57, %v1128, %v1129
    %1133 = vst [vmem:[#allocation2] sm:$0xfe] %v1128
    %1134 = vst [vmem:[#allocation2 + $0x18] sm:$0xff] %v1130
    %v1135 = vrot.slane %v1118, 1
    %v1136 = vrot.slane %v1119, 1
    %v1137 = vsel %vm65, %v1135, %v1136
    %1140 = vst [vmem:[#allocation2 + $0x10] sm:$0xff] %v1137
    %1141 = vst [vmem:[#allocation2 + $0x28] sm:$0x7f] %v1136
    %v1144 = vrot.slane %v1120, 7
    %v1145 = vrot.slane %v1121, 7
    %v1146 = vsel %vm57, %v1144, %v1145
    %1149 = vst [vmem:[#allocation2 + $0x30] sm:$0xfe] %v1144
    %1150 = vst [vmem:[#allocation2 + $0x48] sm:$0xff] %v1146
    %v1151 = vrot.slane %v1120, 1
    %v1152 = vrot.slane %v1121, 1
    %v1153 = vsel %vm65, %v1151, %v1152
    %1156 = vst [vmem:[#allocation2 + $0x40] sm:$0xff] %v1153
    %1157 = vst [vmem:[#allocation2 + $0x58] sm:$0x7f] %v1152
    %v1158 = vld [vmem:[#allocation2] sm:$0xff]
    %v1159 = vld [vmem:[#allocation2 + $0x8] sm:$0xff]
    %v1160 = vld [vmem:[#allocation2 + $0x10] sm:$0xff]
    %v1161 = vld [vmem:[#allocation2 + $0x18] sm:$0xff]
    %v1162 = vld [vmem:[#allocation2 + $0x20] sm:$0xff]
    %v1163 = vld [vmem:[#allocation2 + $0x28] sm:$0xff]
    %v1164 = vld [vmem:[#allocation2 + $0x30] sm:$0xff]
    %v1165 = vld [vmem:[#allocation2 + $0x38] sm:$0xff]
    %v1166 = vld [vmem:[#allocation2 + $0x40] sm:$0xff]
    %v1167 = vld [vmem:[#allocation2 + $0x48] sm:$0xff]
    %v1168 = vld [vmem:[#allocation2 + $0x50] sm:$0xff]
    %v1169 = vld [vmem:[#allocation2 + $0x58] sm:$0xff]
    %v1170 = vpack.c.bf16 %v1161, %v1158
    %v1171 = vpack.c.bf16 %v1162, %v1159
    %v1172 = vpack.c.bf16 %v1163, %v1160
    %v1173 = vpack.c.bf16 %v1167, %v1164
    %v1174 = vpack.c.bf16 %v1168, %v1165
    %v1175 = vpack.c.bf16 %v1169, %v1166
    %s1176 = scalar_lea.vmem [#allocation3], 576
    %v1177 = vld [vmem:[%s1176] sm:$0xf]
    %v1178 = vld [vmem:[%s1176 + $0x4] sm:$0xf]
    %v1179 = vld [vmem:[%s1176 + $0x8] sm:$0xf]
    %v1180 = vld [vmem:[%s1176 + $0xc] sm:$0xf]
    %v1181 = vld [vmem:[%s1176 + $0x10] sm:$0xf]
    %v1182 = vld [vmem:[%s1176 + $0x14] sm:$0xf]
    %v1183 = vld [vmem:[%s1176 + $0x18] sm:$0xf]
    %v1184 = vld [vmem:[%s1176 + $0x1c] sm:$0xf]
    %v1185 = vld [vmem:[%s1176 + $0x20] sm:$0xf]
    %v1186 = vld [vmem:[%s1176 + $0x24] sm:$0xf]
    %v1187 = vld [vmem:[%s1176 + $0x28] sm:$0xf]
    %v1188 = vld [vmem:[%s1176 + $0x2c] sm:$0xf]
    %v1189 = vld [vmem:[%s1176 + $0x30] sm:$0xf]
    %v1190 = vld [vmem:[%s1176 + $0x34] sm:$0xf]
    %v1191 = vld [vmem:[%s1176 + $0x38] sm:$0xf]
    %v1192 = vld [vmem:[%s1176 + $0x3c] sm:$0xf]
    %v1193 = vld [vmem:[%s1176 + $0x40] sm:$0xf]
    %v1194 = vld [vmem:[%s1176 + $0x44] sm:$0xf]
    %v1195 = vld [vmem:[%s1176 + $0x48] sm:$0xf]
    %v1196 = vld [vmem:[%s1176 + $0x4c] sm:$0xf]
    %v1197 = vld [vmem:[%s1176 + $0x50] sm:$0xf]
    %v1198 = vld [vmem:[%s1176 + $0x54] sm:$0xf]
    %v1199 = vld [vmem:[%s1176 + $0x58] sm:$0xf]
    %v1200 = vld [vmem:[%s1176 + $0x5c] sm:$0xf]
    %v1201 = vld [vmem:[%s1176 + $0x60] sm:$0xf]
    %v1202 = vld [vmem:[%s1176 + $0x64] sm:$0xf]
    %v1203 = vld [vmem:[%s1176 + $0x68] sm:$0xf]
    %v1204 = vld [vmem:[%s1176 + $0x6c] sm:$0xf]
    %v1205 = vld [vmem:[%s1176 + $0x70] sm:$0xf]
    %v1206 = vld [vmem:[%s1176 + $0x74] sm:$0xf]
    %v1207 = vld [vmem:[%s1176 + $0x78] sm:$0xf]
    %v1208 = vld [vmem:[%s1176 + $0x7c] sm:$0xf]
    %v1209 = vld [vmem:[%s1176 + $0x80] sm:$0xf]
    %v1210 = vld [vmem:[%s1176 + $0x84] sm:$0xf]
    %v1211 = vld [vmem:[%s1176 + $0x88] sm:$0xf]
    %v1212 = vld [vmem:[%s1176 + $0x8c] sm:$0xf]
    %v1213 = vld [vmem:[%s1176 + $0x90] sm:$0xf]
    %v1214 = vld [vmem:[%s1176 + $0x94] sm:$0xf]
    %v1215 = vld [vmem:[%s1176 + $0x98] sm:$0xf]
    %v1216 = vld [vmem:[%s1176 + $0x9c] sm:$0xf]
    %v1217 = vld [vmem:[%s1176 + $0xa0] sm:$0xf]
    %v1218 = vld [vmem:[%s1176 + $0xa4] sm:$0xf]
    %v1219 = vld [vmem:[%s1176 + $0xa8] sm:$0xf]
    %v1220 = vld [vmem:[%s1176 + $0xac] sm:$0xf]
    %v1221 = vld [vmem:[%s1176 + $0xb0] sm:$0xf]
    %v1222 = vld [vmem:[%s1176 + $0xb4] sm:$0xf]
    %v1223 = vld [vmem:[%s1176 + $0xb8] sm:$0xf]
    %v1224 = vld [vmem:[%s1176 + $0xbc] sm:$0xf]
    %s1225 = scalar_lea.vmem [#allocation5], 3
    %v1226 = vld [vmem:[%s1225] sm:$0x1]
    %v1228 = vlaneseq
    %v1229 = vshrl.u32 %v1228, 7
    %v1230 = vsub.s32 0, %v1229
    %v1231 = vrot.slane %v1226, %v1230
    %v1281 = vunpack.c.l.b16 %v1177
    %v1282 = vunpack.c.l.b16 %v1178
    %v1283 = vunpack.c.l.b16 %v1179
    %v1284 = vunpack.c.l.b16 %v1180
    %v1285 = vunpack.c.l.b16 %v1181
    %v1286 = vunpack.c.l.b16 %v1182
    %v1287 = vunpack.c.l.b16 %v1183
    %v1288 = vunpack.c.l.b16 %v1184
    %v1289 = vunpack.c.l.b16 %v1185
    %v1290 = vunpack.c.l.b16 %v1186
    %v1291 = vunpack.c.l.b16 %v1187
    %v1292 = vunpack.c.l.b16 %v1188
    %v1293 = vunpack.c.l.b16 %v1189
    %v1294 = vunpack.c.l.b16 %v1190
    %v1295 = vunpack.c.l.b16 %v1191
    %v1296 = vunpack.c.l.b16 %v1192
    %v1297 = vunpack.c.l.b16 %v1193
    %v1298 = vunpack.c.l.b16 %v1194
    %v1299 = vunpack.c.l.b16 %v1195
    %v1300 = vunpack.c.l.b16 %v1196
    %v1301 = vunpack.c.l.b16 %v1197
    %v1302 = vunpack.c.l.b16 %v1198
    %v1303 = vunpack.c.l.b16 %v1199
    %v1304 = vunpack.c.l.b16 %v1200
    %v1305 = vunpack.c.l.b16 %v1201
    %v1306 = vunpack.c.l.b16 %v1202
    %v1307 = vunpack.c.l.b16 %v1203
    %v1308 = vunpack.c.l.b16 %v1204
    %v1309 = vunpack.c.l.b16 %v1205
    %v1310 = vunpack.c.l.b16 %v1206
    %v1311 = vunpack.c.l.b16 %v1207
    %v1312 = vunpack.c.l.b16 %v1208
    %v1313 = vunpack.c.l.b16 %v1209
    %v1314 = vunpack.c.l.b16 %v1210
    %v1315 = vunpack.c.l.b16 %v1211
    %v1316 = vunpack.c.l.b16 %v1212
    %v1317 = vunpack.c.l.b16 %v1213
    %v1318 = vunpack.c.l.b16 %v1214
    %v1319 = vunpack.c.l.b16 %v1215
    %v1320 = vunpack.c.l.b16 %v1216
    %v1321 = vunpack.c.l.b16 %v1217
    %v1322 = vunpack.c.l.b16 %v1218
    %v1323 = vunpack.c.l.b16 %v1219
    %v1324 = vunpack.c.l.b16 %v1220
    %v1325 = vunpack.c.l.b16 %v1221
    %v1326 = vunpack.c.l.b16 %v1222
    %v1327 = vunpack.c.l.b16 %v1223
    %v1328 = vunpack.c.l.b16 %v1224
    %v1329 = vpack.c.b16 %v1282, %v1281
    %v1330 = vpack.c.b16 %v1284, %v1283
    %v1331 = vpack.c.b16 %v1286, %v1285
    %v1332 = vpack.c.b16 %v1288, %v1287
    %v1333 = vpack.c.b16 %v1290, %v1289
    %v1334 = vpack.c.b16 %v1292, %v1291
    %v1335 = vpack.c.b16 %v1294, %v1293
    %v1336 = vpack.c.b16 %v1296, %v1295
    %v1337 = vpack.c.b16 %v1298, %v1297
    %v1338 = vpack.c.b16 %v1300, %v1299
    %v1339 = vpack.c.b16 %v1302, %v1301
    %v1340 = vpack.c.b16 %v1304, %v1303
    %v1341 = vpack.c.b16 %v1306, %v1305
    %v1342 = vpack.c.b16 %v1308, %v1307
    %v1343 = vpack.c.b16 %v1310, %v1309
    %v1344 = vpack.c.b16 %v1312, %v1311
    %v1345 = vpack.c.b16 %v1314, %v1313
    %v1346 = vpack.c.b16 %v1316, %v1315
    %v1347 = vpack.c.b16 %v1318, %v1317
    %v1348 = vpack.c.b16 %v1320, %v1319
    %v1349 = vpack.c.b16 %v1322, %v1321
    %v1350 = vpack.c.b16 %v1324, %v1323
    %v1351 = vpack.c.b16 %v1326, %v1325
    %v1352 = vpack.c.b16 %v1328, %v1327
    %1377 = vmatprep.subr.bf16.mxu0 0
    %1378 = vmatpush1.bf16.msra.mxu0 %v1329
    %1379 = vmatprep.subr.bf16.mxu0 0
    %1380 = vmatpush1.bf16.msra.mxu0 %v1330
    %1381 = vmatprep.subr.bf16.mxu0 0
    %1382 = vmatpush1.bf16.msra.mxu0 %v1331
    %1383 = vmatprep.subr.bf16.mxu0 0
    %1384 = vmatpush1.bf16.msra.mxu0 %v1332
    %1385 = vmatprep.subr.bf16.mxu0 0
    %1386 = vmatpush1.bf16.msra.mxu0 %v1333
    %1387 = vmatprep.subr.bf16.mxu0 0
    %1388 = vmatpush1.bf16.msra.mxu0 %v1334
    %1389 = vmatprep.subr.bf16.mxu0 0
    %1390 = vmatpush1.bf16.msra.mxu0 %v1335
    %1391 = vmatprep.subr.bf16.mxu0 0
    %1392 = vmatpush1.bf16.msra.mxu0 %v1336
    %1393 = vmatprep.subr.bf16.mxu0 0
    %1394 = vmatpush1.bf16.msra.mxu0 %v1337
    %1395 = vmatprep.subr.bf16.mxu0 0
    %1396 = vmatpush1.bf16.msra.mxu0 %v1338
    %1397 = vmatprep.subr.bf16.mxu0 0
    %1398 = vmatpush1.bf16.msra.mxu0 %v1339
    %1399 = vmatprep.subr.bf16.mxu0 0
    %1400 = vmatpush1.bf16.msra.mxu0 %v1340
    %1401 = vmatprep.subr.bf16.mxu0 0
    %1402 = vmatpush1.bf16.msra.mxu0 %v1341
    %1403 = vmatprep.subr.bf16.mxu0 0
    %1404 = vmatpush1.bf16.msra.mxu0 %v1342
    %1405 = vmatprep.subr.bf16.mxu0 0
    %1406 = vmatpush1.bf16.msra.mxu0 %v1343
    %1407 = vmatprep.subr.bf16.mxu0 0
    %1408 = vmatpush1.bf16.msra.mxu0 %v1344
    %1409 = vmatprep.mubr.bf16.mxu0 %v1171
    %1410 = vmatmul.mubr.bf16.gmra.mrb[0].mxu0 %v1170
    %v1411 = vpop.f32.mrb[0].mxu0
    %v1412 = vadd.f32 %v1231, %v1411
    %v1413 = vpop.f32.mrb[0].mxu0
    %v1414 = vpop.f32.mrb[0].mxu0
    %v1415 = vadd.f32 %v1231, %v1414
    %v1416 = vpop.f32.mrb[0].mxu0
    %1417 = vmatprep.mubr.bf16.mxu0 %v1174
    %1418 = vmatmul.mubr.bf16.gmra.mrb[0].mxu0 %v1173
    %v1419 = vpop.f32.mrb[0].mxu0
    %v1420 = vadd.f32 %v1231, %v1419
    %v1421 = vpop.f32.mrb[0].mxu0
    %v1422 = vpop.f32.mrb[0].mxu0
    %v1423 = vadd.f32 %v1231, %v1422
    %v1424 = vpop.f32.mrb[0].mxu0
    %1425 = vdwg.mxu0
    %1426 = vmatprep.subr.bf16.mxu0 0
    %1427 = vmatpush1.bf16.msra.mxu0 %v1345
    %1428 = vmatprep.subr.bf16.mxu0 0
    %1429 = vmatpush1.bf16.msra.mxu0 %v1346
    %1430 = vmatprep.subr.bf16.mxu0 0
    %1431 = vmatpush1.bf16.msra.mxu0 %v1347
    %1432 = vmatprep.subr.bf16.mxu0 0
    %1433 = vmatpush1.bf16.msra.mxu0 %v1348
    %1434 = vmatprep.subr.bf16.mxu0 0
    %1435 = vmatpush1.bf16.msra.mxu0 %v1349
    %1436 = vmatprep.subr.bf16.mxu0 0
    %1437 = vmatpush1.bf16.msra.mxu0 %v1350
    %1438 = vmatprep.subr.bf16.mxu0 0
    %1439 = vmatpush1.bf16.msra.mxu0 %v1351
    %1440 = vmatprep.subr.bf16.mxu0 0
    %1441 = vmatpush1.bf16.msra.mxu0 %v1352
    %1442 = vmatprep.subr.bf16.mxu0 0
    %1443 = vmatpush1.bf16.msra.mxu0 0
    %1444 = vmatprep.subr.bf16.mxu0 0
    %1445 = vmatpush1.bf16.msra.mxu0 0
    %1446 = vmatprep.subr.bf16.mxu0 0
    %1447 = vmatpush1.bf16.msra.mxu0 0
    %1448 = vmatprep.subr.bf16.mxu0 0
    %1449 = vmatpush1.bf16.msra.mxu0 0
    %1450 = vmatprep.subr.bf16.mxu0 0
    %1451 = vmatpush1.bf16.msra.mxu0 0
    %1452 = vmatprep.subr.bf16.mxu0 0
    %1453 = vmatpush1.bf16.msra.mxu0 0
    %1454 = vmatprep.subr.bf16.mxu0 0
    %1455 = vmatpush1.bf16.msra.mxu0 0
    %1456 = vmatprep.subr.bf16.mxu0 0
    %1457 = vmatpush1.bf16.msra.mxu0 0
    %1458 = vmatprep.mubr.bf16.mxu0 0
    %1459 = vmatmul.mubr.bf16.gmra.mrb[0].mxu0 %v1172
    %v1460 = vpop.f32.mrb[0].mxu0
    %v1461 = vadd.f32 %v1412, %v1460
    %v1462 = vpop.f32.mrb[0].mxu0
    %v1463 = vpop.f32.mrb[0].mxu0
    %v1464 = vadd.f32 %v1415, %v1463
    %v1465 = vpop.f32.mrb[0].mxu0
    %1466 = vmatprep.mubr.bf16.mxu0 0
    %1467 = vmatmul.mubr.bf16.gmra.mrb[0].mxu0 %v1175
    %v1468 = vpop.f32.mrb[0].mxu0
    %v1469 = vadd.f32 %v1420, %v1468
    %v1470 = vpop.f32.mrb[0].mxu0
    %v1471 = vpop.f32.mrb[0].mxu0
    %v1472 = vadd.f32 %v1423, %v1471
    %v1473 = vpop.f32.mrb[0].mxu0
    %1474 = vdwg.mxu0
    %v1475 = vadd.f32 %v1461, %v761
    %v1476 = vadd.f32 %v1464, %v762
    %v1477 = vadd.f32 %v1469, %v763
    %v1478 = vadd.f32 %v1472, %v764
    %1479 = vst [vmem:[#allocation2 + $0x8] sm:$0xff] %v1475
    %1480 = vst [vmem:[#allocation2 + $0x20] sm:$0xff] %v1476
    %1481 = vst [vmem:[#allocation2 + $0x38] sm:$0xff] %v1477
    %1482 = vst [vmem:[#allocation2 + $0x50] sm:$0xff] %v1478
    %v1485 = vrot.slane %v1475, 7
    %v1486 = vrot.slane %v1476, 7
    %v1487 = vsel %vm57, %v1485, %v1486
    %1490 = vst [vmem:[#allocation2] sm:$0xfe] %v1485
    %1491 = vst [vmem:[#allocation2 + $0x18] sm:$0xff] %v1487
    %v1492 = vrot.slane %v1475, 1
    %v1493 = vrot.slane %v1476, 1
    %v1494 = vsel %vm65, %v1492, %v1493
    %1497 = vst [vmem:[#allocation2 + $0x10] sm:$0xff] %v1494
    %1498 = vst [vmem:[#allocation2 + $0x28] sm:$0x7f] %v1493
    %v1501 = vrot.slane %v1477, 7
    %v1502 = vrot.slane %v1478, 7
    %v1503 = vsel %vm57, %v1501, %v1502
    %1506 = vst [vmem:[#allocation2 + $0x30] sm:$0xfe] %v1501
    %1507 = vst [vmem:[#allocation2 + $0x48] sm:$0xff] %v1503
    %v1508 = vrot.slane %v1477, 1
    %v1509 = vrot.slane %v1478, 1
    %v1510 = vsel %vm65, %v1508, %v1509
    %1513 = vst [vmem:[#allocation2 + $0x40] sm:$0xff] %v1510
    %1514 = vst [vmem:[#allocation2 + $0x58] sm:$0x7f] %v1509
    %v1515 = vld [vmem:[#allocation2] sm:$0xff]
    %v1516 = vld [vmem:[#allocation2 + $0x8] sm:$0xff]
    %v1517 = vld [vmem:[#allocation2 + $0x10] sm:$0xff]
    %v1518 = vld [vmem:[#allocation2 + $0x18] sm:$0xff]
    %v1519 = vld [vmem:[#allocation2 + $0x20] sm:$0xff]
    %v1520 = vld [vmem:[#allocation2 + $0x28] sm:$0xff]
    %v1521 = vld [vmem:[#allocation2 + $0x30] sm:$0xff]
    %v1522 = vld [vmem:[#allocation2 + $0x38] sm:$0xff]
    %v1523 = vld [vmem:[#allocation2 + $0x40] sm:$0xff]
    %v1524 = vld [vmem:[#allocation2 + $0x48] sm:$0xff]
    %v1525 = vld [vmem:[#allocation2 + $0x50] sm:$0xff]
    %v1526 = vld [vmem:[#allocation2 + $0x58] sm:$0xff]
    %v1527 = vpack.c.bf16 %v1518, %v1515
    %v1528 = vpack.c.bf16 %v1519, %v1516
    %v1529 = vpack.c.bf16 %v1520, %v1517
    %v1530 = vpack.c.bf16 %v1524, %v1521
    %v1531 = vpack.c.bf16 %v1525, %v1522
    %v1532 = vpack.c.bf16 %v1526, %v1523
    %s1533 = scalar_lea.vmem [#allocation3], 768
    %v1534 = vld [vmem:[%s1533] sm:$0xf]
    %v1535 = vld [vmem:[%s1533 + $0x4] sm:$0xf]
    %v1536 = vld [vmem:[%s1533 + $0x8] sm:$0xf]
    %v1537 = vld [vmem:[%s1533 + $0xc] sm:$0xf]
    %v1538 = vld [vmem:[%s1533 + $0x10] sm:$0xf]
    %v1539 = vld [vmem:[%s1533 + $0x14] sm:$0xf]
    %v1540 = vld [vmem:[%s1533 + $0x18] sm:$0xf]
    %v1541 = vld [vmem:[%s1533 + $0x1c] sm:$0xf]
    %v1542 = vld [vmem:[%s1533 + $0x20] sm:$0xf]
    %v1543 = vld [vmem:[%s1533 + $0x24] sm:$0xf]
    %v1544 = vld [vmem:[%s1533 + $0x28] sm:$0xf]
    %v1545 = vld [vmem:[%s1533 + $0x2c] sm:$0xf]
    %v1546 = vld [vmem:[%s1533 + $0x30] sm:$0xf]
    %v1547 = vld [vmem:[%s1533 + $0x34] sm:$0xf]
    %v1548 = vld [vmem:[%s1533 + $0x38] sm:$0xf]
    %v1549 = vld [vmem:[%s1533 + $0x3c] sm:$0xf]
    %v1550 = vld [vmem:[%s1533 + $0x40] sm:$0xf]
    %v1551 = vld [vmem:[%s1533 + $0x44] sm:$0xf]
    %v1552 = vld [vmem:[%s1533 + $0x48] sm:$0xf]
    %v1553 = vld [vmem:[%s1533 + $0x4c] sm:$0xf]
    %v1554 = vld [vmem:[%s1533 + $0x50] sm:$0xf]
    %v1555 = vld [vmem:[%s1533 + $0x54] sm:$0xf]
    %v1556 = vld [vmem:[%s1533 + $0x58] sm:$0xf]
    %v1557 = vld [vmem:[%s1533 + $0x5c] sm:$0xf]
    %v1558 = vld [vmem:[%s1533 + $0x60] sm:$0xf]
    %v1559 = vld [vmem:[%s1533 + $0x64] sm:$0xf]
    %v1560 = vld [vmem:[%s1533 + $0x68] sm:$0xf]
    %v1561 = vld [vmem:[%s1533 + $0x6c] sm:$0xf]
    %v1562 = vld [vmem:[%s1533 + $0x70] sm:$0xf]
    %v1563 = vld [vmem:[%s1533 + $0x74] sm:$0xf]
    %v1564 = vld [vmem:[%s1533 + $0x78] sm:$0xf]
    %v1565 = vld [vmem:[%s1533 + $0x7c] sm:$0xf]
    %v1566 = vld [vmem:[%s1533 + $0x80] sm:$0xf]
    %v1567 = vld [vmem:[%s1533 + $0x84] sm:$0xf]
    %v1568 = vld [vmem:[%s1533 + $0x88] sm:$0xf]
    %v1569 = vld [vmem:[%s1533 + $0x8c] sm:$0xf]
    %v1570 = vld [vmem:[%s1533 + $0x90] sm:$0xf]
    %v1571 = vld [vmem:[%s1533 + $0x94] sm:$0xf]
    %v1572 = vld [vmem:[%s1533 + $0x98] sm:$0xf]
    %v1573 = vld [vmem:[%s1533 + $0x9c] sm:$0xf]
    %v1574 = vld [vmem:[%s1533 + $0xa0] sm:$0xf]
    %v1575 = vld [vmem:[%s1533 + $0xa4] sm:$0xf]
    %v1576 = vld [vmem:[%s1533 + $0xa8] sm:$0xf]
    %v1577 = vld [vmem:[%s1533 + $0xac] sm:$0xf]
    %v1578 = vld [vmem:[%s1533 + $0xb0] sm:$0xf]
    %v1579 = vld [vmem:[%s1533 + $0xb4] sm:$0xf]
    %v1580 = vld [vmem:[%s1533 + $0xb8] sm:$0xf]
    %v1581 = vld [vmem:[%s1533 + $0xbc] sm:$0xf]
    %s1582 = scalar_lea.vmem [#allocation5], 4
    %v1583 = vld [vmem:[%s1582] sm:$0x1]
    %v1585 = vlaneseq
    %v1586 = vshrl.u32 %v1585, 7
    %v1587 = vsub.s32 0, %v1586
    %v1588 = vrot.slane %v1583, %v1587
    %v1638 = vunpack.c.l.b16 %v1534
    %v1639 = vunpack.c.l.b16 %v1535
    %v1640 = vunpack.c.l.b16 %v1536
    %v1641 = vunpack.c.l.b16 %v1537
    %v1642 = vunpack.c.l.b16 %v1538
    %v1643 = vunpack.c.l.b16 %v1539
    %v1644 = vunpack.c.l.b16 %v1540
    %v1645 = vunpack.c.l.b16 %v1541
    %v1646 = vunpack.c.l.b16 %v1542
    %v1647 = vunpack.c.l.b16 %v1543
    %v1648 = vunpack.c.l.b16 %v1544
    %v1649 = vunpack.c.l.b16 %v1545
    %v1650 = vunpack.c.l.b16 %v1546
    %v1651 = vunpack.c.l.b16 %v1547
    %v1652 = vunpack.c.l.b16 %v1548
    %v1653 = vunpack.c.l.b16 %v1549
    %v1654 = vunpack.c.l.b16 %v1550
    %v1655 = vunpack.c.l.b16 %v1551
    %v1656 = vunpack.c.l.b16 %v1552
    %v1657 = vunpack.c.l.b16 %v1553
    %v1658 = vunpack.c.l.b16 %v1554
    %v1659 = vunpack.c.l.b16 %v1555
    %v1660 = vunpack.c.l.b16 %v1556
    %v1661 = vunpack.c.l.b16 %v1557
    %v1662 = vunpack.c.l.b16 %v1558
    %v1663 = vunpack.c.l.b16 %v1559
    %v1664 = vunpack.c.l.b16 %v1560
    %v1665 = vunpack.c.l.b16 %v1561
    %v1666 = vunpack.c.l.b16 %v1562
    %v1667 = vunpack.c.l.b16 %v1563
    %v1668 = vunpack.c.l.b16 %v1564
    %v1669 = vunpack.c.l.b16 %v1565
    %v1670 = vunpack.c.l.b16 %v1566
    %v1671 = vunpack.c.l.b16 %v1567
    %v1672 = vunpack.c.l.b16 %v1568
    %v1673 = vunpack.c.l.b16 %v1569
    %v1674 = vunpack.c.l.b16 %v1570
    %v1675 = vunpack.c.l.b16 %v1571
    %v1676 = vunpack.c.l.b16 %v1572
    %v1677 = vunpack.c.l.b16 %v1573
    %v1678 = vunpack.c.l.b16 %v1574
    %v1679 = vunpack.c.l.b16 %v1575
    %v1680 = vunpack.c.l.b16 %v1576
    %v1681 = vunpack.c.l.b16 %v1577
    %v1682 = vunpack.c.l.b16 %v1578
    %v1683 = vunpack.c.l.b16 %v1579
    %v1684 = vunpack.c.l.b16 %v1580
    %v1685 = vunpack.c.l.b16 %v1581
    %v1686 = vpack.c.b16 %v1639, %v1638
    %v1687 = vpack.c.b16 %v1641, %v1640
    %v1688 = vpack.c.b16 %v1643, %v1642
    %v1689 = vpack.c.b16 %v1645, %v1644
    %v1690 = vpack.c.b16 %v1647, %v1646
    %v1691 = vpack.c.b16 %v1649, %v1648
    %v1692 = vpack.c.b16 %v1651, %v1650
    %v1693 = vpack.c.b16 %v1653, %v1652
    %v1694 = vpack.c.b16 %v1655, %v1654
    %v1695 = vpack.c.b16 %v1657, %v1656
    %v1696 = vpack.c.b16 %v1659, %v1658
    %v1697 = vpack.c.b16 %v1661, %v1660
    %v1698 = vpack.c.b16 %v1663, %v1662
    %v1699 = vpack.c.b16 %v1665, %v1664
    %v1700 = vpack.c.b16 %v1667, %v1666
    %v1701 = vpack.c.b16 %v1669, %v1668
    %v1702 = vpack.c.b16 %v1671, %v1670
    %v1703 = vpack.c.b16 %v1673, %v1672
    %v1704 = vpack.c.b16 %v1675, %v1674
    %v1705 = vpack.c.b16 %v1677, %v1676
    %v1706 = vpack.c.b16 %v1679, %v1678
    %v1707 = vpack.c.b16 %v1681, %v1680
    %v1708 = vpack.c.b16 %v1683, %v1682
    %v1709 = vpack.c.b16 %v1685, %v1684
    %1734 = vmatprep.subr.bf16.mxu0 0
    %1735 = vmatpush1.bf16.msra.mxu0 %v1686
    %1736 = vmatprep.subr.bf16.mxu0 0
    %1737 = vmatpush1.bf16.msra.mxu0 %v1687
    %1738 = vmatprep.subr.bf16.mxu0 0
    %1739 = vmatpush1.bf16.msra.mxu0 %v1688
    %1740 = vmatprep.subr.bf16.mxu0 0
    %1741 = vmatpush1.bf16.msra.mxu0 %v1689
    %1742 = vmatprep.subr.bf16.mxu0 0
    %1743 = vmatpush1.bf16.msra.mxu0 %v1690
    %1744 = vmatprep.subr.bf16.mxu0 0
    %1745 = vmatpush1.bf16.msra.mxu0 %v1691
    %1746 = vmatprep.subr.bf16.mxu0 0
    %1747 = vmatpush1.bf16.msra.mxu0 %v1692
    %1748 = vmatprep.subr.bf16.mxu0 0
    %1749 = vmatpush1.bf16.msra.mxu0 %v1693
    %1750 = vmatprep.subr.bf16.mxu0 0
    %1751 = vmatpush1.bf16.msra.mxu0 %v1694
    %1752 = vmatprep.subr.bf16.mxu0 0
    %1753 = vmatpush1.bf16.msra.mxu0 %v1695
    %1754 = vmatprep.subr.bf16.mxu0 0
    %1755 = vmatpush1.bf16.msra.mxu0 %v1696
    %1756 = vmatprep.subr.bf16.mxu0 0
    %1757 = vmatpush1.bf16.msra.mxu0 %v1697
    %1758 = vmatprep.subr.bf16.mxu0 0
    %1759 = vmatpush1.bf16.msra.mxu0 %v1698
    %1760 = vmatprep.subr.bf16.mxu0 0
    %1761 = vmatpush1.bf16.msra.mxu0 %v1699
    %1762 = vmatprep.subr.bf16.mxu0 0
    %1763 = vmatpush1.bf16.msra.mxu0 %v1700
    %1764 = vmatprep.subr.bf16.mxu0 0
    %1765 = vmatpush1.bf16.msra.mxu0 %v1701
    %1766 = vmatprep.mubr.bf16.mxu0 %v1528
    %1767 = vmatmul.mubr.bf16.gmra.mrb[0].mxu0 %v1527
    %v1768 = vpop.f32.mrb[0].mxu0
    %v1769 = vadd.f32 %v1588, %v1768
    %v1770 = vpop.f32.mrb[0].mxu0
    %v1771 = vpop.f32.mrb[0].mxu0
    %v1772 = vadd.f32 %v1588, %v1771
    %v1773 = vpop.f32.mrb[0].mxu0
    %1774 = vmatprep.mubr.bf16.mxu0 %v1531
    %1775 = vmatmul.mubr.bf16.gmra.mrb[0].mxu0 %v1530
    %v1776 = vpop.f32.mrb[0].mxu0
    %v1777 = vadd.f32 %v1588, %v1776
    %v1778 = vpop.f32.mrb[0].mxu0
    %v1779 = vpop.f32.mrb[0].mxu0
    %v1780 = vadd.f32 %v1588, %v1779
    %v1781 = vpop.f32.mrb[0].mxu0
    %1782 = vdwg.mxu0
    %1783 = vmatprep.subr.bf16.mxu0 0
    %1784 = vmatpush1.bf16.msra.mxu0 %v1702
    %1785 = vmatprep.subr.bf16.mxu0 0
    %1786 = vmatpush1.bf16.msra.mxu0 %v1703
    %1787 = vmatprep.subr.bf16.mxu0 0
    %1788 = vmatpush1.bf16.msra.mxu0 %v1704
    %1789 = vmatprep.subr.bf16.mxu0 0
    %1790 = vmatpush1.bf16.msra.mxu0 %v1705
    %1791 = vmatprep.subr.bf16.mxu0 0
    %1792 = vmatpush1.bf16.msra.mxu0 %v1706
    %1793 = vmatprep.subr.bf16.mxu0 0
    %1794 = vmatpush1.bf16.msra.mxu0 %v1707
    %1795 = vmatprep.subr.bf16.mxu0 0
    %1796 = vmatpush1.bf16.msra.mxu0 %v1708
    %1797 = vmatprep.subr.bf16.mxu0 0
    %1798 = vmatpush1.bf16.msra.mxu0 %v1709
    %1799 = vmatprep.subr.bf16.mxu0 0
    %1800 = vmatpush1.bf16.msra.mxu0 0
    %1801 = vmatprep.subr.bf16.mxu0 0
    %1802 = vmatpush1.bf16.msra.mxu0 0
    %1803 = vmatprep.subr.bf16.mxu0 0
    %1804 = vmatpush1.bf16.msra.mxu0 0
    %1805 = vmatprep.subr.bf16.mxu0 0
    %1806 = vmatpush1.bf16.msra.mxu0 0
    %1807 = vmatprep.subr.bf16.mxu0 0
    %1808 = vmatpush1.bf16.msra.mxu0 0
    %1809 = vmatprep.subr.bf16.mxu0 0
    %1810 = vmatpush1.bf16.msra.mxu0 0
    %1811 = vmatprep.subr.bf16.mxu0 0
    %1812 = vmatpush1.bf16.msra.mxu0 0
    %1813 = vmatprep.subr.bf16.mxu0 0
    %1814 = vmatpush1.bf16.msra.mxu0 0
    %1815 = vmatprep.mubr.bf16.mxu0 0
    %1816 = vmatmul.mubr.bf16.gmra.mrb[0].mxu0 %v1529
    %v1817 = vpop.f32.mrb[0].mxu0
    %v1818 = vadd.f32 %v1769, %v1817
    %v1819 = vpop.f32.mrb[0].mxu0
    %v1820 = vpop.f32.mrb[0].mxu0
    %v1821 = vadd.f32 %v1772, %v1820
    %v1822 = vpop.f32.mrb[0].mxu0
    %1823 = vmatprep.mubr.bf16.mxu0 0
    %1824 = vmatmul.mubr.bf16.gmra.mrb[0].mxu0 %v1532
    %v1825 = vpop.f32.mrb[0].mxu0
    %v1826 = vadd.f32 %v1777, %v1825
    %v1827 = vpop.f32.mrb[0].mxu0
    %v1828 = vpop.f32.mrb[0].mxu0
    %v1829 = vadd.f32 %v1780, %v1828
    %v1830 = vpop.f32.mrb[0].mxu0
    %1831 = vdwg.mxu0
    %v1832 = vmax.f32 %v1818, 0.0
    %v1833 = vmax.f32 %v1821, 0.0
    %v1834 = vmax.f32 %v1826, 0.0
    %v1835 = vmax.f32 %v1829, 0.0
    %1836 = vst [vmem:[#allocation2 + $0x8] sm:$0xff] %v1832
    %1837 = vst [vmem:[#allocation2 + $0x20] sm:$0xff] %v1833
    %1838 = vst [vmem:[#allocation2 + $0x38] sm:$0xff] %v1834
    %1839 = vst [vmem:[#allocation2 + $0x50] sm:$0xff] %v1835
    %v1842 = vrot.slane %v1832, 7
    %v1843 = vrot.slane %v1833, 7
    %v1844 = vsel %vm57, %v1842, %v1843
    %1847 = vst [vmem:[#allocation2] sm:$0xfe] %v1842
    %1848 = vst [vmem:[#allocation2 + $0x18] sm:$0xff] %v1844
    %v1849 = vrot.slane %v1832, 1
    %v1850 = vrot.slane %v1833, 1
    %v1851 = vsel %vm65, %v1849, %v1850
    %1854 = vst [vmem:[#allocation2 + $0x10] sm:$0xff] %v1851
    %1855 = vst [vmem:[#allocation2 + $0x28] sm:$0x7f] %v1850
    %v1858 = vrot.slane %v1834, 7
    %v1859 = vrot.slane %v1835, 7
    %v1860 = vsel %vm57, %v1858, %v1859
    %1863 = vst [vmem:[#allocation2 + $0x30] sm:$0xfe] %v1858
    %1864 = vst [vmem:[#allocation2 + $0x48] sm:$0xff] %v1860
    %v1865 = vrot.slane %v1834, 1
    %v1866 = vrot.slane %v1835, 1
    %v1867 = vsel %vm65, %v1865, %v1866
    %1870 = vst [vmem:[#allocation2 + $0x40] sm:$0xff] %v1867
    %1871 = vst [vmem:[#allocation2 + $0x58] sm:$0x7f] %v1866
    %v1872 = vld [vmem:[#allocation2] sm:$0xff]
    %v1873 = vld [vmem:[#allocation2 + $0x8] sm:$0xff]
    %v1874 = vld [vmem:[#allocation2 + $0x10] sm:$0xff]
    %v1875 = vld [vmem:[#allocation2 + $0x18] sm:$0xff]
    %v1876 = vld [vmem:[#allocation2 + $0x20] sm:$0xff]
    %v1877 = vld [vmem:[#allocation2 + $0x28] sm:$0xff]
    %v1878 = vld [vmem:[#allocation2 + $0x30] sm:$0xff]
    %v1879 = vld [vmem:[#allocation2 + $0x38] sm:$0xff]
    %v1880 = vld [vmem:[#allocation2 + $0x40] sm:$0xff]
    %v1881 = vld [vmem:[#allocation2 + $0x48] sm:$0xff]
    %v1882 = vld [vmem:[#allocation2 + $0x50] sm:$0xff]
    %v1883 = vld [vmem:[#allocation2 + $0x58] sm:$0xff]
    %v1884 = vpack.c.bf16 %v1875, %v1872
    %v1885 = vpack.c.bf16 %v1876, %v1873
    %v1886 = vpack.c.bf16 %v1877, %v1874
    %v1887 = vpack.c.bf16 %v1881, %v1878
    %v1888 = vpack.c.bf16 %v1882, %v1879
    %v1889 = vpack.c.bf16 %v1883, %v1880
    %s1890 = scalar_lea.vmem [#allocation3], 960
    %v1891 = vld [vmem:[%s1890] sm:$0xf]
    %v1892 = vld [vmem:[%s1890 + $0x4] sm:$0xf]
    %v1893 = vld [vmem:[%s1890 + $0x8] sm:$0xf]
    %v1894 = vld [vmem:[%s1890 + $0xc] sm:$0xf]
    %v1895 = vld [vmem:[%s1890 + $0x10] sm:$0xf]
    %v1896 = vld [vmem:[%s1890 + $0x14] sm:$0xf]
    %v1897 = vld [vmem:[%s1890 + $0x18] sm:$0xf]
    %v1898 = vld [vmem:[%s1890 + $0x1c] sm:$0xf]
    %v1899 = vld [vmem:[%s1890 + $0x20] sm:$0xf]
    %v1900 = vld [vmem:[%s1890 + $0x24] sm:$0xf]
    %v1901 = vld [vmem:[%s1890 + $0x28] sm:$0xf]
    %v1902 = vld [vmem:[%s1890 + $0x2c] sm:$0xf]
    %v1903 = vld [vmem:[%s1890 + $0x30] sm:$0xf]
    %v1904 = vld [vmem:[%s1890 + $0x34] sm:$0xf]
    %v1905 = vld [vmem:[%s1890 + $0x38] sm:$0xf]
    %v1906 = vld [vmem:[%s1890 + $0x3c] sm:$0xf]
    %v1907 = vld [vmem:[%s1890 + $0x40] sm:$0xf]
    %v1908 = vld [vmem:[%s1890 + $0x44] sm:$0xf]
    %v1909 = vld [vmem:[%s1890 + $0x48] sm:$0xf]
    %v1910 = vld [vmem:[%s1890 + $0x4c] sm:$0xf]
    %v1911 = vld [vmem:[%s1890 + $0x50] sm:$0xf]
    %v1912 = vld [vmem:[%s1890 + $0x54] sm:$0xf]
    %v1913 = vld [vmem:[%s1890 + $0x58] sm:$0xf]
    %v1914 = vld [vmem:[%s1890 + $0x5c] sm:$0xf]
    %v1915 = vld [vmem:[%s1890 + $0x60] sm:$0xf]
    %v1916 = vld [vmem:[%s1890 + $0x64] sm:$0xf]
    %v1917 = vld [vmem:[%s1890 + $0x68] sm:$0xf]
    %v1918 = vld [vmem:[%s1890 + $0x6c] sm:$0xf]
    %v1919 = vld [vmem:[%s1890 + $0x70] sm:$0xf]
    %v1920 = vld [vmem:[%s1890 + $0x74] sm:$0xf]
    %v1921 = vld [vmem:[%s1890 + $0x78] sm:$0xf]
    %v1922 = vld [vmem:[%s1890 + $0x7c] sm:$0xf]
    %v1923 = vld [vmem:[%s1890 + $0x80] sm:$0xf]
    %v1924 = vld [vmem:[%s1890 + $0x84] sm:$0xf]
    %v1925 = vld [vmem:[%s1890 + $0x88] sm:$0xf]
    %v1926 = vld [vmem:[%s1890 + $0x8c] sm:$0xf]
    %v1927 = vld [vmem:[%s1890 + $0x90] sm:$0xf]
    %v1928 = vld [vmem:[%s1890 + $0x94] sm:$0xf]
    %v1929 = vld [vmem:[%s1890 + $0x98] sm:$0xf]
    %v1930 = vld [vmem:[%s1890 + $0x9c] sm:$0xf]
    %v1931 = vld [vmem:[%s1890 + $0xa0] sm:$0xf]
    %v1932 = vld [vmem:[%s1890 + $0xa4] sm:$0xf]
    %v1933 = vld [vmem:[%s1890 + $0xa8] sm:$0xf]
    %v1934 = vld [vmem:[%s1890 + $0xac] sm:$0xf]
    %v1935 = vld [vmem:[%s1890 + $0xb0] sm:$0xf]
    %v1936 = vld [vmem:[%s1890 + $0xb4] sm:$0xf]
    %v1937 = vld [vmem:[%s1890 + $0xb8] sm:$0xf]
    %v1938 = vld [vmem:[%s1890 + $0xbc] sm:$0xf]
    %s1939 = scalar_lea.vmem [#allocation5], 5
    %v1940 = vld [vmem:[%s1939] sm:$0x1]
    %v1942 = vlaneseq
    %v1943 = vshrl.u32 %v1942, 7
    %v1944 = vsub.s32 0, %v1943
    %v1945 = vrot.slane %v1940, %v1944
    %v1995 = vunpack.c.l.b16 %v1891
    %v1996 = vunpack.c.l.b16 %v1892
    %v1997 = vunpack.c.l.b16 %v1893
    %v1998 = vunpack.c.l.b16 %v1894
    %v1999 = vunpack.c.l.b16 %v1895
    %v2000 = vunpack.c.l.b16 %v1896
    %v2001 = vunpack.c.l.b16 %v1897
    %v2002 = vunpack.c.l.b16 %v1898
    %v2003 = vunpack.c.l.b16 %v1899
    %v2004 = vunpack.c.l.b16 %v1900
    %v2005 = vunpack.c.l.b16 %v1901
    %v2006 = vunpack.c.l.b16 %v1902
    %v2007 = vunpack.c.l.b16 %v1903
    %v2008 = vunpack.c.l.b16 %v1904
    %v2009 = vunpack.c.l.b16 %v1905
    %v2010 = vunpack.c.l.b16 %v1906
    %v2011 = vunpack.c.l.b16 %v1907
    %v2012 = vunpack.c.l.b16 %v1908
    %v2013 = vunpack.c.l.b16 %v1909
    %v2014 = vunpack.c.l.b16 %v1910
    %v2015 = vunpack.c.l.b16 %v1911
    %v2016 = vunpack.c.l.b16 %v1912
    %v2017 = vunpack.c.l.b16 %v1913
    %v2018 = vunpack.c.l.b16 %v1914
    %v2019 = vunpack.c.l.b16 %v1915
    %v2020 = vunpack.c.l.b16 %v1916
    %v2021 = vunpack.c.l.b16 %v1917
    %v2022 = vunpack.c.l.b16 %v1918
    %v2023 = vunpack.c.l.b16 %v1919
    %v2024 = vunpack.c.l.b16 %v1920
    %v2025 = vunpack.c.l.b16 %v1921
    %v2026 = vunpack.c.l.b16 %v1922
    %v2027 = vunpack.c.l.b16 %v1923
    %v2028 = vunpack.c.l.b16 %v1924
    %v2029 = vunpack.c.l.b16 %v1925
    %v2030 = vunpack.c.l.b16 %v1926
    %v2031 = vunpack.c.l.b16 %v1927
    %v2032 = vunpack.c.l.b16 %v1928
    %v2033 = vunpack.c.l.b16 %v1929
    %v2034 = vunpack.c.l.b16 %v1930
    %v2035 = vunpack.c.l.b16 %v1931
    %v2036 = vunpack.c.l.b16 %v1932
    %v2037 = vunpack.c.l.b16 %v1933
    %v2038 = vunpack.c.l.b16 %v1934
    %v2039 = vunpack.c.l.b16 %v1935
    %v2040 = vunpack.c.l.b16 %v1936
    %v2041 = vunpack.c.l.b16 %v1937
    %v2042 = vunpack.c.l.b16 %v1938
    %v2043 = vpack.c.b16 %v1996, %v1995
    %v2044 = vpack.c.b16 %v1998, %v1997
    %v2045 = vpack.c.b16 %v2000, %v1999
    %v2046 = vpack.c.b16 %v2002, %v2001
    %v2047 = vpack.c.b16 %v2004, %v2003
    %v2048 = vpack.c.b16 %v2006, %v2005
    %v2049 = vpack.c.b16 %v2008, %v2007
    %v2050 = vpack.c.b16 %v2010, %v2009
    %v2051 = vpack.c.b16 %v2012, %v2011
    %v2052 = vpack.c.b16 %v2014, %v2013
    %v2053 = vpack.c.b16 %v2016, %v2015
    %v2054 = vpack.c.b16 %v2018, %v2017
    %v2055 = vpack.c.b16 %v2020, %v2019
    %v2056 = vpack.c.b16 %v2022, %v2021
    %v2057 = vpack.c.b16 %v2024, %v2023
    %v2058 = vpack.c.b16 %v2026, %v2025
    %v2059 = vpack.c.b16 %v2028, %v2027
    %v2060 = vpack.c.b16 %v2030, %v2029
    %v2061 = vpack.c.b16 %v2032, %v2031
    %v2062 = vpack.c.b16 %v2034, %v2033
    %v2063 = vpack.c.b16 %v2036, %v2035
    %v2064 = vpack.c.b16 %v2038, %v2037
    %v2065 = vpack.c.b16 %v2040, %v2039
    %v2066 = vpack.c.b16 %v2042, %v2041
    %2091 = vmatprep.subr.bf16.mxu0 0
    %2092 = vmatpush1.bf16.msra.mxu0 %v2043
    %2093 = vmatprep.subr.bf16.mxu0 0
    %2094 = vmatpush1.bf16.msra.mxu0 %v2044
    %2095 = vmatprep.subr.bf16.mxu0 0
    %2096 = vmatpush1.bf16.msra.mxu0 %v2045
    %2097 = vmatprep.subr.bf16.mxu0 0
    %2098 = vmatpush1.bf16.msra.mxu0 %v2046
    %2099 = vmatprep.subr.bf16.mxu0 0
    %2100 = vmatpush1.bf16.msra.mxu0 %v2047
    %2101 = vmatprep.subr.bf16.mxu0 0
    %2102 = vmatpush1.bf16.msra.mxu0 %v2048
    %2103 = vmatprep.subr.bf16.mxu0 0
    %2104 = vmatpush1.bf16.msra.mxu0 %v2049
    %2105 = vmatprep.subr.bf16.mxu0 0
    %2106 = vmatpush1.bf16.msra.mxu0 %v2050
    %2107 = vmatprep.subr.bf16.mxu0 0
    %2108 = vmatpush1.bf16.msra.mxu0 %v2051
    %2109 = vmatprep.subr.bf16.mxu0 0
    %2110 = vmatpush1.bf16.msra.mxu0 %v2052
    %2111 = vmatprep.subr.bf16.mxu0 0
    %2112 = vmatpush1.bf16.msra.mxu0 %v2053
    %2113 = vmatprep.subr.bf16.mxu0 0
    %2114 = vmatpush1.bf16.msra.mxu0 %v2054
    %2115 = vmatprep.subr.bf16.mxu0 0
    %2116 = vmatpush1.bf16.msra.mxu0 %v2055
    %2117 = vmatprep.subr.bf16.mxu0 0
    %2118 = vmatpush1.bf16.msra.mxu0 %v2056
    %2119 = vmatprep.subr.bf16.mxu0 0
    %2120 = vmatpush1.bf16.msra.mxu0 %v2057
    %2121 = vmatprep.subr.bf16.mxu0 0
    %2122 = vmatpush1.bf16.msra.mxu0 %v2058
    %2123 = vmatprep.mubr.bf16.mxu0 %v1885
    %2124 = vmatmul.mubr.bf16.gmra.mrb[0].mxu0 %v1884
    %v2125 = vpop.f32.mrb[0].mxu0
    %v2126 = vadd.f32 %v1945, %v2125
    %v2127 = vpop.f32.mrb[0].mxu0
    %v2128 = vpop.f32.mrb[0].mxu0
    %v2129 = vadd.f32 %v1945, %v2128
    %v2130 = vpop.f32.mrb[0].mxu0
    %2131 = vmatprep.mubr.bf16.mxu0 %v1888
    %2132 = vmatmul.mubr.bf16.gmra.mrb[0].mxu0 %v1887
    %v2133 = vpop.f32.mrb[0].mxu0
    %v2134 = vadd.f32 %v1945, %v2133
    %v2135 = vpop.f32.mrb[0].mxu0
    %v2136 = vpop.f32.mrb[0].mxu0
    %v2137 = vadd.f32 %v1945, %v2136
    %v2138 = vpop.f32.mrb[0].mxu0
    %2139 = vdwg.mxu0
    %2140 = vmatprep.subr.bf16.mxu0 0
    %2141 = vmatpush1.bf16.msra.mxu0 %v2059
    %2142 = vmatprep.subr.bf16.mxu0 0
    %2143 = vmatpush1.bf16.msra.mxu0 %v2060
    %2144 = vmatprep.subr.bf16.mxu0 0
    %2145 = vmatpush1.bf16.msra.mxu0 %v2061
    %2146 = vmatprep.subr.bf16.mxu0 0
    %2147 = vmatpush1.bf16.msra.mxu0 %v2062
    %2148 = vmatprep.subr.bf16.mxu0 0
    %2149 = vmatpush1.bf16.msra.mxu0 %v2063
    %2150 = vmatprep.subr.bf16.mxu0 0
    %2151 = vmatpush1.bf16.msra.mxu0 %v2064
    %2152 = vmatprep.subr.bf16.mxu0 0
    %2153 = vmatpush1.bf16.msra.mxu0 %v2065
    %2154 = vmatprep.subr.bf16.mxu0 0
    %2155 = vmatpush1.bf16.msra.mxu0 %v2066
    %2156 = vmatprep.subr.bf16.mxu0 0
    %2157 = vmatpush1.bf16.msra.mxu0 0
    %2158 = vmatprep.subr.bf16.mxu0 0
    %2159 = vmatpush1.bf16.msra.mxu0 0
    %2160 = vmatprep.subr.bf16.mxu0 0
    %2161 = vmatpush1.bf16.msra.mxu0 0
    %2162 = vmatprep.subr.bf16.mxu0 0
    %2163 = vmatpush1.bf16.msra.mxu0 0
    %2164 = vmatprep.subr.bf16.mxu0 0
    %2165 = vmatpush1.bf16.msra.mxu0 0
    %2166 = vmatprep.subr.bf16.mxu0 0
    %2167 = vmatpush1.bf16.msra.mxu0 0
    %2168 = vmatprep.subr.bf16.mxu0 0
    %2169 = vmatpush1.bf16.msra.mxu0 0
    %2170 = vmatprep.subr.bf16.mxu0 0
    %2171 = vmatpush1.bf16.msra.mxu0 0
    %2172 = vmatprep.mubr.bf16.mxu0 0
    %2173 = vmatmul.mubr.bf16.gmra.mrb[0].mxu0 %v1886
    %v2174 = vpop.f32.mrb[0].mxu0
    %v2175 = vadd.f32 %v2126, %v2174
    %v2176 = vpop.f32.mrb[0].mxu0
    %v2177 = vpop.f32.mrb[0].mxu0
    %v2178 = vadd.f32 %v2129, %v2177
    %v2179 = vpop.f32.mrb[0].mxu0
    %2180 = vmatprep.mubr.bf16.mxu0 0
    %2181 = vmatmul.mubr.bf16.gmra.mrb[0].mxu0 %v1889
    %v2182 = vpop.f32.mrb[0].mxu0
    %v2183 = vadd.f32 %v2134, %v2182
    %v2184 = vpop.f32.mrb[0].mxu0
    %v2185 = vpop.f32.mrb[0].mxu0
    %v2186 = vadd.f32 %v2137, %v2185
    %v2187 = vpop.f32.mrb[0].mxu0
    %2188 = vdwg.mxu0
    %v2189 = vadd.f32 %v2175, %v1475
    %v2190 = vadd.f32 %v2178, %v1476
    %v2191 = vadd.f32 %v2183, %v1477
    %v2192 = vadd.f32 %v2186, %v1478
    %2193 = vst [vmem:[#allocation2 + $0x8] sm:$0xff] %v2189
    %2194 = vst [vmem:[#allocation2 + $0x20] sm:$0xff] %v2190
    %2195 = vst [vmem:[#allocation2 + $0x38] sm:$0xff] %v2191
    %2196 = vst [vmem:[#allocation2 + $0x50] sm:$0xff] %v2192
    %v2199 = vrot.slane %v2189, 7
    %v2200 = vrot.slane %v2190, 7
    %v2201 = vsel %vm57, %v2199, %v2200
    %2204 = vst [vmem:[#allocation2] sm:$0xfe] %v2199
    %2205 = vst [vmem:[#allocation2 + $0x18] sm:$0xff] %v2201
    %v2206 = vrot.slane %v2189, 1
    %v2207 = vrot.slane %v2190, 1
    %v2208 = vsel %vm65, %v2206, %v2207
    %2211 = vst [vmem:[#allocation2 + $0x10] sm:$0xff] %v2208
    %2212 = vst [vmem:[#allocation2 + $0x28] sm:$0x7f] %v2207
    %v2215 = vrot.slane %v2191, 7
    %v2216 = vrot.slane %v2192, 7
    %v2217 = vsel %vm57, %v2215, %v2216
    %2220 = vst [vmem:[#allocation2 + $0x30] sm:$0xfe] %v2215
    %2221 = vst [vmem:[#allocation2 + $0x48] sm:$0xff] %v2217
    %v2222 = vrot.slane %v2191, 1
    %v2223 = vrot.slane %v2192, 1
    %v2224 = vsel %vm65, %v2222, %v2223
    %2227 = vst [vmem:[#allocation2 + $0x40] sm:$0xff] %v2224
    %2228 = vst [vmem:[#allocation2 + $0x58] sm:$0x7f] %v2223
    %v2229 = vld [vmem:[#allocation2] sm:$0xff]
    %v2230 = vld [vmem:[#allocation2 + $0x8] sm:$0xff]
    %v2231 = vld [vmem:[#allocation2 + $0x10] sm:$0xff]
    %v2232 = vld [vmem:[#allocation2 + $0x18] sm:$0xff]
    %v2233 = vld [vmem:[#allocation2 + $0x20] sm:$0xff]
    %v2234 = vld [vmem:[#allocation2 + $0x28] sm:$0xff]
    %v2235 = vld [vmem:[#allocation2 + $0x30] sm:$0xff]
    %v2236 = vld [vmem:[#allocation2 + $0x38] sm:$0xff]
    %v2237 = vld [vmem:[#allocation2 + $0x40] sm:$0xff]
    %v2238 = vld [vmem:[#allocation2 + $0x48] sm:$0xff]
    %v2239 = vld [vmem:[#allocation2 + $0x50] sm:$0xff]
    %v2240 = vld [vmem:[#allocation2 + $0x58] sm:$0xff]
    %v2241 = vpack.c.bf16 %v2232, %v2229
    %v2242 = vpack.c.bf16 %v2233, %v2230
    %v2243 = vpack.c.bf16 %v2234, %v2231
    %v2244 = vpack.c.bf16 %v2238, %v2235
    %v2245 = vpack.c.bf16 %v2239, %v2236
    %v2246 = vpack.c.bf16 %v2240, %v2237
    %s2247 = scalar_lea.vmem [#allocation3], 1152
    %v2248 = vld [vmem:[%s2247] sm:$0xf]
    %v2249 = vld [vmem:[%s2247 + $0x4] sm:$0xf]
    %v2250 = vld [vmem:[%s2247 + $0x8] sm:$0xf]
    %v2251 = vld [vmem:[%s2247 + $0xc] sm:$0xf]
    %v2252 = vld [vmem:[%s2247 + $0x10] sm:$0xf]
    %v2253 = vld [vmem:[%s2247 + $0x14] sm:$0xf]
    %v2254 = vld [vmem:[%s2247 + $0x18] sm:$0xf]
    %v2255 = vld [vmem:[%s2247 + $0x1c] sm:$0xf]
    %v2256 = vld [vmem:[%s2247 + $0x20] sm:$0xf]
    %v2257 = vld [vmem:[%s2247 + $0x24] sm:$0xf]
    %v2258 = vld [vmem:[%s2247 + $0x28] sm:$0xf]
    %v2259 = vld [vmem:[%s2247 + $0x2c] sm:$0xf]
    %v2260 = vld [vmem:[%s2247 + $0x30] sm:$0xf]
    %v2261 = vld [vmem:[%s2247 + $0x34] sm:$0xf]
    %v2262 = vld [vmem:[%s2247 + $0x38] sm:$0xf]
    %v2263 = vld [vmem:[%s2247 + $0x3c] sm:$0xf]
    %v2264 = vld [vmem:[%s2247 + $0x40] sm:$0xf]
    %v2265 = vld [vmem:[%s2247 + $0x44] sm:$0xf]
    %v2266 = vld [vmem:[%s2247 + $0x48] sm:$0xf]
    %v2267 = vld [vmem:[%s2247 + $0x4c] sm:$0xf]
    %v2268 = vld [vmem:[%s2247 + $0x50] sm:$0xf]
    %v2269 = vld [vmem:[%s2247 + $0x54] sm:$0xf]
    %v2270 = vld [vmem:[%s2247 + $0x58] sm:$0xf]
    %v2271 = vld [vmem:[%s2247 + $0x5c] sm:$0xf]
    %v2272 = vld [vmem:[%s2247 + $0x60] sm:$0xf]
    %v2273 = vld [vmem:[%s2247 + $0x64] sm:$0xf]
    %v2274 = vld [vmem:[%s2247 + $0x68] sm:$0xf]
    %v2275 = vld [vmem:[%s2247 + $0x6c] sm:$0xf]
    %v2276 = vld [vmem:[%s2247 + $0x70] sm:$0xf]
    %v2277 = vld [vmem:[%s2247 + $0x74] sm:$0xf]
    %v2278 = vld [vmem:[%s2247 + $0x78] sm:$0xf]
    %v2279 = vld [vmem:[%s2247 + $0x7c] sm:$0xf]
    %v2280 = vld [vmem:[%s2247 + $0x80] sm:$0xf]
    %v2281 = vld [vmem:[%s2247 + $0x84] sm:$0xf]
    %v2282 = vld [vmem:[%s2247 + $0x88] sm:$0xf]
    %v2283 = vld [vmem:[%s2247 + $0x8c] sm:$0xf]
    %v2284 = vld [vmem:[%s2247 + $0x90] sm:$0xf]
    %v2285 = vld [vmem:[%s2247 + $0x94] sm:$0xf]
    %v2286 = vld [vmem:[%s2247 + $0x98] sm:$0xf]
    %v2287 = vld [vmem:[%s2247 + $0x9c] sm:$0xf]
    %v2288 = vld [vmem:[%s2247 + $0xa0] sm:$0xf]
    %v2289 = vld [vmem:[%s2247 + $0xa4] sm:$0xf]
    %v2290 = vld [vmem:[%s2247 + $0xa8] sm:$0xf]
    %v2291 = vld [vmem:[%s2247 + $0xac] sm:$0xf]
    %v2292 = vld [vmem:[%s2247 + $0xb0] sm:$0xf]
    %v2293 = vld [vmem:[%s2247 + $0xb4] sm:$0xf]
    %v2294 = vld [vmem:[%s2247 + $0xb8] sm:$0xf]
    %v2295 = vld [vmem:[%s2247 + $0xbc] sm:$0xf]
    %s2296 = scalar_lea.vmem [#allocation5], 6
    %v2297 = vld [vmem:[%s2296] sm:$0x1]
    %v2299 = vlaneseq
    %v2300 = vshrl.u32 %v2299, 7
    %v2301 = vsub.s32 0, %v2300
    %v2302 = vrot.slane %v2297, %v2301
    %v2352 = vunpack.c.l.b16 %v2248
    %v2353 = vunpack.c.l.b16 %v2249
    %v2354 = vunpack.c.l.b16 %v2250
    %v2355 = vunpack.c.l.b16 %v2251
    %v2356 = vunpack.c.l.b16 %v2252
    %v2357 = vunpack.c.l.b16 %v2253
    %v2358 = vunpack.c.l.b16 %v2254
    %v2359 = vunpack.c.l.b16 %v2255
    %v2360 = vunpack.c.l.b16 %v2256
    %v2361 = vunpack.c.l.b16 %v2257
    %v2362 = vunpack.c.l.b16 %v2258
    %v2363 = vunpack.c.l.b16 %v2259
    %v2364 = vunpack.c.l.b16 %v2260
    %v2365 = vunpack.c.l.b16 %v2261
    %v2366 = vunpack.c.l.b16 %v2262
    %v2367 = vunpack.c.l.b16 %v2263
    %v2368 = vunpack.c.l.b16 %v2264
    %v2369 = vunpack.c.l.b16 %v2265
    %v2370 = vunpack.c.l.b16 %v2266
    %v2371 = vunpack.c.l.b16 %v2267
    %v2372 = vunpack.c.l.b16 %v2268
    %v2373 = vunpack.c.l.b16 %v2269
    %v2374 = vunpack.c.l.b16 %v2270
    %v2375 = vunpack.c.l.b16 %v2271
    %v2376 = vunpack.c.l.b16 %v2272
    %v2377 = vunpack.c.l.b16 %v2273
    %v2378 = vunpack.c.l.b16 %v2274
    %v2379 = vunpack.c.l.b16 %v2275
    %v2380 = vunpack.c.l.b16 %v2276
    %v2381 = vunpack.c.l.b16 %v2277
    %v2382 = vunpack.c.l.b16 %v2278
    %v2383 = vunpack.c.l.b16 %v2279
    %v2384 = vunpack.c.l.b16 %v2280
    %v2385 = vunpack.c.l.b16 %v2281
    %v2386 = vunpack.c.l.b16 %v2282
    %v2387 = vunpack.c.l.b16 %v2283
    %v2388 = vunpack.c.l.b16 %v2284
    %v2389 = vunpack.c.l.b16 %v2285
    %v2390 = vunpack.c.l.b16 %v2286
    %v2391 = vunpack.c.l.b16 %v2287
    %v2392 = vunpack.c.l.b16 %v2288
    %v2393 = vunpack.c.l.b16 %v2289
    %v2394 = vunpack.c.l.b16 %v2290
    %v2395 = vunpack.c.l.b16 %v2291
    %v2396 = vunpack.c.l.b16 %v2292
    %v2397 = vunpack.c.l.b16 %v2293
    %v2398 = vunpack.c.l.b16 %v2294
    %v2399 = vunpack.c.l.b16 %v2295
    %v2400 = vpack.c.b16 %v2353, %v2352
    %v2401 = vpack.c.b16 %v2355, %v2354
    %v2402 = vpack.c.b16 %v2357, %v2356
    %v2403 = vpack.c.b16 %v2359, %v2358
    %v2404 = vpack.c.b16 %v2361, %v2360
    %v2405 = vpack.c.b16 %v2363, %v2362
    %v2406 = vpack.c.b16 %v2365, %v2364
    %v2407 = vpack.c.b16 %v2367, %v2366
    %v2408 = vpack.c.b16 %v2369, %v2368
    %v2409 = vpack.c.b16 %v2371, %v2370
    %v2410 = vpack.c.b16 %v2373, %v2372
    %v2411 = vpack.c.b16 %v2375, %v2374
    %v2412 = vpack.c.b16 %v2377, %v2376
    %v2413 = vpack.c.b16 %v2379, %v2378
    %v2414 = vpack.c.b16 %v2381, %v2380
    %v2415 = vpack.c.b16 %v2383, %v2382
    %v2416 = vpack.c.b16 %v2385, %v2384
    %v2417 = vpack.c.b16 %v2387, %v2386
    %v2418 = vpack.c.b16 %v2389, %v2388
    %v2419 = vpack.c.b16 %v2391, %v2390
    %v2420 = vpack.c.b16 %v2393, %v2392
    %v2421 = vpack.c.b16 %v2395, %v2394
    %v2422 = vpack.c.b16 %v2397, %v2396
    %v2423 = vpack.c.b16 %v2399, %v2398
    %2448 = vmatprep.subr.bf16.mxu0 0
    %2449 = vmatpush1.bf16.msra.mxu0 %v2400
    %2450 = vmatprep.subr.bf16.mxu0 0
    %2451 = vmatpush1.bf16.msra.mxu0 %v2401
    %2452 = vmatprep.subr.bf16.mxu0 0
    %2453 = vmatpush1.bf16.msra.mxu0 %v2402
    %2454 = vmatprep.subr.bf16.mxu0 0
    %2455 = vmatpush1.bf16.msra.mxu0 %v2403
    %2456 = vmatprep.subr.bf16.mxu0 0
    %2457 = vmatpush1.bf16.msra.mxu0 %v2404
    %2458 = vmatprep.subr.bf16.mxu0 0
    %2459 = vmatpush1.bf16.msra.mxu0 %v2405
    %2460 = vmatprep.subr.bf16.mxu0 0
    %2461 = vmatpush1.bf16.msra.mxu0 %v2406
    %2462 = vmatprep.subr.bf16.mxu0 0
    %2463 = vmatpush1.bf16.msra.mxu0 %v2407
    %2464 = vmatprep.subr.bf16.mxu0 0
    %2465 = vmatpush1.bf16.msra.mxu0 %v2408
    %2466 = vmatprep.subr.bf16.mxu0 0
    %2467 = vmatpush1.bf16.msra.mxu0 %v2409
    %2468 = vmatprep.subr.bf16.mxu0 0
    %2469 = vmatpush1.bf16.msra.mxu0 %v2410
    %2470 = vmatprep.subr.bf16.mxu0 0
    %2471 = vmatpush1.bf16.msra.mxu0 %v2411
    %2472 = vmatprep.subr.bf16.mxu0 0
    %2473 = vmatpush1.bf16.msra.mxu0 %v2412
    %2474 = vmatprep.subr.bf16.mxu0 0
    %2475 = vmatpush1.bf16.msra.mxu0 %v2413
    %2476 = vmatprep.subr.bf16.mxu0 0
    %2477 = vmatpush1.bf16.msra.mxu0 %v2414
    %2478 = vmatprep.subr.bf16.mxu0 0
    %2479 = vmatpush1.bf16.msra.mxu0 %v2415
    %2480 = vmatprep.mubr.bf16.mxu0 %v2242
    %2481 = vmatmul.mubr.bf16.gmra.mrb[0].mxu0 %v2241
    %v2482 = vpop.f32.mrb[0].mxu0
    %v2483 = vadd.f32 %v2302, %v2482
    %v2484 = vpop.f32.mrb[0].mxu0
    %v2485 = vpop.f32.mrb[0].mxu0
    %v2486 = vadd.f32 %v2302, %v2485
    %v2487 = vpop.f32.mrb[0].mxu0
    %2488 = vmatprep.mubr.bf16.mxu0 %v2245
    %2489 = vmatmul.mubr.bf16.gmra.mrb[0].mxu0 %v2244
    %v2490 = vpop.f32.mrb[0].mxu0
    %v2491 = vadd.f32 %v2302, %v2490
    %v2492 = vpop.f32.mrb[0].mxu0
    %v2493 = vpop.f32.mrb[0].mxu0
    %v2494 = vadd.f32 %v2302, %v2493
    %v2495 = vpop.f32.mrb[0].mxu0
    %2496 = vdwg.mxu0
    %2497 = vmatprep.subr.bf16.mxu0 0
    %2498 = vmatpush1.bf16.msra.mxu0 %v2416
    %2499 = vmatprep.subr.bf16.mxu0 0
    %2500 = vmatpush1.bf16.msra.mxu0 %v2417
    %2501 = vmatprep.subr.bf16.mxu0 0
    %2502 = vmatpush1.bf16.msra.mxu0 %v2418
    %2503 = vmatprep.subr.bf16.mxu0 0
    %2504 = vmatpush1.bf16.msra.mxu0 %v2419
    %2505 = vmatprep.subr.bf16.mxu0 0
    %2506 = vmatpush1.bf16.msra.mxu0 %v2420
    %2507 = vmatprep.subr.bf16.mxu0 0
    %2508 = vmatpush1.bf16.msra.mxu0 %v2421
    %2509 = vmatprep.subr.bf16.mxu0 0
    %2510 = vmatpush1.bf16.msra.mxu0 %v2422
    %2511 = vmatprep.subr.bf16.mxu0 0
    %2512 = vmatpush1.bf16.msra.mxu0 %v2423
    %2513 = vmatprep.subr.bf16.mxu0 0
    %2514 = vmatpush1.bf16.msra.mxu0 0
    %2515 = vmatprep.subr.bf16.mxu0 0
    %2516 = vmatpush1.bf16.msra.mxu0 0
    %2517 = vmatprep.subr.bf16.mxu0 0
    %2518 = vmatpush1.bf16.msra.mxu0 0
    %2519 = vmatprep.subr.bf16.mxu0 0
    %2520 = vmatpush1.bf16.msra.mxu0 0
    %2521 = vmatprep.subr.bf16.mxu0 0
    %2522 = vmatpush1.bf16.msra.mxu0 0
    %2523 = vmatprep.subr.bf16.mxu0 0
    %2524 = vmatpush1.bf16.msra.mxu0 0
    %2525 = vmatprep.subr.bf16.mxu0 0
    %2526 = vmatpush1.bf16.msra.mxu0 0
    %2527 = vmatprep.subr.bf16.mxu0 0
    %2528 = vmatpush1.bf16.msra.mxu0 0
    %2529 = vmatprep.mubr.bf16.mxu0 0
    %2530 = vmatmul.mubr.bf16.gmra.mrb[0].mxu0 %v2243
    %v2531 = vpop.f32.mrb[0].mxu0
    %v2532 = vadd.f32 %v2483, %v2531
    %v2533 = vpop.f32.mrb[0].mxu0
    %v2534 = vpop.f32.mrb[0].mxu0
    %v2535 = vadd.f32 %v2486, %v2534
    %v2536 = vpop.f32.mrb[0].mxu0
    %2537 = vmatprep.mubr.bf16.mxu0 0
    %2538 = vmatmul.mubr.bf16.gmra.mrb[0].mxu0 %v2246
    %v2539 = vpop.f32.mrb[0].mxu0
    %v2540 = vadd.f32 %v2491, %v2539
    %v2541 = vpop.f32.mrb[0].mxu0
    %v2542 = vpop.f32.mrb[0].mxu0
    %v2543 = vadd.f32 %v2494, %v2542
    %v2544 = vpop.f32.mrb[0].mxu0
    %2545 = vdwg.mxu0
    %v2546 = vmax.f32 %v2532, 0.0
    %v2547 = vmax.f32 %v2535, 0.0
    %v2548 = vmax.f32 %v2540, 0.0
    %v2549 = vmax.f32 %v2543, 0.0
    %2550 = vst [vmem:[#allocation2 + $0x8] sm:$0xff] %v2546
    %2551 = vst [vmem:[#allocation2 + $0x20] sm:$0xff] %v2547
    %2552 = vst [vmem:[#allocation2 + $0x38] sm:$0xff] %v2548
    %2553 = vst [vmem:[#allocation2 + $0x50] sm:$0xff] %v2549
    %v2556 = vrot.slane %v2546, 7
    %v2557 = vrot.slane %v2547, 7
    %v2558 = vsel %vm57, %v2556, %v2557
    %2561 = vst [vmem:[#allocation2] sm:$0xfe] %v2556
    %2562 = vst [vmem:[#allocation2 + $0x18] sm:$0xff] %v2558
    %v2563 = vrot.slane %v2546, 1
    %v2564 = vrot.slane %v2547, 1
    %v2565 = vsel %vm65, %v2563, %v2564
    %2568 = vst [vmem:[#allocation2 + $0x10] sm:$0xff] %v2565
    %2569 = vst [vmem:[#allocation2 + $0x28] sm:$0x7f] %v2564
    %v2572 = vrot.slane %v2548, 7
    %v2573 = vrot.slane %v2549, 7
    %v2574 = vsel %vm57, %v2572, %v2573
    %2577 = vst [vmem:[#allocation2 + $0x30] sm:$0xfe] %v2572
    %2578 = vst [vmem:[#allocation2 + $0x48] sm:$0xff] %v2574
    %v2579 = vrot.slane %v2548, 1
    %v2580 = vrot.slane %v2549, 1
    %v2581 = vsel %vm65, %v2579, %v2580
    %2584 = vst [vmem:[#allocation2 + $0x40] sm:$0xff] %v2581
    %2585 = vst [vmem:[#allocation2 + $0x58] sm:$0x7f] %v2580
    %v2586 = vld [vmem:[#allocation2] sm:$0xff]
    %v2587 = vld [vmem:[#allocation2 + $0x8] sm:$0xff]
    %v2588 = vld [vmem:[#allocation2 + $0x10] sm:$0xff]
    %v2589 = vld [vmem:[#allocation2 + $0x18] sm:$0xff]
    %v2590 = vld [vmem:[#allocation2 + $0x20] sm:$0xff]
    %v2591 = vld [vmem:[#allocation2 + $0x28] sm:$0xff]
    %v2592 = vld [vmem:[#allocation2 + $0x30] sm:$0xff]
    %v2593 = vld [vmem:[#allocation2 + $0x38] sm:$0xff]
    %v2594 = vld [vmem:[#allocation2 + $0x40] sm:$0xff]
    %v2595 = vld [vmem:[#allocation2 + $0x48] sm:$0xff]
    %v2596 = vld [vmem:[#allocation2 + $0x50] sm:$0xff]
    %v2597 = vld [vmem:[#allocation2 + $0x58] sm:$0xff]
    %v2598 = vpack.c.bf16 %v2589, %v2586
    %v2599 = vpack.c.bf16 %v2590, %v2587
    %v2600 = vpack.c.bf16 %v2591, %v2588
    %v2601 = vpack.c.bf16 %v2595, %v2592
    %v2602 = vpack.c.bf16 %v2596, %v2593
    %v2603 = vpack.c.bf16 %v2597, %v2594
    %s2604 = scalar_lea.vmem [#allocation3], 1344
    %v2605 = vld [vmem:[%s2604] sm:$0xf]
    %v2606 = vld [vmem:[%s2604 + $0x4] sm:$0xf]
    %v2607 = vld [vmem:[%s2604 + $0x8] sm:$0xf]
    %v2608 = vld [vmem:[%s2604 + $0xc] sm:$0xf]
    %v2609 = vld [vmem:[%s2604 + $0x10] sm:$0xf]
    %v2610 = vld [vmem:[%s2604 + $0x14] sm:$0xf]
    %v2611 = vld [vmem:[%s2604 + $0x18] sm:$0xf]
    %v2612 = vld [vmem:[%s2604 + $0x1c] sm:$0xf]
    %v2613 = vld [vmem:[%s2604 + $0x20] sm:$0xf]
    %v2614 = vld [vmem:[%s2604 + $0x24] sm:$0xf]
    %v2615 = vld [vmem:[%s2604 + $0x28] sm:$0xf]
    %v2616 = vld [vmem:[%s2604 + $0x2c] sm:$0xf]
    %v2617 = vld [vmem:[%s2604 + $0x30] sm:$0xf]
    %v2618 = vld [vmem:[%s2604 + $0x34] sm:$0xf]
    %v2619 = vld [vmem:[%s2604 + $0x38] sm:$0xf]
    %v2620 = vld [vmem:[%s2604 + $0x3c] sm:$0xf]
    %v2621 = vld [vmem:[%s2604 + $0x40] sm:$0xf]
    %v2622 = vld [vmem:[%s2604 + $0x44] sm:$0xf]
    %v2623 = vld [vmem:[%s2604 + $0x48] sm:$0xf]
    %v2624 = vld [vmem:[%s2604 + $0x4c] sm:$0xf]
    %v2625 = vld [vmem:[%s2604 + $0x50] sm:$0xf]
    %v2626 = vld [vmem:[%s2604 + $0x54] sm:$0xf]
    %v2627 = vld [vmem:[%s2604 + $0x58] sm:$0xf]
    %v2628 = vld [vmem:[%s2604 + $0x5c] sm:$0xf]
    %v2629 = vld [vmem:[%s2604 + $0x60] sm:$0xf]
    %v2630 = vld [vmem:[%s2604 + $0x64] sm:$0xf]
    %v2631 = vld [vmem:[%s2604 + $0x68] sm:$0xf]
    %v2632 = vld [vmem:[%s2604 + $0x6c] sm:$0xf]
    %v2633 = vld [vmem:[%s2604 + $0x70] sm:$0xf]
    %v2634 = vld [vmem:[%s2604 + $0x74] sm:$0xf]
    %v2635 = vld [vmem:[%s2604 + $0x78] sm:$0xf]
    %v2636 = vld [vmem:[%s2604 + $0x7c] sm:$0xf]
    %v2637 = vld [vmem:[%s2604 + $0x80] sm:$0xf]
    %v2638 = vld [vmem:[%s2604 + $0x84] sm:$0xf]
    %v2639 = vld [vmem:[%s2604 + $0x88] sm:$0xf]
    %v2640 = vld [vmem:[%s2604 + $0x8c] sm:$0xf]
    %v2641 = vld [vmem:[%s2604 + $0x90] sm:$0xf]
    %v2642 = vld [vmem:[%s2604 + $0x94] sm:$0xf]
    %v2643 = vld [vmem:[%s2604 + $0x98] sm:$0xf]
    %v2644 = vld [vmem:[%s2604 + $0x9c] sm:$0xf]
    %v2645 = vld [vmem:[%s2604 + $0xa0] sm:$0xf]
    %v2646 = vld [vmem:[%s2604 + $0xa4] sm:$0xf]
    %v2647 = vld [vmem:[%s2604 + $0xa8] sm:$0xf]
    %v2648 = vld [vmem:[%s2604 + $0xac] sm:$0xf]
    %v2649 = vld [vmem:[%s2604 + $0xb0] sm:$0xf]
    %v2650 = vld [vmem:[%s2604 + $0xb4] sm:$0xf]
    %v2651 = vld [vmem:[%s2604 + $0xb8] sm:$0xf]
    %v2652 = vld [vmem:[%s2604 + $0xbc] sm:$0xf]
    %s2653 = scalar_lea.vmem [#allocation5], 7
    %v2654 = vld [vmem:[%s2653] sm:$0x1]
    %v2656 = vlaneseq
    %v2657 = vshrl.u32 %v2656, 7
    %v2658 = vsub.s32 0, %v2657
    %v2659 = vrot.slane %v2654, %v2658
    %v2709 = vunpack.c.l.b16 %v2605
    %v2710 = vunpack.c.l.b16 %v2606
    %v2711 = vunpack.c.l.b16 %v2607
    %v2712 = vunpack.c.l.b16 %v2608
    %v2713 = vunpack.c.l.b16 %v2609
    %v2714 = vunpack.c.l.b16 %v2610
    %v2715 = vunpack.c.l.b16 %v2611
    %v2716 = vunpack.c.l.b16 %v2612
    %v2717 = vunpack.c.l.b16 %v2613
    %v2718 = vunpack.c.l.b16 %v2614
    %v2719 = vunpack.c.l.b16 %v2615
    %v2720 = vunpack.c.l.b16 %v2616
    %v2721 = vunpack.c.l.b16 %v2617
    %v2722 = vunpack.c.l.b16 %v2618
    %v2723 = vunpack.c.l.b16 %v2619
    %v2724 = vunpack.c.l.b16 %v2620
    %v2725 = vunpack.c.l.b16 %v2621
    %v2726 = vunpack.c.l.b16 %v2622
    %v2727 = vunpack.c.l.b16 %v2623
    %v2728 = vunpack.c.l.b16 %v2624
    %v2729 = vunpack.c.l.b16 %v2625
    %v2730 = vunpack.c.l.b16 %v2626
    %v2731 = vunpack.c.l.b16 %v2627
    %v2732 = vunpack.c.l.b16 %v2628
    %v2733 = vunpack.c.l.b16 %v2629
    %v2734 = vunpack.c.l.b16 %v2630
    %v2735 = vunpack.c.l.b16 %v2631
    %v2736 = vunpack.c.l.b16 %v2632
    %v2737 = vunpack.c.l.b16 %v2633
    %v2738 = vunpack.c.l.b16 %v2634
    %v2739 = vunpack.c.l.b16 %v2635
    %v2740 = vunpack.c.l.b16 %v2636
    %v2741 = vunpack.c.l.b16 %v2637
    %v2742 = vunpack.c.l.b16 %v2638
    %v2743 = vunpack.c.l.b16 %v2639
    %v2744 = vunpack.c.l.b16 %v2640
    %v2745 = vunpack.c.l.b16 %v2641
    %v2746 = vunpack.c.l.b16 %v2642
    %v2747 = vunpack.c.l.b16 %v2643
    %v2748 = vunpack.c.l.b16 %v2644
    %v2749 = vunpack.c.l.b16 %v2645
    %v2750 = vunpack.c.l.b16 %v2646
    %v2751 = vunpack.c.l.b16 %v2647
    %v2752 = vunpack.c.l.b16 %v2648
    %v2753 = vunpack.c.l.b16 %v2649
    %v2754 = vunpack.c.l.b16 %v2650
    %v2755 = vunpack.c.l.b16 %v2651
    %v2756 = vunpack.c.l.b16 %v2652
    %v2757 = vpack.c.b16 %v2710, %v2709
    %v2758 = vpack.c.b16 %v2712, %v2711
    %v2759 = vpack.c.b16 %v2714, %v2713
    %v2760 = vpack.c.b16 %v2716, %v2715
    %v2761 = vpack.c.b16 %v2718, %v2717
    %v2762 = vpack.c.b16 %v2720, %v2719
    %v2763 = vpack.c.b16 %v2722, %v2721
    %v2764 = vpack.c.b16 %v2724, %v2723
    %v2765 = vpack.c.b16 %v2726, %v2725
    %v2766 = vpack.c.b16 %v2728, %v2727
    %v2767 = vpack.c.b16 %v2730, %v2729
    %v2768 = vpack.c.b16 %v2732, %v2731
    %v2769 = vpack.c.b16 %v2734, %v2733
    %v2770 = vpack.c.b16 %v2736, %v2735
    %v2771 = vpack.c.b16 %v2738, %v2737
    %v2772 = vpack.c.b16 %v2740, %v2739
    %v2773 = vpack.c.b16 %v2742, %v2741
    %v2774 = vpack.c.b16 %v2744, %v2743
    %v2775 = vpack.c.b16 %v2746, %v2745
    %v2776 = vpack.c.b16 %v2748, %v2747
    %v2777 = vpack.c.b16 %v2750, %v2749
    %v2778 = vpack.c.b16 %v2752, %v2751
    %v2779 = vpack.c.b16 %v2754, %v2753
    %v2780 = vpack.c.b16 %v2756, %v2755
    %2805 = vmatprep.subr.bf16.mxu0 0
    %2806 = vmatpush1.bf16.msra.mxu0 %v2757
    %2807 = vmatprep.subr.bf16.mxu0 0
    %2808 = vmatpush1.bf16.msra.mxu0 %v2758
    %2809 = vmatprep.subr.bf16.mxu0 0
    %2810 = vmatpush1.bf16.msra.mxu0 %v2759
    %2811 = vmatprep.subr.bf16.mxu0 0
    %2812 = vmatpush1.bf16.msra.mxu0 %v2760
    %2813 = vmatprep.subr.bf16.mxu0 0
    %2814 = vmatpush1.bf16.msra.mxu0 %v2761
    %2815 = vmatprep.subr.bf16.mxu0 0
    %2816 = vmatpush1.bf16.msra.mxu0 %v2762
    %2817 = vmatprep.subr.bf16.mxu0 0
    %2818 = vmatpush1.bf16.msra.mxu0 %v2763
    %2819 = vmatprep.subr.bf16.mxu0 0
    %2820 = vmatpush1.bf16.msra.mxu0 %v2764
    %2821 = vmatprep.subr.bf16.mxu0 0
    %2822 = vmatpush1.bf16.msra.mxu0 %v2765
    %2823 = vmatprep.subr.bf16.mxu0 0
    %2824 = vmatpush1.bf16.msra.mxu0 %v2766
    %2825 = vmatprep.subr.bf16.mxu0 0
    %2826 = vmatpush1.bf16.msra.mxu0 %v2767
    %2827 = vmatprep.subr.bf16.mxu0 0
    %2828 = vmatpush1.bf16.msra.mxu0 %v2768
    %2829 = vmatprep.subr.bf16.mxu0 0
    %2830 = vmatpush1.bf16.msra.mxu0 %v2769
    %2831 = vmatprep.subr.bf16.mxu0 0
    %2832 = vmatpush1.bf16.msra.mxu0 %v2770
    %2833 = vmatprep.subr.bf16.mxu0 0
    %2834 = vmatpush1.bf16.msra.mxu0 %v2771
    %2835 = vmatprep.subr.bf16.mxu0 0
    %2836 = vmatpush1.bf16.msra.mxu0 %v2772
    %2837 = vmatprep.mubr.bf16.mxu0 %v2599
    %2838 = vmatmul.mubr.bf16.gmra.mrb[0].mxu0 %v2598
    %v2839 = vpop.f32.mrb[0].mxu0
    %v2840 = vadd.f32 %v2659, %v2839
    %v2841 = vpop.f32.mrb[0].mxu0
    %v2842 = vpop.f32.mrb[0].mxu0
    %v2843 = vadd.f32 %v2659, %v2842
    %v2844 = vpop.f32.mrb[0].mxu0
    %2845 = vmatprep.mubr.bf16.mxu0 %v2602
    %2846 = vmatmul.mubr.bf16.gmra.mrb[0].mxu0 %v2601
    %v2847 = vpop.f32.mrb[0].mxu0
    %v2848 = vadd.f32 %v2659, %v2847
    %v2849 = vpop.f32.mrb[0].mxu0
    %v2850 = vpop.f32.mrb[0].mxu0
    %v2851 = vadd.f32 %v2659, %v2850
    %v2852 = vpop.f32.mrb[0].mxu0
    %2853 = vdwg.mxu0
    %2854 = vmatprep.subr.bf16.mxu0 0
    %2855 = vmatpush1.bf16.msra.mxu0 %v2773
    %2856 = vmatprep.subr.bf16.mxu0 0
    %2857 = vmatpush1.bf16.msra.mxu0 %v2774
    %2858 = vmatprep.subr.bf16.mxu0 0
    %2859 = vmatpush1.bf16.msra.mxu0 %v2775
    %2860 = vmatprep.subr.bf16.mxu0 0
    %2861 = vmatpush1.bf16.msra.mxu0 %v2776
    %2862 = vmatprep.subr.bf16.mxu0 0
    %2863 = vmatpush1.bf16.msra.mxu0 %v2777
    %2864 = vmatprep.subr.bf16.mxu0 0
    %2865 = vmatpush1.bf16.msra.mxu0 %v2778
    %2866 = vmatprep.subr.bf16.mxu0 0
    %2867 = vmatpush1.bf16.msra.mxu0 %v2779
    %2868 = vmatprep.subr.bf16.mxu0 0
    %2869 = vmatpush1.bf16.msra.mxu0 %v2780
    %2870 = vmatprep.subr.bf16.mxu0 0
    %2871 = vmatpush1.bf16.msra.mxu0 0
    %2872 = vmatprep.subr.bf16.mxu0 0
    %2873 = vmatpush1.bf16.msra.mxu0 0
    %2874 = vmatprep.subr.bf16.mxu0 0
    %2875 = vmatpush1.bf16.msra.mxu0 0
    %2876 = vmatprep.subr.bf16.mxu0 0
    %2877 = vmatpush1.bf16.msra.mxu0 0
    %2878 = vmatprep.subr.bf16.mxu0 0
    %2879 = vmatpush1.bf16.msra.mxu0 0
    %2880 = vmatprep.subr.bf16.mxu0 0
    %2881 = vmatpush1.bf16.msra.mxu0 0
    %2882 = vmatprep.subr.bf16.mxu0 0
    %2883 = vmatpush1.bf16.msra.mxu0 0
    %2884 = vmatprep.subr.bf16.mxu0 0
    %2885 = vmatpush1.bf16.msra.mxu0 0
    %2886 = vmatprep.mubr.bf16.mxu0 0
    %2887 = vmatmul.mubr.bf16.gmra.mrb[0].mxu0 %v2600
    %v2888 = vpop.f32.mrb[0].mxu0
    %v2889 = vadd.f32 %v2840, %v2888
    %v2890 = vpop.f32.mrb[0].mxu0
    %v2891 = vpop.f32.mrb[0].mxu0
    %v2892 = vadd.f32 %v2843, %v2891
    %v2893 = vpop.f32.mrb[0].mxu0
    %2894 = vmatprep.mubr.bf16.mxu0 0
    %2895 = vmatmul.mubr.bf16.gmra.mrb[0].mxu0 %v2603
    %v2896 = vpop.f32.mrb[0].mxu0
    %v2897 = vadd.f32 %v2848, %v2896
    %v2898 = vpop.f32.mrb[0].mxu0
    %v2899 = vpop.f32.mrb[0].mxu0
    %v2900 = vadd.f32 %v2851, %v2899
    %v2901 = vpop.f32.mrb[0].mxu0
    %2902 = vdwg.mxu0
    %v2903 = vadd.f32 %v2889, %v2189
    %v2904 = vadd.f32 %v2892, %v2190
    %v2905 = vadd.f32 %v2897, %v2191
    %v2906 = vadd.f32 %v2900, %v2192
    %2907 = vst [vmem:[#allocation2 + $0x8] sm:$0xff] %v2903
    %2908 = vst [vmem:[#allocation2 + $0x20] sm:$0xff] %v2904
    %2909 = vst [vmem:[#allocation2 + $0x38] sm:$0xff] %v2905
    %2910 = vst [vmem:[#allocation2 + $0x50] sm:$0xff] %v2906
    %v2913 = vrot.slane %v2903, 7
    %v2914 = vrot.slane %v2904, 7
    %v2915 = vsel %vm57, %v2913, %v2914
    %2918 = vst [vmem:[#allocation2] sm:$0xfe] %v2913
    %2919 = vst [vmem:[#allocation2 + $0x18] sm:$0xff] %v2915
    %v2920 = vrot.slane %v2903, 1
    %v2921 = vrot.slane %v2904, 1
    %v2922 = vsel %vm65, %v2920, %v2921
    %2925 = vst [vmem:[#allocation2 + $0x10] sm:$0xff] %v2922
    %2926 = vst [vmem:[#allocation2 + $0x28] sm:$0x7f] %v2921
    %v2929 = vrot.slane %v2905, 7
    %v2930 = vrot.slane %v2906, 7
    %v2931 = vsel %vm57, %v2929, %v2930
    %2934 = vst [vmem:[#allocation2 + $0x30] sm:$0xfe] %v2929
    %2935 = vst [vmem:[#allocation2 + $0x48] sm:$0xff] %v2931
    %v2936 = vrot.slane %v2905, 1
    %v2937 = vrot.slane %v2906, 1
    %v2938 = vsel %vm65, %v2936, %v2937
    %2941 = vst [vmem:[#allocation2 + $0x40] sm:$0xff] %v2938
    %2942 = vst [vmem:[#allocation2 + $0x58] sm:$0x7f] %v2937
    %v2943 = vld [vmem:[#allocation2] sm:$0xff]
    %v2944 = vld [vmem:[#allocation2 + $0x8] sm:$0xff]
    %v2945 = vld [vmem:[#allocation2 + $0x10] sm:$0xff]
    %v2946 = vld [vmem:[#allocation2 + $0x18] sm:$0xff]
    %v2947 = vld [vmem:[#allocation2 + $0x20] sm:$0xff]
    %v2948 = vld [vmem:[#allocation2 + $0x28] sm:$0xff]
    %v2949 = vld [vmem:[#allocation2 + $0x30] sm:$0xff]
    %v2950 = vld [vmem:[#allocation2 + $0x38] sm:$0xff]
    %v2951 = vld [vmem:[#allocation2 + $0x40] sm:$0xff]
    %v2952 = vld [vmem:[#allocation2 + $0x48] sm:$0xff]
    %v2953 = vld [vmem:[#allocation2 + $0x50] sm:$0xff]
    %v2954 = vld [vmem:[#allocation2 + $0x58] sm:$0xff]
    %v2955 = vpack.c.bf16 %v2946, %v2943
    %v2956 = vpack.c.bf16 %v2947, %v2944
    %v2957 = vpack.c.bf16 %v2948, %v2945
    %v2958 = vpack.c.bf16 %v2952, %v2949
    %v2959 = vpack.c.bf16 %v2953, %v2950
    %v2960 = vpack.c.bf16 %v2954, %v2951
    %s2961 = scalar_lea.vmem [#allocation3], 1536
    %v2962 = vld [vmem:[%s2961] sm:$0xf]
    %v2963 = vld [vmem:[%s2961 + $0x4] sm:$0xf]
    %v2964 = vld [vmem:[%s2961 + $0x8] sm:$0xf]
    %v2965 = vld [vmem:[%s2961 + $0xc] sm:$0xf]
    %v2966 = vld [vmem:[%s2961 + $0x10] sm:$0xf]
    %v2967 = vld [vmem:[%s2961 + $0x14] sm:$0xf]
    %v2968 = vld [vmem:[%s2961 + $0x18] sm:$0xf]
    %v2969 = vld [vmem:[%s2961 + $0x1c] sm:$0xf]
    %v2970 = vld [vmem:[%s2961 + $0x20] sm:$0xf]
    %v2971 = vld [vmem:[%s2961 + $0x24] sm:$0xf]
    %v2972 = vld [vmem:[%s2961 + $0x28] sm:$0xf]
    %v2973 = vld [vmem:[%s2961 + $0x2c] sm:$0xf]
    %v2974 = vld [vmem:[%s2961 + $0x30] sm:$0xf]
    %v2975 = vld [vmem:[%s2961 + $0x34] sm:$0xf]
    %v2976 = vld [vmem:[%s2961 + $0x38] sm:$0xf]
    %v2977 = vld [vmem:[%s2961 + $0x3c] sm:$0xf]
    %v2978 = vld [vmem:[%s2961 + $0x40] sm:$0xf]
    %v2979 = vld [vmem:[%s2961 + $0x44] sm:$0xf]
    %v2980 = vld [vmem:[%s2961 + $0x48] sm:$0xf]
    %v2981 = vld [vmem:[%s2961 + $0x4c] sm:$0xf]
    %v2982 = vld [vmem:[%s2961 + $0x50] sm:$0xf]
    %v2983 = vld [vmem:[%s2961 + $0x54] sm:$0xf]
    %v2984 = vld [vmem:[%s2961 + $0x58] sm:$0xf]
    %v2985 = vld [vmem:[%s2961 + $0x5c] sm:$0xf]
    %v2986 = vld [vmem:[%s2961 + $0x60] sm:$0xf]
    %v2987 = vld [vmem:[%s2961 + $0x64] sm:$0xf]
    %v2988 = vld [vmem:[%s2961 + $0x68] sm:$0xf]
    %v2989 = vld [vmem:[%s2961 + $0x6c] sm:$0xf]
    %v2990 = vld [vmem:[%s2961 + $0x70] sm:$0xf]
    %v2991 = vld [vmem:[%s2961 + $0x74] sm:$0xf]
    %v2992 = vld [vmem:[%s2961 + $0x78] sm:$0xf]
    %v2993 = vld [vmem:[%s2961 + $0x7c] sm:$0xf]
    %v2994 = vld [vmem:[%s2961 + $0x80] sm:$0xf]
    %v2995 = vld [vmem:[%s2961 + $0x84] sm:$0xf]
    %v2996 = vld [vmem:[%s2961 + $0x88] sm:$0xf]
    %v2997 = vld [vmem:[%s2961 + $0x8c] sm:$0xf]
    %v2998 = vld [vmem:[%s2961 + $0x90] sm:$0xf]
    %v2999 = vld [vmem:[%s2961 + $0x94] sm:$0xf]
    %v3000 = vld [vmem:[%s2961 + $0x98] sm:$0xf]
    %v3001 = vld [vmem:[%s2961 + $0x9c] sm:$0xf]
    %v3002 = vld [vmem:[%s2961 + $0xa0] sm:$0xf]
    %v3003 = vld [vmem:[%s2961 + $0xa4] sm:$0xf]
    %v3004 = vld [vmem:[%s2961 + $0xa8] sm:$0xf]
    %v3005 = vld [vmem:[%s2961 + $0xac] sm:$0xf]
    %v3006 = vld [vmem:[%s2961 + $0xb0] sm:$0xf]
    %v3007 = vld [vmem:[%s2961 + $0xb4] sm:$0xf]
    %v3008 = vld [vmem:[%s2961 + $0xb8] sm:$0xf]
    %v3009 = vld [vmem:[%s2961 + $0xbc] sm:$0xf]
    %s3010 = scalar_lea.vmem [#allocation5], 8
    %v3011 = vld [vmem:[%s3010] sm:$0x1]
    %v3013 = vlaneseq
    %v3014 = vshrl.u32 %v3013, 7
    %v3015 = vsub.s32 0, %v3014
    %v3016 = vrot.slane %v3011, %v3015
    %v3066 = vunpack.c.l.b16 %v2962
    %v3067 = vunpack.c.l.b16 %v2963
    %v3068 = vunpack.c.l.b16 %v2964
    %v3069 = vunpack.c.l.b16 %v2965
    %v3070 = vunpack.c.l.b16 %v2966
    %v3071 = vunpack.c.l.b16 %v2967
    %v3072 = vunpack.c.l.b16 %v2968
    %v3073 = vunpack.c.l.b16 %v2969
    %v3074 = vunpack.c.l.b16 %v2970
    %v3075 = vunpack.c.l.b16 %v2971
    %v3076 = vunpack.c.l.b16 %v2972
    %v3077 = vunpack.c.l.b16 %v2973
    %v3078 = vunpack.c.l.b16 %v2974
    %v3079 = vunpack.c.l.b16 %v2975
    %v3080 = vunpack.c.l.b16 %v2976
    %v3081 = vunpack.c.l.b16 %v2977
    %v3082 = vunpack.c.l.b16 %v2978
    %v3083 = vunpack.c.l.b16 %v2979
    %v3084 = vunpack.c.l.b16 %v2980
    %v3085 = vunpack.c.l.b16 %v2981
    %v3086 = vunpack.c.l.b16 %v2982
    %v3087 = vunpack.c.l.b16 %v2983
    %v3088 = vunpack.c.l.b16 %v2984
    %v3089 = vunpack.c.l.b16 %v2985
    %v3090 = vunpack.c.l.b16 %v2986
    %v3091 = vunpack.c.l.b16 %v2987
    %v3092 = vunpack.c.l.b16 %v2988
    %v3093 = vunpack.c.l.b16 %v2989
    %v3094 = vunpack.c.l.b16 %v2990
    %v3095 = vunpack.c.l.b16 %v2991
    %v3096 = vunpack.c.l.b16 %v2992
    %v3097 = vunpack.c.l.b16 %v2993
    %v3098 = vunpack.c.l.b16 %v2994
    %v3099 = vunpack.c.l.b16 %v2995
    %v3100 = vunpack.c.l.b16 %v2996
    %v3101 = vunpack.c.l.b16 %v2997
    %v3102 = vunpack.c.l.b16 %v2998
    %v3103 = vunpack.c.l.b16 %v2999
    %v3104 = vunpack.c.l.b16 %v3000
    %v3105 = vunpack.c.l.b16 %v3001
    %v3106 = vunpack.c.l.b16 %v3002
    %v3107 = vunpack.c.l.b16 %v3003
    %v3108 = vunpack.c.l.b16 %v3004
    %v3109 = vunpack.c.l.b16 %v3005
    %v3110 = vunpack.c.l.b16 %v3006
    %v3111 = vunpack.c.l.b16 %v3007
    %v3112 = vunpack.c.l.b16 %v3008
    %v3113 = vunpack.c.l.b16 %v3009
    %v3114 = vpack.c.b16 %v3067, %v3066
    %v3115 = vpack.c.b16 %v3069, %v3068
    %v3116 = vpack.c.b16 %v3071, %v3070
    %v3117 = vpack.c.b16 %v3073, %v3072
    %v3118 = vpack.c.b16 %v3075, %v3074
    %v3119 = vpack.c.b16 %v3077, %v3076
    %v3120 = vpack.c.b16 %v3079, %v3078
    %v3121 = vpack.c.b16 %v3081, %v3080
    %v3122 = vpack.c.b16 %v3083, %v3082
    %v3123 = vpack.c.b16 %v3085, %v3084
    %v3124 = vpack.c.b16 %v3087, %v3086
    %v3125 = vpack.c.b16 %v3089, %v3088
    %v3126 = vpack.c.b16 %v3091, %v3090
    %v3127 = vpack.c.b16 %v3093, %v3092
    %v3128 = vpack.c.b16 %v3095, %v3094
    %v3129 = vpack.c.b16 %v3097, %v3096
    %v3130 = vpack.c.b16 %v3099, %v3098
    %v3131 = vpack.c.b16 %v3101, %v3100
    %v3132 = vpack.c.b16 %v3103, %v3102
    %v3133 = vpack.c.b16 %v3105, %v3104
    %v3134 = vpack.c.b16 %v3107, %v3106
    %v3135 = vpack.c.b16 %v3109, %v3108
    %v3136 = vpack.c.b16 %v3111, %v3110
    %v3137 = vpack.c.b16 %v3113, %v3112
    %3162 = vmatprep.subr.bf16.mxu0 0
    %3163 = vmatpush1.bf16.msra.mxu0 %v3114
    %3164 = vmatprep.subr.bf16.mxu0 0
    %3165 = vmatpush1.bf16.msra.mxu0 %v3115
    %3166 = vmatprep.subr.bf16.mxu0 0
    %3167 = vmatpush1.bf16.msra.mxu0 %v3116
    %3168 = vmatprep.subr.bf16.mxu0 0
    %3169 = vmatpush1.bf16.msra.mxu0 %v3117
    %3170 = vmatprep.subr.bf16.mxu0 0
    %3171 = vmatpush1.bf16.msra.mxu0 %v3118
    %3172 = vmatprep.subr.bf16.mxu0 0
    %3173 = vmatpush1.bf16.msra.mxu0 %v3119
    %3174 = vmatprep.subr.bf16.mxu0 0
    %3175 = vmatpush1.bf16.msra.mxu0 %v3120
    %3176 = vmatprep.subr.bf16.mxu0 0
    %3177 = vmatpush1.bf16.msra.mxu0 %v3121
    %3178 = vmatprep.subr.bf16.mxu0 0
    %3179 = vmatpush1.bf16.msra.mxu0 %v3122
    %3180 = vmatprep.subr.bf16.mxu0 0
    %3181 = vmatpush1.bf16.msra.mxu0 %v3123
    %3182 = vmatprep.subr.bf16.mxu0 0
    %3183 = vmatpush1.bf16.msra.mxu0 %v3124
    %3184 = vmatprep.subr.bf16.mxu0 0
    %3185 = vmatpush1.bf16.msra.mxu0 %v3125
    %3186 = vmatprep.subr.bf16.mxu0 0
    %3187 = vmatpush1.bf16.msra.mxu0 %v3126
    %3188 = vmatprep.subr.bf16.mxu0 0
    %3189 = vmatpush1.bf16.msra.mxu0 %v3127
    %3190 = vmatprep.subr.bf16.mxu0 0
    %3191 = vmatpush1.bf16.msra.mxu0 %v3128
    %3192 = vmatprep.subr.bf16.mxu0 0
    %3193 = vmatpush1.bf16.msra.mxu0 %v3129
    %3194 = vmatprep.mubr.bf16.mxu0 %v2956
    %3195 = vmatmul.mubr.bf16.gmra.mrb[0].mxu0 %v2955
    %v3196 = vpop.f32.mrb[0].mxu0
    %v3197 = vadd.f32 %v3016, %v3196
    %v3198 = vpop.f32.mrb[0].mxu0
    %v3199 = vpop.f32.mrb[0].mxu0
    %v3200 = vadd.f32 %v3016, %v3199
    %v3201 = vpop.f32.mrb[0].mxu0
    %3202 = vmatprep.mubr.bf16.mxu0 %v2959
    %3203 = vmatmul.mubr.bf16.gmra.mrb[0].mxu0 %v2958
    %v3204 = vpop.f32.mrb[0].mxu0
    %v3205 = vadd.f32 %v3016, %v3204
    %v3206 = vpop.f32.mrb[0].mxu0
    %v3207 = vpop.f32.mrb[0].mxu0
    %v3208 = vadd.f32 %v3016, %v3207
    %v3209 = vpop.f32.mrb[0].mxu0
    %3210 = vdwg.mxu0
    %3211 = vmatprep.subr.bf16.mxu0 0
    %3212 = vmatpush1.bf16.msra.mxu0 %v3130
    %3213 = vmatprep.subr.bf16.mxu0 0
    %3214 = vmatpush1.bf16.msra.mxu0 %v3131
    %3215 = vmatprep.subr.bf16.mxu0 0
    %3216 = vmatpush1.bf16.msra.mxu0 %v3132
    %3217 = vmatprep.subr.bf16.mxu0 0
    %3218 = vmatpush1.bf16.msra.mxu0 %v3133
    %3219 = vmatprep.subr.bf16.mxu0 0
    %3220 = vmatpush1.bf16.msra.mxu0 %v3134
    %3221 = vmatprep.subr.bf16.mxu0 0
    %3222 = vmatpush1.bf16.msra.mxu0 %v3135
    %3223 = vmatprep.subr.bf16.mxu0 0
    %3224 = vmatpush1.bf16.msra.mxu0 %v3136
    %3225 = vmatprep.subr.bf16.mxu0 0
    %3226 = vmatpush1.bf16.msra.mxu0 %v3137
    %3227 = vmatprep.subr.bf16.mxu0 0
    %3228 = vmatpush1.bf16.msra.mxu0 0
    %3229 = vmatprep.subr.bf16.mxu0 0
    %3230 = vmatpush1.bf16.msra.mxu0 0
    %3231 = vmatprep.subr.bf16.mxu0 0
    %3232 = vmatpush1.bf16.msra.mxu0 0
    %3233 = vmatprep.subr.bf16.mxu0 0
    %3234 = vmatpush1.bf16.msra.mxu0 0
    %3235 = vmatprep.subr.bf16.mxu0 0
    %3236 = vmatpush1.bf16.msra.mxu0 0
    %3237 = vmatprep.subr.bf16.mxu0 0
    %3238 = vmatpush1.bf16.msra.mxu0 0
    %3239 = vmatprep.subr.bf16.mxu0 0
    %3240 = vmatpush1.bf16.msra.mxu0 0
    %3241 = vmatprep.subr.bf16.mxu0 0
    %3242 = vmatpush1.bf16.msra.mxu0 0
    %3243 = vmatprep.mubr.bf16.mxu0 0
    %3244 = vmatmul.mubr.bf16.gmra.mrb[0].mxu0 %v2957
    %v3245 = vpop.f32.mrb[0].mxu0
    %v3246 = vadd.f32 %v3197, %v3245
    %v3247 = vpop.f32.mrb[0].mxu0
    %v3248 = vpop.f32.mrb[0].mxu0
    %v3249 = vadd.f32 %v3200, %v3248
    %v3250 = vpop.f32.mrb[0].mxu0
    %3251 = vmatprep.mubr.bf16.mxu0 0
    %3252 = vmatmul.mubr.bf16.gmra.mrb[0].mxu0 %v2960
    %v3253 = vpop.f32.mrb[0].mxu0
    %v3254 = vadd.f32 %v3205, %v3253
    %v3255 = vpop.f32.mrb[0].mxu0
    %v3256 = vpop.f32.mrb[0].mxu0
    %v3257 = vadd.f32 %v3208, %v3256
    %v3258 = vpop.f32.mrb[0].mxu0
    %3259 = vdwg.mxu0
    %v3260 = vmax.f32 %v3246, 0.0
    %v3261 = vmax.f32 %v3249, 0.0
    %v3262 = vmax.f32 %v3254, 0.0
    %v3263 = vmax.f32 %v3257, 0.0
    %3264 = vst [vmem:[#allocation2 + $0x8] sm:$0xff] %v3260
    %3265 = vst [vmem:[#allocation2 + $0x20] sm:$0xff] %v3261
    %3266 = vst [vmem:[#allocation2 + $0x38] sm:$0xff] %v3262
    %3267 = vst [vmem:[#allocation2 + $0x50] sm:$0xff] %v3263
    %v3270 = vrot.slane %v3260, 7
    %v3271 = vrot.slane %v3261, 7
    %v3272 = vsel %vm57, %v3270, %v3271
    %3275 = vst [vmem:[#allocation2] sm:$0xfe] %v3270
    %3276 = vst [vmem:[#allocation2 + $0x18] sm:$0xff] %v3272
    %v3277 = vrot.slane %v3260, 1
    %v3278 = vrot.slane %v3261, 1
    %v3279 = vsel %vm65, %v3277, %v3278
    %3282 = vst [vmem:[#allocation2 + $0x10] sm:$0xff] %v3279
    %3283 = vst [vmem:[#allocation2 + $0x28] sm:$0x7f] %v3278
    %v3286 = vrot.slane %v3262, 7
    %v3287 = vrot.slane %v3263, 7
    %v3288 = vsel %vm57, %v3286, %v3287
    %3291 = vst [vmem:[#allocation2 + $0x30] sm:$0xfe] %v3286
    %3292 = vst [vmem:[#allocation2 + $0x48] sm:$0xff] %v3288
    %v3293 = vrot.slane %v3262, 1
    %v3294 = vrot.slane %v3263, 1
    %v3295 = vsel %vm65, %v3293, %v3294
    %3298 = vst [vmem:[#allocation2 + $0x40] sm:$0xff] %v3295
    %3299 = vst [vmem:[#allocation2 + $0x58] sm:$0x7f] %v3294
    %v3300 = vld [vmem:[#allocation2] sm:$0xff]
    %v3301 = vld [vmem:[#allocation2 + $0x8] sm:$0xff]
    %v3302 = vld [vmem:[#allocation2 + $0x10] sm:$0xff]
    %v3303 = vld [vmem:[#allocation2 + $0x18] sm:$0xff]
    %v3304 = vld [vmem:[#allocation2 + $0x20] sm:$0xff]
    %v3305 = vld [vmem:[#allocation2 + $0x28] sm:$0xff]
    %v3306 = vld [vmem:[#allocation2 + $0x30] sm:$0xff]
    %v3307 = vld [vmem:[#allocation2 + $0x38] sm:$0xff]
    %v3308 = vld [vmem:[#allocation2 + $0x40] sm:$0xff]
    %v3309 = vld [vmem:[#allocation2 + $0x48] sm:$0xff]
    %v3310 = vld [vmem:[#allocation2 + $0x50] sm:$0xff]
    %v3311 = vld [vmem:[#allocation2 + $0x58] sm:$0xff]
    %v3312 = vpack.c.bf16 %v3303, %v3300
    %v3313 = vpack.c.bf16 %v3304, %v3301
    %v3314 = vpack.c.bf16 %v3305, %v3302
    %v3315 = vpack.c.bf16 %v3309, %v3306
    %v3316 = vpack.c.bf16 %v3310, %v3307
    %v3317 = vpack.c.bf16 %v3311, %v3308
    %s3318 = scalar_lea.vmem [#allocation3], 1728
    %v3319 = vld [vmem:[%s3318] sm:$0xf]
    %v3320 = vld [vmem:[%s3318 + $0x4] sm:$0xf]
    %v3321 = vld [vmem:[%s3318 + $0x8] sm:$0xf]
    %v3322 = vld [vmem:[%s3318 + $0xc] sm:$0xf]
    %v3323 = vld [vmem:[%s3318 + $0x10] sm:$0xf]
    %v3324 = vld [vmem:[%s3318 + $0x14] sm:$0xf]
    %v3325 = vld [vmem:[%s3318 + $0x18] sm:$0xf]
    %v3326 = vld [vmem:[%s3318 + $0x1c] sm:$0xf]
    %v3327 = vld [vmem:[%s3318 + $0x20] sm:$0xf]
    %v3328 = vld [vmem:[%s3318 + $0x24] sm:$0xf]
    %v3329 = vld [vmem:[%s3318 + $0x28] sm:$0xf]
    %v3330 = vld [vmem:[%s3318 + $0x2c] sm:$0xf]
    %v3331 = vld [vmem:[%s3318 + $0x30] sm:$0xf]
    %v3332 = vld [vmem:[%s3318 + $0x34] sm:$0xf]
    %v3333 = vld [vmem:[%s3318 + $0x38] sm:$0xf]
    %v3334 = vld [vmem:[%s3318 + $0x3c] sm:$0xf]
    %v3335 = vld [vmem:[%s3318 + $0x40] sm:$0xf]
    %v3336 = vld [vmem:[%s3318 + $0x44] sm:$0xf]
    %v3337 = vld [vmem:[%s3318 + $0x48] sm:$0xf]
    %v3338 = vld [vmem:[%s3318 + $0x4c] sm:$0xf]
    %v3339 = vld [vmem:[%s3318 + $0x50] sm:$0xf]
    %v3340 = vld [vmem:[%s3318 + $0x54] sm:$0xf]
    %v3341 = vld [vmem:[%s3318 + $0x58] sm:$0xf]
    %v3342 = vld [vmem:[%s3318 + $0x5c] sm:$0xf]
    %v3343 = vld [vmem:[%s3318 + $0x60] sm:$0xf]
    %v3344 = vld [vmem:[%s3318 + $0x64] sm:$0xf]
    %v3345 = vld [vmem:[%s3318 + $0x68] sm:$0xf]
    %v3346 = vld [vmem:[%s3318 + $0x6c] sm:$0xf]
    %v3347 = vld [vmem:[%s3318 + $0x70] sm:$0xf]
    %v3348 = vld [vmem:[%s3318 + $0x74] sm:$0xf]
    %v3349 = vld [vmem:[%s3318 + $0x78] sm:$0xf]
    %v3350 = vld [vmem:[%s3318 + $0x7c] sm:$0xf]
    %v3351 = vld [vmem:[%s3318 + $0x80] sm:$0xf]
    %v3352 = vld [vmem:[%s3318 + $0x84] sm:$0xf]
    %v3353 = vld [vmem:[%s3318 + $0x88] sm:$0xf]
    %v3354 = vld [vmem:[%s3318 + $0x8c] sm:$0xf]
    %v3355 = vld [vmem:[%s3318 + $0x90] sm:$0xf]
    %v3356 = vld [vmem:[%s3318 + $0x94] sm:$0xf]
    %v3357 = vld [vmem:[%s3318 + $0x98] sm:$0xf]
    %v3358 = vld [vmem:[%s3318 + $0x9c] sm:$0xf]
    %v3359 = vld [vmem:[%s3318 + $0xa0] sm:$0xf]
    %v3360 = vld [vmem:[%s3318 + $0xa4] sm:$0xf]
    %v3361 = vld [vmem:[%s3318 + $0xa8] sm:$0xf]
    %v3362 = vld [vmem:[%s3318 + $0xac] sm:$0xf]
    %v3363 = vld [vmem:[%s3318 + $0xb0] sm:$0xf]
    %v3364 = vld [vmem:[%s3318 + $0xb4] sm:$0xf]
    %v3365 = vld [vmem:[%s3318 + $0xb8] sm:$0xf]
    %v3366 = vld [vmem:[%s3318 + $0xbc] sm:$0xf]
    %s3367 = scalar_lea.vmem [#allocation5], 9
    %v3368 = vld [vmem:[%s3367] sm:$0x1]
    %v3370 = vlaneseq
    %v3371 = vshrl.u32 %v3370, 7
    %v3372 = vsub.s32 0, %v3371
    %v3373 = vrot.slane %v3368, %v3372
    %v3423 = vunpack.c.l.b16 %v3319
    %v3424 = vunpack.c.l.b16 %v3320
    %v3425 = vunpack.c.l.b16 %v3321
    %v3426 = vunpack.c.l.b16 %v3322
    %v3427 = vunpack.c.l.b16 %v3323
    %v3428 = vunpack.c.l.b16 %v3324
    %v3429 = vunpack.c.l.b16 %v3325
    %v3430 = vunpack.c.l.b16 %v3326
    %v3431 = vunpack.c.l.b16 %v3327
    %v3432 = vunpack.c.l.b16 %v3328
    %v3433 = vunpack.c.l.b16 %v3329
    %v3434 = vunpack.c.l.b16 %v3330
    %v3435 = vunpack.c.l.b16 %v3331
    %v3436 = vunpack.c.l.b16 %v3332
    %v3437 = vunpack.c.l.b16 %v3333
    %v3438 = vunpack.c.l.b16 %v3334
    %v3439 = vunpack.c.l.b16 %v3335
    %v3440 = vunpack.c.l.b16 %v3336
    %v3441 = vunpack.c.l.b16 %v3337
    %v3442 = vunpack.c.l.b16 %v3338
    %v3443 = vunpack.c.l.b16 %v3339
    %v3444 = vunpack.c.l.b16 %v3340
    %v3445 = vunpack.c.l.b16 %v3341
    %v3446 = vunpack.c.l.b16 %v3342
    %v3447 = vunpack.c.l.b16 %v3343
    %v3448 = vunpack.c.l.b16 %v3344
    %v3449 = vunpack.c.l.b16 %v3345
    %v3450 = vunpack.c.l.b16 %v3346
    %v3451 = vunpack.c.l.b16 %v3347
    %v3452 = vunpack.c.l.b16 %v3348
    %v3453 = vunpack.c.l.b16 %v3349
    %v3454 = vunpack.c.l.b16 %v3350
    %v3455 = vunpack.c.l.b16 %v3351
    %v3456 = vunpack.c.l.b16 %v3352
    %v3457 = vunpack.c.l.b16 %v3353
    %v3458 = vunpack.c.l.b16 %v3354
    %v3459 = vunpack.c.l.b16 %v3355
    %v3460 = vunpack.c.l.b16 %v3356
    %v3461 = vunpack.c.l.b16 %v3357
    %v3462 = vunpack.c.l.b16 %v3358
    %v3463 = vunpack.c.l.b16 %v3359
    %v3464 = vunpack.c.l.b16 %v3360
    %v3465 = vunpack.c.l.b16 %v3361
    %v3466 = vunpack.c.l.b16 %v3362
    %v3467 = vunpack.c.l.b16 %v3363
    %v3468 = vunpack.c.l.b16 %v3364
    %v3469 = vunpack.c.l.b16 %v3365
    %v3470 = vunpack.c.l.b16 %v3366
    %v3471 = vpack.c.b16 %v3424, %v3423
    %v3472 = vpack.c.b16 %v3426, %v3425
    %v3473 = vpack.c.b16 %v3428, %v3427
    %v3474 = vpack.c.b16 %v3430, %v3429
    %v3475 = vpack.c.b16 %v3432, %v3431
    %v3476 = vpack.c.b16 %v3434, %v3433
    %v3477 = vpack.c.b16 %v3436, %v3435
    %v3478 = vpack.c.b16 %v3438, %v3437
    %v3479 = vpack.c.b16 %v3440, %v3439
    %v3480 = vpack.c.b16 %v3442, %v3441
    %v3481 = vpack.c.b16 %v3444, %v3443
    %v3482 = vpack.c.b16 %v3446, %v3445
    %v3483 = vpack.c.b16 %v3448, %v3447
    %v3484 = vpack.c.b16 %v3450, %v3449
    %v3485 = vpack.c.b16 %v3452, %v3451
    %v3486 = vpack.c.b16 %v3454, %v3453
    %v3487 = vpack.c.b16 %v3456, %v3455
    %v3488 = vpack.c.b16 %v3458, %v3457
    %v3489 = vpack.c.b16 %v3460, %v3459
    %v3490 = vpack.c.b16 %v3462, %v3461
    %v3491 = vpack.c.b16 %v3464, %v3463
    %v3492 = vpack.c.b16 %v3466, %v3465
    %v3493 = vpack.c.b16 %v3468, %v3467
    %v3494 = vpack.c.b16 %v3470, %v3469
    %3519 = vmatprep.subr.bf16.mxu0 0
    %3520 = vmatpush1.bf16.msra.mxu0 %v3471
    %3521 = vmatprep.subr.bf16.mxu0 0
    %3522 = vmatpush1.bf16.msra.mxu0 %v3472
    %3523 = vmatprep.subr.bf16.mxu0 0
    %3524 = vmatpush1.bf16.msra.mxu0 %v3473
    %3525 = vmatprep.subr.bf16.mxu0 0
    %3526 = vmatpush1.bf16.msra.mxu0 %v3474
    %3527 = vmatprep.subr.bf16.mxu0 0
    %3528 = vmatpush1.bf16.msra.mxu0 %v3475
    %3529 = vmatprep.subr.bf16.mxu0 0
    %3530 = vmatpush1.bf16.msra.mxu0 %v3476
    %3531 = vmatprep.subr.bf16.mxu0 0
    %3532 = vmatpush1.bf16.msra.mxu0 %v3477
    %3533 = vmatprep.subr.bf16.mxu0 0
    %3534 = vmatpush1.bf16.msra.mxu0 %v3478
    %3535 = vmatprep.subr.bf16.mxu0 0
    %3536 = vmatpush1.bf16.msra.mxu0 %v3479
    %3537 = vmatprep.subr.bf16.mxu0 0
    %3538 = vmatpush1.bf16.msra.mxu0 %v3480
    %3539 = vmatprep.subr.bf16.mxu0 0
    %3540 = vmatpush1.bf16.msra.mxu0 %v3481
    %3541 = vmatprep.subr.bf16.mxu0 0
    %3542 = vmatpush1.bf16.msra.mxu0 %v3482
    %3543 = vmatprep.subr.bf16.mxu0 0
    %3544 = vmatpush1.bf16.msra.mxu0 %v3483
    %3545 = vmatprep.subr.bf16.mxu0 0
    %3546 = vmatpush1.bf16.msra.mxu0 %v3484
    %3547 = vmatprep.subr.bf16.mxu0 0
    %3548 = vmatpush1.bf16.msra.mxu0 %v3485
    %3549 = vmatprep.subr.bf16.mxu0 0
    %3550 = vmatpush1.bf16.msra.mxu0 %v3486
    %3551 = vmatprep.mubr.bf16.mxu0 %v3313
    %3552 = vmatmul.mubr.bf16.gmra.mrb[0].mxu0 %v3312
    %v3553 = vpop.f32.mrb[0].mxu0
    %v3554 = vadd.f32 %v3373, %v3553
    %v3555 = vpop.f32.mrb[0].mxu0
    %v3556 = vpop.f32.mrb[0].mxu0
    %v3557 = vadd.f32 %v3373, %v3556
    %v3558 = vpop.f32.mrb[0].mxu0
    %3559 = vmatprep.mubr.bf16.mxu0 %v3316
    %3560 = vmatmul.mubr.bf16.gmra.mrb[0].mxu0 %v3315
    %v3561 = vpop.f32.mrb[0].mxu0
    %v3562 = vadd.f32 %v3373, %v3561
    %v3563 = vpop.f32.mrb[0].mxu0
    %v3564 = vpop.f32.mrb[0].mxu0
    %v3565 = vadd.f32 %v3373, %v3564
    %v3566 = vpop.f32.mrb[0].mxu0
    %3567 = vdwg.mxu0
    %3568 = vmatprep.subr.bf16.mxu0 0
    %3569 = vmatpush1.bf16.msra.mxu0 %v3487
    %3570 = vmatprep.subr.bf16.mxu0 0
    %3571 = vmatpush1.bf16.msra.mxu0 %v3488
    %3572 = vmatprep.subr.bf16.mxu0 0
    %3573 = vmatpush1.bf16.msra.mxu0 %v3489
    %3574 = vmatprep.subr.bf16.mxu0 0
    %3575 = vmatpush1.bf16.msra.mxu0 %v3490
    %3576 = vmatprep.subr.bf16.mxu0 0
    %3577 = vmatpush1.bf16.msra.mxu0 %v3491
    %3578 = vmatprep.subr.bf16.mxu0 0
    %3579 = vmatpush1.bf16.msra.mxu0 %v3492
    %3580 = vmatprep.subr.bf16.mxu0 0
    %3581 = vmatpush1.bf16.msra.mxu0 %v3493
    %3582 = vmatprep.subr.bf16.mxu0 0
    %3583 = vmatpush1.bf16.msra.mxu0 %v3494
    %3584 = vmatprep.subr.bf16.mxu0 0
    %3585 = vmatpush1.bf16.msra.mxu0 0
    %3586 = vmatprep.subr.bf16.mxu0 0
    %3587 = vmatpush1.bf16.msra.mxu0 0
    %3588 = vmatprep.subr.bf16.mxu0 0
    %3589 = vmatpush1.bf16.msra.mxu0 0
    %3590 = vmatprep.subr.bf16.mxu0 0
    %3591 = vmatpush1.bf16.msra.mxu0 0
    %3592 = vmatprep.subr.bf16.mxu0 0
    %3593 = vmatpush1.bf16.msra.mxu0 0
    %3594 = vmatprep.subr.bf16.mxu0 0
    %3595 = vmatpush1.bf16.msra.mxu0 0
    %3596 = vmatprep.subr.bf16.mxu0 0
    %3597 = vmatpush1.bf16.msra.mxu0 0
    %3598 = vmatprep.subr.bf16.mxu0 0
    %3599 = vmatpush1.bf16.msra.mxu0 0
    %3600 = vmatprep.mubr.bf16.mxu0 0
    %3601 = vmatmul.mubr.bf16.gmra.mrb[0].mxu0 %v3314
    %v3602 = vpop.f32.mrb[0].mxu0
    %v3603 = vadd.f32 %v3554, %v3602
    %v3604 = vpop.f32.mrb[0].mxu0
    %v3605 = vpop.f32.mrb[0].mxu0
    %v3606 = vadd.f32 %v3557, %v3605
    %v3607 = vpop.f32.mrb[0].mxu0
    %3608 = vmatprep.mubr.bf16.mxu0 0
    %3609 = vmatmul.mubr.bf16.gmra.mrb[0].mxu0 %v3317
    %v3610 = vpop.f32.mrb[0].mxu0
    %v3611 = vadd.f32 %v3562, %v3610
    %v3612 = vpop.f32.mrb[0].mxu0
    %v3613 = vpop.f32.mrb[0].mxu0
    %v3614 = vadd.f32 %v3565, %v3613
    %v3615 = vpop.f32.mrb[0].mxu0
    %3616 = vdwg.mxu0
    %v3617 = vadd.f32 %v3603, %v2903
    %v3618 = vadd.f32 %v3606, %v2904
    %v3619 = vadd.f32 %v3611, %v2905
    %v3620 = vadd.f32 %v3614, %v2906
    %3621 = vst [vmem:[#allocation2 + $0x8] sm:$0xff] %v3617
    %3622 = vst [vmem:[#allocation2 + $0x20] sm:$0xff] %v3618
    %3623 = vst [vmem:[#allocation2 + $0x38] sm:$0xff] %v3619
    %3624 = vst [vmem:[#allocation2 + $0x50] sm:$0xff] %v3620
    %v3627 = vrot.slane %v3617, 7
    %v3628 = vrot.slane %v3618, 7
    %v3629 = vsel %vm57, %v3627, %v3628
    %3632 = vst [vmem:[#allocation2] sm:$0xfe] %v3627
    %3633 = vst [vmem:[#allocation2 + $0x18] sm:$0xff] %v3629
    %v3634 = vrot.slane %v3617, 1
    %v3635 = vrot.slane %v3618, 1
    %v3636 = vsel %vm65, %v3634, %v3635
    %3639 = vst [vmem:[#allocation2 + $0x10] sm:$0xff] %v3636
    %3640 = vst [vmem:[#allocation2 + $0x28] sm:$0x7f] %v3635
    %v3643 = vrot.slane %v3619, 7
    %v3644 = vrot.slane %v3620, 7
    %v3645 = vsel %vm57, %v3643, %v3644
    %3648 = vst [vmem:[#allocation2 + $0x30] sm:$0xfe] %v3643
    %3649 = vst [vmem:[#allocation2 + $0x48] sm:$0xff] %v3645
    %v3650 = vrot.slane %v3619, 1
    %v3651 = vrot.slane %v3620, 1
    %v3652 = vsel %vm65, %v3650, %v3651
    %3655 = vst [vmem:[#allocation2 + $0x40] sm:$0xff] %v3652
    %3656 = vst [vmem:[#allocation2 + $0x58] sm:$0x7f] %v3651
    %v3657 = vld [vmem:[#allocation2] sm:$0xff]
    %v3658 = vld [vmem:[#allocation2 + $0x8] sm:$0xff]
    %v3659 = vld [vmem:[#allocation2 + $0x10] sm:$0xff]
    %v3660 = vld [vmem:[#allocation2 + $0x18] sm:$0xff]
    %v3661 = vld [vmem:[#allocation2 + $0x20] sm:$0xff]
    %v3662 = vld [vmem:[#allocation2 + $0x28] sm:$0xff]
    %v3663 = vld [vmem:[#allocation2 + $0x30] sm:$0xff]
    %v3664 = vld [vmem:[#allocation2 + $0x38] sm:$0xff]
    %v3665 = vld [vmem:[#allocation2 + $0x40] sm:$0xff]
    %v3666 = vld [vmem:[#allocation2 + $0x48] sm:$0xff]
    %v3667 = vld [vmem:[#allocation2 + $0x50] sm:$0xff]
    %v3668 = vld [vmem:[#allocation2 + $0x58] sm:$0xff]
    %v3669 = vpack.c.bf16 %v3660, %v3657
    %v3670 = vpack.c.bf16 %v3661, %v3658
    %v3671 = vpack.c.bf16 %v3662, %v3659
    %v3672 = vpack.c.bf16 %v3666, %v3663
    %v3673 = vpack.c.bf16 %v3667, %v3664
    %v3674 = vpack.c.bf16 %v3668, %v3665
    %s3675 = scalar_lea.vmem [#allocation3], 1920
    %v3676 = vld [vmem:[%s3675] sm:$0xf]
    %v3677 = vld [vmem:[%s3675 + $0x4] sm:$0xf]
    %v3678 = vld [vmem:[%s3675 + $0x8] sm:$0xf]
    %v3679 = vld [vmem:[%s3675 + $0xc] sm:$0xf]
    %v3680 = vld [vmem:[%s3675 + $0x10] sm:$0xf]
    %v3681 = vld [vmem:[%s3675 + $0x14] sm:$0xf]
    %v3682 = vld [vmem:[%s3675 + $0x18] sm:$0xf]
    %v3683 = vld [vmem:[%s3675 + $0x1c] sm:$0xf]
    %v3684 = vld [vmem:[%s3675 + $0x20] sm:$0xf]
    %v3685 = vld [vmem:[%s3675 + $0x24] sm:$0xf]
    %v3686 = vld [vmem:[%s3675 + $0x28] sm:$0xf]
    %v3687 = vld [vmem:[%s3675 + $0x2c] sm:$0xf]
    %v3688 = vld [vmem:[%s3675 + $0x30] sm:$0xf]
    %v3689 = vld [vmem:[%s3675 + $0x34] sm:$0xf]
    %v3690 = vld [vmem:[%s3675 + $0x38] sm:$0xf]
    %v3691 = vld [vmem:[%s3675 + $0x3c] sm:$0xf]
    %v3692 = vld [vmem:[%s3675 + $0x40] sm:$0xf]
    %v3693 = vld [vmem:[%s3675 + $0x44] sm:$0xf]
    %v3694 = vld [vmem:[%s3675 + $0x48] sm:$0xf]
    %v3695 = vld [vmem:[%s3675 + $0x4c] sm:$0xf]
    %v3696 = vld [vmem:[%s3675 + $0x50] sm:$0xf]
    %v3697 = vld [vmem:[%s3675 + $0x54] sm:$0xf]
    %v3698 = vld [vmem:[%s3675 + $0x58] sm:$0xf]
    %v3699 = vld [vmem:[%s3675 + $0x5c] sm:$0xf]
    %v3700 = vld [vmem:[%s3675 + $0x60] sm:$0xf]
    %v3701 = vld [vmem:[%s3675 + $0x64] sm:$0xf]
    %v3702 = vld [vmem:[%s3675 + $0x68] sm:$0xf]
    %v3703 = vld [vmem:[%s3675 + $0x6c] sm:$0xf]
    %v3704 = vld [vmem:[%s3675 + $0x70] sm:$0xf]
    %v3705 = vld [vmem:[%s3675 + $0x74] sm:$0xf]
    %v3706 = vld [vmem:[%s3675 + $0x78] sm:$0xf]
    %v3707 = vld [vmem:[%s3675 + $0x7c] sm:$0xf]
    %v3708 = vld [vmem:[%s3675 + $0x80] sm:$0xf]
    %v3709 = vld [vmem:[%s3675 + $0x84] sm:$0xf]
    %v3710 = vld [vmem:[%s3675 + $0x88] sm:$0xf]
    %v3711 = vld [vmem:[%s3675 + $0x8c] sm:$0xf]
    %v3712 = vld [vmem:[%s3675 + $0x90] sm:$0xf]
    %v3713 = vld [vmem:[%s3675 + $0x94] sm:$0xf]
    %v3714 = vld [vmem:[%s3675 + $0x98] sm:$0xf]
    %v3715 = vld [vmem:[%s3675 + $0x9c] sm:$0xf]
    %v3716 = vld [vmem:[%s3675 + $0xa0] sm:$0xf]
    %v3717 = vld [vmem:[%s3675 + $0xa4] sm:$0xf]
    %v3718 = vld [vmem:[%s3675 + $0xa8] sm:$0xf]
    %v3719 = vld [vmem:[%s3675 + $0xac] sm:$0xf]
    %v3720 = vld [vmem:[%s3675 + $0xb0] sm:$0xf]
    %v3721 = vld [vmem:[%s3675 + $0xb4] sm:$0xf]
    %v3722 = vld [vmem:[%s3675 + $0xb8] sm:$0xf]
    %v3723 = vld [vmem:[%s3675 + $0xbc] sm:$0xf]
    %s3724 = scalar_lea.vmem [#allocation5], 10
    %v3725 = vld [vmem:[%s3724] sm:$0x1]
    %v3727 = vlaneseq
    %v3728 = vshrl.u32 %v3727, 7
    %v3729 = vsub.s32 0, %v3728
    %v3730 = vrot.slane %v3725, %v3729
    %v3780 = vunpack.c.l.b16 %v3676
    %v3781 = vunpack.c.l.b16 %v3677
    %v3782 = vunpack.c.l.b16 %v3678
    %v3783 = vunpack.c.l.b16 %v3679
    %v3784 = vunpack.c.l.b16 %v3680
    %v3785 = vunpack.c.l.b16 %v3681
    %v3786 = vunpack.c.l.b16 %v3682
    %v3787 = vunpack.c.l.b16 %v3683
    %v3788 = vunpack.c.l.b16 %v3684
    %v3789 = vunpack.c.l.b16 %v3685
    %v3790 = vunpack.c.l.b16 %v3686
    %v3791 = vunpack.c.l.b16 %v3687
    %v3792 = vunpack.c.l.b16 %v3688
    %v3793 = vunpack.c.l.b16 %v3689
    %v3794 = vunpack.c.l.b16 %v3690
    %v3795 = vunpack.c.l.b16 %v3691
    %v3796 = vunpack.c.l.b16 %v3692
    %v3797 = vunpack.c.l.b16 %v3693
    %v3798 = vunpack.c.l.b16 %v3694
    %v3799 = vunpack.c.l.b16 %v3695
    %v3800 = vunpack.c.l.b16 %v3696
    %v3801 = vunpack.c.l.b16 %v3697
    %v3802 = vunpack.c.l.b16 %v3698
    %v3803 = vunpack.c.l.b16 %v3699
    %v3804 = vunpack.c.l.b16 %v3700
    %v3805 = vunpack.c.l.b16 %v3701
    %v3806 = vunpack.c.l.b16 %v3702
    %v3807 = vunpack.c.l.b16 %v3703
    %v3808 = vunpack.c.l.b16 %v3704
    %v3809 = vunpack.c.l.b16 %v3705
    %v3810 = vunpack.c.l.b16 %v3706
    %v3811 = vunpack.c.l.b16 %v3707
    %v3812 = vunpack.c.l.b16 %v3708
    %v3813 = vunpack.c.l.b16 %v3709
    %v3814 = vunpack.c.l.b16 %v3710
    %v3815 = vunpack.c.l.b16 %v3711
    %v3816 = vunpack.c.l.b16 %v3712
    %v3817 = vunpack.c.l.b16 %v3713
    %v3818 = vunpack.c.l.b16 %v3714
    %v3819 = vunpack.c.l.b16 %v3715
    %v3820 = vunpack.c.l.b16 %v3716
    %v3821 = vunpack.c.l.b16 %v3717
    %v3822 = vunpack.c.l.b16 %v3718
    %v3823 = vunpack.c.l.b16 %v3719
    %v3824 = vunpack.c.l.b16 %v3720
    %v3825 = vunpack.c.l.b16 %v3721
    %v3826 = vunpack.c.l.b16 %v3722
    %v3827 = vunpack.c.l.b16 %v3723
    %v3828 = vpack.c.b16 %v3781, %v3780
    %v3829 = vpack.c.b16 %v3783, %v3782
    %v3830 = vpack.c.b16 %v3785, %v3784
    %v3831 = vpack.c.b16 %v3787, %v3786
    %v3832 = vpack.c.b16 %v3789, %v3788
    %v3833 = vpack.c.b16 %v3791, %v3790
    %v3834 = vpack.c.b16 %v3793, %v3792
    %v3835 = vpack.c.b16 %v3795, %v3794
    %v3836 = vpack.c.b16 %v3797, %v3796
    %v3837 = vpack.c.b16 %v3799, %v3798
    %v3838 = vpack.c.b16 %v3801, %v3800
    %v3839 = vpack.c.b16 %v3803, %v3802
    %v3840 = vpack.c.b16 %v3805, %v3804
    %v3841 = vpack.c.b16 %v3807, %v3806
    %v3842 = vpack.c.b16 %v3809, %v3808
    %v3843 = vpack.c.b16 %v3811, %v3810
    %v3844 = vpack.c.b16 %v3813, %v3812
    %v3845 = vpack.c.b16 %v3815, %v3814
    %v3846 = vpack.c.b16 %v3817, %v3816
    %v3847 = vpack.c.b16 %v3819, %v3818
    %v3848 = vpack.c.b16 %v3821, %v3820
    %v3849 = vpack.c.b16 %v3823, %v3822
    %v3850 = vpack.c.b16 %v3825, %v3824
    %v3851 = vpack.c.b16 %v3827, %v3826
    %3876 = vmatprep.subr.bf16.mxu0 0
    %3877 = vmatpush1.bf16.msra.mxu0 %v3828
    %3878 = vmatprep.subr.bf16.mxu0 0
    %3879 = vmatpush1.bf16.msra.mxu0 %v3829
    %3880 = vmatprep.subr.bf16.mxu0 0
    %3881 = vmatpush1.bf16.msra.mxu0 %v3830
    %3882 = vmatprep.subr.bf16.mxu0 0
    %3883 = vmatpush1.bf16.msra.mxu0 %v3831
    %3884 = vmatprep.subr.bf16.mxu0 0
    %3885 = vmatpush1.bf16.msra.mxu0 %v3832
    %3886 = vmatprep.subr.bf16.mxu0 0
    %3887 = vmatpush1.bf16.msra.mxu0 %v3833
    %3888 = vmatprep.subr.bf16.mxu0 0
    %3889 = vmatpush1.bf16.msra.mxu0 %v3834
    %3890 = vmatprep.subr.bf16.mxu0 0
    %3891 = vmatpush1.bf16.msra.mxu0 %v3835
    %3892 = vmatprep.subr.bf16.mxu0 0
    %3893 = vmatpush1.bf16.msra.mxu0 %v3836
    %3894 = vmatprep.subr.bf16.mxu0 0
    %3895 = vmatpush1.bf16.msra.mxu0 %v3837
    %3896 = vmatprep.subr.bf16.mxu0 0
    %3897 = vmatpush1.bf16.msra.mxu0 %v3838
    %3898 = vmatprep.subr.bf16.mxu0 0
    %3899 = vmatpush1.bf16.msra.mxu0 %v3839
    %3900 = vmatprep.subr.bf16.mxu0 0
    %3901 = vmatpush1.bf16.msra.mxu0 %v3840
    %3902 = vmatprep.subr.bf16.mxu0 0
    %3903 = vmatpush1.bf16.msra.mxu0 %v3841
    %3904 = vmatprep.subr.bf16.mxu0 0
    %3905 = vmatpush1.bf16.msra.mxu0 %v3842
    %3906 = vmatprep.subr.bf16.mxu0 0
    %3907 = vmatpush1.bf16.msra.mxu0 %v3843
    %3908 = vmatprep.mubr.bf16.mxu0 %v3670
    %3909 = vmatmul.mubr.bf16.gmra.mrb[0].mxu0 %v3669
    %v3910 = vpop.f32.mrb[0].mxu0
    %v3911 = vadd.f32 %v3730, %v3910
    %v3912 = vpop.f32.mrb[0].mxu0
    %v3913 = vpop.f32.mrb[0].mxu0
    %v3914 = vadd.f32 %v3730, %v3913
    %v3915 = vpop.f32.mrb[0].mxu0
    %3916 = vmatprep.mubr.bf16.mxu0 %v3673
    %3917 = vmatmul.mubr.bf16.gmra.mrb[0].mxu0 %v3672
    %v3918 = vpop.f32.mrb[0].mxu0
    %v3919 = vadd.f32 %v3730, %v3918
    %v3920 = vpop.f32.mrb[0].mxu0
    %v3921 = vpop.f32.mrb[0].mxu0
    %v3922 = vadd.f32 %v3730, %v3921
    %v3923 = vpop.f32.mrb[0].mxu0
    %3924 = vdwg.mxu0
    %3925 = vmatprep.subr.bf16.mxu0 0
    %3926 = vmatpush1.bf16.msra.mxu0 %v3844
    %3927 = vmatprep.subr.bf16.mxu0 0
    %3928 = vmatpush1.bf16.msra.mxu0 %v3845
    %3929 = vmatprep.subr.bf16.mxu0 0
    %3930 = vmatpush1.bf16.msra.mxu0 %v3846
    %3931 = vmatprep.subr.bf16.mxu0 0
    %3932 = vmatpush1.bf16.msra.mxu0 %v3847
    %3933 = vmatprep.subr.bf16.mxu0 0
    %3934 = vmatpush1.bf16.msra.mxu0 %v3848
    %3935 = vmatprep.subr.bf16.mxu0 0
    %3936 = vmatpush1.bf16.msra.mxu0 %v3849
    %3937 = vmatprep.subr.bf16.mxu0 0
    %3938 = vmatpush1.bf16.msra.mxu0 %v3850
    %3939 = vmatprep.subr.bf16.mxu0 0
    %3940 = vmatpush1.bf16.msra.mxu0 %v3851
    %3941 = vmatprep.subr.bf16.mxu0 0
    %3942 = vmatpush1.bf16.msra.mxu0 0
    %3943 = vmatprep.subr.bf16.mxu0 0
    %3944 = vmatpush1.bf16.msra.mxu0 0
    %3945 = vmatprep.subr.bf16.mxu0 0
    %3946 = vmatpush1.bf16.msra.mxu0 0
    %3947 = vmatprep.subr.bf16.mxu0 0
    %3948 = vmatpush1.bf16.msra.mxu0 0
    %3949 = vmatprep.subr.bf16.mxu0 0
    %3950 = vmatpush1.bf16.msra.mxu0 0
    %3951 = vmatprep.subr.bf16.mxu0 0
    %3952 = vmatpush1.bf16.msra.mxu0 0
    %3953 = vmatprep.subr.bf16.mxu0 0
    %3954 = vmatpush1.bf16.msra.mxu0 0
    %3955 = vmatprep.subr.bf16.mxu0 0
    %3956 = vmatpush1.bf16.msra.mxu0 0
    %3957 = vmatprep.mubr.bf16.mxu0 0
    %3958 = vmatmul.mubr.bf16.gmra.mrb[0].mxu0 %v3671
    %v3959 = vpop.f32.mrb[0].mxu0
    %v3960 = vadd.f32 %v3911, %v3959
    %v3961 = vpop.f32.mrb[0].mxu0
    %v3962 = vpop.f32.mrb[0].mxu0
    %v3963 = vadd.f32 %v3914, %v3962
    %v3964 = vpop.f32.mrb[0].mxu0
    %3965 = vmatprep.mubr.bf16.mxu0 0
    %3966 = vmatmul.mubr.bf16.gmra.mrb[0].mxu0 %v3674
    %v3967 = vpop.f32.mrb[0].mxu0
    %v3968 = vadd.f32 %v3919, %v3967
    %v3969 = vpop.f32.mrb[0].mxu0
    %v3970 = vpop.f32.mrb[0].mxu0
    %v3971 = vadd.f32 %v3922, %v3970
    %v3972 = vpop.f32.mrb[0].mxu0
    %3973 = vdwg.mxu0
    %v3974 = vadd.f32 %v3960, %v47
    %v3975 = vadd.f32 %v3963, %v48
    %v3976 = vadd.f32 %v3968, %v49
    %v3977 = vadd.f32 %v3971, %v50
    %3978 = vst [vmem:[%s3] sm:$0xff] %v3974
    %3979 = vst [vmem:[%s3 + $0x8] sm:$0xff] %v3975
    %3980 = vst [vmem:[%s3 + $0x10] sm:$0xff] %v3976
    %3981 = vst [vmem:[%s3 + $0x18] sm:$0xff] %v3977
    // Predicated region
    $region22: #{rir_block.1} parent=1 // pred_check
      _
    $region23: #{rir_block.1} parent=1 // pred_check_branch
      %3983 = sbr.rel (0) target = $region25
    $region24: #{rir_block.1} parent=1 // pred_region
      _
    $region25: #{rir_block.1} parent=1 // pred_fallthru
      _
    // Predicated region
    $region26: #{rir_block.1} parent=1 // pred_check
      _
    $region27: #{rir_block.1} parent=1 // pred_check_branch
      %3985 = sbr.rel (0) target = $region29
    $region28: #{rir_block.1} parent=1 // pred_region
      _
    $region29: #{rir_block.1} parent=1 // pred_fallthru
      _
    %3986 = vsyncpa [#allocation4], 1
    %3987 = vsyncpa [#allocation6], 1

</llo_original>
